<compile_context>
chip_gen: v6e
topology: v6e:2x2x1
jax: 0.10.0
libtpu: 0.0.40
codegen_flags: <defaults>
</compile_context>

<pallas_src>
import jax
import jax.numpy as jnp
import numpy as np
from jax import lax
from jax.experimental import pallas as pl
from jax.experimental.pallas import tpu as pltpu

N_HIDDEN = 96
N_LAYER = 4
HP = 128          # per-gate hidden size padded to the 128-lane vreg width


def _round_up(n, m):
    return (n + m - 1) // m * m


# ----------------------------------------------------------------------------
# Fused kernel: 4 LSTM layers + time recurrence + MLP head, all in VMEM
# ----------------------------------------------------------------------------
def _fused_lstm_kernel(x_ref, *refs):
    n_lstm = 3 * N_LAYER
    lstm_refs = refs[:n_lstm]
    hw1_ref, hb1_ref, hw2_ref, hb2_ref, hw3_ref, hb3_ref = refs[n_lstm:n_lstm + 6]
    o_ref = refs[n_lstm + 6]
    xproj_scr, yseq_scr, h_scr, c_scr = refs[n_lstm + 7:]

    Bp = h_scr.shape[0]          # padded batch (multiple of 8)
    Hp = h_scr.shape[1]          # 128 (padded hidden per gate)
    T = xproj_scr.shape[0] // Bp

    hn_1 = None
    cur_in = x_ref[...]          # (T*Bp, Din_pad) for layer 0

    for k in range(N_LAYER):
        wih_ref, whh_ref, b_ref = lstm_refs[3 * k:3 * k + 3]

        # Hoisted input projection for ALL timesteps: one MXU matmul, bias folded in.
        xproj_scr[...] = (
            jnp.dot(cur_in, wih_ref[...], preferred_element_type=jnp.float32)
            + b_ref[...]
        )

        h_scr[...] = jnp.zeros_like(h_scr)
        c_scr[...] = jnp.zeros_like(c_scr)
        whh = whh_ref[...]                       # hoist weight load out of the time loop
        write_seq = (k < N_LAYER - 1)            # last layer only needs its final h

        def step(t, carry, whh=whh, write_seq=write_seq):
            base = pl.multiple_of(t * Bp, Bp)
            gates = xproj_scr[pl.ds(base, Bp), :] + jnp.dot(
                h_scr[...], whh, preferred_element_type=jnp.float32
            )                                            # (Bp, 4*Hp)
            # PyTorch gate order [i, f, g, o]; slices are 128-lane aligned.
            i_g = jax.nn.sigmoid(gates[:, 0 * Hp:1 * Hp])
            f_g = jax.nn.sigmoid(gates[:, 1 * Hp:2 * Hp])
            g_g = jnp.tanh(gates[:, 2 * Hp:3 * Hp])
            o_g = jax.nn.sigmoid(gates[:, 3 * Hp:4 * Hp])
            c_new = f_g * c_scr[...] + i_g * g_g
            h_new = o_g * jnp.tanh(c_new)
            c_scr[...] = c_new
            h_scr[...] = h_new
            if write_seq:
                yseq_scr[pl.ds(base, Bp), :] = h_new
            return carry

        lax.fori_loop(0, T, step, 0, unroll=True)

        if k == 1:
            hn_1 = h_scr[...]    # hn[1] (padded lanes are zero)
        # inter-layer dropout(0.1) -> identity (eval mode)
        cur_in = yseq_scr[...]   # next layer input, stays in VMEM

    fused = h_scr[...] + hn_1    # hn[-1] + hn[1], shape (Bp, Hp), padded lanes zero

    # Head: ReLU -> Linear(96->16) -> ReLU -> Linear(16->8) -> ReLU -> Dropout(id)
    #       -> Linear(8->1).  All weights zero-padded to 128 lanes -> unmasked stores;
    # the true scalar output sits in lane 0.
    z = jnp.maximum(fused, 0.0)
    z = jnp.maximum(
        jnp.dot(z, hw1_ref[...], preferred_element_type=jnp.float32) + hb1_ref[...], 0.0)
    z = jnp.maximum(
        jnp.dot(z, hw2_ref[...], preferred_element_type=jnp.float32) + hb2_ref[...], 0.0)
    z = jnp.dot(z, hw3_ref[...], preferred_element_type=jnp.float32) + hb3_ref[...]
    o_ref[...] = z.astype(o_ref.dtype)


# ----------------------------------------------------------------------------
# Parameter preprocessing: transpose + zero-pad to lane-aligned shapes
# ----------------------------------------------------------------------------
def _pad_gate_cols(w2d):
    """(rows, 4*H) -> (rows, 4*HP), zero-padding each gate block from H to HP."""
    H = N_HIDDEN
    parts = [jnp.pad(w2d[:, g * H:(g + 1) * H], ((0, 0), (0, HP - H))) for g in range(4)]
    return jnp.concatenate(parts, axis=1)


def _pad2d(w, rows, cols):
    return jnp.pad(w, ((0, rows - w.shape[0]), (0, cols - w.shape[1])))


def prepare_kernel_params(params):
    lstm_flat = []
    for (w_ih, w_hh, b_ih, b_hh) in params["lstm"]:
        d_in = w_ih.shape[1]
        rows_pad = _round_up(d_in, 128)
        wih_t = jnp.pad(_pad_gate_cols(w_ih.T), ((0, rows_pad - d_in), (0, 0)))
        whh_t = jnp.pad(_pad_gate_cols(w_hh.T), ((0, HP - N_HIDDEN), (0, 0)))
        b = _pad_gate_cols((b_ih + b_hh).reshape(1, 4 * N_HIDDEN))
        lstm_flat += [wih_t, whh_t, b]

    (w1, b1), (w2, b2), (w3, b3) = params["head"]
    head_flat = [
        _pad2d(w1, HP, HP), _pad2d(b1.reshape(1, -1), 1, HP),
        _pad2d(w2, HP, HP), _pad2d(b2.reshape(1, -1), 1, HP),
        _pad2d(w3, HP, HP), _pad2d(b3.reshape(1, -1), 1, HP),
    ]
    return lstm_flat, head_flat


# ----------------------------------------------------------------------------
# Full model forward (single fused pallas_call)
# ----------------------------------------------------------------------------
@jax.jit
def lstm_net_forward(params, x_bf):
    """x_bf: (B, T, input_size) batch-first, like the PyTorch module."""
    B, T, Din = x_bf.shape
    Bp = _round_up(B, 8)
    din_pad = _round_up(Din, 128)

    lstm_flat, head_flat = prepare_kernel_params(params)

    x_tm = jnp.transpose(x_bf, (1, 0, 2)).astype(jnp.float32)           # time-major
    x_tm = jnp.pad(x_tm, ((0, 0), (0, Bp - B), (0, din_pad - Din)))     # pad batch & feat
    x2d = x_tm.reshape(T * Bp, din_pad)                                 # (T*Bp, Din_pad)

    out = pl.pallas_call(
        _fused_lstm_kernel,
        out_shape=jax.ShapeDtypeStruct((Bp, HP), jnp.float32),          # lane-dense output
        scratch_shapes=[
            pltpu.VMEM((T * Bp, 4 * HP), jnp.float32),   # hoisted x-projection for a layer
            pltpu.VMEM((T * Bp, HP), jnp.float32),       # layer output sequence (next input)
            pltpu.VMEM((Bp, HP), jnp.float32),           # h
            pltpu.VMEM((Bp, HP), jnp.float32),           # c
        ],
    )(x2d, *lstm_flat, *head_flat)
    return out[:B, :1]


# ----------------------------------------------------------------------------
# Deterministic parameter init (PyTorch-style uniform(-1/sqrt(H), 1/sqrt(H)))
# ----------------------------------------------------------------------------
def init_params(key, input_size):
    H = N_HIDDEN
    bound = 1.0 / np.sqrt(H)
    lstm = []
    for k in range(N_LAYER):
        d_in = input_size if k == 0 else H
        key, k1, k2, k3, k4 = jax.random.split(key, 5)
        w_ih = jax.random.uniform(k1, (4 * H, d_in), jnp.float32, -bound, bound)
        w_hh = jax.random.uniform(k2, (4 * H, H), jnp.float32, -bound, bound)
        b_ih = jax.random.uniform(k3, (4 * H,), jnp.float32, -bound, bound)
        b_hh = jax.random.uniform(k4, (4 * H,), jnp.float32, -bound, bound)
        lstm.append((w_ih, w_hh, b_ih, b_hh))

    def linear(key, fan_in, fan_out):
        k1, k2 = jax.random.split(key)
        bnd = 1.0 / np.sqrt(fan_in)
        w = jax.random.uniform(k1, (fan_in, fan_out), jnp.float32, -bnd, bnd)
        b = jax.random.uniform(k2, (fan_out,), jnp.float32, -bnd, bnd)
        return w, b

    key, k1, k2, k3 = jax.random.split(key, 4)
    head = (linear(k1, H, 16), linear(k2, 16, 8), linear(k3, 8, 1))
    return {"lstm": lstm, "head": head}


# ----------------------------------------------------------------------------
# Pure-JAX reference (for numerical sanity check)
# ----------------------------------------------------------------------------
def reference_forward(params, x_bf):
    H = N_HIDDEN
    x_tm = jnp.transpose(x_bf, (1, 0, 2)).astype(jnp.float32)
    hn_per_layer = []
    cur = x_tm
    for (w_ih, w_hh, b_ih, b_hh) in params["lstm"]:
        B = cur.shape[1]
        w_ih_t, w_hh_t, b_row = w_ih.T, w_hh.T, (b_ih + b_hh)[None, :]

        def step(carry, x_t, w_ih_t=w_ih_t, w_hh_t=w_hh_t, b_row=b_row):
            h, c = carry
            gates = x_t @ w_ih_t + h @ w_hh_t + b_row
            i = jax.nn.sigmoid(gates[:, 0 * H:1 * H])
            f = jax.nn.sigmoid(gates[:, 1 * H:2 * H])
            g = jnp.tanh(gates[:, 2 * H:3 * H])
            o = jax.nn.sigmoid(gates[:, 3 * H:4 * H])
            c_new = f * c + i * g
            h_new = o * jnp.tanh(c_new)
            return (h_new, c_new), h_new

        init = (jnp.zeros((B, H), jnp.float32), jnp.zeros((B, H), jnp.float32))
        (h_fin, _), ys = lax.scan(step, init, cur)
        hn_per_layer.append(h_fin)
        cur = ys

    fused = hn_per_layer[-1] + hn_per_layer[1]
    (w1, b1), (w2, b2), (w3, b3) = params["head"]
    z = jnp.maximum(fused, 0.0)
    z = jnp.maximum(z @ w1 + b1[None, :], 0.0)
    z = jnp.maximum(z @ w2 + b2[None, :], 0.0)
    return z @ w3 + b3[None, :]


if __name__ == "__main__":
    INPUT_SIZE = 12
    BATCH = 4
    SEQ = 8

    key = jax.random.PRNGKey(0)
    pkey, xkey = jax.random.split(key)
    params = init_params(pkey, INPUT_SIZE)
    x = jax.random.normal(xkey, (BATCH, SEQ, INPUT_SIZE), jnp.float32)

    out = jax.block_until_ready(lstm_net_forward(params, x))
    assert out.shape == (BATCH, 1), out.shape

    ref = jax.block_until_ready(reference_forward(params, x))
    np.testing.assert_allclose(np.asarray(out), np.asarray(ref), rtol=1e-3, atol=1e-3)

    print("KERNEL_OK")
</pallas_src>

<mosaic_0001>
module attributes {stable_mosaic.version = 11 : i64} {
  func.func @_fused_lstm_kernel(%arg0: memref<64x128xf32, #tpu.memory_space<vmem>>, %arg1: memref<128x512xf32, #tpu.memory_space<vmem>>, %arg2: memref<128x512xf32, #tpu.memory_space<vmem>>, %arg3: memref<1x512xf32, #tpu.memory_space<vmem>>, %arg4: memref<128x512xf32, #tpu.memory_space<vmem>>, %arg5: memref<128x512xf32, #tpu.memory_space<vmem>>, %arg6: memref<1x512xf32, #tpu.memory_space<vmem>>, %arg7: memref<128x512xf32, #tpu.memory_space<vmem>>, %arg8: memref<128x512xf32, #tpu.memory_space<vmem>>, %arg9: memref<1x512xf32, #tpu.memory_space<vmem>>, %arg10: memref<128x512xf32, #tpu.memory_space<vmem>>, %arg11: memref<128x512xf32, #tpu.memory_space<vmem>>, %arg12: memref<1x512xf32, #tpu.memory_space<vmem>>, %arg13: memref<128x128xf32, #tpu.memory_space<vmem>>, %arg14: memref<1x128xf32, #tpu.memory_space<vmem>>, %arg15: memref<128x128xf32, #tpu.memory_space<vmem>>, %arg16: memref<1x128xf32, #tpu.memory_space<vmem>>, %arg17: memref<128x128xf32, #tpu.memory_space<vmem>>, %arg18: memref<1x128xf32, #tpu.memory_space<vmem>>, %arg19: memref<8x128xf32, #tpu.memory_space<vmem>>, %arg20: memref<64x512xf32, #tpu.memory_space<vmem>>, %arg21: memref<64x128xf32, #tpu.memory_space<vmem>>, %arg22: memref<8x128xf32, #tpu.memory_space<vmem>>, %arg23: memref<8x128xf32, #tpu.memory_space<vmem>>) attributes {dimension_semantics = [], scalar_prefetch = 0 : i64, scratch_operands = 4 : i64, tpu.core_type = #tpu.core_type<tc>} {
    %c0 = arith.constant 0 : index
    %c0_0 = arith.constant 0 : index
    %0 = vector.load %arg0[%c0, %c0_0] : memref<64x128xf32, #tpu.memory_space<vmem>>, vector<64x128xf32>
    %c0_1 = arith.constant 0 : index
    %c0_2 = arith.constant 0 : index
    %1 = vector.load %arg1[%c0_1, %c0_2] : memref<128x512xf32, #tpu.memory_space<vmem>>, vector<128x512xf32>
    %cst = arith.constant dense<0.000000e+00> : vector<64x512xf32>
    %2 = tpu.matmul %0, %1, %cst {dimension_numbers = #tpu.dot_dimension_numbers<[1], [0], [0], [1], [0, 0, 1, 1], [], []>} : vector<64x128xf32>, vector<128x512xf32>, vector<64x512xf32> -> vector<64x512xf32>
    %c0_3 = arith.constant 0 : index
    %c0_4 = arith.constant 0 : index
    %3 = vector.load %arg3[%c0_3, %c0_4] : memref<1x512xf32, #tpu.memory_space<vmem>>, vector<1x512xf32>
    %4 = vector.broadcast %3 : vector<1x512xf32> to vector<64x512xf32>
    %5 = arith.addf %2, %4 : vector<64x512xf32>
    %c0_5 = arith.constant 0 : index
    %c0_6 = arith.constant 0 : index
    %6 = vector.load %arg20[%c0_5, %c0_6] : memref<64x512xf32, #tpu.memory_space<vmem>>, vector<64x512xf32>
    tpu.vector_store %arg20[%c0_5, %c0_6], %5 {strides = array<i32>} : memref<64x512xf32, #tpu.memory_space<vmem>>, vector<64x512xf32>,
    %cst_7 = arith.constant 0.000000e+00 : f32
    %7 = vector.broadcast %cst_7 : f32 to vector<8x128xf32>
    %c0_8 = arith.constant 0 : index
    %c0_9 = arith.constant 0 : index
    %8 = vector.load %arg22[%c0_8, %c0_9] : memref<8x128xf32, #tpu.memory_space<vmem>>, vector<8x128xf32>
    tpu.vector_store %arg22[%c0_8, %c0_9], %7 {strides = array<i32>} : memref<8x128xf32, #tpu.memory_space<vmem>>, vector<8x128xf32>,
    %cst_10 = arith.constant 0.000000e+00 : f32
    %9 = vector.broadcast %cst_10 : f32 to vector<8x128xf32>
    %c0_11 = arith.constant 0 : index
    %c0_12 = arith.constant 0 : index
    %10 = vector.load %arg23[%c0_11, %c0_12] : memref<8x128xf32, #tpu.memory_space<vmem>>, vector<8x128xf32>
    tpu.vector_store %arg23[%c0_11, %c0_12], %9 {strides = array<i32>} : memref<8x128xf32, #tpu.memory_space<vmem>>, vector<8x128xf32>,
    %c0_13 = arith.constant 0 : index
    %c0_14 = arith.constant 0 : index
    %11 = vector.load %arg2[%c0_13, %c0_14] : memref<128x512xf32, #tpu.memory_space<vmem>>, vector<128x512xf32>
    %c0_i32 = arith.constant 0 : i32
    %c8_i32 = arith.constant 8 : i32
    %12 = arith.muli %c0_i32, %c8_i32 : i32
    %13 = tpu.assume_multiple %12, 8 : i32
    %14 = arith.index_cast %13 : i32 to index
    %c0_15 = arith.constant 0 : index
    %15 = vector.load %arg20[%14, %c0_15] : memref<64x512xf32, #tpu.memory_space<vmem>>, vector<8x512xf32>
    %c0_16 = arith.constant 0 : index
    %c0_17 = arith.constant 0 : index
    %16 = vector.load %arg22[%c0_16, %c0_17] : memref<8x128xf32, #tpu.memory_space<vmem>>, vector<8x128xf32>
    %cst_18 = arith.constant dense<0.000000e+00> : vector<8x512xf32>
    %17 = tpu.matmul %16, %11, %cst_18 {dimension_numbers = #tpu.dot_dimension_numbers<[1], [0], [0], [1], [0, 0, 1, 1], [], []>} : vector<8x128xf32>, vector<128x512xf32>, vector<8x512xf32> -> vector<8x512xf32>
    %18 = arith.addf %15, %17 : vector<8x512xf32>
    %19 = vector.extract_strided_slice %18 {offsets = [0, 0], sizes = [8, 128], strides = [1, 1]} : vector<8x512xf32> to vector<8x128xf32>
    %20 = arith.negf %19 : vector<8x128xf32>
    %21 = math.exp %20 : vector<8x128xf32>
    %cst_19 = arith.constant 1.000000e+00 : f32
    %22 = vector.broadcast %cst_19 : f32 to vector<8x128xf32>
    %23 = arith.addf %22, %21 : vector<8x128xf32>
    %24 = arith.divf %22, %23 : vector<8x128xf32>
    %25 = vector.extract_strided_slice %18 {offsets = [0, 128], sizes = [8, 128], strides = [1, 1]} : vector<8x512xf32> to vector<8x128xf32>
    %26 = arith.negf %25 : vector<8x128xf32>
    %27 = math.exp %26 : vector<8x128xf32>
    %cst_20 = arith.constant 1.000000e+00 : f32
    %28 = vector.broadcast %cst_20 : f32 to vector<8x128xf32>
    %29 = arith.addf %28, %27 : vector<8x128xf32>
    %30 = arith.divf %28, %29 : vector<8x128xf32>
    %31 = vector.extract_strided_slice %18 {offsets = [0, 256], sizes = [8, 128], strides = [1, 1]} : vector<8x512xf32> to vector<8x128xf32>
    %32 = math.tanh %31 : vector<8x128xf32>
    %33 = vector.extract_strided_slice %18 {offsets = [0, 384], sizes = [8, 128], strides = [1, 1]} : vector<8x512xf32> to vector<8x128xf32>
    %34 = arith.negf %33 : vector<8x128xf32>
    %35 = math.exp %34 : vector<8x128xf32>
    %cst_21 = arith.constant 1.000000e+00 : f32
    %36 = vector.broadcast %cst_21 : f32 to vector<8x128xf32>
    %37 = arith.addf %36, %35 : vector<8x128xf32>
    %38 = arith.divf %36, %37 : vector<8x128xf32>
    %c0_22 = arith.constant 0 : index
    %c0_23 = arith.constant 0 : index
    %39 = vector.load %arg23[%c0_22, %c0_23] : memref<8x128xf32, #tpu.memory_space<vmem>>, vector<8x128xf32>
    %40 = arith.mulf %30, %39 : vector<8x128xf32>
    %41 = arith.mulf %24, %32 : vector<8x128xf32>
    %42 = arith.addf %40, %41 : vector<8x128xf32>
    %43 = math.tanh %42 : vector<8x128xf32>
    %44 = arith.mulf %38, %43 : vector<8x128xf32>
    %c0_24 = arith.constant 0 : index
    %c0_25 = arith.constant 0 : index
    %45 = vector.load %arg23[%c0_24, %c0_25] : memref<8x128xf32, #tpu.memory_space<vmem>>, vector<8x128xf32>
    tpu.vector_store %arg23[%c0_24, %c0_25], %42 {strides = array<i32>} : memref<8x128xf32, #tpu.memory_space<vmem>>, vector<8x128xf32>,
    %c0_26 = arith.constant 0 : index
    %c0_27 = arith.constant 0 : index
    %46 = vector.load %arg22[%c0_26, %c0_27] : memref<8x128xf32, #tpu.memory_space<vmem>>, vector<8x128xf32>
    tpu.vector_store %arg22[%c0_26, %c0_27], %44 {strides = array<i32>} : memref<8x128xf32, #tpu.memory_space<vmem>>, vector<8x128xf32>,
    %47 = arith.index_cast %13 : i32 to index
    %c0_28 = arith.constant 0 : index
    %48 = vector.load %arg21[%47, %c0_28] : memref<64x128xf32, #tpu.memory_space<vmem>>, vector<8x128xf32>
    tpu.vector_store %arg21[%47, %c0_28], %44 {strides = array<i32>} : memref<64x128xf32, #tpu.memory_space<vmem>>, vector<8x128xf32>,
    %c1_i32 = arith.constant 1 : i32
    %c8_i32_29 = arith.constant 8 : i32
    %49 = arith.muli %c1_i32, %c8_i32_29 : i32
    %50 = tpu.assume_multiple %49, 8 : i32
    %51 = arith.index_cast %50 : i32 to index
    %c0_30 = arith.constant 0 : index
    %52 = vector.load %arg20[%51, %c0_30] : memref<64x512xf32, #tpu.memory_space<vmem>>, vector<8x512xf32>
    %c0_31 = arith.constant 0 : index
    %c0_32 = arith.constant 0 : index
    %53 = vector.load %arg22[%c0_31, %c0_32] : memref<8x128xf32, #tpu.memory_space<vmem>>, vector<8x128xf32>
    %cst_33 = arith.constant dense<0.000000e+00> : vector<8x512xf32>
    %54 = tpu.matmul %53, %11, %cst_33 {dimension_numbers = #tpu.dot_dimension_numbers<[1], [0], [0], [1], [0, 0, 1, 1], [], []>} : vector<8x128xf32>, vector<128x512xf32>, vector<8x512xf32> -> vector<8x512xf32>
    %55 = arith.addf %52, %54 : vector<8x512xf32>
    %56 = vector.extract_strided_slice %55 {offsets = [0, 0], sizes = [8, 128], strides = [1, 1]} : vector<8x512xf32> to vector<8x128xf32>
    %57 = arith.negf %56 : vector<8x128xf32>
    %58 = math.exp %57 : vector<8x128xf32>
    %cst_34 = arith.constant 1.000000e+00 : f32
    %59 = vector.broadcast %cst_34 : f32 to vector<8x128xf32>
    %60 = arith.addf %59, %58 : vector<8x128xf32>
    %61 = arith.divf %59, %60 : vector<8x128xf32>
    %62 = vector.extract_strided_slice %55 {offsets = [0, 128], sizes = [8, 128], strides = [1, 1]} : vector<8x512xf32> to vector<8x128xf32>
    %63 = arith.negf %62 : vector<8x128xf32>
    %64 = math.exp %63 : vector<8x128xf32>
    %cst_35 = arith.constant 1.000000e+00 : f32
    %65 = vector.broadcast %cst_35 : f32 to vector<8x128xf32>
    %66 = arith.addf %65, %64 : vector<8x128xf32>
    %67 = arith.divf %65, %66 : vector<8x128xf32>
    %68 = vector.extract_strided_slice %55 {offsets = [0, 256], sizes = [8, 128], strides = [1, 1]} : vector<8x512xf32> to vector<8x128xf32>
    %69 = math.tanh %68 : vector<8x128xf32>
    %70 = vector.extract_strided_slice %55 {offsets = [0, 384], sizes = [8, 128], strides = [1, 1]} : vector<8x512xf32> to vector<8x128xf32>
    %71 = arith.negf %70 : vector<8x128xf32>
    %72 = math.exp %71 : vector<8x128xf32>
    %cst_36 = arith.constant 1.000000e+00 : f32
    %73 = vector.broadcast %cst_36 : f32 to vector<8x128xf32>
    %74 = arith.addf %73, %72 : vector<8x128xf32>
    %75 = arith.divf %73, %74 : vector<8x128xf32>
    %c0_37 = arith.constant 0 : index
    %c0_38 = arith.constant 0 : index
    %76 = vector.load %arg23[%c0_37, %c0_38] : memref<8x128xf32, #tpu.memory_space<vmem>>, vector<8x128xf32>
    %77 = arith.mulf %67, %76 : vector<8x128xf32>
    %78 = arith.mulf %61, %69 : vector<8x128xf32>
    %79 = arith.addf %77, %78 : vector<8x128xf32>
    %80 = math.tanh %79 : vector<8x128xf32>
    %81 = arith.mulf %75, %80 : vector<8x128xf32>
    %c0_39 = arith.constant 0 : index
    %c0_40 = arith.constant 0 : index
    %82 = vector.load %arg23[%c0_39, %c0_40] : memref<8x128xf32, #tpu.memory_space<vmem>>, vector<8x128xf32>
    tpu.vector_store %arg23[%c0_39, %c0_40], %79 {strides = array<i32>} : memref<8x128xf32, #tpu.memory_space<vmem>>, vector<8x128xf32>,
    %c0_41 = arith.constant 0 : index
    %c0_42 = arith.constant 0 : index
    %83 = vector.load %arg22[%c0_41, %c0_42] : memref<8x128xf32, #tpu.memory_space<vmem>>, vector<8x128xf32>
    tpu.vector_store %arg22[%c0_41, %c0_42], %81 {strides = array<i32>} : memref<8x128xf32, #tpu.memory_space<vmem>>, vector<8x128xf32>,
    %84 = arith.index_cast %50 : i32 to index
    %c0_43 = arith.constant 0 : index
    %85 = vector.load %arg21[%84, %c0_43] : memref<64x128xf32, #tpu.memory_space<vmem>>, vector<8x128xf32>
    tpu.vector_store %arg21[%84, %c0_43], %81 {strides = array<i32>} : memref<64x128xf32, #tpu.memory_space<vmem>>, vector<8x128xf32>,
    %c2_i32 = arith.constant 2 : i32
    %c8_i32_44 = arith.constant 8 : i32
    %86 = arith.muli %c2_i32, %c8_i32_44 : i32
    %87 = tpu.assume_multiple %86, 8 : i32
    %88 = arith.index_cast %87 : i32 to index
    %c0_45 = arith.constant 0 : index
    %89 = vector.load %arg20[%88, %c0_45] : memref<64x512xf32, #tpu.memory_space<vmem>>, vector<8x512xf32>
    %c0_46 = arith.constant 0 : index
    %c0_47 = arith.constant 0 : index
    %90 = vector.load %arg22[%c0_46, %c0_47] : memref<8x128xf32, #tpu.memory_space<vmem>>, vector<8x128xf32>
    %cst_48 = arith.constant dense<0.000000e+00> : vector<8x512xf32>
    %91 = tpu.matmul %90, %11, %cst_48 {dimension_numbers = #tpu.dot_dimension_numbers<[1], [0], [0], [1], [0, 0, 1, 1], [], []>} : vector<8x128xf32>, vector<128x512xf32>, vector<8x512xf32> -> vector<8x512xf32>
    %92 = arith.addf %89, %91 : vector<8x512xf32>
    %93 = vector.extract_strided_slice %92 {offsets = [0, 0], sizes = [8, 128], strides = [1, 1]} : vector<8x512xf32> to vector<8x128xf32>
    %94 = arith.negf %93 : vector<8x128xf32>
    %95 = math.exp %94 : vector<8x128xf32>
    %cst_49 = arith.constant 1.000000e+00 : f32
    %96 = vector.broadcast %cst_49 : f32 to vector<8x128xf32>
    %97 = arith.addf %96, %95 : vector<8x128xf32>
    %98 = arith.divf %96, %97 : vector<8x128xf32>
    %99 = vector.extract_strided_slice %92 {offsets = [0, 128], sizes = [8, 128], strides = [1, 1]} : vector<8x512xf32> to vector<8x128xf32>
    %100 = arith.negf %99 : vector<8x128xf32>
    %101 = math.exp %100 : vector<8x128xf32>
    %cst_50 = arith.constant 1.000000e+00 : f32
    %102 = vector.broadcast %cst_50 : f32 to vector<8x128xf32>
    %103 = arith.addf %102, %101 : vector<8x128xf32>
    %104 = arith.divf %102, %103 : vector<8x128xf32>
    %105 = vector.extract_strided_slice %92 {offsets = [0, 256], sizes = [8, 128], strides = [1, 1]} : vector<8x512xf32> to vector<8x128xf32>
    %106 = math.tanh %105 : vector<8x128xf32>
    %107 = vector.extract_strided_slice %92 {offsets = [0, 384], sizes = [8, 128], strides = [1, 1]} : vector<8x512xf32> to vector<8x128xf32>
    %108 = arith.negf %107 : vector<8x128xf32>
    %109 = math.exp %108 : vector<8x128xf32>
    %cst_51 = arith.constant 1.000000e+00 : f32
    %110 = vector.broadcast %cst_51 : f32 to vector<8x128xf32>
    %111 = arith.addf %110, %109 : vector<8x128xf32>
    %112 = arith.divf %110, %111 : vector<8x128xf32>
    %c0_52 = arith.constant 0 : index
    %c0_53 = arith.constant 0 : index
    %113 = vector.load %arg23[%c0_52, %c0_53] : memref<8x128xf32, #tpu.memory_space<vmem>>, vector<8x128xf32>
    %114 = arith.mulf %104, %113 : vector<8x128xf32>
    %115 = arith.mulf %98, %106 : vector<8x128xf32>
    %116 = arith.addf %114, %115 : vector<8x128xf32>
    %117 = math.tanh %116 : vector<8x128xf32>
    %118 = arith.mulf %112, %117 : vector<8x128xf32>
    %c0_54 = arith.constant 0 : index
    %c0_55 = arith.constant 0 : index
    %119 = vector.load %arg23[%c0_54, %c0_55] : memref<8x128xf32, #tpu.memory_space<vmem>>, vector<8x128xf32>
    tpu.vector_store %arg23[%c0_54, %c0_55], %116 {strides = array<i32>} : memref<8x128xf32, #tpu.memory_space<vmem>>, vector<8x128xf32>,
    %c0_56 = arith.constant 0 : index
    %c0_57 = arith.constant 0 : index
    %120 = vector.load %arg22[%c0_56, %c0_57] : memref<8x128xf32, #tpu.memory_space<vmem>>, vector<8x128xf32>
    tpu.vector_store %arg22[%c0_56, %c0_57], %118 {strides = array<i32>} : memref<8x128xf32, #tpu.memory_space<vmem>>, vector<8x128xf32>,
    %121 = arith.index_cast %87 : i32 to index
    %c0_58 = arith.constant 0 : index
    %122 = vector.load %arg21[%121, %c0_58] : memref<64x128xf32, #tpu.memory_space<vmem>>, vector<8x128xf32>
    tpu.vector_store %arg21[%121, %c0_58], %118 {strides = array<i32>} : memref<64x128xf32, #tpu.memory_space<vmem>>, vector<8x128xf32>,
    %c3_i32 = arith.constant 3 : i32
    %c8_i32_59 = arith.constant 8 : i32
    %123 = arith.muli %c3_i32, %c8_i32_59 : i32
    %124 = tpu.assume_multiple %123, 8 : i32
    %125 = arith.index_cast %124 : i32 to index
    %c0_60 = arith.constant 0 : index
    %126 = vector.load %arg20[%125, %c0_60] : memref<64x512xf32, #tpu.memory_space<vmem>>, vector<8x512xf32>
    %c0_61 = arith.constant 0 : index
    %c0_62 = arith.constant 0 : index
    %127 = vector.load %arg22[%c0_61, %c0_62] : memref<8x128xf32, #tpu.memory_space<vmem>>, vector<8x128xf32>
    %cst_63 = arith.constant dense<0.000000e+00> : vector<8x512xf32>
    %128 = tpu.matmul %127, %11, %cst_63 {dimension_numbers = #tpu.dot_dimension_numbers<[1], [0], [0], [1], [0, 0, 1, 1], [], []>} : vector<8x128xf32>, vector<128x512xf32>, vector<8x512xf32> -> vector<8x512xf32>
    %129 = arith.addf %126, %128 : vector<8x512xf32>
    %130 = vector.extract_strided_slice %129 {offsets = [0, 0], sizes = [8, 128], strides = [1, 1]} : vector<8x512xf32> to vector<8x128xf32>
    %131 = arith.negf %130 : vector<8x128xf32>
    %132 = math.exp %131 : vector<8x128xf32>
    %cst_64 = arith.constant 1.000000e+00 : f32
    %133 = vector.broadcast %cst_64 : f32 to vector<8x128xf32>
    %134 = arith.addf %133, %132 : vector<8x128xf32>
    %135 = arith.divf %133, %134 : vector<8x128xf32>
    %136 = vector.extract_strided_slice %129 {offsets = [0, 128], sizes = [8, 128], strides = [1, 1]} : vector<8x512xf32> to vector<8x128xf32>
    %137 = arith.negf %136 : vector<8x128xf32>
    %138 = math.exp %137 : vector<8x128xf32>
    %cst_65 = arith.constant 1.000000e+00 : f32
    %139 = vector.broadcast %cst_65 : f32 to vector<8x128xf32>
    %140 = arith.addf %139, %138 : vector<8x128xf32>
    %141 = arith.divf %139, %140 : vector<8x128xf32>
    %142 = vector.extract_strided_slice %129 {offsets = [0, 256], sizes = [8, 128], strides = [1, 1]} : vector<8x512xf32> to vector<8x128xf32>
    %143 = math.tanh %142 : vector<8x128xf32>
    %144 = vector.extract_strided_slice %129 {offsets = [0, 384], sizes = [8, 128], strides = [1, 1]} : vector<8x512xf32> to vector<8x128xf32>
    %145 = arith.negf %144 : vector<8x128xf32>
    %146 = math.exp %145 : vector<8x128xf32>
    %cst_66 = arith.constant 1.000000e+00 : f32
    %147 = vector.broadcast %cst_66 : f32 to vector<8x128xf32>
    %148 = arith.addf %147, %146 : vector<8x128xf32>
    %149 = arith.divf %147, %148 : vector<8x128xf32>
    %c0_67 = arith.constant 0 : index
    %c0_68 = arith.constant 0 : index
    %150 = vector.load %arg23[%c0_67, %c0_68] : memref<8x128xf32, #tpu.memory_space<vmem>>, vector<8x128xf32>
    %151 = arith.mulf %141, %150 : vector<8x128xf32>
    %152 = arith.mulf %135, %143 : vector<8x128xf32>
    %153 = arith.addf %151, %152 : vector<8x128xf32>
    %154 = math.tanh %153 : vector<8x128xf32>
    %155 = arith.mulf %149, %154 : vector<8x128xf32>
    %c0_69 = arith.constant 0 : index
    %c0_70 = arith.constant 0 : index
    %156 = vector.load %arg23[%c0_69, %c0_70] : memref<8x128xf32, #tpu.memory_space<vmem>>, vector<8x128xf32>
    tpu.vector_store %arg23[%c0_69, %c0_70], %153 {strides = array<i32>} : memref<8x128xf32, #tpu.memory_space<vmem>>, vector<8x128xf32>,
    %c0_71 = arith.constant 0 : index
    %c0_72 = arith.constant 0 : index
    %157 = vector.load %arg22[%c0_71, %c0_72] : memref<8x128xf32, #tpu.memory_space<vmem>>, vector<8x128xf32>
    tpu.vector_store %arg22[%c0_71, %c0_72], %155 {strides = array<i32>} : memref<8x128xf32, #tpu.memory_space<vmem>>, vector<8x128xf32>,
    %158 = arith.index_cast %124 : i32 to index
    %c0_73 = arith.constant 0 : index
    %159 = vector.load %arg21[%158, %c0_73] : memref<64x128xf32, #tpu.memory_space<vmem>>, vector<8x128xf32>
    tpu.vector_store %arg21[%158, %c0_73], %155 {strides = array<i32>} : memref<64x128xf32, #tpu.memory_space<vmem>>, vector<8x128xf32>,
    %c4_i32 = arith.constant 4 : i32
    %c8_i32_74 = arith.constant 8 : i32
    %160 = arith.muli %c4_i32, %c8_i32_74 : i32
    %161 = tpu.assume_multiple %160, 8 : i32
    %162 = arith.index_cast %161 : i32 to index
    %c0_75 = arith.constant 0 : index
    %163 = vector.load %arg20[%162, %c0_75] : memref<64x512xf32, #tpu.memory_space<vmem>>, vector<8x512xf32>
    %c0_76 = arith.constant 0 : index
    %c0_77 = arith.constant 0 : index
    %164 = vector.load %arg22[%c0_76, %c0_77] : memref<8x128xf32, #tpu.memory_space<vmem>>, vector<8x128xf32>
    %cst_78 = arith.constant dense<0.000000e+00> : vector<8x512xf32>
    %165 = tpu.matmul %164, %11, %cst_78 {dimension_numbers = #tpu.dot_dimension_numbers<[1], [0], [0], [1], [0, 0, 1, 1], [], []>} : vector<8x128xf32>, vector<128x512xf32>, vector<8x512xf32> -> vector<8x512xf32>
    %166 = arith.addf %163, %165 : vector<8x512xf32>
    %167 = vector.extract_strided_slice %166 {offsets = [0, 0], sizes = [8, 128], strides = [1, 1]} : vector<8x512xf32> to vector<8x128xf32>
    %168 = arith.negf %167 : vector<8x128xf32>
    %169 = math.exp %168 : vector<8x128xf32>
    %cst_79 = arith.constant 1.000000e+00 : f32
    %170 = vector.broadcast %cst_79 : f32 to vector<8x128xf32>
    %171 = arith.addf %170, %169 : vector<8x128xf32>
    %172 = arith.divf %170, %171 : vector<8x128xf32>
    %173 = vector.extract_strided_slice %166 {offsets = [0, 128], sizes = [8, 128], strides = [1, 1]} : vector<8x512xf32> to vector<8x128xf32>
    %174 = arith.negf %173 : vector<8x128xf32>
    %175 = math.exp %174 : vector<8x128xf32>
    %cst_80 = arith.constant 1.000000e+00 : f32
    %176 = vector.broadcast %cst_80 : f32 to vector<8x128xf32>
    %177 = arith.addf %176, %175 : vector<8x128xf32>
    %178 = arith.divf %176, %177 : vector<8x128xf32>
    %179 = vector.extract_strided_slice %166 {offsets = [0, 256], sizes = [8, 128], strides = [1, 1]} : vector<8x512xf32> to vector<8x128xf32>
    %180 = math.tanh %179 : vector<8x128xf32>
    %181 = vector.extract_strided_slice %166 {offsets = [0, 384], sizes = [8, 128], strides = [1, 1]} : vector<8x512xf32> to vector<8x128xf32>
    %182 = arith.negf %181 : vector<8x128xf32>
    %183 = math.exp %182 : vector<8x128xf32>
    %cst_81 = arith.constant 1.000000e+00 : f32
    %184 = vector.broadcast %cst_81 : f32 to vector<8x128xf32>
    %185 = arith.addf %184, %183 : vector<8x128xf32>
    %186 = arith.divf %184, %185 : vector<8x128xf32>
    %c0_82 = arith.constant 0 : index
    %c0_83 = arith.constant 0 : index
    %187 = vector.load %arg23[%c0_82, %c0_83] : memref<8x128xf32, #tpu.memory_space<vmem>>, vector<8x128xf32>
    %188 = arith.mulf %178, %187 : vector<8x128xf32>
    %189 = arith.mulf %172, %180 : vector<8x128xf32>
    %190 = arith.addf %188, %189 : vector<8x128xf32>
    %191 = math.tanh %190 : vector<8x128xf32>
    %192 = arith.mulf %186, %191 : vector<8x128xf32>
    %c0_84 = arith.constant 0 : index
    %c0_85 = arith.constant 0 : index
    %193 = vector.load %arg23[%c0_84, %c0_85] : memref<8x128xf32, #tpu.memory_space<vmem>>, vector<8x128xf32>
    tpu.vector_store %arg23[%c0_84, %c0_85], %190 {strides = array<i32>} : memref<8x128xf32, #tpu.memory_space<vmem>>, vector<8x128xf32>,
    %c0_86 = arith.constant 0 : index
    %c0_87 = arith.constant 0 : index
    %194 = vector.load %arg22[%c0_86, %c0_87] : memref<8x128xf32, #tpu.memory_space<vmem>>, vector<8x128xf32>
    tpu.vector_store %arg22[%c0_86, %c0_87], %192 {strides = array<i32>} : memref<8x128xf32, #tpu.memory_space<vmem>>, vector<8x128xf32>,
    %195 = arith.index_cast %161 : i32 to index
    %c0_88 = arith.constant 0 : index
    %196 = vector.load %arg21[%195, %c0_88] : memref<64x128xf32, #tpu.memory_space<vmem>>, vector<8x128xf32>
    tpu.vector_store %arg21[%195, %c0_88], %192 {strides = array<i32>} : memref<64x128xf32, #tpu.memory_space<vmem>>, vector<8x128xf32>,
    %c5_i32 = arith.constant 5 : i32
    %c8_i32_89 = arith.constant 8 : i32
    %197 = arith.muli %c5_i32, %c8_i32_89 : i32
    %198 = tpu.assume_multiple %197, 8 : i32
    %199 = arith.index_cast %198 : i32 to index
    %c0_90 = arith.constant 0 : index
    %200 = vector.load %arg20[%199, %c0_90] : memref<64x512xf32, #tpu.memory_space<vmem>>, vector<8x512xf32>
    %c0_91 = arith.constant 0 : index
    %c0_92 = arith.constant 0 : index
    %201 = vector.load %arg22[%c0_91, %c0_92] : memref<8x128xf32, #tpu.memory_space<vmem>>, vector<8x128xf32>
    %cst_93 = arith.constant dense<0.000000e+00> : vector<8x512xf32>
    %202 = tpu.matmul %201, %11, %cst_93 {dimension_numbers = #tpu.dot_dimension_numbers<[1], [0], [0], [1], [0, 0, 1, 1], [], []>} : vector<8x128xf32>, vector<128x512xf32>, vector<8x512xf32> -> vector<8x512xf32>
    %203 = arith.addf %200, %202 : vector<8x512xf32>
    %204 = vector.extract_strided_slice %203 {offsets = [0, 0], sizes = [8, 128], strides = [1, 1]} : vector<8x512xf32> to vector<8x128xf32>
    %205 = arith.negf %204 : vector<8x128xf32>
    %206 = math.exp %205 : vector<8x128xf32>
    %cst_94 = arith.constant 1.000000e+00 : f32
    %207 = vector.broadcast %cst_94 : f32 to vector<8x128xf32>
    %208 = arith.addf %207, %206 : vector<8x128xf32>
    %209 = arith.divf %207, %208 : vector<8x128xf32>
    %210 = vector.extract_strided_slice %203 {offsets = [0, 128], sizes = [8, 128], strides = [1, 1]} : vector<8x512xf32> to vector<8x128xf32>
    %211 = arith.negf %210 : vector<8x128xf32>
    %212 = math.exp %211 : vector<8x128xf32>
    %cst_95 = arith.constant 1.000000e+00 : f32
    %213 = vector.broadcast %cst_95 : f32 to vector<8x128xf32>
    %214 = arith.addf %213, %212 : vector<8x128xf32>
    %215 = arith.divf %213, %214 : vector<8x128xf32>
    %216 = vector.extract_strided_slice %203 {offsets = [0, 256], sizes = [8, 128], strides = [1, 1]} : vector<8x512xf32> to vector<8x128xf32>
    %217 = math.tanh %216 : vector<8x128xf32>
    %218 = vector.extract_strided_slice %203 {offsets = [0, 384], sizes = [8, 128], strides = [1, 1]} : vector<8x512xf32> to vector<8x128xf32>
    %219 = arith.negf %218 : vector<8x128xf32>
    %220 = math.exp %219 : vector<8x128xf32>
    %cst_96 = arith.constant 1.000000e+00 : f32
    %221 = vector.broadcast %cst_96 : f32 to vector<8x128xf32>
    %222 = arith.addf %221, %220 : vector<8x128xf32>
    %223 = arith.divf %221, %222 : vector<8x128xf32>
    %c0_97 = arith.constant 0 : index
    %c0_98 = arith.constant 0 : index
    %224 = vector.load %arg23[%c0_97, %c0_98] : memref<8x128xf32, #tpu.memory_space<vmem>>, vector<8x128xf32>
    %225 = arith.mulf %215, %224 : vector<8x128xf32>
    %226 = arith.mulf %209, %217 : vector<8x128xf32>
    %227 = arith.addf %225, %226 : vector<8x128xf32>
    %228 = math.tanh %227 : vector<8x128xf32>
    %229 = arith.mulf %223, %228 : vector<8x128xf32>
    %c0_99 = arith.constant 0 : index
    %c0_100 = arith.constant 0 : index
    %230 = vector.load %arg23[%c0_99, %c0_100] : memref<8x128xf32, #tpu.memory_space<vmem>>, vector<8x128xf32>
    tpu.vector_store %arg23[%c0_99, %c0_100], %227 {strides = array<i32>} : memref<8x128xf32, #tpu.memory_space<vmem>>, vector<8x128xf32>,
    %c0_101 = arith.constant 0 : index
    %c0_102 = arith.constant 0 : index
    %231 = vector.load %arg22[%c0_101, %c0_102] : memref<8x128xf32, #tpu.memory_space<vmem>>, vector<8x128xf32>
    tpu.vector_store %arg22[%c0_101, %c0_102], %229 {strides = array<i32>} : memref<8x128xf32, #tpu.memory_space<vmem>>, vector<8x128xf32>,
    %232 = arith.index_cast %198 : i32 to index
    %c0_103 = arith.constant 0 : index
    %233 = vector.load %arg21[%232, %c0_103] : memref<64x128xf32, #tpu.memory_space<vmem>>, vector<8x128xf32>
    tpu.vector_store %arg21[%232, %c0_103], %229 {strides = array<i32>} : memref<64x128xf32, #tpu.memory_space<vmem>>, vector<8x128xf32>,
    %c6_i32 = arith.constant 6 : i32
    %c8_i32_104 = arith.constant 8 : i32
    %234 = arith.muli %c6_i32, %c8_i32_104 : i32
    %235 = tpu.assume_multiple %234, 8 : i32
    %236 = arith.index_cast %235 : i32 to index
    %c0_105 = arith.constant 0 : index
    %237 = vector.load %arg20[%236, %c0_105] : memref<64x512xf32, #tpu.memory_space<vmem>>, vector<8x512xf32>
    %c0_106 = arith.constant 0 : index
    %c0_107 = arith.constant 0 : index
    %238 = vector.load %arg22[%c0_106, %c0_107] : memref<8x128xf32, #tpu.memory_space<vmem>>, vector<8x128xf32>
    %cst_108 = arith.constant dense<0.000000e+00> : vector<8x512xf32>
    %239 = tpu.matmul %238, %11, %cst_108 {dimension_numbers = #tpu.dot_dimension_numbers<[1], [0], [0], [1], [0, 0, 1, 1], [], []>} : vector<8x128xf32>, vector<128x512xf32>, vector<8x512xf32> -> vector<8x512xf32>
    %240 = arith.addf %237, %239 : vector<8x512xf32>
    %241 = vector.extract_strided_slice %240 {offsets = [0, 0], sizes = [8, 128], strides = [1, 1]} : vector<8x512xf32> to vector<8x128xf32>
    %242 = arith.negf %241 : vector<8x128xf32>
    %243 = math.exp %242 : vector<8x128xf32>
    %cst_109 = arith.constant 1.000000e+00 : f32
    %244 = vector.broadcast %cst_109 : f32 to vector<8x128xf32>
    %245 = arith.addf %244, %243 : vector<8x128xf32>
    %246 = arith.divf %244, %245 : vector<8x128xf32>
    %247 = vector.extract_strided_slice %240 {offsets = [0, 128], sizes = [8, 128], strides = [1, 1]} : vector<8x512xf32> to vector<8x128xf32>
    %248 = arith.negf %247 : vector<8x128xf32>
    %249 = math.exp %248 : vector<8x128xf32>
    %cst_110 = arith.constant 1.000000e+00 : f32
    %250 = vector.broadcast %cst_110 : f32 to vector<8x128xf32>
    %251 = arith.addf %250, %249 : vector<8x128xf32>
    %252 = arith.divf %250, %251 : vector<8x128xf32>
    %253 = vector.extract_strided_slice %240 {offsets = [0, 256], sizes = [8, 128], strides = [1, 1]} : vector<8x512xf32> to vector<8x128xf32>
    %254 = math.tanh %253 : vector<8x128xf32>
    %255 = vector.extract_strided_slice %240 {offsets = [0, 384], sizes = [8, 128], strides = [1, 1]} : vector<8x512xf32> to vector<8x128xf32>
    %256 = arith.negf %255 : vector<8x128xf32>
    %257 = math.exp %256 : vector<8x128xf32>
    %cst_111 = arith.constant 1.000000e+00 : f32
    %258 = vector.broadcast %cst_111 : f32 to vector<8x128xf32>
    %259 = arith.addf %258, %257 : vector<8x128xf32>
    %260 = arith.divf %258, %259 : vector<8x128xf32>
    %c0_112 = arith.constant 0 : index
    %c0_113 = arith.constant 0 : index
    %261 = vector.load %arg23[%c0_112, %c0_113] : memref<8x128xf32, #tpu.memory_space<vmem>>, vector<8x128xf32>
    %262 = arith.mulf %252, %261 : vector<8x128xf32>
    %263 = arith.mulf %246, %254 : vector<8x128xf32>
    %264 = arith.addf %262, %263 : vector<8x128xf32>
    %265 = math.tanh %264 : vector<8x128xf32>
    %266 = arith.mulf %260, %265 : vector<8x128xf32>
    %c0_114 = arith.constant 0 : index
    %c0_115 = arith.constant 0 : index
    %267 = vector.load %arg23[%c0_114, %c0_115] : memref<8x128xf32, #tpu.memory_space<vmem>>, vector<8x128xf32>
    tpu.vector_store %arg23[%c0_114, %c0_115], %264 {strides = array<i32>} : memref<8x128xf32, #tpu.memory_space<vmem>>, vector<8x128xf32>,
    %c0_116 = arith.constant 0 : index
    %c0_117 = arith.constant 0 : index
    %268 = vector.load %arg22[%c0_116, %c0_117] : memref<8x128xf32, #tpu.memory_space<vmem>>, vector<8x128xf32>
    tpu.vector_store %arg22[%c0_116, %c0_117], %266 {strides = array<i32>} : memref<8x128xf32, #tpu.memory_space<vmem>>, vector<8x128xf32>,
    %269 = arith.index_cast %235 : i32 to index
    %c0_118 = arith.constant 0 : index
    %270 = vector.load %arg21[%269, %c0_118] : memref<64x128xf32, #tpu.memory_space<vmem>>, vector<8x128xf32>
    tpu.vector_store %arg21[%269, %c0_118], %266 {strides = array<i32>} : memref<64x128xf32, #tpu.memory_space<vmem>>, vector<8x128xf32>,
    %c7_i32 = arith.constant 7 : i32
    %c8_i32_119 = arith.constant 8 : i32
    %271 = arith.muli %c7_i32, %c8_i32_119 : i32
    %272 = tpu.assume_multiple %271, 8 : i32
    %273 = arith.index_cast %272 : i32 to index
    %c0_120 = arith.constant 0 : index
    %274 = vector.load %arg20[%273, %c0_120] : memref<64x512xf32, #tpu.memory_space<vmem>>, vector<8x512xf32>
    %c0_121 = arith.constant 0 : index
    %c0_122 = arith.constant 0 : index
    %275 = vector.load %arg22[%c0_121, %c0_122] : memref<8x128xf32, #tpu.memory_space<vmem>>, vector<8x128xf32>
    %cst_123 = arith.constant dense<0.000000e+00> : vector<8x512xf32>
    %276 = tpu.matmul %275, %11, %cst_123 {dimension_numbers = #tpu.dot_dimension_numbers<[1], [0], [0], [1], [0, 0, 1, 1], [], []>} : vector<8x128xf32>, vector<128x512xf32>, vector<8x512xf32> -> vector<8x512xf32>
    %277 = arith.addf %274, %276 : vector<8x512xf32>
    %278 = vector.extract_strided_slice %277 {offsets = [0, 0], sizes = [8, 128], strides = [1, 1]} : vector<8x512xf32> to vector<8x128xf32>
    %279 = arith.negf %278 : vector<8x128xf32>
    %280 = math.exp %279 : vector<8x128xf32>
    %cst_124 = arith.constant 1.000000e+00 : f32
    %281 = vector.broadcast %cst_124 : f32 to vector<8x128xf32>
    %282 = arith.addf %281, %280 : vector<8x128xf32>
    %283 = arith.divf %281, %282 : vector<8x128xf32>
    %284 = vector.extract_strided_slice %277 {offsets = [0, 128], sizes = [8, 128], strides = [1, 1]} : vector<8x512xf32> to vector<8x128xf32>
    %285 = arith.negf %284 : vector<8x128xf32>
    %286 = math.exp %285 : vector<8x128xf32>
    %cst_125 = arith.constant 1.000000e+00 : f32
    %287 = vector.broadcast %cst_125 : f32 to vector<8x128xf32>
    %288 = arith.addf %287, %286 : vector<8x128xf32>
    %289 = arith.divf %287, %288 : vector<8x128xf32>
    %290 = vector.extract_strided_slice %277 {offsets = [0, 256], sizes = [8, 128], strides = [1, 1]} : vector<8x512xf32> to vector<8x128xf32>
    %291 = math.tanh %290 : vector<8x128xf32>
    %292 = vector.extract_strided_slice %277 {offsets = [0, 384], sizes = [8, 128], strides = [1, 1]} : vector<8x512xf32> to vector<8x128xf32>
    %293 = arith.negf %292 : vector<8x128xf32>
    %294 = math.exp %293 : vector<8x128xf32>
    %cst_126 = arith.constant 1.000000e+00 : f32
    %295 = vector.broadcast %cst_126 : f32 to vector<8x128xf32>
    %296 = arith.addf %295, %294 : vector<8x128xf32>
    %297 = arith.divf %295, %296 : vector<8x128xf32>
    %c0_127 = arith.constant 0 : index
    %c0_128 = arith.constant 0 : index
    %298 = vector.load %arg23[%c0_127, %c0_128] : memref<8x128xf32, #tpu.memory_space<vmem>>, vector<8x128xf32>
    %299 = arith.mulf %289, %298 : vector<8x128xf32>
    %300 = arith.mulf %283, %291 : vector<8x128xf32>
    %301 = arith.addf %299, %300 : vector<8x128xf32>
    %302 = math.tanh %301 : vector<8x128xf32>
    %303 = arith.mulf %297, %302 : vector<8x128xf32>
    %c0_129 = arith.constant 0 : index
    %c0_130 = arith.constant 0 : index
    %304 = vector.load %arg23[%c0_129, %c0_130] : memref<8x128xf32, #tpu.memory_space<vmem>>, vector<8x128xf32>
    tpu.vector_store %arg23[%c0_129, %c0_130], %301 {strides = array<i32>} : memref<8x128xf32, #tpu.memory_space<vmem>>, vector<8x128xf32>,
    %c0_131 = arith.constant 0 : index
    %c0_132 = arith.constant 0 : index
    %305 = vector.load %arg22[%c0_131, %c0_132] : memref<8x128xf32, #tpu.memory_space<vmem>>, vector<8x128xf32>
    tpu.vector_store %arg22[%c0_131, %c0_132], %303 {strides = array<i32>} : memref<8x128xf32, #tpu.memory_space<vmem>>, vector<8x128xf32>,
    %306 = arith.index_cast %272 : i32 to index
    %c0_133 = arith.constant 0 : index
    %307 = vector.load %arg21[%306, %c0_133] : memref<64x128xf32, #tpu.memory_space<vmem>>, vector<8x128xf32>
    tpu.vector_store %arg21[%306, %c0_133], %303 {strides = array<i32>} : memref<64x128xf32, #tpu.memory_space<vmem>>, vector<8x128xf32>,
    %c8_i32_134 = arith.constant 8 : i32
    %c0_135 = arith.constant 0 : index
    %c0_136 = arith.constant 0 : index
    %308 = vector.load %arg21[%c0_135, %c0_136] : memref<64x128xf32, #tpu.memory_space<vmem>>, vector<64x128xf32>
    %c0_137 = arith.constant 0 : index
    %c0_138 = arith.constant 0 : index
    %309 = vector.load %arg4[%c0_137, %c0_138] : memref<128x512xf32, #tpu.memory_space<vmem>>, vector<128x512xf32>
    %cst_139 = arith.constant dense<0.000000e+00> : vector<64x512xf32>
    %310 = tpu.matmul %308, %309, %cst_139 {dimension_numbers = #tpu.dot_dimension_numbers<[1], [0], [0], [1], [0, 0, 1, 1], [], []>} : vector<64x128xf32>, vector<128x512xf32>, vector<64x512xf32> -> vector<64x512xf32>
    %c0_140 = arith.constant 0 : index
    %c0_141 = arith.constant 0 : index
    %311 = vector.load %arg6[%c0_140, %c0_141] : memref<1x512xf32, #tpu.memory_space<vmem>>, vector<1x512xf32>
    %312 = vector.broadcast %311 : vector<1x512xf32> to vector<64x512xf32>
    %313 = arith.addf %310, %312 : vector<64x512xf32>
    %c0_142 = arith.constant 0 : index
    %c0_143 = arith.constant 0 : index
    %314 = vector.load %arg20[%c0_142, %c0_143] : memref<64x512xf32, #tpu.memory_space<vmem>>, vector<64x512xf32>
    tpu.vector_store %arg20[%c0_142, %c0_143], %313 {strides = array<i32>} : memref<64x512xf32, #tpu.memory_space<vmem>>, vector<64x512xf32>,
    %cst_144 = arith.constant 0.000000e+00 : f32
    %315 = vector.broadcast %cst_144 : f32 to vector<8x128xf32>
    %c0_145 = arith.constant 0 : index
    %c0_146 = arith.constant 0 : index
    %316 = vector.load %arg22[%c0_145, %c0_146] : memref<8x128xf32, #tpu.memory_space<vmem>>, vector<8x128xf32>
    tpu.vector_store %arg22[%c0_145, %c0_146], %315 {strides = array<i32>} : memref<8x128xf32, #tpu.memory_space<vmem>>, vector<8x128xf32>,
    %cst_147 = arith.constant 0.000000e+00 : f32
    %317 = vector.broadcast %cst_147 : f32 to vector<8x128xf32>
    %c0_148 = arith.constant 0 : index
    %c0_149 = arith.constant 0 : index
    %318 = vector.load %arg23[%c0_148, %c0_149] : memref<8x128xf32, #tpu.memory_space<vmem>>, vector<8x128xf32>
    tpu.vector_store %arg23[%c0_148, %c0_149], %317 {strides = array<i32>} : memref<8x128xf32, #tpu.memory_space<vmem>>, vector<8x128xf32>,
    %c0_150 = arith.constant 0 : index
    %c0_151 = arith.constant 0 : index
    %319 = vector.load %arg5[%c0_150, %c0_151] : memref<128x512xf32, #tpu.memory_space<vmem>>, vector<128x512xf32>
    %c0_i32_152 = arith.constant 0 : i32
    %c8_i32_153 = arith.constant 8 : i32
    %320 = arith.muli %c0_i32_152, %c8_i32_153 : i32
    %321 = tpu.assume_multiple %320, 8 : i32
    %322 = arith.index_cast %321 : i32 to index
    %c0_154 = arith.constant 0 : index
    %323 = vector.load %arg20[%322, %c0_154] : memref<64x512xf32, #tpu.memory_space<vmem>>, vector<8x512xf32>
    %c0_155 = arith.constant 0 : index
    %c0_156 = arith.constant 0 : index
    %324 = vector.load %arg22[%c0_155, %c0_156] : memref<8x128xf32, #tpu.memory_space<vmem>>, vector<8x128xf32>
    %cst_157 = arith.constant dense<0.000000e+00> : vector<8x512xf32>
    %325 = tpu.matmul %324, %319, %cst_157 {dimension_numbers = #tpu.dot_dimension_numbers<[1], [0], [0], [1], [0, 0, 1, 1], [], []>} : vector<8x128xf32>, vector<128x512xf32>, vector<8x512xf32> -> vector<8x512xf32>
    %326 = arith.addf %323, %325 : vector<8x512xf32>
    %327 = vector.extract_strided_slice %326 {offsets = [0, 0], sizes = [8, 128], strides = [1, 1]} : vector<8x512xf32> to vector<8x128xf32>
    %328 = arith.negf %327 : vector<8x128xf32>
    %329 = math.exp %328 : vector<8x128xf32>
    %cst_158 = arith.constant 1.000000e+00 : f32
    %330 = vector.broadcast %cst_158 : f32 to vector<8x128xf32>
    %331 = arith.addf %330, %329 : vector<8x128xf32>
    %332 = arith.divf %330, %331 : vector<8x128xf32>
    %333 = vector.extract_strided_slice %326 {offsets = [0, 128], sizes = [8, 128], strides = [1, 1]} : vector<8x512xf32> to vector<8x128xf32>
    %334 = arith.negf %333 : vector<8x128xf32>
    %335 = math.exp %334 : vector<8x128xf32>
    %cst_159 = arith.constant 1.000000e+00 : f32
    %336 = vector.broadcast %cst_159 : f32 to vector<8x128xf32>
    %337 = arith.addf %336, %335 : vector<8x128xf32>
    %338 = arith.divf %336, %337 : vector<8x128xf32>
    %339 = vector.extract_strided_slice %326 {offsets = [0, 256], sizes = [8, 128], strides = [1, 1]} : vector<8x512xf32> to vector<8x128xf32>
    %340 = math.tanh %339 : vector<8x128xf32>
    %341 = vector.extract_strided_slice %326 {offsets = [0, 384], sizes = [8, 128], strides = [1, 1]} : vector<8x512xf32> to vector<8x128xf32>
    %342 = arith.negf %341 : vector<8x128xf32>
    %343 = math.exp %342 : vector<8x128xf32>
    %cst_160 = arith.constant 1.000000e+00 : f32
    %344 = vector.broadcast %cst_160 : f32 to vector<8x128xf32>
    %345 = arith.addf %344, %343 : vector<8x128xf32>
    %346 = arith.divf %344, %345 : vector<8x128xf32>
    %c0_161 = arith.constant 0 : index
    %c0_162 = arith.constant 0 : index
    %347 = vector.load %arg23[%c0_161, %c0_162] : memref<8x128xf32, #tpu.memory_space<vmem>>, vector<8x128xf32>
    %348 = arith.mulf %338, %347 : vector<8x128xf32>
    %349 = arith.mulf %332, %340 : vector<8x128xf32>
    %350 = arith.addf %348, %349 : vector<8x128xf32>
    %351 = math.tanh %350 : vector<8x128xf32>
    %352 = arith.mulf %346, %351 : vector<8x128xf32>
    %c0_163 = arith.constant 0 : index
    %c0_164 = arith.constant 0 : index
    %353 = vector.load %arg23[%c0_163, %c0_164] : memref<8x128xf32, #tpu.memory_space<vmem>>, vector<8x128xf32>
    tpu.vector_store %arg23[%c0_163, %c0_164], %350 {strides = array<i32>} : memref<8x128xf32, #tpu.memory_space<vmem>>, vector<8x128xf32>,
    %c0_165 = arith.constant 0 : index
    %c0_166 = arith.constant 0 : index
    %354 = vector.load %arg22[%c0_165, %c0_166] : memref<8x128xf32, #tpu.memory_space<vmem>>, vector<8x128xf32>
    tpu.vector_store %arg22[%c0_165, %c0_166], %352 {strides = array<i32>} : memref<8x128xf32, #tpu.memory_space<vmem>>, vector<8x128xf32>,
    %355 = arith.index_cast %321 : i32 to index
    %c0_167 = arith.constant 0 : index
    %356 = vector.load %arg21[%355, %c0_167] : memref<64x128xf32, #tpu.memory_space<vmem>>, vector<8x128xf32>
    tpu.vector_store %arg21[%355, %c0_167], %352 {strides = array<i32>} : memref<64x128xf32, #tpu.memory_space<vmem>>, vector<8x128xf32>,
    %c1_i32_168 = arith.constant 1 : i32
    %c8_i32_169 = arith.constant 8 : i32
    %357 = arith.muli %c1_i32_168, %c8_i32_169 : i32
    %358 = tpu.assume_multiple %357, 8 : i32
    %359 = arith.index_cast %358 : i32 to index
    %c0_170 = arith.constant 0 : index
    %360 = vector.load %arg20[%359, %c0_170] : memref<64x512xf32, #tpu.memory_space<vmem>>, vector<8x512xf32>
    %c0_171 = arith.constant 0 : index
    %c0_172 = arith.constant 0 : index
    %361 = vector.load %arg22[%c0_171, %c0_172] : memref<8x128xf32, #tpu.memory_space<vmem>>, vector<8x128xf32>
    %cst_173 = arith.constant dense<0.000000e+00> : vector<8x512xf32>
    %362 = tpu.matmul %361, %319, %cst_173 {dimension_numbers = #tpu.dot_dimension_numbers<[1], [0], [0], [1], [0, 0, 1, 1], [], []>} : vector<8x128xf32>, vector<128x512xf32>, vector<8x512xf32> -> vector<8x512xf32>
    %363 = arith.addf %360, %362 : vector<8x512xf32>
    %364 = vector.extract_strided_slice %363 {offsets = [0, 0], sizes = [8, 128], strides = [1, 1]} : vector<8x512xf32> to vector<8x128xf32>
    %365 = arith.negf %364 : vector<8x128xf32>
    %366 = math.exp %365 : vector<8x128xf32>
    %cst_174 = arith.constant 1.000000e+00 : f32
    %367 = vector.broadcast %cst_174 : f32 to vector<8x128xf32>
    %368 = arith.addf %367, %366 : vector<8x128xf32>
    %369 = arith.divf %367, %368 : vector<8x128xf32>
    %370 = vector.extract_strided_slice %363 {offsets = [0, 128], sizes = [8, 128], strides = [1, 1]} : vector<8x512xf32> to vector<8x128xf32>
    %371 = arith.negf %370 : vector<8x128xf32>
    %372 = math.exp %371 : vector<8x128xf32>
    %cst_175 = arith.constant 1.000000e+00 : f32
    %373 = vector.broadcast %cst_175 : f32 to vector<8x128xf32>
    %374 = arith.addf %373, %372 : vector<8x128xf32>
    %375 = arith.divf %373, %374 : vector<8x128xf32>
    %376 = vector.extract_strided_slice %363 {offsets = [0, 256], sizes = [8, 128], strides = [1, 1]} : vector<8x512xf32> to vector<8x128xf32>
    %377 = math.tanh %376 : vector<8x128xf32>
    %378 = vector.extract_strided_slice %363 {offsets = [0, 384], sizes = [8, 128], strides = [1, 1]} : vector<8x512xf32> to vector<8x128xf32>
    %379 = arith.negf %378 : vector<8x128xf32>
    %380 = math.exp %379 : vector<8x128xf32>
    %cst_176 = arith.constant 1.000000e+00 : f32
    %381 = vector.broadcast %cst_176 : f32 to vector<8x128xf32>
    %382 = arith.addf %381, %380 : vector<8x128xf32>
    %383 = arith.divf %381, %382 : vector<8x128xf32>
    %c0_177 = arith.constant 0 : index
    %c0_178 = arith.constant 0 : index
    %384 = vector.load %arg23[%c0_177, %c0_178] : memref<8x128xf32, #tpu.memory_space<vmem>>, vector<8x128xf32>
    %385 = arith.mulf %375, %384 : vector<8x128xf32>
    %386 = arith.mulf %369, %377 : vector<8x128xf32>
    %387 = arith.addf %385, %386 : vector<8x128xf32>
    %388 = math.tanh %387 : vector<8x128xf32>
    %389 = arith.mulf %383, %388 : vector<8x128xf32>
    %c0_179 = arith.constant 0 : index
    %c0_180 = arith.constant 0 : index
    %390 = vector.load %arg23[%c0_179, %c0_180] : memref<8x128xf32, #tpu.memory_space<vmem>>, vector<8x128xf32>
    tpu.vector_store %arg23[%c0_179, %c0_180], %387 {strides = array<i32>} : memref<8x128xf32, #tpu.memory_space<vmem>>, vector<8x128xf32>,
    %c0_181 = arith.constant 0 : index
    %c0_182 = arith.constant 0 : index
    %391 = vector.load %arg22[%c0_181, %c0_182] : memref<8x128xf32, #tpu.memory_space<vmem>>, vector<8x128xf32>
    tpu.vector_store %arg22[%c0_181, %c0_182], %389 {strides = array<i32>} : memref<8x128xf32, #tpu.memory_space<vmem>>, vector<8x128xf32>,
    %392 = arith.index_cast %358 : i32 to index
    %c0_183 = arith.constant 0 : index
    %393 = vector.load %arg21[%392, %c0_183] : memref<64x128xf32, #tpu.memory_space<vmem>>, vector<8x128xf32>
    tpu.vector_store %arg21[%392, %c0_183], %389 {strides = array<i32>} : memref<64x128xf32, #tpu.memory_space<vmem>>, vector<8x128xf32>,
    %c2_i32_184 = arith.constant 2 : i32
    %c8_i32_185 = arith.constant 8 : i32
    %394 = arith.muli %c2_i32_184, %c8_i32_185 : i32
    %395 = tpu.assume_multiple %394, 8 : i32
    %396 = arith.index_cast %395 : i32 to index
    %c0_186 = arith.constant 0 : index
    %397 = vector.load %arg20[%396, %c0_186] : memref<64x512xf32, #tpu.memory_space<vmem>>, vector<8x512xf32>
    %c0_187 = arith.constant 0 : index
    %c0_188 = arith.constant 0 : index
    %398 = vector.load %arg22[%c0_187, %c0_188] : memref<8x128xf32, #tpu.memory_space<vmem>>, vector<8x128xf32>
    %cst_189 = arith.constant dense<0.000000e+00> : vector<8x512xf32>
    %399 = tpu.matmul %398, %319, %cst_189 {dimension_numbers = #tpu.dot_dimension_numbers<[1], [0], [0], [1], [0, 0, 1, 1], [], []>} : vector<8x128xf32>, vector<128x512xf32>, vector<8x512xf32> -> vector<8x512xf32>
    %400 = arith.addf %397, %399 : vector<8x512xf32>
    %401 = vector.extract_strided_slice %400 {offsets = [0, 0], sizes = [8, 128], strides = [1, 1]} : vector<8x512xf32> to vector<8x128xf32>
    %402 = arith.negf %401 : vector<8x128xf32>
    %403 = math.exp %402 : vector<8x128xf32>
    %cst_190 = arith.constant 1.000000e+00 : f32
    %404 = vector.broadcast %cst_190 : f32 to vector<8x128xf32>
    %405 = arith.addf %404, %403 : vector<8x128xf32>
    %406 = arith.divf %404, %405 : vector<8x128xf32>
    %407 = vector.extract_strided_slice %400 {offsets = [0, 128], sizes = [8, 128], strides = [1, 1]} : vector<8x512xf32> to vector<8x128xf32>
    %408 = arith.negf %407 : vector<8x128xf32>
    %409 = math.exp %408 : vector<8x128xf32>
    %cst_191 = arith.constant 1.000000e+00 : f32
    %410 = vector.broadcast %cst_191 : f32 to vector<8x128xf32>
    %411 = arith.addf %410, %409 : vector<8x128xf32>
    %412 = arith.divf %410, %411 : vector<8x128xf32>
    %413 = vector.extract_strided_slice %400 {offsets = [0, 256], sizes = [8, 128], strides = [1, 1]} : vector<8x512xf32> to vector<8x128xf32>
    %414 = math.tanh %413 : vector<8x128xf32>
    %415 = vector.extract_strided_slice %400 {offsets = [0, 384], sizes = [8, 128], strides = [1, 1]} : vector<8x512xf32> to vector<8x128xf32>
    %416 = arith.negf %415 : vector<8x128xf32>
    %417 = math.exp %416 : vector<8x128xf32>
    %cst_192 = arith.constant 1.000000e+00 : f32
    %418 = vector.broadcast %cst_192 : f32 to vector<8x128xf32>
    %419 = arith.addf %418, %417 : vector<8x128xf32>
    %420 = arith.divf %418, %419 : vector<8x128xf32>
    %c0_193 = arith.constant 0 : index
    %c0_194 = arith.constant 0 : index
    %421 = vector.load %arg23[%c0_193, %c0_194] : memref<8x128xf32, #tpu.memory_space<vmem>>, vector<8x128xf32>
    %422 = arith.mulf %412, %421 : vector<8x128xf32>
    %423 = arith.mulf %406, %414 : vector<8x128xf32>
    %424 = arith.addf %422, %423 : vector<8x128xf32>
    %425 = math.tanh %424 : vector<8x128xf32>
    %426 = arith.mulf %420, %425 : vector<8x128xf32>
    %c0_195 = arith.constant 0 : index
    %c0_196 = arith.constant 0 : index
    %427 = vector.load %arg23[%c0_195, %c0_196] : memref<8x128xf32, #tpu.memory_space<vmem>>, vector<8x128xf32>
    tpu.vector_store %arg23[%c0_195, %c0_196], %424 {strides = array<i32>} : memref<8x128xf32, #tpu.memory_space<vmem>>, vector<8x128xf32>,
    %c0_197 = arith.constant 0 : index
    %c0_198 = arith.constant 0 : index
    %428 = vector.load %arg22[%c0_197, %c0_198] : memref<8x128xf32, #tpu.memory_space<vmem>>, vector<8x128xf32>
    tpu.vector_store %arg22[%c0_197, %c0_198], %426 {strides = array<i32>} : memref<8x128xf32, #tpu.memory_space<vmem>>, vector<8x128xf32>,
    %429 = arith.index_cast %395 : i32 to index
    %c0_199 = arith.constant 0 : index
    %430 = vector.load %arg21[%429, %c0_199] : memref<64x128xf32, #tpu.memory_space<vmem>>, vector<8x128xf32>
    tpu.vector_store %arg21[%429, %c0_199], %426 {strides = array<i32>} : memref<64x128xf32, #tpu.memory_space<vmem>>, vector<8x128xf32>,
    %c3_i32_200 = arith.constant 3 : i32
    %c8_i32_201 = arith.constant 8 : i32
    %431 = arith.muli %c3_i32_200, %c8_i32_201 : i32
    %432 = tpu.assume_multiple %431, 8 : i32
    %433 = arith.index_cast %432 : i32 to index
    %c0_202 = arith.constant 0 : index
    %434 = vector.load %arg20[%433, %c0_202] : memref<64x512xf32, #tpu.memory_space<vmem>>, vector<8x512xf32>
    %c0_203 = arith.constant 0 : index
    %c0_204 = arith.constant 0 : index
    %435 = vector.load %arg22[%c0_203, %c0_204] : memref<8x128xf32, #tpu.memory_space<vmem>>, vector<8x128xf32>
    %cst_205 = arith.constant dense<0.000000e+00> : vector<8x512xf32>
    %436 = tpu.matmul %435, %319, %cst_205 {dimension_numbers = #tpu.dot_dimension_numbers<[1], [0], [0], [1], [0, 0, 1, 1], [], []>} : vector<8x128xf32>, vector<128x512xf32>, vector<8x512xf32> -> vector<8x512xf32>
    %437 = arith.addf %434, %436 : vector<8x512xf32>
    %438 = vector.extract_strided_slice %437 {offsets = [0, 0], sizes = [8, 128], strides = [1, 1]} : vector<8x512xf32> to vector<8x128xf32>
    %439 = arith.negf %438 : vector<8x128xf32>
    %440 = math.exp %439 : vector<8x128xf32>
    %cst_206 = arith.constant 1.000000e+00 : f32
    %441 = vector.broadcast %cst_206 : f32 to vector<8x128xf32>
    %442 = arith.addf %441, %440 : vector<8x128xf32>
    %443 = arith.divf %441, %442 : vector<8x128xf32>
    %444 = vector.extract_strided_slice %437 {offsets = [0, 128], sizes = [8, 128], strides = [1, 1]} : vector<8x512xf32> to vector<8x128xf32>
    %445 = arith.negf %444 : vector<8x128xf32>
    %446 = math.exp %445 : vector<8x128xf32>
    %cst_207 = arith.constant 1.000000e+00 : f32
    %447 = vector.broadcast %cst_207 : f32 to vector<8x128xf32>
    %448 = arith.addf %447, %446 : vector<8x128xf32>
    %449 = arith.divf %447, %448 : vector<8x128xf32>
    %450 = vector.extract_strided_slice %437 {offsets = [0, 256], sizes = [8, 128], strides = [1, 1]} : vector<8x512xf32> to vector<8x128xf32>
    %451 = math.tanh %450 : vector<8x128xf32>
    %452 = vector.extract_strided_slice %437 {offsets = [0, 384], sizes = [8, 128], strides = [1, 1]} : vector<8x512xf32> to vector<8x128xf32>
    %453 = arith.negf %452 : vector<8x128xf32>
    %454 = math.exp %453 : vector<8x128xf32>
    %cst_208 = arith.constant 1.000000e+00 : f32
    %455 = vector.broadcast %cst_208 : f32 to vector<8x128xf32>
    %456 = arith.addf %455, %454 : vector<8x128xf32>
    %457 = arith.divf %455, %456 : vector<8x128xf32>
    %c0_209 = arith.constant 0 : index
    %c0_210 = arith.constant 0 : index
    %458 = vector.load %arg23[%c0_209, %c0_210] : memref<8x128xf32, #tpu.memory_space<vmem>>, vector<8x128xf32>
    %459 = arith.mulf %449, %458 : vector<8x128xf32>
    %460 = arith.mulf %443, %451 : vector<8x128xf32>
    %461 = arith.addf %459, %460 : vector<8x128xf32>
    %462 = math.tanh %461 : vector<8x128xf32>
    %463 = arith.mulf %457, %462 : vector<8x128xf32>
    %c0_211 = arith.constant 0 : index
    %c0_212 = arith.constant 0 : index
    %464 = vector.load %arg23[%c0_211, %c0_212] : memref<8x128xf32, #tpu.memory_space<vmem>>, vector<8x128xf32>
    tpu.vector_store %arg23[%c0_211, %c0_212], %461 {strides = array<i32>} : memref<8x128xf32, #tpu.memory_space<vmem>>, vector<8x128xf32>,
    %c0_213 = arith.constant 0 : index
    %c0_214 = arith.constant 0 : index
    %465 = vector.load %arg22[%c0_213, %c0_214] : memref<8x128xf32, #tpu.memory_space<vmem>>, vector<8x128xf32>
    tpu.vector_store %arg22[%c0_213, %c0_214], %463 {strides = array<i32>} : memref<8x128xf32, #tpu.memory_space<vmem>>, vector<8x128xf32>,
    %466 = arith.index_cast %432 : i32 to index
    %c0_215 = arith.constant 0 : index
    %467 = vector.load %arg21[%466, %c0_215] : memref<64x128xf32, #tpu.memory_space<vmem>>, vector<8x128xf32>
    tpu.vector_store %arg21[%466, %c0_215], %463 {strides = array<i32>} : memref<64x128xf32, #tpu.memory_space<vmem>>, vector<8x128xf32>,
    %c4_i32_216 = arith.constant 4 : i32
    %c8_i32_217 = arith.constant 8 : i32
    %468 = arith.muli %c4_i32_216, %c8_i32_217 : i32
    %469 = tpu.assume_multiple %468, 8 : i32
    %470 = arith.index_cast %469 : i32 to index
    %c0_218 = arith.constant 0 : index
    %471 = vector.load %arg20[%470, %c0_218] : memref<64x512xf32, #tpu.memory_space<vmem>>, vector<8x512xf32>
    %c0_219 = arith.constant 0 : index
    %c0_220 = arith.constant 0 : index
    %472 = vector.load %arg22[%c0_219, %c0_220] : memref<8x128xf32, #tpu.memory_space<vmem>>, vector<8x128xf32>
    %cst_221 = arith.constant dense<0.000000e+00> : vector<8x512xf32>
    %473 = tpu.matmul %472, %319, %cst_221 {dimension_numbers = #tpu.dot_dimension_numbers<[1], [0], [0], [1], [0, 0, 1, 1], [], []>} : vector<8x128xf32>, vector<128x512xf32>, vector<8x512xf32> -> vector<8x512xf32>
    %474 = arith.addf %471, %473 : vector<8x512xf32>
    %475 = vector.extract_strided_slice %474 {offsets = [0, 0], sizes = [8, 128], strides = [1, 1]} : vector<8x512xf32> to vector<8x128xf32>
    %476 = arith.negf %475 : vector<8x128xf32>
    %477 = math.exp %476 : vector<8x128xf32>
    %cst_222 = arith.constant 1.000000e+00 : f32
    %478 = vector.broadcast %cst_222 : f32 to vector<8x128xf32>
    %479 = arith.addf %478, %477 : vector<8x128xf32>
    %480 = arith.divf %478, %479 : vector<8x128xf32>
    %481 = vector.extract_strided_slice %474 {offsets = [0, 128], sizes = [8, 128], strides = [1, 1]} : vector<8x512xf32> to vector<8x128xf32>
    %482 = arith.negf %481 : vector<8x128xf32>
    %483 = math.exp %482 : vector<8x128xf32>
    %cst_223 = arith.constant 1.000000e+00 : f32
    %484 = vector.broadcast %cst_223 : f32 to vector<8x128xf32>
    %485 = arith.addf %484, %483 : vector<8x128xf32>
    %486 = arith.divf %484, %485 : vector<8x128xf32>
    %487 = vector.extract_strided_slice %474 {offsets = [0, 256], sizes = [8, 128], strides = [1, 1]} : vector<8x512xf32> to vector<8x128xf32>
    %488 = math.tanh %487 : vector<8x128xf32>
    %489 = vector.extract_strided_slice %474 {offsets = [0, 384], sizes = [8, 128], strides = [1, 1]} : vector<8x512xf32> to vector<8x128xf32>
    %490 = arith.negf %489 : vector<8x128xf32>
    %491 = math.exp %490 : vector<8x128xf32>
    %cst_224 = arith.constant 1.000000e+00 : f32
    %492 = vector.broadcast %cst_224 : f32 to vector<8x128xf32>
    %493 = arith.addf %492, %491 : vector<8x128xf32>
    %494 = arith.divf %492, %493 : vector<8x128xf32>
    %c0_225 = arith.constant 0 : index
    %c0_226 = arith.constant 0 : index
    %495 = vector.load %arg23[%c0_225, %c0_226] : memref<8x128xf32, #tpu.memory_space<vmem>>, vector<8x128xf32>
    %496 = arith.mulf %486, %495 : vector<8x128xf32>
    %497 = arith.mulf %480, %488 : vector<8x128xf32>
    %498 = arith.addf %496, %497 : vector<8x128xf32>
    %499 = math.tanh %498 : vector<8x128xf32>
    %500 = arith.mulf %494, %499 : vector<8x128xf32>
    %c0_227 = arith.constant 0 : index
    %c0_228 = arith.constant 0 : index
    %501 = vector.load %arg23[%c0_227, %c0_228] : memref<8x128xf32, #tpu.memory_space<vmem>>, vector<8x128xf32>
    tpu.vector_store %arg23[%c0_227, %c0_228], %498 {strides = array<i32>} : memref<8x128xf32, #tpu.memory_space<vmem>>, vector<8x128xf32>,
    %c0_229 = arith.constant 0 : index
    %c0_230 = arith.constant 0 : index
    %502 = vector.load %arg22[%c0_229, %c0_230] : memref<8x128xf32, #tpu.memory_space<vmem>>, vector<8x128xf32>
    tpu.vector_store %arg22[%c0_229, %c0_230], %500 {strides = array<i32>} : memref<8x128xf32, #tpu.memory_space<vmem>>, vector<8x128xf32>,
    %503 = arith.index_cast %469 : i32 to index
    %c0_231 = arith.constant 0 : index
    %504 = vector.load %arg21[%503, %c0_231] : memref<64x128xf32, #tpu.memory_space<vmem>>, vector<8x128xf32>
    tpu.vector_store %arg21[%503, %c0_231], %500 {strides = array<i32>} : memref<64x128xf32, #tpu.memory_space<vmem>>, vector<8x128xf32>,
    %c5_i32_232 = arith.constant 5 : i32
    %c8_i32_233 = arith.constant 8 : i32
    %505 = arith.muli %c5_i32_232, %c8_i32_233 : i32
    %506 = tpu.assume_multiple %505, 8 : i32
    %507 = arith.index_cast %506 : i32 to index
    %c0_234 = arith.constant 0 : index
    %508 = vector.load %arg20[%507, %c0_234] : memref<64x512xf32, #tpu.memory_space<vmem>>, vector<8x512xf32>
    %c0_235 = arith.constant 0 : index
    %c0_236 = arith.constant 0 : index
    %509 = vector.load %arg22[%c0_235, %c0_236] : memref<8x128xf32, #tpu.memory_space<vmem>>, vector<8x128xf32>
    %cst_237 = arith.constant dense<0.000000e+00> : vector<8x512xf32>
    %510 = tpu.matmul %509, %319, %cst_237 {dimension_numbers = #tpu.dot_dimension_numbers<[1], [0], [0], [1], [0, 0, 1, 1], [], []>} : vector<8x128xf32>, vector<128x512xf32>, vector<8x512xf32> -> vector<8x512xf32>
    %511 = arith.addf %508, %510 : vector<8x512xf32>
    %512 = vector.extract_strided_slice %511 {offsets = [0, 0], sizes = [8, 128], strides = [1, 1]} : vector<8x512xf32> to vector<8x128xf32>
    %513 = arith.negf %512 : vector<8x128xf32>
    %514 = math.exp %513 : vector<8x128xf32>
    %cst_238 = arith.constant 1.000000e+00 : f32
    %515 = vector.broadcast %cst_238 : f32 to vector<8x128xf32>
    %516 = arith.addf %515, %514 : vector<8x128xf32>
    %517 = arith.divf %515, %516 : vector<8x128xf32>
    %518 = vector.extract_strided_slice %511 {offsets = [0, 128], sizes = [8, 128], strides = [1, 1]} : vector<8x512xf32> to vector<8x128xf32>
    %519 = arith.negf %518 : vector<8x128xf32>
    %520 = math.exp %519 : vector<8x128xf32>
    %cst_239 = arith.constant 1.000000e+00 : f32
    %521 = vector.broadcast %cst_239 : f32 to vector<8x128xf32>
    %522 = arith.addf %521, %520 : vector<8x128xf32>
    %523 = arith.divf %521, %522 : vector<8x128xf32>
    %524 = vector.extract_strided_slice %511 {offsets = [0, 256], sizes = [8, 128], strides = [1, 1]} : vector<8x512xf32> to vector<8x128xf32>
    %525 = math.tanh %524 : vector<8x128xf32>
    %526 = vector.extract_strided_slice %511 {offsets = [0, 384], sizes = [8, 128], strides = [1, 1]} : vector<8x512xf32> to vector<8x128xf32>
    %527 = arith.negf %526 : vector<8x128xf32>
    %528 = math.exp %527 : vector<8x128xf32>
    %cst_240 = arith.constant 1.000000e+00 : f32
    %529 = vector.broadcast %cst_240 : f32 to vector<8x128xf32>
    %530 = arith.addf %529, %528 : vector<8x128xf32>
    %531 = arith.divf %529, %530 : vector<8x128xf32>
    %c0_241 = arith.constant 0 : index
    %c0_242 = arith.constant 0 : index
    %532 = vector.load %arg23[%c0_241, %c0_242] : memref<8x128xf32, #tpu.memory_space<vmem>>, vector<8x128xf32>
    %533 = arith.mulf %523, %532 : vector<8x128xf32>
    %534 = arith.mulf %517, %525 : vector<8x128xf32>
    %535 = arith.addf %533, %534 : vector<8x128xf32>
    %536 = math.tanh %535 : vector<8x128xf32>
    %537 = arith.mulf %531, %536 : vector<8x128xf32>
    %c0_243 = arith.constant 0 : index
    %c0_244 = arith.constant 0 : index
    %538 = vector.load %arg23[%c0_243, %c0_244] : memref<8x128xf32, #tpu.memory_space<vmem>>, vector<8x128xf32>
    tpu.vector_store %arg23[%c0_243, %c0_244], %535 {strides = array<i32>} : memref<8x128xf32, #tpu.memory_space<vmem>>, vector<8x128xf32>,
    %c0_245 = arith.constant 0 : index
    %c0_246 = arith.constant 0 : index
    %539 = vector.load %arg22[%c0_245, %c0_246] : memref<8x128xf32, #tpu.memory_space<vmem>>, vector<8x128xf32>
    tpu.vector_store %arg22[%c0_245, %c0_246], %537 {strides = array<i32>} : memref<8x128xf32, #tpu.memory_space<vmem>>, vector<8x128xf32>,
    %540 = arith.index_cast %506 : i32 to index
    %c0_247 = arith.constant 0 : index
    %541 = vector.load %arg21[%540, %c0_247] : memref<64x128xf32, #tpu.memory_space<vmem>>, vector<8x128xf32>
    tpu.vector_store %arg21[%540, %c0_247], %537 {strides = array<i32>} : memref<64x128xf32, #tpu.memory_space<vmem>>, vector<8x128xf32>,
    %c6_i32_248 = arith.constant 6 : i32
    %c8_i32_249 = arith.constant 8 : i32
    %542 = arith.muli %c6_i32_248, %c8_i32_249 : i32
    %543 = tpu.assume_multiple %542, 8 : i32
    %544 = arith.index_cast %543 : i32 to index
    %c0_250 = arith.constant 0 : index
    %545 = vector.load %arg20[%544, %c0_250] : memref<64x512xf32, #tpu.memory_space<vmem>>, vector<8x512xf32>
    %c0_251 = arith.constant 0 : index
    %c0_252 = arith.constant 0 : index
    %546 = vector.load %arg22[%c0_251, %c0_252] : memref<8x128xf32, #tpu.memory_space<vmem>>, vector<8x128xf32>
    %cst_253 = arith.constant dense<0.000000e+00> : vector<8x512xf32>
    %547 = tpu.matmul %546, %319, %cst_253 {dimension_numbers = #tpu.dot_dimension_numbers<[1], [0], [0], [1], [0, 0, 1, 1], [], []>} : vector<8x128xf32>, vector<128x512xf32>, vector<8x512xf32> -> vector<8x512xf32>
    %548 = arith.addf %545, %547 : vector<8x512xf32>
    %549 = vector.extract_strided_slice %548 {offsets = [0, 0], sizes = [8, 128], strides = [1, 1]} : vector<8x512xf32> to vector<8x128xf32>
    %550 = arith.negf %549 : vector<8x128xf32>
    %551 = math.exp %550 : vector<8x128xf32>
    %cst_254 = arith.constant 1.000000e+00 : f32
    %552 = vector.broadcast %cst_254 : f32 to vector<8x128xf32>
    %553 = arith.addf %552, %551 : vector<8x128xf32>
    %554 = arith.divf %552, %553 : vector<8x128xf32>
    %555 = vector.extract_strided_slice %548 {offsets = [0, 128], sizes = [8, 128], strides = [1, 1]} : vector<8x512xf32> to vector<8x128xf32>
    %556 = arith.negf %555 : vector<8x128xf32>
    %557 = math.exp %556 : vector<8x128xf32>
    %cst_255 = arith.constant 1.000000e+00 : f32
    %558 = vector.broadcast %cst_255 : f32 to vector<8x128xf32>
    %559 = arith.addf %558, %557 : vector<8x128xf32>
    %560 = arith.divf %558, %559 : vector<8x128xf32>
    %561 = vector.extract_strided_slice %548 {offsets = [0, 256], sizes = [8, 128], strides = [1, 1]} : vector<8x512xf32> to vector<8x128xf32>
    %562 = math.tanh %561 : vector<8x128xf32>
    %563 = vector.extract_strided_slice %548 {offsets = [0, 384], sizes = [8, 128], strides = [1, 1]} : vector<8x512xf32> to vector<8x128xf32>
    %564 = arith.negf %563 : vector<8x128xf32>
    %565 = math.exp %564 : vector<8x128xf32>
    %cst_256 = arith.constant 1.000000e+00 : f32
    %566 = vector.broadcast %cst_256 : f32 to vector<8x128xf32>
    %567 = arith.addf %566, %565 : vector<8x128xf32>
    %568 = arith.divf %566, %567 : vector<8x128xf32>
    %c0_257 = arith.constant 0 : index
    %c0_258 = arith.constant 0 : index
    %569 = vector.load %arg23[%c0_257, %c0_258] : memref<8x128xf32, #tpu.memory_space<vmem>>, vector<8x128xf32>
    %570 = arith.mulf %560, %569 : vector<8x128xf32>
    %571 = arith.mulf %554, %562 : vector<8x128xf32>
    %572 = arith.addf %570, %571 : vector<8x128xf32>
    %573 = math.tanh %572 : vector<8x128xf32>
    %574 = arith.mulf %568, %573 : vector<8x128xf32>
    %c0_259 = arith.constant 0 : index
    %c0_260 = arith.constant 0 : index
    %575 = vector.load %arg23[%c0_259, %c0_260] : memref<8x128xf32, #tpu.memory_space<vmem>>, vector<8x128xf32>
    tpu.vector_store %arg23[%c0_259, %c0_260], %572 {strides = array<i32>} : memref<8x128xf32, #tpu.memory_space<vmem>>, vector<8x128xf32>,
    %c0_261 = arith.constant 0 : index
    %c0_262 = arith.constant 0 : index
    %576 = vector.load %arg22[%c0_261, %c0_262] : memref<8x128xf32, #tpu.memory_space<vmem>>, vector<8x128xf32>
    tpu.vector_store %arg22[%c0_261, %c0_262], %574 {strides = array<i32>} : memref<8x128xf32, #tpu.memory_space<vmem>>, vector<8x128xf32>,
    %577 = arith.index_cast %543 : i32 to index
    %c0_263 = arith.constant 0 : index
    %578 = vector.load %arg21[%577, %c0_263] : memref<64x128xf32, #tpu.memory_space<vmem>>, vector<8x128xf32>
    tpu.vector_store %arg21[%577, %c0_263], %574 {strides = array<i32>} : memref<64x128xf32, #tpu.memory_space<vmem>>, vector<8x128xf32>,
    %c7_i32_264 = arith.constant 7 : i32
    %c8_i32_265 = arith.constant 8 : i32
    %579 = arith.muli %c7_i32_264, %c8_i32_265 : i32
    %580 = tpu.assume_multiple %579, 8 : i32
    %581 = arith.index_cast %580 : i32 to index
    %c0_266 = arith.constant 0 : index
    %582 = vector.load %arg20[%581, %c0_266] : memref<64x512xf32, #tpu.memory_space<vmem>>, vector<8x512xf32>
    %c0_267 = arith.constant 0 : index
    %c0_268 = arith.constant 0 : index
    %583 = vector.load %arg22[%c0_267, %c0_268] : memref<8x128xf32, #tpu.memory_space<vmem>>, vector<8x128xf32>
    %cst_269 = arith.constant dense<0.000000e+00> : vector<8x512xf32>
    %584 = tpu.matmul %583, %319, %cst_269 {dimension_numbers = #tpu.dot_dimension_numbers<[1], [0], [0], [1], [0, 0, 1, 1], [], []>} : vector<8x128xf32>, vector<128x512xf32>, vector<8x512xf32> -> vector<8x512xf32>
    %585 = arith.addf %582, %584 : vector<8x512xf32>
    %586 = vector.extract_strided_slice %585 {offsets = [0, 0], sizes = [8, 128], strides = [1, 1]} : vector<8x512xf32> to vector<8x128xf32>
    %587 = arith.negf %586 : vector<8x128xf32>
    %588 = math.exp %587 : vector<8x128xf32>
    %cst_270 = arith.constant 1.000000e+00 : f32
    %589 = vector.broadcast %cst_270 : f32 to vector<8x128xf32>
    %590 = arith.addf %589, %588 : vector<8x128xf32>
    %591 = arith.divf %589, %590 : vector<8x128xf32>
    %592 = vector.extract_strided_slice %585 {offsets = [0, 128], sizes = [8, 128], strides = [1, 1]} : vector<8x512xf32> to vector<8x128xf32>
    %593 = arith.negf %592 : vector<8x128xf32>
    %594 = math.exp %593 : vector<8x128xf32>
    %cst_271 = arith.constant 1.000000e+00 : f32
    %595 = vector.broadcast %cst_271 : f32 to vector<8x128xf32>
    %596 = arith.addf %595, %594 : vector<8x128xf32>
    %597 = arith.divf %595, %596 : vector<8x128xf32>
    %598 = vector.extract_strided_slice %585 {offsets = [0, 256], sizes = [8, 128], strides = [1, 1]} : vector<8x512xf32> to vector<8x128xf32>
    %599 = math.tanh %598 : vector<8x128xf32>
    %600 = vector.extract_strided_slice %585 {offsets = [0, 384], sizes = [8, 128], strides = [1, 1]} : vector<8x512xf32> to vector<8x128xf32>
    %601 = arith.negf %600 : vector<8x128xf32>
    %602 = math.exp %601 : vector<8x128xf32>
    %cst_272 = arith.constant 1.000000e+00 : f32
    %603 = vector.broadcast %cst_272 : f32 to vector<8x128xf32>
    %604 = arith.addf %603, %602 : vector<8x128xf32>
    %605 = arith.divf %603, %604 : vector<8x128xf32>
    %c0_273 = arith.constant 0 : index
    %c0_274 = arith.constant 0 : index
    %606 = vector.load %arg23[%c0_273, %c0_274] : memref<8x128xf32, #tpu.memory_space<vmem>>, vector<8x128xf32>
    %607 = arith.mulf %597, %606 : vector<8x128xf32>
    %608 = arith.mulf %591, %599 : vector<8x128xf32>
    %609 = arith.addf %607, %608 : vector<8x128xf32>
    %610 = math.tanh %609 : vector<8x128xf32>
    %611 = arith.mulf %605, %610 : vector<8x128xf32>
    %c0_275 = arith.constant 0 : index
    %c0_276 = arith.constant 0 : index
    %612 = vector.load %arg23[%c0_275, %c0_276] : memref<8x128xf32, #tpu.memory_space<vmem>>, vector<8x128xf32>
    tpu.vector_store %arg23[%c0_275, %c0_276], %609 {strides = array<i32>} : memref<8x128xf32, #tpu.memory_space<vmem>>, vector<8x128xf32>,
    %c0_277 = arith.constant 0 : index
    %c0_278 = arith.constant 0 : index
    %613 = vector.load %arg22[%c0_277, %c0_278] : memref<8x128xf32, #tpu.memory_space<vmem>>, vector<8x128xf32>
    tpu.vector_store %arg22[%c0_277, %c0_278], %611 {strides = array<i32>} : memref<8x128xf32, #tpu.memory_space<vmem>>, vector<8x128xf32>,
    %614 = arith.index_cast %580 : i32 to index
    %c0_279 = arith.constant 0 : index
    %615 = vector.load %arg21[%614, %c0_279] : memref<64x128xf32, #tpu.memory_space<vmem>>, vector<8x128xf32>
    tpu.vector_store %arg21[%614, %c0_279], %611 {strides = array<i32>} : memref<64x128xf32, #tpu.memory_space<vmem>>, vector<8x128xf32>,
    %c8_i32_280 = arith.constant 8 : i32
    %c0_281 = arith.constant 0 : index
    %c0_282 = arith.constant 0 : index
    %616 = vector.load %arg22[%c0_281, %c0_282] : memref<8x128xf32, #tpu.memory_space<vmem>>, vector<8x128xf32>
    %c0_283 = arith.constant 0 : index
    %c0_284 = arith.constant 0 : index
    %617 = vector.load %arg21[%c0_283, %c0_284] : memref<64x128xf32, #tpu.memory_space<vmem>>, vector<64x128xf32>
    %c0_285 = arith.constant 0 : index
    %c0_286 = arith.constant 0 : index
    %618 = vector.load %arg7[%c0_285, %c0_286] : memref<128x512xf32, #tpu.memory_space<vmem>>, vector<128x512xf32>
    %cst_287 = arith.constant dense<0.000000e+00> : vector<64x512xf32>
    %619 = tpu.matmul %617, %618, %cst_287 {dimension_numbers = #tpu.dot_dimension_numbers<[1], [0], [0], [1], [0, 0, 1, 1], [], []>} : vector<64x128xf32>, vector<128x512xf32>, vector<64x512xf32> -> vector<64x512xf32>
    %c0_288 = arith.constant 0 : index
    %c0_289 = arith.constant 0 : index
    %620 = vector.load %arg9[%c0_288, %c0_289] : memref<1x512xf32, #tpu.memory_space<vmem>>, vector<1x512xf32>
    %621 = vector.broadcast %620 : vector<1x512xf32> to vector<64x512xf32>
    %622 = arith.addf %619, %621 : vector<64x512xf32>
    %c0_290 = arith.constant 0 : index
    %c0_291 = arith.constant 0 : index
    %623 = vector.load %arg20[%c0_290, %c0_291] : memref<64x512xf32, #tpu.memory_space<vmem>>, vector<64x512xf32>
    tpu.vector_store %arg20[%c0_290, %c0_291], %622 {strides = array<i32>} : memref<64x512xf32, #tpu.memory_space<vmem>>, vector<64x512xf32>,
    %cst_292 = arith.constant 0.000000e+00 : f32
    %624 = vector.broadcast %cst_292 : f32 to vector<8x128xf32>
    %c0_293 = arith.constant 0 : index
    %c0_294 = arith.constant 0 : index
    %625 = vector.load %arg22[%c0_293, %c0_294] : memref<8x128xf32, #tpu.memory_space<vmem>>, vector<8x128xf32>
    tpu.vector_store %arg22[%c0_293, %c0_294], %624 {strides = array<i32>} : memref<8x128xf32, #tpu.memory_space<vmem>>, vector<8x128xf32>,
    %cst_295 = arith.constant 0.000000e+00 : f32
    %626 = vector.broadcast %cst_295 : f32 to vector<8x128xf32>
    %c0_296 = arith.constant 0 : index
    %c0_297 = arith.constant 0 : index
    %627 = vector.load %arg23[%c0_296, %c0_297] : memref<8x128xf32, #tpu.memory_space<vmem>>, vector<8x128xf32>
    tpu.vector_store %arg23[%c0_296, %c0_297], %626 {strides = array<i32>} : memref<8x128xf32, #tpu.memory_space<vmem>>, vector<8x128xf32>,
    %c0_298 = arith.constant 0 : index
    %c0_299 = arith.constant 0 : index
    %628 = vector.load %arg8[%c0_298, %c0_299] : memref<128x512xf32, #tpu.memory_space<vmem>>, vector<128x512xf32>
    %c0_i32_300 = arith.constant 0 : i32
    %c8_i32_301 = arith.constant 8 : i32
    %629 = arith.muli %c0_i32_300, %c8_i32_301 : i32
    %630 = tpu.assume_multiple %629, 8 : i32
    %631 = arith.index_cast %630 : i32 to index
    %c0_302 = arith.constant 0 : index
    %632 = vector.load %arg20[%631, %c0_302] : memref<64x512xf32, #tpu.memory_space<vmem>>, vector<8x512xf32>
    %c0_303 = arith.constant 0 : index
    %c0_304 = arith.constant 0 : index
    %633 = vector.load %arg22[%c0_303, %c0_304] : memref<8x128xf32, #tpu.memory_space<vmem>>, vector<8x128xf32>
    %cst_305 = arith.constant dense<0.000000e+00> : vector<8x512xf32>
    %634 = tpu.matmul %633, %628, %cst_305 {dimension_numbers = #tpu.dot_dimension_numbers<[1], [0], [0], [1], [0, 0, 1, 1], [], []>} : vector<8x128xf32>, vector<128x512xf32>, vector<8x512xf32> -> vector<8x512xf32>
    %635 = arith.addf %632, %634 : vector<8x512xf32>
    %636 = vector.extract_strided_slice %635 {offsets = [0, 0], sizes = [8, 128], strides = [1, 1]} : vector<8x512xf32> to vector<8x128xf32>
    %637 = arith.negf %636 : vector<8x128xf32>
    %638 = math.exp %637 : vector<8x128xf32>
    %cst_306 = arith.constant 1.000000e+00 : f32
    %639 = vector.broadcast %cst_306 : f32 to vector<8x128xf32>
    %640 = arith.addf %639, %638 : vector<8x128xf32>
    %641 = arith.divf %639, %640 : vector<8x128xf32>
    %642 = vector.extract_strided_slice %635 {offsets = [0, 128], sizes = [8, 128], strides = [1, 1]} : vector<8x512xf32> to vector<8x128xf32>
    %643 = arith.negf %642 : vector<8x128xf32>
    %644 = math.exp %643 : vector<8x128xf32>
    %cst_307 = arith.constant 1.000000e+00 : f32
    %645 = vector.broadcast %cst_307 : f32 to vector<8x128xf32>
    %646 = arith.addf %645, %644 : vector<8x128xf32>
    %647 = arith.divf %645, %646 : vector<8x128xf32>
    %648 = vector.extract_strided_slice %635 {offsets = [0, 256], sizes = [8, 128], strides = [1, 1]} : vector<8x512xf32> to vector<8x128xf32>
    %649 = math.tanh %648 : vector<8x128xf32>
    %650 = vector.extract_strided_slice %635 {offsets = [0, 384], sizes = [8, 128], strides = [1, 1]} : vector<8x512xf32> to vector<8x128xf32>
    %651 = arith.negf %650 : vector<8x128xf32>
    %652 = math.exp %651 : vector<8x128xf32>
    %cst_308 = arith.constant 1.000000e+00 : f32
    %653 = vector.broadcast %cst_308 : f32 to vector<8x128xf32>
    %654 = arith.addf %653, %652 : vector<8x128xf32>
    %655 = arith.divf %653, %654 : vector<8x128xf32>
    %c0_309 = arith.constant 0 : index
    %c0_310 = arith.constant 0 : index
    %656 = vector.load %arg23[%c0_309, %c0_310] : memref<8x128xf32, #tpu.memory_space<vmem>>, vector<8x128xf32>
    %657 = arith.mulf %647, %656 : vector<8x128xf32>
    %658 = arith.mulf %641, %649 : vector<8x128xf32>
    %659 = arith.addf %657, %658 : vector<8x128xf32>
    %660 = math.tanh %659 : vector<8x128xf32>
    %661 = arith.mulf %655, %660 : vector<8x128xf32>
    %c0_311 = arith.constant 0 : index
    %c0_312 = arith.constant 0 : index
    %662 = vector.load %arg23[%c0_311, %c0_312] : memref<8x128xf32, #tpu.memory_space<vmem>>, vector<8x128xf32>
    tpu.vector_store %arg23[%c0_311, %c0_312], %659 {strides = array<i32>} : memref<8x128xf32, #tpu.memory_space<vmem>>, vector<8x128xf32>,
    %c0_313 = arith.constant 0 : index
    %c0_314 = arith.constant 0 : index
    %663 = vector.load %arg22[%c0_313, %c0_314] : memref<8x128xf32, #tpu.memory_space<vmem>>, vector<8x128xf32>
    tpu.vector_store %arg22[%c0_313, %c0_314], %661 {strides = array<i32>} : memref<8x128xf32, #tpu.memory_space<vmem>>, vector<8x128xf32>,
    %664 = arith.index_cast %630 : i32 to index
    %c0_315 = arith.constant 0 : index
    %665 = vector.load %arg21[%664, %c0_315] : memref<64x128xf32, #tpu.memory_space<vmem>>, vector<8x128xf32>
    tpu.vector_store %arg21[%664, %c0_315], %661 {strides = array<i32>} : memref<64x128xf32, #tpu.memory_space<vmem>>, vector<8x128xf32>,
    %c1_i32_316 = arith.constant 1 : i32
    %c8_i32_317 = arith.constant 8 : i32
    %666 = arith.muli %c1_i32_316, %c8_i32_317 : i32
    %667 = tpu.assume_multiple %666, 8 : i32
    %668 = arith.index_cast %667 : i32 to index
    %c0_318 = arith.constant 0 : index
    %669 = vector.load %arg20[%668, %c0_318] : memref<64x512xf32, #tpu.memory_space<vmem>>, vector<8x512xf32>
    %c0_319 = arith.constant 0 : index
    %c0_320 = arith.constant 0 : index
    %670 = vector.load %arg22[%c0_319, %c0_320] : memref<8x128xf32, #tpu.memory_space<vmem>>, vector<8x128xf32>
    %cst_321 = arith.constant dense<0.000000e+00> : vector<8x512xf32>
    %671 = tpu.matmul %670, %628, %cst_321 {dimension_numbers = #tpu.dot_dimension_numbers<[1], [0], [0], [1], [0, 0, 1, 1], [], []>} : vector<8x128xf32>, vector<128x512xf32>, vector<8x512xf32> -> vector<8x512xf32>
    %672 = arith.addf %669, %671 : vector<8x512xf32>
    %673 = vector.extract_strided_slice %672 {offsets = [0, 0], sizes = [8, 128], strides = [1, 1]} : vector<8x512xf32> to vector<8x128xf32>
    %674 = arith.negf %673 : vector<8x128xf32>
    %675 = math.exp %674 : vector<8x128xf32>
    %cst_322 = arith.constant 1.000000e+00 : f32
    %676 = vector.broadcast %cst_322 : f32 to vector<8x128xf32>
    %677 = arith.addf %676, %675 : vector<8x128xf32>
    %678 = arith.divf %676, %677 : vector<8x128xf32>
    %679 = vector.extract_strided_slice %672 {offsets = [0, 128], sizes = [8, 128], strides = [1, 1]} : vector<8x512xf32> to vector<8x128xf32>
    %680 = arith.negf %679 : vector<8x128xf32>
    %681 = math.exp %680 : vector<8x128xf32>
    %cst_323 = arith.constant 1.000000e+00 : f32
    %682 = vector.broadcast %cst_323 : f32 to vector<8x128xf32>
    %683 = arith.addf %682, %681 : vector<8x128xf32>
    %684 = arith.divf %682, %683 : vector<8x128xf32>
    %685 = vector.extract_strided_slice %672 {offsets = [0, 256], sizes = [8, 128], strides = [1, 1]} : vector<8x512xf32> to vector<8x128xf32>
    %686 = math.tanh %685 : vector<8x128xf32>
    %687 = vector.extract_strided_slice %672 {offsets = [0, 384], sizes = [8, 128], strides = [1, 1]} : vector<8x512xf32> to vector<8x128xf32>
    %688 = arith.negf %687 : vector<8x128xf32>
    %689 = math.exp %688 : vector<8x128xf32>
    %cst_324 = arith.constant 1.000000e+00 : f32
    %690 = vector.broadcast %cst_324 : f32 to vector<8x128xf32>
    %691 = arith.addf %690, %689 : vector<8x128xf32>
    %692 = arith.divf %690, %691 : vector<8x128xf32>
    %c0_325 = arith.constant 0 : index
    %c0_326 = arith.constant 0 : index
    %693 = vector.load %arg23[%c0_325, %c0_326] : memref<8x128xf32, #tpu.memory_space<vmem>>, vector<8x128xf32>
    %694 = arith.mulf %684, %693 : vector<8x128xf32>
    %695 = arith.mulf %678, %686 : vector<8x128xf32>
    %696 = arith.addf %694, %695 : vector<8x128xf32>
    %697 = math.tanh %696 : vector<8x128xf32>
    %698 = arith.mulf %692, %697 : vector<8x128xf32>
    %c0_327 = arith.constant 0 : index
    %c0_328 = arith.constant 0 : index
    %699 = vector.load %arg23[%c0_327, %c0_328] : memref<8x128xf32, #tpu.memory_space<vmem>>, vector<8x128xf32>
    tpu.vector_store %arg23[%c0_327, %c0_328], %696 {strides = array<i32>} : memref<8x128xf32, #tpu.memory_space<vmem>>, vector<8x128xf32>,
    %c0_329 = arith.constant 0 : index
    %c0_330 = arith.constant 0 : index
    %700 = vector.load %arg22[%c0_329, %c0_330] : memref<8x128xf32, #tpu.memory_space<vmem>>, vector<8x128xf32>
    tpu.vector_store %arg22[%c0_329, %c0_330], %698 {strides = array<i32>} : memref<8x128xf32, #tpu.memory_space<vmem>>, vector<8x128xf32>,
    %701 = arith.index_cast %667 : i32 to index
    %c0_331 = arith.constant 0 : index
    %702 = vector.load %arg21[%701, %c0_331] : memref<64x128xf32, #tpu.memory_space<vmem>>, vector<8x128xf32>
    tpu.vector_store %arg21[%701, %c0_331], %698 {strides = array<i32>} : memref<64x128xf32, #tpu.memory_space<vmem>>, vector<8x128xf32>,
    %c2_i32_332 = arith.constant 2 : i32
    %c8_i32_333 = arith.constant 8 : i32
    %703 = arith.muli %c2_i32_332, %c8_i32_333 : i32
    %704 = tpu.assume_multiple %703, 8 : i32
    %705 = arith.index_cast %704 : i32 to index
    %c0_334 = arith.constant 0 : index
    %706 = vector.load %arg20[%705, %c0_334] : memref<64x512xf32, #tpu.memory_space<vmem>>, vector<8x512xf32>
    %c0_335 = arith.constant 0 : index
    %c0_336 = arith.constant 0 : index
    %707 = vector.load %arg22[%c0_335, %c0_336] : memref<8x128xf32, #tpu.memory_space<vmem>>, vector<8x128xf32>
    %cst_337 = arith.constant dense<0.000000e+00> : vector<8x512xf32>
    %708 = tpu.matmul %707, %628, %cst_337 {dimension_numbers = #tpu.dot_dimension_numbers<[1], [0], [0], [1], [0, 0, 1, 1], [], []>} : vector<8x128xf32>, vector<128x512xf32>, vector<8x512xf32> -> vector<8x512xf32>
    %709 = arith.addf %706, %708 : vector<8x512xf32>
    %710 = vector.extract_strided_slice %709 {offsets = [0, 0], sizes = [8, 128], strides = [1, 1]} : vector<8x512xf32> to vector<8x128xf32>
    %711 = arith.negf %710 : vector<8x128xf32>
    %712 = math.exp %711 : vector<8x128xf32>
    %cst_338 = arith.constant 1.000000e+00 : f32
    %713 = vector.broadcast %cst_338 : f32 to vector<8x128xf32>
    %714 = arith.addf %713, %712 : vector<8x128xf32>
    %715 = arith.divf %713, %714 : vector<8x128xf32>
    %716 = vector.extract_strided_slice %709 {offsets = [0, 128], sizes = [8, 128], strides = [1, 1]} : vector<8x512xf32> to vector<8x128xf32>
    %717 = arith.negf %716 : vector<8x128xf32>
    %718 = math.exp %717 : vector<8x128xf32>
    %cst_339 = arith.constant 1.000000e+00 : f32
    %719 = vector.broadcast %cst_339 : f32 to vector<8x128xf32>
    %720 = arith.addf %719, %718 : vector<8x128xf32>
    %721 = arith.divf %719, %720 : vector<8x128xf32>
    %722 = vector.extract_strided_slice %709 {offsets = [0, 256], sizes = [8, 128], strides = [1, 1]} : vector<8x512xf32> to vector<8x128xf32>
    %723 = math.tanh %722 : vector<8x128xf32>
    %724 = vector.extract_strided_slice %709 {offsets = [0, 384], sizes = [8, 128], strides = [1, 1]} : vector<8x512xf32> to vector<8x128xf32>
    %725 = arith.negf %724 : vector<8x128xf32>
    %726 = math.exp %725 : vector<8x128xf32>
    %cst_340 = arith.constant 1.000000e+00 : f32
    %727 = vector.broadcast %cst_340 : f32 to vector<8x128xf32>
    %728 = arith.addf %727, %726 : vector<8x128xf32>
    %729 = arith.divf %727, %728 : vector<8x128xf32>
    %c0_341 = arith.constant 0 : index
    %c0_342 = arith.constant 0 : index
    %730 = vector.load %arg23[%c0_341, %c0_342] : memref<8x128xf32, #tpu.memory_space<vmem>>, vector<8x128xf32>
    %731 = arith.mulf %721, %730 : vector<8x128xf32>
    %732 = arith.mulf %715, %723 : vector<8x128xf32>
    %733 = arith.addf %731, %732 : vector<8x128xf32>
    %734 = math.tanh %733 : vector<8x128xf32>
    %735 = arith.mulf %729, %734 : vector<8x128xf32>
    %c0_343 = arith.constant 0 : index
    %c0_344 = arith.constant 0 : index
    %736 = vector.load %arg23[%c0_343, %c0_344] : memref<8x128xf32, #tpu.memory_space<vmem>>, vector<8x128xf32>
    tpu.vector_store %arg23[%c0_343, %c0_344], %733 {strides = array<i32>} : memref<8x128xf32, #tpu.memory_space<vmem>>, vector<8x128xf32>,
    %c0_345 = arith.constant 0 : index
    %c0_346 = arith.constant 0 : index
    %737 = vector.load %arg22[%c0_345, %c0_346] : memref<8x128xf32, #tpu.memory_space<vmem>>, vector<8x128xf32>
    tpu.vector_store %arg22[%c0_345, %c0_346], %735 {strides = array<i32>} : memref<8x128xf32, #tpu.memory_space<vmem>>, vector<8x128xf32>,
    %738 = arith.index_cast %704 : i32 to index
    %c0_347 = arith.constant 0 : index
    %739 = vector.load %arg21[%738, %c0_347] : memref<64x128xf32, #tpu.memory_space<vmem>>, vector<8x128xf32>
    tpu.vector_store %arg21[%738, %c0_347], %735 {strides = array<i32>} : memref<64x128xf32, #tpu.memory_space<vmem>>, vector<8x128xf32>,
    %c3_i32_348 = arith.constant 3 : i32
    %c8_i32_349 = arith.constant 8 : i32
    %740 = arith.muli %c3_i32_348, %c8_i32_349 : i32
    %741 = tpu.assume_multiple %740, 8 : i32
    %742 = arith.index_cast %741 : i32 to index
    %c0_350 = arith.constant 0 : index
    %743 = vector.load %arg20[%742, %c0_350] : memref<64x512xf32, #tpu.memory_space<vmem>>, vector<8x512xf32>
    %c0_351 = arith.constant 0 : index
    %c0_352 = arith.constant 0 : index
    %744 = vector.load %arg22[%c0_351, %c0_352] : memref<8x128xf32, #tpu.memory_space<vmem>>, vector<8x128xf32>
    %cst_353 = arith.constant dense<0.000000e+00> : vector<8x512xf32>
    %745 = tpu.matmul %744, %628, %cst_353 {dimension_numbers = #tpu.dot_dimension_numbers<[1], [0], [0], [1], [0, 0, 1, 1], [], []>} : vector<8x128xf32>, vector<128x512xf32>, vector<8x512xf32> -> vector<8x512xf32>
    %746 = arith.addf %743, %745 : vector<8x512xf32>
    %747 = vector.extract_strided_slice %746 {offsets = [0, 0], sizes = [8, 128], strides = [1, 1]} : vector<8x512xf32> to vector<8x128xf32>
    %748 = arith.negf %747 : vector<8x128xf32>
    %749 = math.exp %748 : vector<8x128xf32>
    %cst_354 = arith.constant 1.000000e+00 : f32
    %750 = vector.broadcast %cst_354 : f32 to vector<8x128xf32>
    %751 = arith.addf %750, %749 : vector<8x128xf32>
    %752 = arith.divf %750, %751 : vector<8x128xf32>
    %753 = vector.extract_strided_slice %746 {offsets = [0, 128], sizes = [8, 128], strides = [1, 1]} : vector<8x512xf32> to vector<8x128xf32>
    %754 = arith.negf %753 : vector<8x128xf32>
    %755 = math.exp %754 : vector<8x128xf32>
    %cst_355 = arith.constant 1.000000e+00 : f32
    %756 = vector.broadcast %cst_355 : f32 to vector<8x128xf32>
    %757 = arith.addf %756, %755 : vector<8x128xf32>
    %758 = arith.divf %756, %757 : vector<8x128xf32>
    %759 = vector.extract_strided_slice %746 {offsets = [0, 256], sizes = [8, 128], strides = [1, 1]} : vector<8x512xf32> to vector<8x128xf32>
    %760 = math.tanh %759 : vector<8x128xf32>
    %761 = vector.extract_strided_slice %746 {offsets = [0, 384], sizes = [8, 128], strides = [1, 1]} : vector<8x512xf32> to vector<8x128xf32>
    %762 = arith.negf %761 : vector<8x128xf32>
    %763 = math.exp %762 : vector<8x128xf32>
    %cst_356 = arith.constant 1.000000e+00 : f32
    %764 = vector.broadcast %cst_356 : f32 to vector<8x128xf32>
    %765 = arith.addf %764, %763 : vector<8x128xf32>
    %766 = arith.divf %764, %765 : vector<8x128xf32>
    %c0_357 = arith.constant 0 : index
    %c0_358 = arith.constant 0 : index
    %767 = vector.load %arg23[%c0_357, %c0_358] : memref<8x128xf32, #tpu.memory_space<vmem>>, vector<8x128xf32>
    %768 = arith.mulf %758, %767 : vector<8x128xf32>
    %769 = arith.mulf %752, %760 : vector<8x128xf32>
    %770 = arith.addf %768, %769 : vector<8x128xf32>
    %771 = math.tanh %770 : vector<8x128xf32>
    %772 = arith.mulf %766, %771 : vector<8x128xf32>
    %c0_359 = arith.constant 0 : index
    %c0_360 = arith.constant 0 : index
    %773 = vector.load %arg23[%c0_359, %c0_360] : memref<8x128xf32, #tpu.memory_space<vmem>>, vector<8x128xf32>
    tpu.vector_store %arg23[%c0_359, %c0_360], %770 {strides = array<i32>} : memref<8x128xf32, #tpu.memory_space<vmem>>, vector<8x128xf32>,
    %c0_361 = arith.constant 0 : index
    %c0_362 = arith.constant 0 : index
    %774 = vector.load %arg22[%c0_361, %c0_362] : memref<8x128xf32, #tpu.memory_space<vmem>>, vector<8x128xf32>
    tpu.vector_store %arg22[%c0_361, %c0_362], %772 {strides = array<i32>} : memref<8x128xf32, #tpu.memory_space<vmem>>, vector<8x128xf32>,
    %775 = arith.index_cast %741 : i32 to index
    %c0_363 = arith.constant 0 : index
    %776 = vector.load %arg21[%775, %c0_363] : memref<64x128xf32, #tpu.memory_space<vmem>>, vector<8x128xf32>
    tpu.vector_store %arg21[%775, %c0_363], %772 {strides = array<i32>} : memref<64x128xf32, #tpu.memory_space<vmem>>, vector<8x128xf32>,
    %c4_i32_364 = arith.constant 4 : i32
    %c8_i32_365 = arith.constant 8 : i32
    %777 = arith.muli %c4_i32_364, %c8_i32_365 : i32
    %778 = tpu.assume_multiple %777, 8 : i32
    %779 = arith.index_cast %778 : i32 to index
    %c0_366 = arith.constant 0 : index
    %780 = vector.load %arg20[%779, %c0_366] : memref<64x512xf32, #tpu.memory_space<vmem>>, vector<8x512xf32>
    %c0_367 = arith.constant 0 : index
    %c0_368 = arith.constant 0 : index
    %781 = vector.load %arg22[%c0_367, %c0_368] : memref<8x128xf32, #tpu.memory_space<vmem>>, vector<8x128xf32>
    %cst_369 = arith.constant dense<0.000000e+00> : vector<8x512xf32>
    %782 = tpu.matmul %781, %628, %cst_369 {dimension_numbers = #tpu.dot_dimension_numbers<[1], [0], [0], [1], [0, 0, 1, 1], [], []>} : vector<8x128xf32>, vector<128x512xf32>, vector<8x512xf32> -> vector<8x512xf32>
    %783 = arith.addf %780, %782 : vector<8x512xf32>
    %784 = vector.extract_strided_slice %783 {offsets = [0, 0], sizes = [8, 128], strides = [1, 1]} : vector<8x512xf32> to vector<8x128xf32>
    %785 = arith.negf %784 : vector<8x128xf32>
    %786 = math.exp %785 : vector<8x128xf32>
    %cst_370 = arith.constant 1.000000e+00 : f32
    %787 = vector.broadcast %cst_370 : f32 to vector<8x128xf32>
    %788 = arith.addf %787, %786 : vector<8x128xf32>
    %789 = arith.divf %787, %788 : vector<8x128xf32>
    %790 = vector.extract_strided_slice %783 {offsets = [0, 128], sizes = [8, 128], strides = [1, 1]} : vector<8x512xf32> to vector<8x128xf32>
    %791 = arith.negf %790 : vector<8x128xf32>
    %792 = math.exp %791 : vector<8x128xf32>
    %cst_371 = arith.constant 1.000000e+00 : f32
    %793 = vector.broadcast %cst_371 : f32 to vector<8x128xf32>
    %794 = arith.addf %793, %792 : vector<8x128xf32>
    %795 = arith.divf %793, %794 : vector<8x128xf32>
    %796 = vector.extract_strided_slice %783 {offsets = [0, 256], sizes = [8, 128], strides = [1, 1]} : vector<8x512xf32> to vector<8x128xf32>
    %797 = math.tanh %796 : vector<8x128xf32>
    %798 = vector.extract_strided_slice %783 {offsets = [0, 384], sizes = [8, 128], strides = [1, 1]} : vector<8x512xf32> to vector<8x128xf32>
    %799 = arith.negf %798 : vector<8x128xf32>
    %800 = math.exp %799 : vector<8x128xf32>
    %cst_372 = arith.constant 1.000000e+00 : f32
    %801 = vector.broadcast %cst_372 : f32 to vector<8x128xf32>
    %802 = arith.addf %801, %800 : vector<8x128xf32>
    %803 = arith.divf %801, %802 : vector<8x128xf32>
    %c0_373 = arith.constant 0 : index
    %c0_374 = arith.constant 0 : index
    %804 = vector.load %arg23[%c0_373, %c0_374] : memref<8x128xf32, #tpu.memory_space<vmem>>, vector<8x128xf32>
    %805 = arith.mulf %795, %804 : vector<8x128xf32>
    %806 = arith.mulf %789, %797 : vector<8x128xf32>
    %807 = arith.addf %805, %806 : vector<8x128xf32>
    %808 = math.tanh %807 : vector<8x128xf32>
    %809 = arith.mulf %803, %808 : vector<8x128xf32>
    %c0_375 = arith.constant 0 : index
    %c0_376 = arith.constant 0 : index
    %810 = vector.load %arg23[%c0_375, %c0_376] : memref<8x128xf32, #tpu.memory_space<vmem>>, vector<8x128xf32>
    tpu.vector_store %arg23[%c0_375, %c0_376], %807 {strides = array<i32>} : memref<8x128xf32, #tpu.memory_space<vmem>>, vector<8x128xf32>,
    %c0_377 = arith.constant 0 : index
    %c0_378 = arith.constant 0 : index
    %811 = vector.load %arg22[%c0_377, %c0_378] : memref<8x128xf32, #tpu.memory_space<vmem>>, vector<8x128xf32>
    tpu.vector_store %arg22[%c0_377, %c0_378], %809 {strides = array<i32>} : memref<8x128xf32, #tpu.memory_space<vmem>>, vector<8x128xf32>,
    %812 = arith.index_cast %778 : i32 to index
    %c0_379 = arith.constant 0 : index
    %813 = vector.load %arg21[%812, %c0_379] : memref<64x128xf32, #tpu.memory_space<vmem>>, vector<8x128xf32>
    tpu.vector_store %arg21[%812, %c0_379], %809 {strides = array<i32>} : memref<64x128xf32, #tpu.memory_space<vmem>>, vector<8x128xf32>,
    %c5_i32_380 = arith.constant 5 : i32
    %c8_i32_381 = arith.constant 8 : i32
    %814 = arith.muli %c5_i32_380, %c8_i32_381 : i32
    %815 = tpu.assume_multiple %814, 8 : i32
    %816 = arith.index_cast %815 : i32 to index
    %c0_382 = arith.constant 0 : index
    %817 = vector.load %arg20[%816, %c0_382] : memref<64x512xf32, #tpu.memory_space<vmem>>, vector<8x512xf32>
    %c0_383 = arith.constant 0 : index
    %c0_384 = arith.constant 0 : index
    %818 = vector.load %arg22[%c0_383, %c0_384] : memref<8x128xf32, #tpu.memory_space<vmem>>, vector<8x128xf32>
    %cst_385 = arith.constant dense<0.000000e+00> : vector<8x512xf32>
    %819 = tpu.matmul %818, %628, %cst_385 {dimension_numbers = #tpu.dot_dimension_numbers<[1], [0], [0], [1], [0, 0, 1, 1], [], []>} : vector<8x128xf32>, vector<128x512xf32>, vector<8x512xf32> -> vector<8x512xf32>
    %820 = arith.addf %817, %819 : vector<8x512xf32>
    %821 = vector.extract_strided_slice %820 {offsets = [0, 0], sizes = [8, 128], strides = [1, 1]} : vector<8x512xf32> to vector<8x128xf32>
    %822 = arith.negf %821 : vector<8x128xf32>
    %823 = math.exp %822 : vector<8x128xf32>
    %cst_386 = arith.constant 1.000000e+00 : f32
    %824 = vector.broadcast %cst_386 : f32 to vector<8x128xf32>
    %825 = arith.addf %824, %823 : vector<8x128xf32>
    %826 = arith.divf %824, %825 : vector<8x128xf32>
    %827 = vector.extract_strided_slice %820 {offsets = [0, 128], sizes = [8, 128], strides = [1, 1]} : vector<8x512xf32> to vector<8x128xf32>
    %828 = arith.negf %827 : vector<8x128xf32>
    %829 = math.exp %828 : vector<8x128xf32>
    %cst_387 = arith.constant 1.000000e+00 : f32
    %830 = vector.broadcast %cst_387 : f32 to vector<8x128xf32>
    %831 = arith.addf %830, %829 : vector<8x128xf32>
    %832 = arith.divf %830, %831 : vector<8x128xf32>
    %833 = vector.extract_strided_slice %820 {offsets = [0, 256], sizes = [8, 128], strides = [1, 1]} : vector<8x512xf32> to vector<8x128xf32>
    %834 = math.tanh %833 : vector<8x128xf32>
    %835 = vector.extract_strided_slice %820 {offsets = [0, 384], sizes = [8, 128], strides = [1, 1]} : vector<8x512xf32> to vector<8x128xf32>
    %836 = arith.negf %835 : vector<8x128xf32>
    %837 = math.exp %836 : vector<8x128xf32>
    %cst_388 = arith.constant 1.000000e+00 : f32
    %838 = vector.broadcast %cst_388 : f32 to vector<8x128xf32>
    %839 = arith.addf %838, %837 : vector<8x128xf32>
    %840 = arith.divf %838, %839 : vector<8x128xf32>
    %c0_389 = arith.constant 0 : index
    %c0_390 = arith.constant 0 : index
    %841 = vector.load %arg23[%c0_389, %c0_390] : memref<8x128xf32, #tpu.memory_space<vmem>>, vector<8x128xf32>
    %842 = arith.mulf %832, %841 : vector<8x128xf32>
    %843 = arith.mulf %826, %834 : vector<8x128xf32>
    %844 = arith.addf %842, %843 : vector<8x128xf32>
    %845 = math.tanh %844 : vector<8x128xf32>
    %846 = arith.mulf %840, %845 : vector<8x128xf32>
    %c0_391 = arith.constant 0 : index
    %c0_392 = arith.constant 0 : index
    %847 = vector.load %arg23[%c0_391, %c0_392] : memref<8x128xf32, #tpu.memory_space<vmem>>, vector<8x128xf32>
    tpu.vector_store %arg23[%c0_391, %c0_392], %844 {strides = array<i32>} : memref<8x128xf32, #tpu.memory_space<vmem>>, vector<8x128xf32>,
    %c0_393 = arith.constant 0 : index
    %c0_394 = arith.constant 0 : index
    %848 = vector.load %arg22[%c0_393, %c0_394] : memref<8x128xf32, #tpu.memory_space<vmem>>, vector<8x128xf32>
    tpu.vector_store %arg22[%c0_393, %c0_394], %846 {strides = array<i32>} : memref<8x128xf32, #tpu.memory_space<vmem>>, vector<8x128xf32>,
    %849 = arith.index_cast %815 : i32 to index
    %c0_395 = arith.constant 0 : index
    %850 = vector.load %arg21[%849, %c0_395] : memref<64x128xf32, #tpu.memory_space<vmem>>, vector<8x128xf32>
    tpu.vector_store %arg21[%849, %c0_395], %846 {strides = array<i32>} : memref<64x128xf32, #tpu.memory_space<vmem>>, vector<8x128xf32>,
    %c6_i32_396 = arith.constant 6 : i32
    %c8_i32_397 = arith.constant 8 : i32
    %851 = arith.muli %c6_i32_396, %c8_i32_397 : i32
    %852 = tpu.assume_multiple %851, 8 : i32
    %853 = arith.index_cast %852 : i32 to index
    %c0_398 = arith.constant 0 : index
    %854 = vector.load %arg20[%853, %c0_398] : memref<64x512xf32, #tpu.memory_space<vmem>>, vector<8x512xf32>
    %c0_399 = arith.constant 0 : index
    %c0_400 = arith.constant 0 : index
    %855 = vector.load %arg22[%c0_399, %c0_400] : memref<8x128xf32, #tpu.memory_space<vmem>>, vector<8x128xf32>
    %cst_401 = arith.constant dense<0.000000e+00> : vector<8x512xf32>
    %856 = tpu.matmul %855, %628, %cst_401 {dimension_numbers = #tpu.dot_dimension_numbers<[1], [0], [0], [1], [0, 0, 1, 1], [], []>} : vector<8x128xf32>, vector<128x512xf32>, vector<8x512xf32> -> vector<8x512xf32>
    %857 = arith.addf %854, %856 : vector<8x512xf32>
    %858 = vector.extract_strided_slice %857 {offsets = [0, 0], sizes = [8, 128], strides = [1, 1]} : vector<8x512xf32> to vector<8x128xf32>
    %859 = arith.negf %858 : vector<8x128xf32>
    %860 = math.exp %859 : vector<8x128xf32>
    %cst_402 = arith.constant 1.000000e+00 : f32
    %861 = vector.broadcast %cst_402 : f32 to vector<8x128xf32>
    %862 = arith.addf %861, %860 : vector<8x128xf32>
    %863 = arith.divf %861, %862 : vector<8x128xf32>
    %864 = vector.extract_strided_slice %857 {offsets = [0, 128], sizes = [8, 128], strides = [1, 1]} : vector<8x512xf32> to vector<8x128xf32>
    %865 = arith.negf %864 : vector<8x128xf32>
    %866 = math.exp %865 : vector<8x128xf32>
    %cst_403 = arith.constant 1.000000e+00 : f32
    %867 = vector.broadcast %cst_403 : f32 to vector<8x128xf32>
    %868 = arith.addf %867, %866 : vector<8x128xf32>
    %869 = arith.divf %867, %868 : vector<8x128xf32>
    %870 = vector.extract_strided_slice %857 {offsets = [0, 256], sizes = [8, 128], strides = [1, 1]} : vector<8x512xf32> to vector<8x128xf32>
    %871 = math.tanh %870 : vector<8x128xf32>
    %872 = vector.extract_strided_slice %857 {offsets = [0, 384], sizes = [8, 128], strides = [1, 1]} : vector<8x512xf32> to vector<8x128xf32>
    %873 = arith.negf %872 : vector<8x128xf32>
    %874 = math.exp %873 : vector<8x128xf32>
    %cst_404 = arith.constant 1.000000e+00 : f32
    %875 = vector.broadcast %cst_404 : f32 to vector<8x128xf32>
    %876 = arith.addf %875, %874 : vector<8x128xf32>
    %877 = arith.divf %875, %876 : vector<8x128xf32>
    %c0_405 = arith.constant 0 : index
    %c0_406 = arith.constant 0 : index
    %878 = vector.load %arg23[%c0_405, %c0_406] : memref<8x128xf32, #tpu.memory_space<vmem>>, vector<8x128xf32>
    %879 = arith.mulf %869, %878 : vector<8x128xf32>
    %880 = arith.mulf %863, %871 : vector<8x128xf32>
    %881 = arith.addf %879, %880 : vector<8x128xf32>
    %882 = math.tanh %881 : vector<8x128xf32>
    %883 = arith.mulf %877, %882 : vector<8x128xf32>
    %c0_407 = arith.constant 0 : index
    %c0_408 = arith.constant 0 : index
    %884 = vector.load %arg23[%c0_407, %c0_408] : memref<8x128xf32, #tpu.memory_space<vmem>>, vector<8x128xf32>
    tpu.vector_store %arg23[%c0_407, %c0_408], %881 {strides = array<i32>} : memref<8x128xf32, #tpu.memory_space<vmem>>, vector<8x128xf32>,
    %c0_409 = arith.constant 0 : index
    %c0_410 = arith.constant 0 : index
    %885 = vector.load %arg22[%c0_409, %c0_410] : memref<8x128xf32, #tpu.memory_space<vmem>>, vector<8x128xf32>
    tpu.vector_store %arg22[%c0_409, %c0_410], %883 {strides = array<i32>} : memref<8x128xf32, #tpu.memory_space<vmem>>, vector<8x128xf32>,
    %886 = arith.index_cast %852 : i32 to index
    %c0_411 = arith.constant 0 : index
    %887 = vector.load %arg21[%886, %c0_411] : memref<64x128xf32, #tpu.memory_space<vmem>>, vector<8x128xf32>
    tpu.vector_store %arg21[%886, %c0_411], %883 {strides = array<i32>} : memref<64x128xf32, #tpu.memory_space<vmem>>, vector<8x128xf32>,
    %c7_i32_412 = arith.constant 7 : i32
    %c8_i32_413 = arith.constant 8 : i32
    %888 = arith.muli %c7_i32_412, %c8_i32_413 : i32
    %889 = tpu.assume_multiple %888, 8 : i32
    %890 = arith.index_cast %889 : i32 to index
    %c0_414 = arith.constant 0 : index
    %891 = vector.load %arg20[%890, %c0_414] : memref<64x512xf32, #tpu.memory_space<vmem>>, vector<8x512xf32>
    %c0_415 = arith.constant 0 : index
    %c0_416 = arith.constant 0 : index
    %892 = vector.load %arg22[%c0_415, %c0_416] : memref<8x128xf32, #tpu.memory_space<vmem>>, vector<8x128xf32>
    %cst_417 = arith.constant dense<0.000000e+00> : vector<8x512xf32>
    %893 = tpu.matmul %892, %628, %cst_417 {dimension_numbers = #tpu.dot_dimension_numbers<[1], [0], [0], [1], [0, 0, 1, 1], [], []>} : vector<8x128xf32>, vector<128x512xf32>, vector<8x512xf32> -> vector<8x512xf32>
    %894 = arith.addf %891, %893 : vector<8x512xf32>
    %895 = vector.extract_strided_slice %894 {offsets = [0, 0], sizes = [8, 128], strides = [1, 1]} : vector<8x512xf32> to vector<8x128xf32>
    %896 = arith.negf %895 : vector<8x128xf32>
    %897 = math.exp %896 : vector<8x128xf32>
    %cst_418 = arith.constant 1.000000e+00 : f32
    %898 = vector.broadcast %cst_418 : f32 to vector<8x128xf32>
    %899 = arith.addf %898, %897 : vector<8x128xf32>
    %900 = arith.divf %898, %899 : vector<8x128xf32>
    %901 = vector.extract_strided_slice %894 {offsets = [0, 128], sizes = [8, 128], strides = [1, 1]} : vector<8x512xf32> to vector<8x128xf32>
    %902 = arith.negf %901 : vector<8x128xf32>
    %903 = math.exp %902 : vector<8x128xf32>
    %cst_419 = arith.constant 1.000000e+00 : f32
    %904 = vector.broadcast %cst_419 : f32 to vector<8x128xf32>
    %905 = arith.addf %904, %903 : vector<8x128xf32>
    %906 = arith.divf %904, %905 : vector<8x128xf32>
    %907 = vector.extract_strided_slice %894 {offsets = [0, 256], sizes = [8, 128], strides = [1, 1]} : vector<8x512xf32> to vector<8x128xf32>
    %908 = math.tanh %907 : vector<8x128xf32>
    %909 = vector.extract_strided_slice %894 {offsets = [0, 384], sizes = [8, 128], strides = [1, 1]} : vector<8x512xf32> to vector<8x128xf32>
    %910 = arith.negf %909 : vector<8x128xf32>
    %911 = math.exp %910 : vector<8x128xf32>
    %cst_420 = arith.constant 1.000000e+00 : f32
    %912 = vector.broadcast %cst_420 : f32 to vector<8x128xf32>
    %913 = arith.addf %912, %911 : vector<8x128xf32>
    %914 = arith.divf %912, %913 : vector<8x128xf32>
    %c0_421 = arith.constant 0 : index
    %c0_422 = arith.constant 0 : index
    %915 = vector.load %arg23[%c0_421, %c0_422] : memref<8x128xf32, #tpu.memory_space<vmem>>, vector<8x128xf32>
    %916 = arith.mulf %906, %915 : vector<8x128xf32>
    %917 = arith.mulf %900, %908 : vector<8x128xf32>
    %918 = arith.addf %916, %917 : vector<8x128xf32>
    %919 = math.tanh %918 : vector<8x128xf32>
    %920 = arith.mulf %914, %919 : vector<8x128xf32>
    %c0_423 = arith.constant 0 : index
    %c0_424 = arith.constant 0 : index
    %921 = vector.load %arg23[%c0_423, %c0_424] : memref<8x128xf32, #tpu.memory_space<vmem>>, vector<8x128xf32>
    tpu.vector_store %arg23[%c0_423, %c0_424], %918 {strides = array<i32>} : memref<8x128xf32, #tpu.memory_space<vmem>>, vector<8x128xf32>,
    %c0_425 = arith.constant 0 : index
    %c0_426 = arith.constant 0 : index
    %922 = vector.load %arg22[%c0_425, %c0_426] : memref<8x128xf32, #tpu.memory_space<vmem>>, vector<8x128xf32>
    tpu.vector_store %arg22[%c0_425, %c0_426], %920 {strides = array<i32>} : memref<8x128xf32, #tpu.memory_space<vmem>>, vector<8x128xf32>,
    %923 = arith.index_cast %889 : i32 to index
    %c0_427 = arith.constant 0 : index
    %924 = vector.load %arg21[%923, %c0_427] : memref<64x128xf32, #tpu.memory_space<vmem>>, vector<8x128xf32>
    tpu.vector_store %arg21[%923, %c0_427], %920 {strides = array<i32>} : memref<64x128xf32, #tpu.memory_space<vmem>>, vector<8x128xf32>,
    %c8_i32_428 = arith.constant 8 : i32
    %c0_429 = arith.constant 0 : index
    %c0_430 = arith.constant 0 : index
    %925 = vector.load %arg21[%c0_429, %c0_430] : memref<64x128xf32, #tpu.memory_space<vmem>>, vector<64x128xf32>
    %c0_431 = arith.constant 0 : index
    %c0_432 = arith.constant 0 : index
    %926 = vector.load %arg10[%c0_431, %c0_432] : memref<128x512xf32, #tpu.memory_space<vmem>>, vector<128x512xf32>
    %cst_433 = arith.constant dense<0.000000e+00> : vector<64x512xf32>
    %927 = tpu.matmul %925, %926, %cst_433 {dimension_numbers = #tpu.dot_dimension_numbers<[1], [0], [0], [1], [0, 0, 1, 1], [], []>} : vector<64x128xf32>, vector<128x512xf32>, vector<64x512xf32> -> vector<64x512xf32>
    %c0_434 = arith.constant 0 : index
    %c0_435 = arith.constant 0 : index
    %928 = vector.load %arg12[%c0_434, %c0_435] : memref<1x512xf32, #tpu.memory_space<vmem>>, vector<1x512xf32>
    %929 = vector.broadcast %928 : vector<1x512xf32> to vector<64x512xf32>
    %930 = arith.addf %927, %929 : vector<64x512xf32>
    %c0_436 = arith.constant 0 : index
    %c0_437 = arith.constant 0 : index
    %931 = vector.load %arg20[%c0_436, %c0_437] : memref<64x512xf32, #tpu.memory_space<vmem>>, vector<64x512xf32>
    tpu.vector_store %arg20[%c0_436, %c0_437], %930 {strides = array<i32>} : memref<64x512xf32, #tpu.memory_space<vmem>>, vector<64x512xf32>,
    %cst_438 = arith.constant 0.000000e+00 : f32
    %932 = vector.broadcast %cst_438 : f32 to vector<8x128xf32>
    %c0_439 = arith.constant 0 : index
    %c0_440 = arith.constant 0 : index
    %933 = vector.load %arg22[%c0_439, %c0_440] : memref<8x128xf32, #tpu.memory_space<vmem>>, vector<8x128xf32>
    tpu.vector_store %arg22[%c0_439, %c0_440], %932 {strides = array<i32>} : memref<8x128xf32, #tpu.memory_space<vmem>>, vector<8x128xf32>,
    %cst_441 = arith.constant 0.000000e+00 : f32
    %934 = vector.broadcast %cst_441 : f32 to vector<8x128xf32>
    %c0_442 = arith.constant 0 : index
    %c0_443 = arith.constant 0 : index
    %935 = vector.load %arg23[%c0_442, %c0_443] : memref<8x128xf32, #tpu.memory_space<vmem>>, vector<8x128xf32>
    tpu.vector_store %arg23[%c0_442, %c0_443], %934 {strides = array<i32>} : memref<8x128xf32, #tpu.memory_space<vmem>>, vector<8x128xf32>,
    %c0_444 = arith.constant 0 : index
    %c0_445 = arith.constant 0 : index
    %936 = vector.load %arg11[%c0_444, %c0_445] : memref<128x512xf32, #tpu.memory_space<vmem>>, vector<128x512xf32>
    %c0_i32_446 = arith.constant 0 : i32
    %c8_i32_447 = arith.constant 8 : i32
    %937 = arith.muli %c0_i32_446, %c8_i32_447 : i32
    %938 = tpu.assume_multiple %937, 8 : i32
    %939 = arith.index_cast %938 : i32 to index
    %c0_448 = arith.constant 0 : index
    %940 = vector.load %arg20[%939, %c0_448] : memref<64x512xf32, #tpu.memory_space<vmem>>, vector<8x512xf32>
    %c0_449 = arith.constant 0 : index
    %c0_450 = arith.constant 0 : index
    %941 = vector.load %arg22[%c0_449, %c0_450] : memref<8x128xf32, #tpu.memory_space<vmem>>, vector<8x128xf32>
    %cst_451 = arith.constant dense<0.000000e+00> : vector<8x512xf32>
    %942 = tpu.matmul %941, %936, %cst_451 {dimension_numbers = #tpu.dot_dimension_numbers<[1], [0], [0], [1], [0, 0, 1, 1], [], []>} : vector<8x128xf32>, vector<128x512xf32>, vector<8x512xf32> -> vector<8x512xf32>
    %943 = arith.addf %940, %942 : vector<8x512xf32>
    %944 = vector.extract_strided_slice %943 {offsets = [0, 0], sizes = [8, 128], strides = [1, 1]} : vector<8x512xf32> to vector<8x128xf32>
    %945 = arith.negf %944 : vector<8x128xf32>
    %946 = math.exp %945 : vector<8x128xf32>
    %cst_452 = arith.constant 1.000000e+00 : f32
    %947 = vector.broadcast %cst_452 : f32 to vector<8x128xf32>
    %948 = arith.addf %947, %946 : vector<8x128xf32>
    %949 = arith.divf %947, %948 : vector<8x128xf32>
    %950 = vector.extract_strided_slice %943 {offsets = [0, 128], sizes = [8, 128], strides = [1, 1]} : vector<8x512xf32> to vector<8x128xf32>
    %951 = arith.negf %950 : vector<8x128xf32>
    %952 = math.exp %951 : vector<8x128xf32>
    %cst_453 = arith.constant 1.000000e+00 : f32
    %953 = vector.broadcast %cst_453 : f32 to vector<8x128xf32>
    %954 = arith.addf %953, %952 : vector<8x128xf32>
    %955 = arith.divf %953, %954 : vector<8x128xf32>
    %956 = vector.extract_strided_slice %943 {offsets = [0, 256], sizes = [8, 128], strides = [1, 1]} : vector<8x512xf32> to vector<8x128xf32>
    %957 = math.tanh %956 : vector<8x128xf32>
    %958 = vector.extract_strided_slice %943 {offsets = [0, 384], sizes = [8, 128], strides = [1, 1]} : vector<8x512xf32> to vector<8x128xf32>
    %959 = arith.negf %958 : vector<8x128xf32>
    %960 = math.exp %959 : vector<8x128xf32>
    %cst_454 = arith.constant 1.000000e+00 : f32
    %961 = vector.broadcast %cst_454 : f32 to vector<8x128xf32>
    %962 = arith.addf %961, %960 : vector<8x128xf32>
    %963 = arith.divf %961, %962 : vector<8x128xf32>
    %c0_455 = arith.constant 0 : index
    %c0_456 = arith.constant 0 : index
    %964 = vector.load %arg23[%c0_455, %c0_456] : memref<8x128xf32, #tpu.memory_space<vmem>>, vector<8x128xf32>
    %965 = arith.mulf %955, %964 : vector<8x128xf32>
    %966 = arith.mulf %949, %957 : vector<8x128xf32>
    %967 = arith.addf %965, %966 : vector<8x128xf32>
    %968 = math.tanh %967 : vector<8x128xf32>
    %969 = arith.mulf %963, %968 : vector<8x128xf32>
    %c0_457 = arith.constant 0 : index
    %c0_458 = arith.constant 0 : index
    %970 = vector.load %arg23[%c0_457, %c0_458] : memref<8x128xf32, #tpu.memory_space<vmem>>, vector<8x128xf32>
    tpu.vector_store %arg23[%c0_457, %c0_458], %967 {strides = array<i32>} : memref<8x128xf32, #tpu.memory_space<vmem>>, vector<8x128xf32>,
    %c0_459 = arith.constant 0 : index
    %c0_460 = arith.constant 0 : index
    %971 = vector.load %arg22[%c0_459, %c0_460] : memref<8x128xf32, #tpu.memory_space<vmem>>, vector<8x128xf32>
    tpu.vector_store %arg22[%c0_459, %c0_460], %969 {strides = array<i32>} : memref<8x128xf32, #tpu.memory_space<vmem>>, vector<8x128xf32>,
    %c1_i32_461 = arith.constant 1 : i32
    %c8_i32_462 = arith.constant 8 : i32
    %972 = arith.muli %c1_i32_461, %c8_i32_462 : i32
    %973 = tpu.assume_multiple %972, 8 : i32
    %974 = arith.index_cast %973 : i32 to index
    %c0_463 = arith.constant 0 : index
    %975 = vector.load %arg20[%974, %c0_463] : memref<64x512xf32, #tpu.memory_space<vmem>>, vector<8x512xf32>
    %c0_464 = arith.constant 0 : index
    %c0_465 = arith.constant 0 : index
    %976 = vector.load %arg22[%c0_464, %c0_465] : memref<8x128xf32, #tpu.memory_space<vmem>>, vector<8x128xf32>
    %cst_466 = arith.constant dense<0.000000e+00> : vector<8x512xf32>
    %977 = tpu.matmul %976, %936, %cst_466 {dimension_numbers = #tpu.dot_dimension_numbers<[1], [0], [0], [1], [0, 0, 1, 1], [], []>} : vector<8x128xf32>, vector<128x512xf32>, vector<8x512xf32> -> vector<8x512xf32>
    %978 = arith.addf %975, %977 : vector<8x512xf32>
    %979 = vector.extract_strided_slice %978 {offsets = [0, 0], sizes = [8, 128], strides = [1, 1]} : vector<8x512xf32> to vector<8x128xf32>
    %980 = arith.negf %979 : vector<8x128xf32>
    %981 = math.exp %980 : vector<8x128xf32>
    %cst_467 = arith.constant 1.000000e+00 : f32
    %982 = vector.broadcast %cst_467 : f32 to vector<8x128xf32>
    %983 = arith.addf %982, %981 : vector<8x128xf32>
    %984 = arith.divf %982, %983 : vector<8x128xf32>
    %985 = vector.extract_strided_slice %978 {offsets = [0, 128], sizes = [8, 128], strides = [1, 1]} : vector<8x512xf32> to vector<8x128xf32>
    %986 = arith.negf %985 : vector<8x128xf32>
    %987 = math.exp %986 : vector<8x128xf32>
    %cst_468 = arith.constant 1.000000e+00 : f32
    %988 = vector.broadcast %cst_468 : f32 to vector<8x128xf32>
    %989 = arith.addf %988, %987 : vector<8x128xf32>
    %990 = arith.divf %988, %989 : vector<8x128xf32>
    %991 = vector.extract_strided_slice %978 {offsets = [0, 256], sizes = [8, 128], strides = [1, 1]} : vector<8x512xf32> to vector<8x128xf32>
    %992 = math.tanh %991 : vector<8x128xf32>
    %993 = vector.extract_strided_slice %978 {offsets = [0, 384], sizes = [8, 128], strides = [1, 1]} : vector<8x512xf32> to vector<8x128xf32>
    %994 = arith.negf %993 : vector<8x128xf32>
    %995 = math.exp %994 : vector<8x128xf32>
    %cst_469 = arith.constant 1.000000e+00 : f32
    %996 = vector.broadcast %cst_469 : f32 to vector<8x128xf32>
    %997 = arith.addf %996, %995 : vector<8x128xf32>
    %998 = arith.divf %996, %997 : vector<8x128xf32>
    %c0_470 = arith.constant 0 : index
    %c0_471 = arith.constant 0 : index
    %999 = vector.load %arg23[%c0_470, %c0_471] : memref<8x128xf32, #tpu.memory_space<vmem>>, vector<8x128xf32>
    %1000 = arith.mulf %990, %999 : vector<8x128xf32>
    %1001 = arith.mulf %984, %992 : vector<8x128xf32>
    %1002 = arith.addf %1000, %1001 : vector<8x128xf32>
    %1003 = math.tanh %1002 : vector<8x128xf32>
    %1004 = arith.mulf %998, %1003 : vector<8x128xf32>
    %c0_472 = arith.constant 0 : index
    %c0_473 = arith.constant 0 : index
    %1005 = vector.load %arg23[%c0_472, %c0_473] : memref<8x128xf32, #tpu.memory_space<vmem>>, vector<8x128xf32>
    tpu.vector_store %arg23[%c0_472, %c0_473], %1002 {strides = array<i32>} : memref<8x128xf32, #tpu.memory_space<vmem>>, vector<8x128xf32>,
    %c0_474 = arith.constant 0 : index
    %c0_475 = arith.constant 0 : index
    %1006 = vector.load %arg22[%c0_474, %c0_475] : memref<8x128xf32, #tpu.memory_space<vmem>>, vector<8x128xf32>
    tpu.vector_store %arg22[%c0_474, %c0_475], %1004 {strides = array<i32>} : memref<8x128xf32, #tpu.memory_space<vmem>>, vector<8x128xf32>,
    %c2_i32_476 = arith.constant 2 : i32
    %c8_i32_477 = arith.constant 8 : i32
    %1007 = arith.muli %c2_i32_476, %c8_i32_477 : i32
    %1008 = tpu.assume_multiple %1007, 8 : i32
    %1009 = arith.index_cast %1008 : i32 to index
    %c0_478 = arith.constant 0 : index
    %1010 = vector.load %arg20[%1009, %c0_478] : memref<64x512xf32, #tpu.memory_space<vmem>>, vector<8x512xf32>
    %c0_479 = arith.constant 0 : index
    %c0_480 = arith.constant 0 : index
    %1011 = vector.load %arg22[%c0_479, %c0_480] : memref<8x128xf32, #tpu.memory_space<vmem>>, vector<8x128xf32>
    %cst_481 = arith.constant dense<0.000000e+00> : vector<8x512xf32>
    %1012 = tpu.matmul %1011, %936, %cst_481 {dimension_numbers = #tpu.dot_dimension_numbers<[1], [0], [0], [1], [0, 0, 1, 1], [], []>} : vector<8x128xf32>, vector<128x512xf32>, vector<8x512xf32> -> vector<8x512xf32>
    %1013 = arith.addf %1010, %1012 : vector<8x512xf32>
    %1014 = vector.extract_strided_slice %1013 {offsets = [0, 0], sizes = [8, 128], strides = [1, 1]} : vector<8x512xf32> to vector<8x128xf32>
    %1015 = arith.negf %1014 : vector<8x128xf32>
    %1016 = math.exp %1015 : vector<8x128xf32>
    %cst_482 = arith.constant 1.000000e+00 : f32
    %1017 = vector.broadcast %cst_482 : f32 to vector<8x128xf32>
    %1018 = arith.addf %1017, %1016 : vector<8x128xf32>
    %1019 = arith.divf %1017, %1018 : vector<8x128xf32>
    %1020 = vector.extract_strided_slice %1013 {offsets = [0, 128], sizes = [8, 128], strides = [1, 1]} : vector<8x512xf32> to vector<8x128xf32>
    %1021 = arith.negf %1020 : vector<8x128xf32>
    %1022 = math.exp %1021 : vector<8x128xf32>
    %cst_483 = arith.constant 1.000000e+00 : f32
    %1023 = vector.broadcast %cst_483 : f32 to vector<8x128xf32>
    %1024 = arith.addf %1023, %1022 : vector<8x128xf32>
    %1025 = arith.divf %1023, %1024 : vector<8x128xf32>
    %1026 = vector.extract_strided_slice %1013 {offsets = [0, 256], sizes = [8, 128], strides = [1, 1]} : vector<8x512xf32> to vector<8x128xf32>
    %1027 = math.tanh %1026 : vector<8x128xf32>
    %1028 = vector.extract_strided_slice %1013 {offsets = [0, 384], sizes = [8, 128], strides = [1, 1]} : vector<8x512xf32> to vector<8x128xf32>
    %1029 = arith.negf %1028 : vector<8x128xf32>
    %1030 = math.exp %1029 : vector<8x128xf32>
    %cst_484 = arith.constant 1.000000e+00 : f32
    %1031 = vector.broadcast %cst_484 : f32 to vector<8x128xf32>
    %1032 = arith.addf %1031, %1030 : vector<8x128xf32>
    %1033 = arith.divf %1031, %1032 : vector<8x128xf32>
    %c0_485 = arith.constant 0 : index
    %c0_486 = arith.constant 0 : index
    %1034 = vector.load %arg23[%c0_485, %c0_486] : memref<8x128xf32, #tpu.memory_space<vmem>>, vector<8x128xf32>
    %1035 = arith.mulf %1025, %1034 : vector<8x128xf32>
    %1036 = arith.mulf %1019, %1027 : vector<8x128xf32>
    %1037 = arith.addf %1035, %1036 : vector<8x128xf32>
    %1038 = math.tanh %1037 : vector<8x128xf32>
    %1039 = arith.mulf %1033, %1038 : vector<8x128xf32>
    %c0_487 = arith.constant 0 : index
    %c0_488 = arith.constant 0 : index
    %1040 = vector.load %arg23[%c0_487, %c0_488] : memref<8x128xf32, #tpu.memory_space<vmem>>, vector<8x128xf32>
    tpu.vector_store %arg23[%c0_487, %c0_488], %1037 {strides = array<i32>} : memref<8x128xf32, #tpu.memory_space<vmem>>, vector<8x128xf32>,
    %c0_489 = arith.constant 0 : index
    %c0_490 = arith.constant 0 : index
    %1041 = vector.load %arg22[%c0_489, %c0_490] : memref<8x128xf32, #tpu.memory_space<vmem>>, vector<8x128xf32>
    tpu.vector_store %arg22[%c0_489, %c0_490], %1039 {strides = array<i32>} : memref<8x128xf32, #tpu.memory_space<vmem>>, vector<8x128xf32>,
    %c3_i32_491 = arith.constant 3 : i32
    %c8_i32_492 = arith.constant 8 : i32
    %1042 = arith.muli %c3_i32_491, %c8_i32_492 : i32
    %1043 = tpu.assume_multiple %1042, 8 : i32
    %1044 = arith.index_cast %1043 : i32 to index
    %c0_493 = arith.constant 0 : index
    %1045 = vector.load %arg20[%1044, %c0_493] : memref<64x512xf32, #tpu.memory_space<vmem>>, vector<8x512xf32>
    %c0_494 = arith.constant 0 : index
    %c0_495 = arith.constant 0 : index
    %1046 = vector.load %arg22[%c0_494, %c0_495] : memref<8x128xf32, #tpu.memory_space<vmem>>, vector<8x128xf32>
    %cst_496 = arith.constant dense<0.000000e+00> : vector<8x512xf32>
    %1047 = tpu.matmul %1046, %936, %cst_496 {dimension_numbers = #tpu.dot_dimension_numbers<[1], [0], [0], [1], [0, 0, 1, 1], [], []>} : vector<8x128xf32>, vector<128x512xf32>, vector<8x512xf32> -> vector<8x512xf32>
    %1048 = arith.addf %1045, %1047 : vector<8x512xf32>
    %1049 = vector.extract_strided_slice %1048 {offsets = [0, 0], sizes = [8, 128], strides = [1, 1]} : vector<8x512xf32> to vector<8x128xf32>
    %1050 = arith.negf %1049 : vector<8x128xf32>
    %1051 = math.exp %1050 : vector<8x128xf32>
    %cst_497 = arith.constant 1.000000e+00 : f32
    %1052 = vector.broadcast %cst_497 : f32 to vector<8x128xf32>
    %1053 = arith.addf %1052, %1051 : vector<8x128xf32>
    %1054 = arith.divf %1052, %1053 : vector<8x128xf32>
    %1055 = vector.extract_strided_slice %1048 {offsets = [0, 128], sizes = [8, 128], strides = [1, 1]} : vector<8x512xf32> to vector<8x128xf32>
    %1056 = arith.negf %1055 : vector<8x128xf32>
    %1057 = math.exp %1056 : vector<8x128xf32>
    %cst_498 = arith.constant 1.000000e+00 : f32
    %1058 = vector.broadcast %cst_498 : f32 to vector<8x128xf32>
    %1059 = arith.addf %1058, %1057 : vector<8x128xf32>
    %1060 = arith.divf %1058, %1059 : vector<8x128xf32>
    %1061 = vector.extract_strided_slice %1048 {offsets = [0, 256], sizes = [8, 128], strides = [1, 1]} : vector<8x512xf32> to vector<8x128xf32>
    %1062 = math.tanh %1061 : vector<8x128xf32>
    %1063 = vector.extract_strided_slice %1048 {offsets = [0, 384], sizes = [8, 128], strides = [1, 1]} : vector<8x512xf32> to vector<8x128xf32>
    %1064 = arith.negf %1063 : vector<8x128xf32>
    %1065 = math.exp %1064 : vector<8x128xf32>
    %cst_499 = arith.constant 1.000000e+00 : f32
    %1066 = vector.broadcast %cst_499 : f32 to vector<8x128xf32>
    %1067 = arith.addf %1066, %1065 : vector<8x128xf32>
    %1068 = arith.divf %1066, %1067 : vector<8x128xf32>
    %c0_500 = arith.constant 0 : index
    %c0_501 = arith.constant 0 : index
    %1069 = vector.load %arg23[%c0_500, %c0_501] : memref<8x128xf32, #tpu.memory_space<vmem>>, vector<8x128xf32>
    %1070 = arith.mulf %1060, %1069 : vector<8x128xf32>
    %1071 = arith.mulf %1054, %1062 : vector<8x128xf32>
    %1072 = arith.addf %1070, %1071 : vector<8x128xf32>
    %1073 = math.tanh %1072 : vector<8x128xf32>
    %1074 = arith.mulf %1068, %1073 : vector<8x128xf32>
    %c0_502 = arith.constant 0 : index
    %c0_503 = arith.constant 0 : index
    %1075 = vector.load %arg23[%c0_502, %c0_503] : memref<8x128xf32, #tpu.memory_space<vmem>>, vector<8x128xf32>
    tpu.vector_store %arg23[%c0_502, %c0_503], %1072 {strides = array<i32>} : memref<8x128xf32, #tpu.memory_space<vmem>>, vector<8x128xf32>,
    %c0_504 = arith.constant 0 : index
    %c0_505 = arith.constant 0 : index
    %1076 = vector.load %arg22[%c0_504, %c0_505] : memref<8x128xf32, #tpu.memory_space<vmem>>, vector<8x128xf32>
    tpu.vector_store %arg22[%c0_504, %c0_505], %1074 {strides = array<i32>} : memref<8x128xf32, #tpu.memory_space<vmem>>, vector<8x128xf32>,
    %c4_i32_506 = arith.constant 4 : i32
    %c8_i32_507 = arith.constant 8 : i32
    %1077 = arith.muli %c4_i32_506, %c8_i32_507 : i32
    %1078 = tpu.assume_multiple %1077, 8 : i32
    %1079 = arith.index_cast %1078 : i32 to index
    %c0_508 = arith.constant 0 : index
    %1080 = vector.load %arg20[%1079, %c0_508] : memref<64x512xf32, #tpu.memory_space<vmem>>, vector<8x512xf32>
    %c0_509 = arith.constant 0 : index
    %c0_510 = arith.constant 0 : index
    %1081 = vector.load %arg22[%c0_509, %c0_510] : memref<8x128xf32, #tpu.memory_space<vmem>>, vector<8x128xf32>
    %cst_511 = arith.constant dense<0.000000e+00> : vector<8x512xf32>
    %1082 = tpu.matmul %1081, %936, %cst_511 {dimension_numbers = #tpu.dot_dimension_numbers<[1], [0], [0], [1], [0, 0, 1, 1], [], []>} : vector<8x128xf32>, vector<128x512xf32>, vector<8x512xf32> -> vector<8x512xf32>
    %1083 = arith.addf %1080, %1082 : vector<8x512xf32>
    %1084 = vector.extract_strided_slice %1083 {offsets = [0, 0], sizes = [8, 128], strides = [1, 1]} : vector<8x512xf32> to vector<8x128xf32>
    %1085 = arith.negf %1084 : vector<8x128xf32>
    %1086 = math.exp %1085 : vector<8x128xf32>
    %cst_512 = arith.constant 1.000000e+00 : f32
    %1087 = vector.broadcast %cst_512 : f32 to vector<8x128xf32>
    %1088 = arith.addf %1087, %1086 : vector<8x128xf32>
    %1089 = arith.divf %1087, %1088 : vector<8x128xf32>
    %1090 = vector.extract_strided_slice %1083 {offsets = [0, 128], sizes = [8, 128], strides = [1, 1]} : vector<8x512xf32> to vector<8x128xf32>
    %1091 = arith.negf %1090 : vector<8x128xf32>
    %1092 = math.exp %1091 : vector<8x128xf32>
    %cst_513 = arith.constant 1.000000e+00 : f32
    %1093 = vector.broadcast %cst_513 : f32 to vector<8x128xf32>
    %1094 = arith.addf %1093, %1092 : vector<8x128xf32>
    %1095 = arith.divf %1093, %1094 : vector<8x128xf32>
    %1096 = vector.extract_strided_slice %1083 {offsets = [0, 256], sizes = [8, 128], strides = [1, 1]} : vector<8x512xf32> to vector<8x128xf32>
    %1097 = math.tanh %1096 : vector<8x128xf32>
    %1098 = vector.extract_strided_slice %1083 {offsets = [0, 384], sizes = [8, 128], strides = [1, 1]} : vector<8x512xf32> to vector<8x128xf32>
    %1099 = arith.negf %1098 : vector<8x128xf32>
    %1100 = math.exp %1099 : vector<8x128xf32>
    %cst_514 = arith.constant 1.000000e+00 : f32
    %1101 = vector.broadcast %cst_514 : f32 to vector<8x128xf32>
    %1102 = arith.addf %1101, %1100 : vector<8x128xf32>
    %1103 = arith.divf %1101, %1102 : vector<8x128xf32>
    %c0_515 = arith.constant 0 : index
    %c0_516 = arith.constant 0 : index
    %1104 = vector.load %arg23[%c0_515, %c0_516] : memref<8x128xf32, #tpu.memory_space<vmem>>, vector<8x128xf32>
    %1105 = arith.mulf %1095, %1104 : vector<8x128xf32>
    %1106 = arith.mulf %1089, %1097 : vector<8x128xf32>
    %1107 = arith.addf %1105, %1106 : vector<8x128xf32>
    %1108 = math.tanh %1107 : vector<8x128xf32>
    %1109 = arith.mulf %1103, %1108 : vector<8x128xf32>
    %c0_517 = arith.constant 0 : index
    %c0_518 = arith.constant 0 : index
    %1110 = vector.load %arg23[%c0_517, %c0_518] : memref<8x128xf32, #tpu.memory_space<vmem>>, vector<8x128xf32>
    tpu.vector_store %arg23[%c0_517, %c0_518], %1107 {strides = array<i32>} : memref<8x128xf32, #tpu.memory_space<vmem>>, vector<8x128xf32>,
    %c0_519 = arith.constant 0 : index
    %c0_520 = arith.constant 0 : index
    %1111 = vector.load %arg22[%c0_519, %c0_520] : memref<8x128xf32, #tpu.memory_space<vmem>>, vector<8x128xf32>
    tpu.vector_store %arg22[%c0_519, %c0_520], %1109 {strides = array<i32>} : memref<8x128xf32, #tpu.memory_space<vmem>>, vector<8x128xf32>,
    %c5_i32_521 = arith.constant 5 : i32
    %c8_i32_522 = arith.constant 8 : i32
    %1112 = arith.muli %c5_i32_521, %c8_i32_522 : i32
    %1113 = tpu.assume_multiple %1112, 8 : i32
    %1114 = arith.index_cast %1113 : i32 to index
    %c0_523 = arith.constant 0 : index
    %1115 = vector.load %arg20[%1114, %c0_523] : memref<64x512xf32, #tpu.memory_space<vmem>>, vector<8x512xf32>
    %c0_524 = arith.constant 0 : index
    %c0_525 = arith.constant 0 : index
    %1116 = vector.load %arg22[%c0_524, %c0_525] : memref<8x128xf32, #tpu.memory_space<vmem>>, vector<8x128xf32>
    %cst_526 = arith.constant dense<0.000000e+00> : vector<8x512xf32>
    %1117 = tpu.matmul %1116, %936, %cst_526 {dimension_numbers = #tpu.dot_dimension_numbers<[1], [0], [0], [1], [0, 0, 1, 1], [], []>} : vector<8x128xf32>, vector<128x512xf32>, vector<8x512xf32> -> vector<8x512xf32>
    %1118 = arith.addf %1115, %1117 : vector<8x512xf32>
    %1119 = vector.extract_strided_slice %1118 {offsets = [0, 0], sizes = [8, 128], strides = [1, 1]} : vector<8x512xf32> to vector<8x128xf32>
    %1120 = arith.negf %1119 : vector<8x128xf32>
    %1121 = math.exp %1120 : vector<8x128xf32>
    %cst_527 = arith.constant 1.000000e+00 : f32
    %1122 = vector.broadcast %cst_527 : f32 to vector<8x128xf32>
    %1123 = arith.addf %1122, %1121 : vector<8x128xf32>
    %1124 = arith.divf %1122, %1123 : vector<8x128xf32>
    %1125 = vector.extract_strided_slice %1118 {offsets = [0, 128], sizes = [8, 128], strides = [1, 1]} : vector<8x512xf32> to vector<8x128xf32>
    %1126 = arith.negf %1125 : vector<8x128xf32>
    %1127 = math.exp %1126 : vector<8x128xf32>
    %cst_528 = arith.constant 1.000000e+00 : f32
    %1128 = vector.broadcast %cst_528 : f32 to vector<8x128xf32>
    %1129 = arith.addf %1128, %1127 : vector<8x128xf32>
    %1130 = arith.divf %1128, %1129 : vector<8x128xf32>
    %1131 = vector.extract_strided_slice %1118 {offsets = [0, 256], sizes = [8, 128], strides = [1, 1]} : vector<8x512xf32> to vector<8x128xf32>
    %1132 = math.tanh %1131 : vector<8x128xf32>
    %1133 = vector.extract_strided_slice %1118 {offsets = [0, 384], sizes = [8, 128], strides = [1, 1]} : vector<8x512xf32> to vector<8x128xf32>
    %1134 = arith.negf %1133 : vector<8x128xf32>
    %1135 = math.exp %1134 : vector<8x128xf32>
    %cst_529 = arith.constant 1.000000e+00 : f32
    %1136 = vector.broadcast %cst_529 : f32 to vector<8x128xf32>
    %1137 = arith.addf %1136, %1135 : vector<8x128xf32>
    %1138 = arith.divf %1136, %1137 : vector<8x128xf32>
    %c0_530 = arith.constant 0 : index
    %c0_531 = arith.constant 0 : index
    %1139 = vector.load %arg23[%c0_530, %c0_531] : memref<8x128xf32, #tpu.memory_space<vmem>>, vector<8x128xf32>
    %1140 = arith.mulf %1130, %1139 : vector<8x128xf32>
    %1141 = arith.mulf %1124, %1132 : vector<8x128xf32>
    %1142 = arith.addf %1140, %1141 : vector<8x128xf32>
    %1143 = math.tanh %1142 : vector<8x128xf32>
    %1144 = arith.mulf %1138, %1143 : vector<8x128xf32>
    %c0_532 = arith.constant 0 : index
    %c0_533 = arith.constant 0 : index
    %1145 = vector.load %arg23[%c0_532, %c0_533] : memref<8x128xf32, #tpu.memory_space<vmem>>, vector<8x128xf32>
    tpu.vector_store %arg23[%c0_532, %c0_533], %1142 {strides = array<i32>} : memref<8x128xf32, #tpu.memory_space<vmem>>, vector<8x128xf32>,
    %c0_534 = arith.constant 0 : index
    %c0_535 = arith.constant 0 : index
    %1146 = vector.load %arg22[%c0_534, %c0_535] : memref<8x128xf32, #tpu.memory_space<vmem>>, vector<8x128xf32>
    tpu.vector_store %arg22[%c0_534, %c0_535], %1144 {strides = array<i32>} : memref<8x128xf32, #tpu.memory_space<vmem>>, vector<8x128xf32>,
    %c6_i32_536 = arith.constant 6 : i32
    %c8_i32_537 = arith.constant 8 : i32
    %1147 = arith.muli %c6_i32_536, %c8_i32_537 : i32
    %1148 = tpu.assume_multiple %1147, 8 : i32
    %1149 = arith.index_cast %1148 : i32 to index
    %c0_538 = arith.constant 0 : index
    %1150 = vector.load %arg20[%1149, %c0_538] : memref<64x512xf32, #tpu.memory_space<vmem>>, vector<8x512xf32>
    %c0_539 = arith.constant 0 : index
    %c0_540 = arith.constant 0 : index
    %1151 = vector.load %arg22[%c0_539, %c0_540] : memref<8x128xf32, #tpu.memory_space<vmem>>, vector<8x128xf32>
    %cst_541 = arith.constant dense<0.000000e+00> : vector<8x512xf32>
    %1152 = tpu.matmul %1151, %936, %cst_541 {dimension_numbers = #tpu.dot_dimension_numbers<[1], [0], [0], [1], [0, 0, 1, 1], [], []>} : vector<8x128xf32>, vector<128x512xf32>, vector<8x512xf32> -> vector<8x512xf32>
    %1153 = arith.addf %1150, %1152 : vector<8x512xf32>
    %1154 = vector.extract_strided_slice %1153 {offsets = [0, 0], sizes = [8, 128], strides = [1, 1]} : vector<8x512xf32> to vector<8x128xf32>
    %1155 = arith.negf %1154 : vector<8x128xf32>
    %1156 = math.exp %1155 : vector<8x128xf32>
    %cst_542 = arith.constant 1.000000e+00 : f32
    %1157 = vector.broadcast %cst_542 : f32 to vector<8x128xf32>
    %1158 = arith.addf %1157, %1156 : vector<8x128xf32>
    %1159 = arith.divf %1157, %1158 : vector<8x128xf32>
    %1160 = vector.extract_strided_slice %1153 {offsets = [0, 128], sizes = [8, 128], strides = [1, 1]} : vector<8x512xf32> to vector<8x128xf32>
    %1161 = arith.negf %1160 : vector<8x128xf32>
    %1162 = math.exp %1161 : vector<8x128xf32>
    %cst_543 = arith.constant 1.000000e+00 : f32
    %1163 = vector.broadcast %cst_543 : f32 to vector<8x128xf32>
    %1164 = arith.addf %1163, %1162 : vector<8x128xf32>
    %1165 = arith.divf %1163, %1164 : vector<8x128xf32>
    %1166 = vector.extract_strided_slice %1153 {offsets = [0, 256], sizes = [8, 128], strides = [1, 1]} : vector<8x512xf32> to vector<8x128xf32>
    %1167 = math.tanh %1166 : vector<8x128xf32>
    %1168 = vector.extract_strided_slice %1153 {offsets = [0, 384], sizes = [8, 128], strides = [1, 1]} : vector<8x512xf32> to vector<8x128xf32>
    %1169 = arith.negf %1168 : vector<8x128xf32>
    %1170 = math.exp %1169 : vector<8x128xf32>
    %cst_544 = arith.constant 1.000000e+00 : f32
    %1171 = vector.broadcast %cst_544 : f32 to vector<8x128xf32>
    %1172 = arith.addf %1171, %1170 : vector<8x128xf32>
    %1173 = arith.divf %1171, %1172 : vector<8x128xf32>
    %c0_545 = arith.constant 0 : index
    %c0_546 = arith.constant 0 : index
    %1174 = vector.load %arg23[%c0_545, %c0_546] : memref<8x128xf32, #tpu.memory_space<vmem>>, vector<8x128xf32>
    %1175 = arith.mulf %1165, %1174 : vector<8x128xf32>
    %1176 = arith.mulf %1159, %1167 : vector<8x128xf32>
    %1177 = arith.addf %1175, %1176 : vector<8x128xf32>
    %1178 = math.tanh %1177 : vector<8x128xf32>
    %1179 = arith.mulf %1173, %1178 : vector<8x128xf32>
    %c0_547 = arith.constant 0 : index
    %c0_548 = arith.constant 0 : index
    %1180 = vector.load %arg23[%c0_547, %c0_548] : memref<8x128xf32, #tpu.memory_space<vmem>>, vector<8x128xf32>
    tpu.vector_store %arg23[%c0_547, %c0_548], %1177 {strides = array<i32>} : memref<8x128xf32, #tpu.memory_space<vmem>>, vector<8x128xf32>,
    %c0_549 = arith.constant 0 : index
    %c0_550 = arith.constant 0 : index
    %1181 = vector.load %arg22[%c0_549, %c0_550] : memref<8x128xf32, #tpu.memory_space<vmem>>, vector<8x128xf32>
    tpu.vector_store %arg22[%c0_549, %c0_550], %1179 {strides = array<i32>} : memref<8x128xf32, #tpu.memory_space<vmem>>, vector<8x128xf32>,
    %c7_i32_551 = arith.constant 7 : i32
    %c8_i32_552 = arith.constant 8 : i32
    %1182 = arith.muli %c7_i32_551, %c8_i32_552 : i32
    %1183 = tpu.assume_multiple %1182, 8 : i32
    %1184 = arith.index_cast %1183 : i32 to index
    %c0_553 = arith.constant 0 : index
    %1185 = vector.load %arg20[%1184, %c0_553] : memref<64x512xf32, #tpu.memory_space<vmem>>, vector<8x512xf32>
    %c0_554 = arith.constant 0 : index
    %c0_555 = arith.constant 0 : index
    %1186 = vector.load %arg22[%c0_554, %c0_555] : memref<8x128xf32, #tpu.memory_space<vmem>>, vector<8x128xf32>
    %cst_556 = arith.constant dense<0.000000e+00> : vector<8x512xf32>
    %1187 = tpu.matmul %1186, %936, %cst_556 {dimension_numbers = #tpu.dot_dimension_numbers<[1], [0], [0], [1], [0, 0, 1, 1], [], []>} : vector<8x128xf32>, vector<128x512xf32>, vector<8x512xf32> -> vector<8x512xf32>
    %1188 = arith.addf %1185, %1187 : vector<8x512xf32>
    %1189 = vector.extract_strided_slice %1188 {offsets = [0, 0], sizes = [8, 128], strides = [1, 1]} : vector<8x512xf32> to vector<8x128xf32>
    %1190 = arith.negf %1189 : vector<8x128xf32>
    %1191 = math.exp %1190 : vector<8x128xf32>
    %cst_557 = arith.constant 1.000000e+00 : f32
    %1192 = vector.broadcast %cst_557 : f32 to vector<8x128xf32>
    %1193 = arith.addf %1192, %1191 : vector<8x128xf32>
    %1194 = arith.divf %1192, %1193 : vector<8x128xf32>
    %1195 = vector.extract_strided_slice %1188 {offsets = [0, 128], sizes = [8, 128], strides = [1, 1]} : vector<8x512xf32> to vector<8x128xf32>
    %1196 = arith.negf %1195 : vector<8x128xf32>
    %1197 = math.exp %1196 : vector<8x128xf32>
    %cst_558 = arith.constant 1.000000e+00 : f32
    %1198 = vector.broadcast %cst_558 : f32 to vector<8x128xf32>
    %1199 = arith.addf %1198, %1197 : vector<8x128xf32>
    %1200 = arith.divf %1198, %1199 : vector<8x128xf32>
    %1201 = vector.extract_strided_slice %1188 {offsets = [0, 256], sizes = [8, 128], strides = [1, 1]} : vector<8x512xf32> to vector<8x128xf32>
    %1202 = math.tanh %1201 : vector<8x128xf32>
    %1203 = vector.extract_strided_slice %1188 {offsets = [0, 384], sizes = [8, 128], strides = [1, 1]} : vector<8x512xf32> to vector<8x128xf32>
    %1204 = arith.negf %1203 : vector<8x128xf32>
    %1205 = math.exp %1204 : vector<8x128xf32>
    %cst_559 = arith.constant 1.000000e+00 : f32
    %1206 = vector.broadcast %cst_559 : f32 to vector<8x128xf32>
    %1207 = arith.addf %1206, %1205 : vector<8x128xf32>
    %1208 = arith.divf %1206, %1207 : vector<8x128xf32>
    %c0_560 = arith.constant 0 : index
    %c0_561 = arith.constant 0 : index
    %1209 = vector.load %arg23[%c0_560, %c0_561] : memref<8x128xf32, #tpu.memory_space<vmem>>, vector<8x128xf32>
    %1210 = arith.mulf %1200, %1209 : vector<8x128xf32>
    %1211 = arith.mulf %1194, %1202 : vector<8x128xf32>
    %1212 = arith.addf %1210, %1211 : vector<8x128xf32>
    %1213 = math.tanh %1212 : vector<8x128xf32>
    %1214 = arith.mulf %1208, %1213 : vector<8x128xf32>
    %c0_562 = arith.constant 0 : index
    %c0_563 = arith.constant 0 : index
    %1215 = vector.load %arg23[%c0_562, %c0_563] : memref<8x128xf32, #tpu.memory_space<vmem>>, vector<8x128xf32>
    tpu.vector_store %arg23[%c0_562, %c0_563], %1212 {strides = array<i32>} : memref<8x128xf32, #tpu.memory_space<vmem>>, vector<8x128xf32>,
    %c0_564 = arith.constant 0 : index
    %c0_565 = arith.constant 0 : index
    %1216 = vector.load %arg22[%c0_564, %c0_565] : memref<8x128xf32, #tpu.memory_space<vmem>>, vector<8x128xf32>
    tpu.vector_store %arg22[%c0_564, %c0_565], %1214 {strides = array<i32>} : memref<8x128xf32, #tpu.memory_space<vmem>>, vector<8x128xf32>,
    %c8_i32_566 = arith.constant 8 : i32
    %c0_567 = arith.constant 0 : index
    %c0_568 = arith.constant 0 : index
    %1217 = vector.load %arg22[%c0_567, %c0_568] : memref<8x128xf32, #tpu.memory_space<vmem>>, vector<8x128xf32>
    %1218 = arith.addf %1217, %616 : vector<8x128xf32>
    %cst_569 = arith.constant 0.000000e+00 : f32
    %1219 = vector.broadcast %cst_569 : f32 to vector<8x128xf32>
    %1220 = arith.maximumf %1218, %1219 : vector<8x128xf32>
    %c0_570 = arith.constant 0 : index
    %c0_571 = arith.constant 0 : index
    %1221 = vector.load %arg13[%c0_570, %c0_571] : memref<128x128xf32, #tpu.memory_space<vmem>>, vector<128x128xf32>
    %cst_572 = arith.constant dense<0.000000e+00> : vector<8x128xf32>
    %1222 = tpu.matmul %1220, %1221, %cst_572 {dimension_numbers = #tpu.dot_dimension_numbers<[1], [0], [0], [1], [0, 0, 1, 1], [], []>} : vector<8x128xf32>, vector<128x128xf32>, vector<8x128xf32> -> vector<8x128xf32>
    %c0_573 = arith.constant 0 : index
    %c0_574 = arith.constant 0 : index
    %1223 = vector.load %arg14[%c0_573, %c0_574] : memref<1x128xf32, #tpu.memory_space<vmem>>, vector<1x128xf32>
    %1224 = vector.broadcast %1223 : vector<1x128xf32> to vector<8x128xf32>
    %1225 = arith.addf %1222, %1224 : vector<8x128xf32>
    %cst_575 = arith.constant 0.000000e+00 : f32
    %1226 = vector.broadcast %cst_575 : f32 to vector<8x128xf32>
    %1227 = arith.maximumf %1225, %1226 : vector<8x128xf32>
    %c0_576 = arith.constant 0 : index
    %c0_577 = arith.constant 0 : index
    %1228 = vector.load %arg15[%c0_576, %c0_577] : memref<128x128xf32, #tpu.memory_space<vmem>>, vector<128x128xf32>
    %cst_578 = arith.constant dense<0.000000e+00> : vector<8x128xf32>
    %1229 = tpu.matmul %1227, %1228, %cst_578 {dimension_numbers = #tpu.dot_dimension_numbers<[1], [0], [0], [1], [0, 0, 1, 1], [], []>} : vector<8x128xf32>, vector<128x128xf32>, vector<8x128xf32> -> vector<8x128xf32>
    %c0_579 = arith.constant 0 : index
    %c0_580 = arith.constant 0 : index
    %1230 = vector.load %arg16[%c0_579, %c0_580] : memref<1x128xf32, #tpu.memory_space<vmem>>, vector<1x128xf32>
    %1231 = vector.broadcast %1230 : vector<1x128xf32> to vector<8x128xf32>
    %1232 = arith.addf %1229, %1231 : vector<8x128xf32>
    %cst_581 = arith.constant 0.000000e+00 : f32
    %1233 = vector.broadcast %cst_581 : f32 to vector<8x128xf32>
    %1234 = arith.maximumf %1232, %1233 : vector<8x128xf32>
    %c0_582 = arith.constant 0 : index
    %c0_583 = arith.constant 0 : index
    %1235 = vector.load %arg17[%c0_582, %c0_583] : memref<128x128xf32, #tpu.memory_space<vmem>>, vector<128x128xf32>
    %cst_584 = arith.constant dense<0.000000e+00> : vector<8x128xf32>
    %1236 = tpu.matmul %1234, %1235, %cst_584 {dimension_numbers = #tpu.dot_dimension_numbers<[1], [0], [0], [1], [0, 0, 1, 1], [], []>} : vector<8x128xf32>, vector<128x128xf32>, vector<8x128xf32> -> vector<8x128xf32>
    %c0_585 = arith.constant 0 : index
    %c0_586 = arith.constant 0 : index
    %1237 = vector.load %arg18[%c0_585, %c0_586] : memref<1x128xf32, #tpu.memory_space<vmem>>, vector<1x128xf32>
    %1238 = vector.broadcast %1237 : vector<1x128xf32> to vector<8x128xf32>
    %1239 = arith.addf %1236, %1238 : vector<8x128xf32>
    %c0_587 = arith.constant 0 : index
    %c0_588 = arith.constant 0 : index
    %1240 = vector.load %arg19[%c0_587, %c0_588] : memref<8x128xf32, #tpu.memory_space<vmem>>, vector<8x128xf32>
    tpu.vector_store %arg19[%c0_587, %c0_588], %1239 {strides = array<i32>} : memref<8x128xf32, #tpu.memory_space<vmem>>, vector<8x128xf32>,
    return
  }
}

</mosaic_0001>

<llo_original>
// kernel: lstm_net_forward.1
$region0: #{lstm_net_forward.1}
  #allocation0 [shape = 'u32[]', space=smem, size = 0x4, offset = 0x4, fixed_abs, tag = 'smem constant byte address 0x4 - core index']
  #allocation1 [shape = 'u32[144,128]{1,0:T(1,128)}', space=vmem, size = 0x12000, scoped, tag = 'internal scratch']
  #allocation2 [shape = 'f32[64,512]{1,0:T(8,128)}', space=vmem, size = 0x20000, scoped, tag = 'scratch operand']
  #allocation3 [shape = 'f32[64,128]{1,0:T(8,128)}', space=vmem, size = 0x8000, scoped, tag = 'scratch operand']
  #allocation4 [shape = 'f32[8,128]{1,0:T(8,128)}', space=vmem, size = 0x1000, scoped, tag = 'scratch operand']
  #allocation5 [shape = 'f32[8,128]{1,0:T(8,128)}', space=vmem, size = 0x1000, scoped, tag = 'scratch operand']
  %s0 = inlined_call_operand.vmem [shape: f32[64,128], index: 0, kind: input, shape index: {}]
  %s1 = inlined_call_operand.vmem [shape: f32[128,512], index: 1, kind: input, shape index: {}]
  %s2 = inlined_call_operand.vmem [shape: f32[128,512], index: 2, kind: input, shape index: {}]
  %s3 = inlined_call_operand.vmem [shape: f32[1,512], index: 3, kind: input, shape index: {}]
  %s4 = inlined_call_operand.vmem [shape: f32[128,512], index: 4, kind: input, shape index: {}]
  %s5 = inlined_call_operand.vmem [shape: f32[128,512], index: 5, kind: input, shape index: {}]
  %s6 = inlined_call_operand.vmem [shape: f32[1,512], index: 6, kind: input, shape index: {}]
  %s7 = inlined_call_operand.vmem [shape: f32[128,512], index: 7, kind: input, shape index: {}]
  %s8 = inlined_call_operand.vmem [shape: f32[128,512], index: 8, kind: input, shape index: {}]
  %s9 = inlined_call_operand.vmem [shape: f32[1,512], index: 9, kind: input, shape index: {}]
  %s10 = inlined_call_operand.vmem [shape: f32[128,512], index: 10, kind: input, shape index: {}]
  %s11 = inlined_call_operand.vmem [shape: f32[128,512], index: 11, kind: input, shape index: {}]
  %s12 = inlined_call_operand.vmem [shape: f32[1,512], index: 12, kind: input, shape index: {}]
  %s13 = inlined_call_operand.vmem [shape: f32[128,128], index: 13, kind: input, shape index: {}]
  %s14 = inlined_call_operand.vmem [shape: f32[1,128], index: 14, kind: input, shape index: {}]
  %s15 = inlined_call_operand.vmem [shape: f32[128,128], index: 15, kind: input, shape index: {}]
  %s16 = inlined_call_operand.vmem [shape: f32[1,128], index: 16, kind: input, shape index: {}]
  %s17 = inlined_call_operand.vmem [shape: f32[128,128], index: 17, kind: input, shape index: {}]
  %s18 = inlined_call_operand.vmem [shape: f32[1,128], index: 18, kind: input, shape index: {}]
  %s19 = inlined_call_operand.vmem [shape: f32[8,128], index: 19, kind: output, shape index: {}]
  %s20 = sld [smem:[#allocation0]]
  $region86: #{lstm_net_forward.1} parent=0
    _
  %s22 = ssub.s32 1, %s20
  %s23 = scalar_select 0, %s22, %s20
  // Predicated region
  $region2: #{lstm_net_forward.1} parent=0 // pred_check
    _
  $region3: #{lstm_net_forward.1} parent=0 // pred_check_branch
    %25 = sbr.rel (0) target = $region5
  $region4: #{lstm_net_forward.1} parent=0 // pred_region
    _
  $region5: #{lstm_net_forward.1} parent=0 // pred_fallthru
    _
  // Predicated region
  $region6: #{lstm_net_forward.1} parent=0 // pred_check
    _
  $region7: #{lstm_net_forward.1} parent=0 // pred_check_branch
    %27 = sbr.rel (0) target = $region9
  $region8: #{lstm_net_forward.1} parent=0 // pred_region
    _
  $region9: #{lstm_net_forward.1} parent=0 // pred_fallthru
    _
  // Predicated region
  $region10: #{lstm_net_forward.1} parent=0 // pred_check
    _
  $region11: #{lstm_net_forward.1} parent=0 // pred_check_branch
    %29 = sbr.rel (0) target = $region13
  $region12: #{lstm_net_forward.1} parent=0 // pred_region
    _
  $region13: #{lstm_net_forward.1} parent=0 // pred_fallthru
    _
  // Predicated region
  $region14: #{lstm_net_forward.1} parent=0 // pred_check
    _
  $region15: #{lstm_net_forward.1} parent=0 // pred_check_branch
    %31 = sbr.rel (0) target = $region17
  $region16: #{lstm_net_forward.1} parent=0 // pred_region
    _
  $region17: #{lstm_net_forward.1} parent=0 // pred_fallthru
    _
  // Predicated region
  $region18: #{lstm_net_forward.1} parent=0 // pred_check
    _
  $region19: #{lstm_net_forward.1} parent=0 // pred_check_branch
    %33 = sbr.rel (0) target = $region21
  $region20: #{lstm_net_forward.1} parent=0 // pred_region
    _
  $region21: #{lstm_net_forward.1} parent=0 // pred_fallthru
    _
  // Predicated region
  $region22: #{lstm_net_forward.1} parent=0 // pred_check
    _
  $region23: #{lstm_net_forward.1} parent=0 // pred_check_branch
    %35 = sbr.rel (0) target = $region25
  $region24: #{lstm_net_forward.1} parent=0 // pred_region
    _
  $region25: #{lstm_net_forward.1} parent=0 // pred_fallthru
    _
  // Predicated region
  $region26: #{lstm_net_forward.1} parent=0 // pred_check
    _
  $region27: #{lstm_net_forward.1} parent=0 // pred_check_branch
    %37 = sbr.rel (0) target = $region29
  $region28: #{lstm_net_forward.1} parent=0 // pred_region
    _
  $region29: #{lstm_net_forward.1} parent=0 // pred_fallthru
    _
  // Predicated region
  $region30: #{lstm_net_forward.1} parent=0 // pred_check
    _
  $region31: #{lstm_net_forward.1} parent=0 // pred_check_branch
    %39 = sbr.rel (0) target = $region33
  $region32: #{lstm_net_forward.1} parent=0 // pred_region
    _
  $region33: #{lstm_net_forward.1} parent=0 // pred_fallthru
    _
  // Predicated region
  $region34: #{lstm_net_forward.1} parent=0 // pred_check
    _
  $region35: #{lstm_net_forward.1} parent=0 // pred_check_branch
    %41 = sbr.rel (0) target = $region37
  $region36: #{lstm_net_forward.1} parent=0 // pred_region
    _
  $region37: #{lstm_net_forward.1} parent=0 // pred_fallthru
    _
  // Predicated region
  $region38: #{lstm_net_forward.1} parent=0 // pred_check
    _
  $region39: #{lstm_net_forward.1} parent=0 // pred_check_branch
    %43 = sbr.rel (0) target = $region41
  $region40: #{lstm_net_forward.1} parent=0 // pred_region
    _
  $region41: #{lstm_net_forward.1} parent=0 // pred_fallthru
    _
  // Predicated region
  $region42: #{lstm_net_forward.1} parent=0 // pred_check
    _
  $region43: #{lstm_net_forward.1} parent=0 // pred_check_branch
    %45 = sbr.rel (0) target = $region45
  $region44: #{lstm_net_forward.1} parent=0 // pred_region
    _
  $region45: #{lstm_net_forward.1} parent=0 // pred_fallthru
    _
  // Predicated region
  $region46: #{lstm_net_forward.1} parent=0 // pred_check
    _
  $region47: #{lstm_net_forward.1} parent=0 // pred_check_branch
    %47 = sbr.rel (0) target = $region49
  $region48: #{lstm_net_forward.1} parent=0 // pred_region
    _
  $region49: #{lstm_net_forward.1} parent=0 // pred_fallthru
    _
  // Predicated region
  $region50: #{lstm_net_forward.1} parent=0 // pred_check
    _
  $region51: #{lstm_net_forward.1} parent=0 // pred_check_branch
    %49 = sbr.rel (0) target = $region53
  $region52: #{lstm_net_forward.1} parent=0 // pred_region
    _
  $region53: #{lstm_net_forward.1} parent=0 // pred_fallthru
    _
  // Predicated region
  $region54: #{lstm_net_forward.1} parent=0 // pred_check
    _
  $region55: #{lstm_net_forward.1} parent=0 // pred_check_branch
    %51 = sbr.rel (0) target = $region57
  $region56: #{lstm_net_forward.1} parent=0 // pred_region
    _
  $region57: #{lstm_net_forward.1} parent=0 // pred_fallthru
    _
  // Predicated region
  $region58: #{lstm_net_forward.1} parent=0 // pred_check
    _
  $region59: #{lstm_net_forward.1} parent=0 // pred_check_branch
    %53 = sbr.rel (0) target = $region61
  $region60: #{lstm_net_forward.1} parent=0 // pred_region
    _
  $region61: #{lstm_net_forward.1} parent=0 // pred_fallthru
    _
  // Predicated region
  $region62: #{lstm_net_forward.1} parent=0 // pred_check
    _
  $region63: #{lstm_net_forward.1} parent=0 // pred_check_branch
    %55 = sbr.rel (0) target = $region65
  $region64: #{lstm_net_forward.1} parent=0 // pred_region
    _
  $region65: #{lstm_net_forward.1} parent=0 // pred_fallthru
    _
  // Predicated region
  $region66: #{lstm_net_forward.1} parent=0 // pred_check
    _
  $region67: #{lstm_net_forward.1} parent=0 // pred_check_branch
    %57 = sbr.rel (0) target = $region69
  $region68: #{lstm_net_forward.1} parent=0 // pred_region
    _
  $region69: #{lstm_net_forward.1} parent=0 // pred_fallthru
    _
  // Predicated region
  $region70: #{lstm_net_forward.1} parent=0 // pred_check
    _
  $region71: #{lstm_net_forward.1} parent=0 // pred_check_branch
    %59 = sbr.rel (0) target = $region73
  $region72: #{lstm_net_forward.1} parent=0 // pred_region
    _
  $region73: #{lstm_net_forward.1} parent=0 // pred_fallthru
    _
  // Predicated region
  $region74: #{lstm_net_forward.1} parent=0 // pred_check
    _
  $region75: #{lstm_net_forward.1} parent=0 // pred_check_branch
    %61 = sbr.rel (0) target = $region77
  $region76: #{lstm_net_forward.1} parent=0 // pred_region
    _
  $region77: #{lstm_net_forward.1} parent=0 // pred_fallthru
    _
  %v62 = vld [vmem:[%s0] sm:$0xff]
  %v63 = vld [vmem:[%s0 + $0x8] sm:$0xff]
  %v64 = vld [vmem:[%s0 + $0x10] sm:$0xff]
  %v65 = vld [vmem:[%s0 + $0x18] sm:$0xff]
  %v66 = vld [vmem:[%s0 + $0x20] sm:$0xff]
  %v67 = vld [vmem:[%s0 + $0x28] sm:$0xff]
  %v68 = vld [vmem:[%s0 + $0x30] sm:$0xff]
  %v69 = vld [vmem:[%s0 + $0x38] sm:$0xff]
  %v70 = vld [vmem:[%s1] sm:$0xff]
  %v71 = vld [vmem:[%s1 + $0x8] sm:$0xff]
  %v72 = vld [vmem:[%s1 + $0x10] sm:$0xff]
  %v73 = vld [vmem:[%s1 + $0x18] sm:$0xff]
  %v74 = vld [vmem:[%s1 + $0x20] sm:$0xff]
  %v75 = vld [vmem:[%s1 + $0x28] sm:$0xff]
  %v76 = vld [vmem:[%s1 + $0x30] sm:$0xff]
  %v77 = vld [vmem:[%s1 + $0x38] sm:$0xff]
  %v78 = vld [vmem:[%s1 + $0x40] sm:$0xff]
  %v79 = vld [vmem:[%s1 + $0x48] sm:$0xff]
  %v80 = vld [vmem:[%s1 + $0x50] sm:$0xff]
  %v81 = vld [vmem:[%s1 + $0x58] sm:$0xff]
  %v82 = vld [vmem:[%s1 + $0x60] sm:$0xff]
  %v83 = vld [vmem:[%s1 + $0x68] sm:$0xff]
  %v84 = vld [vmem:[%s1 + $0x70] sm:$0xff]
  %v85 = vld [vmem:[%s1 + $0x78] sm:$0xff]
  %v86 = vld [vmem:[%s1 + $0x80] sm:$0xff]
  %v87 = vld [vmem:[%s1 + $0x88] sm:$0xff]
  %v88 = vld [vmem:[%s1 + $0x90] sm:$0xff]
  %v89 = vld [vmem:[%s1 + $0x98] sm:$0xff]
  %v90 = vld [vmem:[%s1 + $0xa0] sm:$0xff]
  %v91 = vld [vmem:[%s1 + $0xa8] sm:$0xff]
  %v92 = vld [vmem:[%s1 + $0xb0] sm:$0xff]
  %v93 = vld [vmem:[%s1 + $0xb8] sm:$0xff]
  %v94 = vld [vmem:[%s1 + $0xc0] sm:$0xff]
  %v95 = vld [vmem:[%s1 + $0xc8] sm:$0xff]
  %v96 = vld [vmem:[%s1 + $0xd0] sm:$0xff]
  %v97 = vld [vmem:[%s1 + $0xd8] sm:$0xff]
  %v98 = vld [vmem:[%s1 + $0xe0] sm:$0xff]
  %v99 = vld [vmem:[%s1 + $0xe8] sm:$0xff]
  %v100 = vld [vmem:[%s1 + $0xf0] sm:$0xff]
  %v101 = vld [vmem:[%s1 + $0xf8] sm:$0xff]
  %v102 = vld [vmem:[%s1 + $0x100] sm:$0xff]
  %v103 = vld [vmem:[%s1 + $0x108] sm:$0xff]
  %v104 = vld [vmem:[%s1 + $0x110] sm:$0xff]
  %v105 = vld [vmem:[%s1 + $0x118] sm:$0xff]
  %v106 = vld [vmem:[%s1 + $0x120] sm:$0xff]
  %v107 = vld [vmem:[%s1 + $0x128] sm:$0xff]
  %v108 = vld [vmem:[%s1 + $0x130] sm:$0xff]
  %v109 = vld [vmem:[%s1 + $0x138] sm:$0xff]
  %v110 = vld [vmem:[%s1 + $0x140] sm:$0xff]
  %v111 = vld [vmem:[%s1 + $0x148] sm:$0xff]
  %v112 = vld [vmem:[%s1 + $0x150] sm:$0xff]
  %v113 = vld [vmem:[%s1 + $0x158] sm:$0xff]
  %v114 = vld [vmem:[%s1 + $0x160] sm:$0xff]
  %v115 = vld [vmem:[%s1 + $0x168] sm:$0xff]
  %v116 = vld [vmem:[%s1 + $0x170] sm:$0xff]
  %v117 = vld [vmem:[%s1 + $0x178] sm:$0xff]
  %v118 = vld [vmem:[%s1 + $0x180] sm:$0xff]
  %v119 = vld [vmem:[%s1 + $0x188] sm:$0xff]
  %v120 = vld [vmem:[%s1 + $0x190] sm:$0xff]
  %v121 = vld [vmem:[%s1 + $0x198] sm:$0xff]
  %v122 = vld [vmem:[%s1 + $0x1a0] sm:$0xff]
  %v123 = vld [vmem:[%s1 + $0x1a8] sm:$0xff]
  %v124 = vld [vmem:[%s1 + $0x1b0] sm:$0xff]
  %v125 = vld [vmem:[%s1 + $0x1b8] sm:$0xff]
  %v126 = vld [vmem:[%s1 + $0x1c0] sm:$0xff]
  %v127 = vld [vmem:[%s1 + $0x1c8] sm:$0xff]
  %v128 = vld [vmem:[%s1 + $0x1d0] sm:$0xff]
  %v129 = vld [vmem:[%s1 + $0x1d8] sm:$0xff]
  %v130 = vld [vmem:[%s1 + $0x1e0] sm:$0xff]
  %v131 = vld [vmem:[%s1 + $0x1e8] sm:$0xff]
  %v132 = vld [vmem:[%s1 + $0x1f0] sm:$0xff]
  %v133 = vld [vmem:[%s1 + $0x1f8] sm:$0xff]
  %v134 = vld [vmem:[%s3] sm:$0xf]
  %v136 = vlaneseq
  %v137 = vshrl.u32 %v136, 7
  %v138 = vsub.s32 0, %v137
  %v139 = vrot.slane %v134, %v138
  %v140 = vlaneseq
  %v141 = vshrl.u32 %v140, 7
  %v142 = vsub.s32 1, %v141
  %v143 = vrot.slane %v134, %v142
  %v144 = vlaneseq
  %v145 = vshrl.u32 %v144, 7
  %v146 = vsub.s32 2, %v145
  %v147 = vrot.slane %v134, %v146
  %v148 = vlaneseq
  %v149 = vshrl.u32 %v148, 7
  %v150 = vsub.s32 3, %v149
  %v151 = vrot.slane %v134, %v150
  %156 = vmatprep.subr.mxu0 %v131
  %157 = vmatpush1.msra.mxu0 %v130
  %158 = vmatprep.subr.mxu0 %v127
  %159 = vmatpush1.msra.mxu0 %v126
  %160 = vmatprep.subr.mxu0 %v123
  %161 = vmatpush1.msra.mxu0 %v122
  %162 = vmatprep.subr.mxu0 %v119
  %163 = vmatpush1.msra.mxu0 %v118
  %164 = vmatprep.subr.mxu0 %v115
  %165 = vmatpush1.msra.mxu0 %v114
  %166 = vmatprep.subr.mxu0 %v111
  %167 = vmatpush1.msra.mxu0 %v110
  %168 = vmatprep.subr.mxu0 %v107
  %169 = vmatpush1.msra.mxu0 %v106
  %170 = vmatprep.subr.mxu0 %v103
  %171 = vmatpush1.msra.mxu0 %v102
  %172 = vmatprep.subr.mxu0 %v99
  %173 = vmatpush1.msra.mxu0 %v98
  %174 = vmatprep.subr.mxu0 %v95
  %175 = vmatpush1.msra.mxu0 %v94
  %176 = vmatprep.subr.mxu0 %v91
  %177 = vmatpush1.msra.mxu0 %v90
  %178 = vmatprep.subr.mxu0 %v87
  %179 = vmatpush1.msra.mxu0 %v86
  %180 = vmatprep.subr.mxu0 %v83
  %181 = vmatpush1.msra.mxu0 %v82
  %182 = vmatprep.subr.mxu0 %v79
  %183 = vmatpush1.msra.mxu0 %v78
  %184 = vmatprep.subr.mxu0 %v75
  %185 = vmatpush1.msra.mxu0 %v74
  %186 = vmatprep.subr.mxu0 %v71
  %187 = vmatpush1.msra.mxu0 %v70
  %188 = vmatprep.subr.mxu0 0.0
  %189 = vmatpush2.msra.mxu0 0.0
  %190 = vmatprep.subr.mxu0 0.0
  %191 = vmatpush2.msra.mxu0 0.0
  %192 = vmatprep.subr.mxu0 0.0
  %193 = vmatpush2.msra.mxu0 0.0
  %194 = vmatprep.subr.mxu0 0.0
  %195 = vmatpush2.msra.mxu0 0.0
  %196 = vmatprep.subr.mxu0 0.0
  %197 = vmatpush2.msra.mxu0 0.0
  %198 = vmatprep.subr.mxu0 0.0
  %199 = vmatpush2.msra.mxu0 0.0
  %200 = vmatprep.subr.mxu0 0.0
  %201 = vmatpush2.msra.mxu0 0.0
  %202 = vmatprep.subr.mxu0 0.0
  %203 = vmatpush2.msra.mxu0 0.0
  %204 = vmatprep.subr.mxu0 0.0
  %205 = vmatpush2.msra.mxu0 0.0
  %206 = vmatprep.subr.mxu0 0.0
  %207 = vmatpush2.msra.mxu0 0.0
  %208 = vmatprep.subr.mxu0 0.0
  %209 = vmatpush2.msra.mxu0 0.0
  %210 = vmatprep.subr.mxu0 0.0
  %211 = vmatpush2.msra.mxu0 0.0
  %212 = vmatprep.subr.mxu0 0.0
  %213 = vmatpush2.msra.mxu0 0.0
  %214 = vmatprep.subr.mxu0 0.0
  %215 = vmatpush2.msra.mxu0 0.0
  %216 = vmatprep.subr.mxu0 0.0
  %217 = vmatpush2.msra.mxu0 0.0
  %218 = vmatprep.subr.mxu0 0.0
  %219 = vmatpush2.msra.mxu0 0.0
  %220 = vmatprep.mubr.f32.mxu0 0.0
  %221 = vmatmul.mubr.f32.gmra.mxu0 %v62
  %v222 = vpop.f32.mrf.mxu0
  %v223 = vadd.f32 %v139, %v222
  %v224 = vpop.f32.mrf.mxu0
  %v225 = vadd.f32 %v143, %v224
  %226 = vmatprep.mubr.f32.mxu0 0.0
  %227 = vmatmul.mubr.f32.gmra.mxu0 %v63
  %v228 = vpop.f32.mrf.mxu0
  %v229 = vadd.f32 %v139, %v228
  %v230 = vpop.f32.mrf.mxu0
  %v231 = vadd.f32 %v143, %v230
  %232 = vmatprep.mubr.f32.mxu0 0.0
  %233 = vmatmul.mubr.f32.gmra.mxu0 %v64
  %v234 = vpop.f32.mrf.mxu0
  %v235 = vadd.f32 %v139, %v234
  %v236 = vpop.f32.mrf.mxu0
  %v237 = vadd.f32 %v143, %v236
  %238 = vmatprep.mubr.f32.mxu0 0.0
  %239 = vmatmul.mubr.f32.gmra.mxu0 %v65
  %v240 = vpop.f32.mrf.mxu0
  %v241 = vadd.f32 %v139, %v240
  %v242 = vpop.f32.mrf.mxu0
  %v243 = vadd.f32 %v143, %v242
  %244 = vmatprep.mubr.f32.mxu0 0.0
  %245 = vmatmul.mubr.f32.gmra.mxu0 %v66
  %v246 = vpop.f32.mrf.mxu0
  %v247 = vadd.f32 %v139, %v246
  %v248 = vpop.f32.mrf.mxu0
  %v249 = vadd.f32 %v143, %v248
  %250 = vmatprep.mubr.f32.mxu0 0.0
  %251 = vmatmul.mubr.f32.gmra.mxu0 %v67
  %v252 = vpop.f32.mrf.mxu0
  %v253 = vadd.f32 %v139, %v252
  %v254 = vpop.f32.mrf.mxu0
  %v255 = vadd.f32 %v143, %v254
  %256 = vmatprep.mubr.f32.mxu0 0.0
  %257 = vmatmul.mubr.f32.gmra.mxu0 %v68
  %v258 = vpop.f32.mrf.mxu0
  %v259 = vadd.f32 %v139, %v258
  %v260 = vpop.f32.mrf.mxu0
  %v261 = vadd.f32 %v143, %v260
  %262 = vmatprep.mubr.f32.mxu0 0.0
  %263 = vmatmul.mubr.f32.gmra.mxu0 %v69
  %v264 = vpop.f32.mrf.mxu0
  %v265 = vadd.f32 %v139, %v264
  %v266 = vpop.f32.mrf.mxu0
  %v267 = vadd.f32 %v143, %v266
  %268 = vdwg.mxu0
  %269 = vmatprep.subr.mxu0 %v133
  %270 = vmatpush1.msra.mxu0 %v132
  %271 = vmatprep.subr.mxu0 %v129
  %272 = vmatpush1.msra.mxu0 %v128
  %273 = vmatprep.subr.mxu0 %v125
  %274 = vmatpush1.msra.mxu0 %v124
  %275 = vmatprep.subr.mxu0 %v121
  %276 = vmatpush1.msra.mxu0 %v120
  %277 = vmatprep.subr.mxu0 %v117
  %278 = vmatpush1.msra.mxu0 %v116
  %279 = vmatprep.subr.mxu0 %v113
  %280 = vmatpush1.msra.mxu0 %v112
  %281 = vmatprep.subr.mxu0 %v109
  %282 = vmatpush1.msra.mxu0 %v108
  %283 = vmatprep.subr.mxu0 %v105
  %284 = vmatpush1.msra.mxu0 %v104
  %285 = vmatprep.subr.mxu0 %v101
  %286 = vmatpush1.msra.mxu0 %v100
  %287 = vmatprep.subr.mxu0 %v97
  %288 = vmatpush1.msra.mxu0 %v96
  %289 = vmatprep.subr.mxu0 %v93
  %290 = vmatpush1.msra.mxu0 %v92
  %291 = vmatprep.subr.mxu0 %v89
  %292 = vmatpush1.msra.mxu0 %v88
  %293 = vmatprep.subr.mxu0 %v85
  %294 = vmatpush1.msra.mxu0 %v84
  %295 = vmatprep.subr.mxu0 %v81
  %296 = vmatpush1.msra.mxu0 %v80
  %297 = vmatprep.subr.mxu0 %v77
  %298 = vmatpush1.msra.mxu0 %v76
  %299 = vmatprep.subr.mxu0 %v73
  %300 = vmatpush1.msra.mxu0 %v72
  %301 = vmatprep.subr.mxu0 0.0
  %302 = vmatpush2.msra.mxu0 0.0
  %303 = vmatprep.subr.mxu0 0.0
  %304 = vmatpush2.msra.mxu0 0.0
  %305 = vmatprep.subr.mxu0 0.0
  %306 = vmatpush2.msra.mxu0 0.0
  %307 = vmatprep.subr.mxu0 0.0
  %308 = vmatpush2.msra.mxu0 0.0
  %309 = vmatprep.subr.mxu0 0.0
  %310 = vmatpush2.msra.mxu0 0.0
  %311 = vmatprep.subr.mxu0 0.0
  %312 = vmatpush2.msra.mxu0 0.0
  %313 = vmatprep.subr.mxu0 0.0
  %314 = vmatpush2.msra.mxu0 0.0
  %315 = vmatprep.subr.mxu0 0.0
  %316 = vmatpush2.msra.mxu0 0.0
  %317 = vmatprep.subr.mxu0 0.0
  %318 = vmatpush2.msra.mxu0 0.0
  %319 = vmatprep.subr.mxu0 0.0
  %320 = vmatpush2.msra.mxu0 0.0
  %321 = vmatprep.subr.mxu0 0.0
  %322 = vmatpush2.msra.mxu0 0.0
  %323 = vmatprep.subr.mxu0 0.0
  %324 = vmatpush2.msra.mxu0 0.0
  %325 = vmatprep.subr.mxu0 0.0
  %326 = vmatpush2.msra.mxu0 0.0
  %327 = vmatprep.subr.mxu0 0.0
  %328 = vmatpush2.msra.mxu0 0.0
  %329 = vmatprep.subr.mxu0 0.0
  %330 = vmatpush2.msra.mxu0 0.0
  %331 = vmatprep.subr.mxu0 0.0
  %332 = vmatpush2.msra.mxu0 0.0
  %333 = vmatprep.mubr.f32.mxu0 0.0
  %334 = vmatmul.mubr.f32.gmra.mxu0 %v62
  %v335 = vpop.f32.mrf.mxu0
  %v336 = vadd.f32 %v147, %v335
  %v337 = vpop.f32.mrf.mxu0
  %v338 = vadd.f32 %v151, %v337
  %339 = vmatprep.mubr.f32.mxu0 0.0
  %340 = vmatmul.mubr.f32.gmra.mxu0 %v63
  %v341 = vpop.f32.mrf.mxu0
  %v342 = vadd.f32 %v147, %v341
  %v343 = vpop.f32.mrf.mxu0
  %v344 = vadd.f32 %v151, %v343
  %345 = vmatprep.mubr.f32.mxu0 0.0
  %346 = vmatmul.mubr.f32.gmra.mxu0 %v64
  %v347 = vpop.f32.mrf.mxu0
  %v348 = vadd.f32 %v147, %v347
  %v349 = vpop.f32.mrf.mxu0
  %v350 = vadd.f32 %v151, %v349
  %351 = vmatprep.mubr.f32.mxu0 0.0
  %352 = vmatmul.mubr.f32.gmra.mxu0 %v65
  %v353 = vpop.f32.mrf.mxu0
  %v354 = vadd.f32 %v147, %v353
  %v355 = vpop.f32.mrf.mxu0
  %v356 = vadd.f32 %v151, %v355
  %357 = vmatprep.mubr.f32.mxu0 0.0
  %358 = vmatmul.mubr.f32.gmra.mxu0 %v66
  %v359 = vpop.f32.mrf.mxu0
  %v360 = vadd.f32 %v147, %v359
  %v361 = vpop.f32.mrf.mxu0
  %v362 = vadd.f32 %v151, %v361
  %363 = vmatprep.mubr.f32.mxu0 0.0
  %364 = vmatmul.mubr.f32.gmra.mxu0 %v67
  %v365 = vpop.f32.mrf.mxu0
  %v366 = vadd.f32 %v147, %v365
  %v367 = vpop.f32.mrf.mxu0
  %v368 = vadd.f32 %v151, %v367
  %369 = vmatprep.mubr.f32.mxu0 0.0
  %370 = vmatmul.mubr.f32.gmra.mxu0 %v68
  %v371 = vpop.f32.mrf.mxu0
  %v372 = vadd.f32 %v147, %v371
  %v373 = vpop.f32.mrf.mxu0
  %v374 = vadd.f32 %v151, %v373
  %375 = vmatprep.mubr.f32.mxu0 0.0
  %376 = vmatmul.mubr.f32.gmra.mxu0 %v69
  %v377 = vpop.f32.mrf.mxu0
  %v378 = vadd.f32 %v147, %v377
  %v379 = vpop.f32.mrf.mxu0
  %v380 = vadd.f32 %v151, %v379
  %381 = vdwg.mxu0
  %382 = vst [vmem:[#allocation2] sm:$0xff] %v223
  %383 = vst [vmem:[#allocation2 + $0x8] sm:$0xff] %v225
  %384 = vst [vmem:[#allocation2 + $0x10] sm:$0xff] %v336
  %385 = vst [vmem:[#allocation2 + $0x18] sm:$0xff] %v338
  %386 = vst [vmem:[#allocation2 + $0x20] sm:$0xff] %v229
  %387 = vst [vmem:[#allocation2 + $0x28] sm:$0xff] %v231
  %388 = vst [vmem:[#allocation2 + $0x30] sm:$0xff] %v342
  %389 = vst [vmem:[#allocation2 + $0x38] sm:$0xff] %v344
  %390 = vst [vmem:[#allocation2 + $0x40] sm:$0xff] %v235
  %391 = vst [vmem:[#allocation2 + $0x48] sm:$0xff] %v237
  %392 = vst [vmem:[#allocation2 + $0x50] sm:$0xff] %v348
  %393 = vst [vmem:[#allocation2 + $0x58] sm:$0xff] %v350
  %394 = vst [vmem:[#allocation2 + $0x60] sm:$0xff] %v241
  %395 = vst [vmem:[#allocation2 + $0x68] sm:$0xff] %v243
  %396 = vst [vmem:[#allocation2 + $0x70] sm:$0xff] %v354
  %397 = vst [vmem:[#allocation2 + $0x78] sm:$0xff] %v356
  %398 = vst [vmem:[#allocation2 + $0x80] sm:$0xff] %v247
  %399 = vst [vmem:[#allocation2 + $0x88] sm:$0xff] %v249
  %400 = vst [vmem:[#allocation2 + $0x90] sm:$0xff] %v360
  %401 = vst [vmem:[#allocation2 + $0x98] sm:$0xff] %v362
  %402 = vst [vmem:[#allocation2 + $0xa0] sm:$0xff] %v253
  %403 = vst [vmem:[#allocation2 + $0xa8] sm:$0xff] %v255
  %404 = vst [vmem:[#allocation2 + $0xb0] sm:$0xff] %v366
  %405 = vst [vmem:[#allocation2 + $0xb8] sm:$0xff] %v368
  %406 = vst [vmem:[#allocation2 + $0xc0] sm:$0xff] %v259
  %407 = vst [vmem:[#allocation2 + $0xc8] sm:$0xff] %v261
  %408 = vst [vmem:[#allocation2 + $0xd0] sm:$0xff] %v372
  %409 = vst [vmem:[#allocation2 + $0xd8] sm:$0xff] %v374
  %410 = vst [vmem:[#allocation2 + $0xe0] sm:$0xff] %v265
  %411 = vst [vmem:[#allocation2 + $0xe8] sm:$0xff] %v267
  %412 = vst [vmem:[#allocation2 + $0xf0] sm:$0xff] %v378
  %413 = vst [vmem:[#allocation2 + $0xf8] sm:$0xff] %v380
  %414 = vst [vmem:[#allocation4] sm:$0xff] 0.0
  %415 = vst [vmem:[#allocation5] sm:$0xff] 0.0
  %v416 = vld [vmem:[%s2] sm:$0xff]
  %v417 = vld [vmem:[%s2 + $0x8] sm:$0xff]
  %v418 = vld [vmem:[%s2 + $0x10] sm:$0xff]
  %v419 = vld [vmem:[%s2 + $0x18] sm:$0xff]
  %v420 = vld [vmem:[%s2 + $0x20] sm:$0xff]
  %v421 = vld [vmem:[%s2 + $0x28] sm:$0xff]
  %v422 = vld [vmem:[%s2 + $0x30] sm:$0xff]
  %v423 = vld [vmem:[%s2 + $0x38] sm:$0xff]
  %v424 = vld [vmem:[%s2 + $0x40] sm:$0xff]
  %v425 = vld [vmem:[%s2 + $0x48] sm:$0xff]
  %v426 = vld [vmem:[%s2 + $0x50] sm:$0xff]
  %v427 = vld [vmem:[%s2 + $0x58] sm:$0xff]
  %v428 = vld [vmem:[%s2 + $0x60] sm:$0xff]
  %v429 = vld [vmem:[%s2 + $0x68] sm:$0xff]
  %v430 = vld [vmem:[%s2 + $0x70] sm:$0xff]
  %v431 = vld [vmem:[%s2 + $0x78] sm:$0xff]
  %v432 = vld [vmem:[%s2 + $0x80] sm:$0xff]
  %v433 = vld [vmem:[%s2 + $0x88] sm:$0xff]
  %v434 = vld [vmem:[%s2 + $0x90] sm:$0xff]
  %v435 = vld [vmem:[%s2 + $0x98] sm:$0xff]
  %v436 = vld [vmem:[%s2 + $0xa0] sm:$0xff]
  %v437 = vld [vmem:[%s2 + $0xa8] sm:$0xff]
  %v438 = vld [vmem:[%s2 + $0xb0] sm:$0xff]
  %v439 = vld [vmem:[%s2 + $0xb8] sm:$0xff]
  %v440 = vld [vmem:[%s2 + $0xc0] sm:$0xff]
  %v441 = vld [vmem:[%s2 + $0xc8] sm:$0xff]
  %v442 = vld [vmem:[%s2 + $0xd0] sm:$0xff]
  %v443 = vld [vmem:[%s2 + $0xd8] sm:$0xff]
  %v444 = vld [vmem:[%s2 + $0xe0] sm:$0xff]
  %v445 = vld [vmem:[%s2 + $0xe8] sm:$0xff]
  %v446 = vld [vmem:[%s2 + $0xf0] sm:$0xff]
  %v447 = vld [vmem:[%s2 + $0xf8] sm:$0xff]
  %v448 = vld [vmem:[%s2 + $0x100] sm:$0xff]
  %v449 = vld [vmem:[%s2 + $0x108] sm:$0xff]
  %v450 = vld [vmem:[%s2 + $0x110] sm:$0xff]
  %v451 = vld [vmem:[%s2 + $0x118] sm:$0xff]
  %v452 = vld [vmem:[%s2 + $0x120] sm:$0xff]
  %v453 = vld [vmem:[%s2 + $0x128] sm:$0xff]
  %v454 = vld [vmem:[%s2 + $0x130] sm:$0xff]
  %v455 = vld [vmem:[%s2 + $0x138] sm:$0xff]
  %v456 = vld [vmem:[%s2 + $0x140] sm:$0xff]
  %v457 = vld [vmem:[%s2 + $0x148] sm:$0xff]
  %v458 = vld [vmem:[%s2 + $0x150] sm:$0xff]
  %v459 = vld [vmem:[%s2 + $0x158] sm:$0xff]
  %v460 = vld [vmem:[%s2 + $0x160] sm:$0xff]
  %v461 = vld [vmem:[%s2 + $0x168] sm:$0xff]
  %v462 = vld [vmem:[%s2 + $0x170] sm:$0xff]
  %v463 = vld [vmem:[%s2 + $0x178] sm:$0xff]
  %v464 = vld [vmem:[%s2 + $0x180] sm:$0xff]
  %v465 = vld [vmem:[%s2 + $0x188] sm:$0xff]
  %v466 = vld [vmem:[%s2 + $0x190] sm:$0xff]
  %v467 = vld [vmem:[%s2 + $0x198] sm:$0xff]
  %v468 = vld [vmem:[%s2 + $0x1a0] sm:$0xff]
  %v469 = vld [vmem:[%s2 + $0x1a8] sm:$0xff]
  %v470 = vld [vmem:[%s2 + $0x1b0] sm:$0xff]
  %v471 = vld [vmem:[%s2 + $0x1b8] sm:$0xff]
  %v472 = vld [vmem:[%s2 + $0x1c0] sm:$0xff]
  %v473 = vld [vmem:[%s2 + $0x1c8] sm:$0xff]
  %v474 = vld [vmem:[%s2 + $0x1d0] sm:$0xff]
  %v475 = vld [vmem:[%s2 + $0x1d8] sm:$0xff]
  %v476 = vld [vmem:[%s2 + $0x1e0] sm:$0xff]
  %v477 = vld [vmem:[%s2 + $0x1e8] sm:$0xff]
  %v478 = vld [vmem:[%s2 + $0x1f0] sm:$0xff]
  %v479 = vld [vmem:[%s2 + $0x1f8] sm:$0xff]
  %s480 = smul.u32 0, 4
  %s481 = smul.addr %s480, 8
  %s482 = scalar_lea.vmem [#allocation2], %s481
  %v483 = vld [vmem:[%s482] sm:$0xff]
  %v484 = vld [vmem:[%s482 + $0x8] sm:$0xff]
  %v485 = vld [vmem:[%s482 + $0x10] sm:$0xff]
  %v486 = vld [vmem:[%s482 + $0x18] sm:$0xff]
  %v487 = vld [vmem:[#allocation4] sm:$0xff]
  %488 = vmatprep.subr.mxu0 %v477
  %489 = vmatpush1.msra.mxu0 %v476
  %490 = vmatprep.subr.mxu0 %v473
  %491 = vmatpush1.msra.mxu0 %v472
  %492 = vmatprep.subr.mxu0 %v469
  %493 = vmatpush1.msra.mxu0 %v468
  %494 = vmatprep.subr.mxu0 %v465
  %495 = vmatpush1.msra.mxu0 %v464
  %496 = vmatprep.subr.mxu0 %v461
  %497 = vmatpush1.msra.mxu0 %v460
  %498 = vmatprep.subr.mxu0 %v457
  %499 = vmatpush1.msra.mxu0 %v456
  %500 = vmatprep.subr.mxu0 %v453
  %501 = vmatpush1.msra.mxu0 %v452
  %502 = vmatprep.subr.mxu0 %v449
  %503 = vmatpush1.msra.mxu0 %v448
  %504 = vmatprep.subr.mxu0 %v445
  %505 = vmatpush1.msra.mxu0 %v444
  %506 = vmatprep.subr.mxu0 %v441
  %507 = vmatpush1.msra.mxu0 %v440
  %508 = vmatprep.subr.mxu0 %v437
  %509 = vmatpush1.msra.mxu0 %v436
  %510 = vmatprep.subr.mxu0 %v433
  %511 = vmatpush1.msra.mxu0 %v432
  %512 = vmatprep.subr.mxu0 %v429
  %513 = vmatpush1.msra.mxu0 %v428
  %514 = vmatprep.subr.mxu0 %v425
  %515 = vmatpush1.msra.mxu0 %v424
  %516 = vmatprep.subr.mxu0 %v421
  %517 = vmatpush1.msra.mxu0 %v420
  %518 = vmatprep.subr.mxu0 %v417
  %519 = vmatpush1.msra.mxu0 %v416
  %520 = vmatprep.subr.mxu0 0.0
  %521 = vmatpush2.msra.mxu0 0.0
  %522 = vmatprep.subr.mxu0 0.0
  %523 = vmatpush2.msra.mxu0 0.0
  %524 = vmatprep.subr.mxu0 0.0
  %525 = vmatpush2.msra.mxu0 0.0
  %526 = vmatprep.subr.mxu0 0.0
  %527 = vmatpush2.msra.mxu0 0.0
  %528 = vmatprep.subr.mxu0 0.0
  %529 = vmatpush2.msra.mxu0 0.0
  %530 = vmatprep.subr.mxu0 0.0
  %531 = vmatpush2.msra.mxu0 0.0
  %532 = vmatprep.subr.mxu0 0.0
  %533 = vmatpush2.msra.mxu0 0.0
  %534 = vmatprep.subr.mxu0 0.0
  %535 = vmatpush2.msra.mxu0 0.0
  %536 = vmatprep.subr.mxu0 0.0
  %537 = vmatpush2.msra.mxu0 0.0
  %538 = vmatprep.subr.mxu0 0.0
  %539 = vmatpush2.msra.mxu0 0.0
  %540 = vmatprep.subr.mxu0 0.0
  %541 = vmatpush2.msra.mxu0 0.0
  %542 = vmatprep.subr.mxu0 0.0
  %543 = vmatpush2.msra.mxu0 0.0
  %544 = vmatprep.subr.mxu0 0.0
  %545 = vmatpush2.msra.mxu0 0.0
  %546 = vmatprep.subr.mxu0 0.0
  %547 = vmatpush2.msra.mxu0 0.0
  %548 = vmatprep.subr.mxu0 0.0
  %549 = vmatpush2.msra.mxu0 0.0
  %550 = vmatprep.subr.mxu0 0.0
  %551 = vmatpush2.msra.mxu0 0.0
  %552 = vmatprep.mubr.f32.mxu0 0.0
  %553 = vmatmul.mubr.f32.gmra.mxu0 %v487
  %v554 = vpop.f32.mrf.mxu0
  %v555 = vadd.f32 0.0, %v554
  %v556 = vpop.f32.mrf.mxu0
  %v557 = vadd.f32 0.0, %v556
  %558 = vdwg.mxu0
  %559 = vmatprep.subr.mxu0 %v479
  %560 = vmatpush1.msra.mxu0 %v478
  %561 = vmatprep.subr.mxu0 %v475
  %562 = vmatpush1.msra.mxu0 %v474
  %563 = vmatprep.subr.mxu0 %v471
  %564 = vmatpush1.msra.mxu0 %v470
  %565 = vmatprep.subr.mxu0 %v467
  %566 = vmatpush1.msra.mxu0 %v466
  %567 = vmatprep.subr.mxu0 %v463
  %568 = vmatpush1.msra.mxu0 %v462
  %569 = vmatprep.subr.mxu0 %v459
  %570 = vmatpush1.msra.mxu0 %v458
  %571 = vmatprep.subr.mxu0 %v455
  %572 = vmatpush1.msra.mxu0 %v454
  %573 = vmatprep.subr.mxu0 %v451
  %574 = vmatpush1.msra.mxu0 %v450
  %575 = vmatprep.subr.mxu0 %v447
  %576 = vmatpush1.msra.mxu0 %v446
  %577 = vmatprep.subr.mxu0 %v443
  %578 = vmatpush1.msra.mxu0 %v442
  %579 = vmatprep.subr.mxu0 %v439
  %580 = vmatpush1.msra.mxu0 %v438
  %581 = vmatprep.subr.mxu0 %v435
  %582 = vmatpush1.msra.mxu0 %v434
  %583 = vmatprep.subr.mxu0 %v431
  %584 = vmatpush1.msra.mxu0 %v430
  %585 = vmatprep.subr.mxu0 %v427
  %586 = vmatpush1.msra.mxu0 %v426
  %587 = vmatprep.subr.mxu0 %v423
  %588 = vmatpush1.msra.mxu0 %v422
  %589 = vmatprep.subr.mxu0 %v419
  %590 = vmatpush1.msra.mxu0 %v418
  %591 = vmatprep.subr.mxu0 0.0
  %592 = vmatpush2.msra.mxu0 0.0
  %593 = vmatprep.subr.mxu0 0.0
  %594 = vmatpush2.msra.mxu0 0.0
  %595 = vmatprep.subr.mxu0 0.0
  %596 = vmatpush2.msra.mxu0 0.0
  %597 = vmatprep.subr.mxu0 0.0
  %598 = vmatpush2.msra.mxu0 0.0
  %599 = vmatprep.subr.mxu0 0.0
  %600 = vmatpush2.msra.mxu0 0.0
  %601 = vmatprep.subr.mxu0 0.0
  %602 = vmatpush2.msra.mxu0 0.0
  %603 = vmatprep.subr.mxu0 0.0
  %604 = vmatpush2.msra.mxu0 0.0
  %605 = vmatprep.subr.mxu0 0.0
  %606 = vmatpush2.msra.mxu0 0.0
  %607 = vmatprep.subr.mxu0 0.0
  %608 = vmatpush2.msra.mxu0 0.0
  %609 = vmatprep.subr.mxu0 0.0
  %610 = vmatpush2.msra.mxu0 0.0
  %611 = vmatprep.subr.mxu0 0.0
  %612 = vmatpush2.msra.mxu0 0.0
  %613 = vmatprep.subr.mxu0 0.0
  %614 = vmatpush2.msra.mxu0 0.0
  %615 = vmatprep.subr.mxu0 0.0
  %616 = vmatpush2.msra.mxu0 0.0
  %617 = vmatprep.subr.mxu0 0.0
  %618 = vmatpush2.msra.mxu0 0.0
  %619 = vmatprep.subr.mxu0 0.0
  %620 = vmatpush2.msra.mxu0 0.0
  %621 = vmatprep.subr.mxu0 0.0
  %622 = vmatpush2.msra.mxu0 0.0
  %623 = vmatprep.mubr.f32.mxu0 0.0
  %624 = vmatmul.mubr.f32.gmra.mxu0 %v487
  %v625 = vpop.f32.mrf.mxu0
  %v626 = vadd.f32 0.0, %v625
  %v627 = vpop.f32.mrf.mxu0
  %v628 = vadd.f32 0.0, %v627
  %629 = vdwg.mxu0
  %v630 = vadd.f32 %v483, %v555
  %v631 = vadd.f32 %v484, %v557
  %v632 = vadd.f32 %v485, %v626
  %v633 = vadd.f32 %v486, %v628
  %v634 = vxor.u32 %v630, 2147483648
  %v635 = vmul.f32 %v634, 1.442695
  %v636 = vpow.pop %v635
  %v637 = vadd.f32 %v636, 1.0
  %v638 = vrcp.pop %v637
  %v639 = vmul.f32 1.0, %v638
  %v640 = vxor.u32 %v631, 2147483648
  %v641 = vmul.f32 %v640, 1.442695
  %v642 = vpow.pop %v641
  %v643 = vadd.f32 %v642, 1.0
  %v644 = vrcp.pop %v643
  %v645 = vmul.f32 1.0, %v644
  %v646 = vtanh.pop %v632
  %v647 = vxor.u32 %v633, 2147483648
  %v648 = vmul.f32 %v647, 1.442695
  %v649 = vpow.pop %v648
  %v650 = vadd.f32 %v649, 1.0
  %v651 = vrcp.pop %v650
  %v652 = vmul.f32 1.0, %v651
  %v653 = vld [vmem:[#allocation5] sm:$0xff]
  %v654 = vmul.f32 %v645, %v653
  %v655 = vmul.f32 %v639, %v646
  %v656 = vadd.f32 %v654, %v655
  %v657 = vtanh.pop %v656
  %v658 = vmul.f32 %v652, %v657
  %659 = vst [vmem:[#allocation5] sm:$0xff] %v656
  %660 = vst [vmem:[#allocation4] sm:$0xff] %v658
  %661 = vst [vmem:[#allocation3] sm:$0xff] %v658
  %s662 = smul.u32 1, 4
  %s663 = smul.addr %s662, 8
  %s664 = scalar_lea.vmem [#allocation2], %s663
  %v665 = vld [vmem:[%s664] sm:$0xff]
  %v666 = vld [vmem:[%s664 + $0x8] sm:$0xff]
  %v667 = vld [vmem:[%s664 + $0x10] sm:$0xff]
  %v668 = vld [vmem:[%s664 + $0x18] sm:$0xff]
  %v669 = vld [vmem:[#allocation4] sm:$0xff]
  %670 = vmatprep.subr.mxu0 %v477
  %671 = vmatpush1.msra.mxu0 %v476
  %672 = vmatprep.subr.mxu0 %v473
  %673 = vmatpush1.msra.mxu0 %v472
  %674 = vmatprep.subr.mxu0 %v469
  %675 = vmatpush1.msra.mxu0 %v468
  %676 = vmatprep.subr.mxu0 %v465
  %677 = vmatpush1.msra.mxu0 %v464
  %678 = vmatprep.subr.mxu0 %v461
  %679 = vmatpush1.msra.mxu0 %v460
  %680 = vmatprep.subr.mxu0 %v457
  %681 = vmatpush1.msra.mxu0 %v456
  %682 = vmatprep.subr.mxu0 %v453
  %683 = vmatpush1.msra.mxu0 %v452
  %684 = vmatprep.subr.mxu0 %v449
  %685 = vmatpush1.msra.mxu0 %v448
  %686 = vmatprep.subr.mxu0 %v445
  %687 = vmatpush1.msra.mxu0 %v444
  %688 = vmatprep.subr.mxu0 %v441
  %689 = vmatpush1.msra.mxu0 %v440
  %690 = vmatprep.subr.mxu0 %v437
  %691 = vmatpush1.msra.mxu0 %v436
  %692 = vmatprep.subr.mxu0 %v433
  %693 = vmatpush1.msra.mxu0 %v432
  %694 = vmatprep.subr.mxu0 %v429
  %695 = vmatpush1.msra.mxu0 %v428
  %696 = vmatprep.subr.mxu0 %v425
  %697 = vmatpush1.msra.mxu0 %v424
  %698 = vmatprep.subr.mxu0 %v421
  %699 = vmatpush1.msra.mxu0 %v420
  %700 = vmatprep.subr.mxu0 %v417
  %701 = vmatpush1.msra.mxu0 %v416
  %702 = vmatprep.subr.mxu0 0.0
  %703 = vmatpush2.msra.mxu0 0.0
  %704 = vmatprep.subr.mxu0 0.0
  %705 = vmatpush2.msra.mxu0 0.0
  %706 = vmatprep.subr.mxu0 0.0
  %707 = vmatpush2.msra.mxu0 0.0
  %708 = vmatprep.subr.mxu0 0.0
  %709 = vmatpush2.msra.mxu0 0.0
  %710 = vmatprep.subr.mxu0 0.0
  %711 = vmatpush2.msra.mxu0 0.0
  %712 = vmatprep.subr.mxu0 0.0
  %713 = vmatpush2.msra.mxu0 0.0
  %714 = vmatprep.subr.mxu0 0.0
  %715 = vmatpush2.msra.mxu0 0.0
  %716 = vmatprep.subr.mxu0 0.0
  %717 = vmatpush2.msra.mxu0 0.0
  %718 = vmatprep.subr.mxu0 0.0
  %719 = vmatpush2.msra.mxu0 0.0
  %720 = vmatprep.subr.mxu0 0.0
  %721 = vmatpush2.msra.mxu0 0.0
  %722 = vmatprep.subr.mxu0 0.0
  %723 = vmatpush2.msra.mxu0 0.0
  %724 = vmatprep.subr.mxu0 0.0
  %725 = vmatpush2.msra.mxu0 0.0
  %726 = vmatprep.subr.mxu0 0.0
  %727 = vmatpush2.msra.mxu0 0.0
  %728 = vmatprep.subr.mxu0 0.0
  %729 = vmatpush2.msra.mxu0 0.0
  %730 = vmatprep.subr.mxu0 0.0
  %731 = vmatpush2.msra.mxu0 0.0
  %732 = vmatprep.subr.mxu0 0.0
  %733 = vmatpush2.msra.mxu0 0.0
  %734 = vmatprep.mubr.f32.mxu0 0.0
  %735 = vmatmul.mubr.f32.gmra.mxu0 %v669
  %v736 = vpop.f32.mrf.mxu0
  %v737 = vadd.f32 0.0, %v736
  %v738 = vpop.f32.mrf.mxu0
  %v739 = vadd.f32 0.0, %v738
  %740 = vdwg.mxu0
  %741 = vmatprep.subr.mxu0 %v479
  %742 = vmatpush1.msra.mxu0 %v478
  %743 = vmatprep.subr.mxu0 %v475
  %744 = vmatpush1.msra.mxu0 %v474
  %745 = vmatprep.subr.mxu0 %v471
  %746 = vmatpush1.msra.mxu0 %v470
  %747 = vmatprep.subr.mxu0 %v467
  %748 = vmatpush1.msra.mxu0 %v466
  %749 = vmatprep.subr.mxu0 %v463
  %750 = vmatpush1.msra.mxu0 %v462
  %751 = vmatprep.subr.mxu0 %v459
  %752 = vmatpush1.msra.mxu0 %v458
  %753 = vmatprep.subr.mxu0 %v455
  %754 = vmatpush1.msra.mxu0 %v454
  %755 = vmatprep.subr.mxu0 %v451
  %756 = vmatpush1.msra.mxu0 %v450
  %757 = vmatprep.subr.mxu0 %v447
  %758 = vmatpush1.msra.mxu0 %v446
  %759 = vmatprep.subr.mxu0 %v443
  %760 = vmatpush1.msra.mxu0 %v442
  %761 = vmatprep.subr.mxu0 %v439
  %762 = vmatpush1.msra.mxu0 %v438
  %763 = vmatprep.subr.mxu0 %v435
  %764 = vmatpush1.msra.mxu0 %v434
  %765 = vmatprep.subr.mxu0 %v431
  %766 = vmatpush1.msra.mxu0 %v430
  %767 = vmatprep.subr.mxu0 %v427
  %768 = vmatpush1.msra.mxu0 %v426
  %769 = vmatprep.subr.mxu0 %v423
  %770 = vmatpush1.msra.mxu0 %v422
  %771 = vmatprep.subr.mxu0 %v419
  %772 = vmatpush1.msra.mxu0 %v418
  %773 = vmatprep.subr.mxu0 0.0
  %774 = vmatpush2.msra.mxu0 0.0
  %775 = vmatprep.subr.mxu0 0.0
  %776 = vmatpush2.msra.mxu0 0.0
  %777 = vmatprep.subr.mxu0 0.0
  %778 = vmatpush2.msra.mxu0 0.0
  %779 = vmatprep.subr.mxu0 0.0
  %780 = vmatpush2.msra.mxu0 0.0
  %781 = vmatprep.subr.mxu0 0.0
  %782 = vmatpush2.msra.mxu0 0.0
  %783 = vmatprep.subr.mxu0 0.0
  %784 = vmatpush2.msra.mxu0 0.0
  %785 = vmatprep.subr.mxu0 0.0
  %786 = vmatpush2.msra.mxu0 0.0
  %787 = vmatprep.subr.mxu0 0.0
  %788 = vmatpush2.msra.mxu0 0.0
  %789 = vmatprep.subr.mxu0 0.0
  %790 = vmatpush2.msra.mxu0 0.0
  %791 = vmatprep.subr.mxu0 0.0
  %792 = vmatpush2.msra.mxu0 0.0
  %793 = vmatprep.subr.mxu0 0.0
  %794 = vmatpush2.msra.mxu0 0.0
  %795 = vmatprep.subr.mxu0 0.0
  %796 = vmatpush2.msra.mxu0 0.0
  %797 = vmatprep.subr.mxu0 0.0
  %798 = vmatpush2.msra.mxu0 0.0
  %799 = vmatprep.subr.mxu0 0.0
  %800 = vmatpush2.msra.mxu0 0.0
  %801 = vmatprep.subr.mxu0 0.0
  %802 = vmatpush2.msra.mxu0 0.0
  %803 = vmatprep.subr.mxu0 0.0
  %804 = vmatpush2.msra.mxu0 0.0
  %805 = vmatprep.mubr.f32.mxu0 0.0
  %806 = vmatmul.mubr.f32.gmra.mxu0 %v669
  %v807 = vpop.f32.mrf.mxu0
  %v808 = vadd.f32 0.0, %v807
  %v809 = vpop.f32.mrf.mxu0
  %v810 = vadd.f32 0.0, %v809
  %811 = vdwg.mxu0
  %v812 = vadd.f32 %v665, %v737
  %v813 = vadd.f32 %v666, %v739
  %v814 = vadd.f32 %v667, %v808
  %v815 = vadd.f32 %v668, %v810
  %v816 = vxor.u32 %v812, 2147483648
  %v817 = vmul.f32 %v816, 1.442695
  %v818 = vpow.pop %v817
  %v819 = vadd.f32 %v818, 1.0
  %v820 = vrcp.pop %v819
  %v821 = vmul.f32 1.0, %v820
  %v822 = vxor.u32 %v813, 2147483648
  %v823 = vmul.f32 %v822, 1.442695
  %v824 = vpow.pop %v823
  %v825 = vadd.f32 %v824, 1.0
  %v826 = vrcp.pop %v825
  %v827 = vmul.f32 1.0, %v826
  %v828 = vtanh.pop %v814
  %v829 = vxor.u32 %v815, 2147483648
  %v830 = vmul.f32 %v829, 1.442695
  %v831 = vpow.pop %v830
  %v832 = vadd.f32 %v831, 1.0
  %v833 = vrcp.pop %v832
  %v834 = vmul.f32 1.0, %v833
  %v835 = vld [vmem:[#allocation5] sm:$0xff]
  %v836 = vmul.f32 %v827, %v835
  %v837 = vmul.f32 %v821, %v828
  %v838 = vadd.f32 %v836, %v837
  %v839 = vtanh.pop %v838
  %v840 = vmul.f32 %v834, %v839
  %841 = vst [vmem:[#allocation5] sm:$0xff] %v838
  %842 = vst [vmem:[#allocation4] sm:$0xff] %v840
  %s843 = scalar_lea.vmem [#allocation3], 8
  %844 = vst [vmem:[%s843] sm:$0xff] %v840
  %s845 = smul.u32 2, 4
  %s846 = smul.addr %s845, 8
  %s847 = scalar_lea.vmem [#allocation2], %s846
  %v848 = vld [vmem:[%s847] sm:$0xff]
  %v849 = vld [vmem:[%s847 + $0x8] sm:$0xff]
  %v850 = vld [vmem:[%s847 + $0x10] sm:$0xff]
  %v851 = vld [vmem:[%s847 + $0x18] sm:$0xff]
  %v852 = vld [vmem:[#allocation4] sm:$0xff]
  %853 = vmatprep.subr.mxu0 %v477
  %854 = vmatpush1.msra.mxu0 %v476
  %855 = vmatprep.subr.mxu0 %v473
  %856 = vmatpush1.msra.mxu0 %v472
  %857 = vmatprep.subr.mxu0 %v469
  %858 = vmatpush1.msra.mxu0 %v468
  %859 = vmatprep.subr.mxu0 %v465
  %860 = vmatpush1.msra.mxu0 %v464
  %861 = vmatprep.subr.mxu0 %v461
  %862 = vmatpush1.msra.mxu0 %v460
  %863 = vmatprep.subr.mxu0 %v457
  %864 = vmatpush1.msra.mxu0 %v456
  %865 = vmatprep.subr.mxu0 %v453
  %866 = vmatpush1.msra.mxu0 %v452
  %867 = vmatprep.subr.mxu0 %v449
  %868 = vmatpush1.msra.mxu0 %v448
  %869 = vmatprep.subr.mxu0 %v445
  %870 = vmatpush1.msra.mxu0 %v444
  %871 = vmatprep.subr.mxu0 %v441
  %872 = vmatpush1.msra.mxu0 %v440
  %873 = vmatprep.subr.mxu0 %v437
  %874 = vmatpush1.msra.mxu0 %v436
  %875 = vmatprep.subr.mxu0 %v433
  %876 = vmatpush1.msra.mxu0 %v432
  %877 = vmatprep.subr.mxu0 %v429
  %878 = vmatpush1.msra.mxu0 %v428
  %879 = vmatprep.subr.mxu0 %v425
  %880 = vmatpush1.msra.mxu0 %v424
  %881 = vmatprep.subr.mxu0 %v421
  %882 = vmatpush1.msra.mxu0 %v420
  %883 = vmatprep.subr.mxu0 %v417
  %884 = vmatpush1.msra.mxu0 %v416
  %885 = vmatprep.subr.mxu0 0.0
  %886 = vmatpush2.msra.mxu0 0.0
  %887 = vmatprep.subr.mxu0 0.0
  %888 = vmatpush2.msra.mxu0 0.0
  %889 = vmatprep.subr.mxu0 0.0
  %890 = vmatpush2.msra.mxu0 0.0
  %891 = vmatprep.subr.mxu0 0.0
  %892 = vmatpush2.msra.mxu0 0.0
  %893 = vmatprep.subr.mxu0 0.0
  %894 = vmatpush2.msra.mxu0 0.0
  %895 = vmatprep.subr.mxu0 0.0
  %896 = vmatpush2.msra.mxu0 0.0
  %897 = vmatprep.subr.mxu0 0.0
  %898 = vmatpush2.msra.mxu0 0.0
  %899 = vmatprep.subr.mxu0 0.0
  %900 = vmatpush2.msra.mxu0 0.0
  %901 = vmatprep.subr.mxu0 0.0
  %902 = vmatpush2.msra.mxu0 0.0
  %903 = vmatprep.subr.mxu0 0.0
  %904 = vmatpush2.msra.mxu0 0.0
  %905 = vmatprep.subr.mxu0 0.0
  %906 = vmatpush2.msra.mxu0 0.0
  %907 = vmatprep.subr.mxu0 0.0
  %908 = vmatpush2.msra.mxu0 0.0
  %909 = vmatprep.subr.mxu0 0.0
  %910 = vmatpush2.msra.mxu0 0.0
  %911 = vmatprep.subr.mxu0 0.0
  %912 = vmatpush2.msra.mxu0 0.0
  %913 = vmatprep.subr.mxu0 0.0
  %914 = vmatpush2.msra.mxu0 0.0
  %915 = vmatprep.subr.mxu0 0.0
  %916 = vmatpush2.msra.mxu0 0.0
  %917 = vmatprep.mubr.f32.mxu0 0.0
  %918 = vmatmul.mubr.f32.gmra.mxu0 %v852
  %v919 = vpop.f32.mrf.mxu0
  %v920 = vadd.f32 0.0, %v919
  %v921 = vpop.f32.mrf.mxu0
  %v922 = vadd.f32 0.0, %v921
  %923 = vdwg.mxu0
  %924 = vmatprep.subr.mxu0 %v479
  %925 = vmatpush1.msra.mxu0 %v478
  %926 = vmatprep.subr.mxu0 %v475
  %927 = vmatpush1.msra.mxu0 %v474
  %928 = vmatprep.subr.mxu0 %v471
  %929 = vmatpush1.msra.mxu0 %v470
  %930 = vmatprep.subr.mxu0 %v467
  %931 = vmatpush1.msra.mxu0 %v466
  %932 = vmatprep.subr.mxu0 %v463
  %933 = vmatpush1.msra.mxu0 %v462
  %934 = vmatprep.subr.mxu0 %v459
  %935 = vmatpush1.msra.mxu0 %v458
  %936 = vmatprep.subr.mxu0 %v455
  %937 = vmatpush1.msra.mxu0 %v454
  %938 = vmatprep.subr.mxu0 %v451
  %939 = vmatpush1.msra.mxu0 %v450
  %940 = vmatprep.subr.mxu0 %v447
  %941 = vmatpush1.msra.mxu0 %v446
  %942 = vmatprep.subr.mxu0 %v443
  %943 = vmatpush1.msra.mxu0 %v442
  %944 = vmatprep.subr.mxu0 %v439
  %945 = vmatpush1.msra.mxu0 %v438
  %946 = vmatprep.subr.mxu0 %v435
  %947 = vmatpush1.msra.mxu0 %v434
  %948 = vmatprep.subr.mxu0 %v431
  %949 = vmatpush1.msra.mxu0 %v430
  %950 = vmatprep.subr.mxu0 %v427
  %951 = vmatpush1.msra.mxu0 %v426
  %952 = vmatprep.subr.mxu0 %v423
  %953 = vmatpush1.msra.mxu0 %v422
  %954 = vmatprep.subr.mxu0 %v419
  %955 = vmatpush1.msra.mxu0 %v418
  %956 = vmatprep.subr.mxu0 0.0
  %957 = vmatpush2.msra.mxu0 0.0
  %958 = vmatprep.subr.mxu0 0.0
  %959 = vmatpush2.msra.mxu0 0.0
  %960 = vmatprep.subr.mxu0 0.0
  %961 = vmatpush2.msra.mxu0 0.0
  %962 = vmatprep.subr.mxu0 0.0
  %963 = vmatpush2.msra.mxu0 0.0
  %964 = vmatprep.subr.mxu0 0.0
  %965 = vmatpush2.msra.mxu0 0.0
  %966 = vmatprep.subr.mxu0 0.0
  %967 = vmatpush2.msra.mxu0 0.0
  %968 = vmatprep.subr.mxu0 0.0
  %969 = vmatpush2.msra.mxu0 0.0
  %970 = vmatprep.subr.mxu0 0.0
  %971 = vmatpush2.msra.mxu0 0.0
  %972 = vmatprep.subr.mxu0 0.0
  %973 = vmatpush2.msra.mxu0 0.0
  %974 = vmatprep.subr.mxu0 0.0
  %975 = vmatpush2.msra.mxu0 0.0
  %976 = vmatprep.subr.mxu0 0.0
  %977 = vmatpush2.msra.mxu0 0.0
  %978 = vmatprep.subr.mxu0 0.0
  %979 = vmatpush2.msra.mxu0 0.0
  %980 = vmatprep.subr.mxu0 0.0
  %981 = vmatpush2.msra.mxu0 0.0
  %982 = vmatprep.subr.mxu0 0.0
  %983 = vmatpush2.msra.mxu0 0.0
  %984 = vmatprep.subr.mxu0 0.0
  %985 = vmatpush2.msra.mxu0 0.0
  %986 = vmatprep.subr.mxu0 0.0
  %987 = vmatpush2.msra.mxu0 0.0
  %988 = vmatprep.mubr.f32.mxu0 0.0
  %989 = vmatmul.mubr.f32.gmra.mxu0 %v852
  %v990 = vpop.f32.mrf.mxu0
  %v991 = vadd.f32 0.0, %v990
  %v992 = vpop.f32.mrf.mxu0
  %v993 = vadd.f32 0.0, %v992
  %994 = vdwg.mxu0
  %v995 = vadd.f32 %v848, %v920
  %v996 = vadd.f32 %v849, %v922
  %v997 = vadd.f32 %v850, %v991
  %v998 = vadd.f32 %v851, %v993
  %v999 = vxor.u32 %v995, 2147483648
  %v1000 = vmul.f32 %v999, 1.442695
  %v1001 = vpow.pop %v1000
  %v1002 = vadd.f32 %v1001, 1.0
  %v1003 = vrcp.pop %v1002
  %v1004 = vmul.f32 1.0, %v1003
  %v1005 = vxor.u32 %v996, 2147483648
  %v1006 = vmul.f32 %v1005, 1.442695
  %v1007 = vpow.pop %v1006
  %v1008 = vadd.f32 %v1007, 1.0
  %v1009 = vrcp.pop %v1008
  %v1010 = vmul.f32 1.0, %v1009
  %v1011 = vtanh.pop %v997
  %v1012 = vxor.u32 %v998, 2147483648
  %v1013 = vmul.f32 %v1012, 1.442695
  %v1014 = vpow.pop %v1013
  %v1015 = vadd.f32 %v1014, 1.0
  %v1016 = vrcp.pop %v1015
  %v1017 = vmul.f32 1.0, %v1016
  %v1018 = vld [vmem:[#allocation5] sm:$0xff]
  %v1019 = vmul.f32 %v1010, %v1018
  %v1020 = vmul.f32 %v1004, %v1011
  %v1021 = vadd.f32 %v1019, %v1020
  %v1022 = vtanh.pop %v1021
  %v1023 = vmul.f32 %v1017, %v1022
  %1024 = vst [vmem:[#allocation5] sm:$0xff] %v1021
  %1025 = vst [vmem:[#allocation4] sm:$0xff] %v1023
  %s1026 = scalar_lea.vmem [#allocation3], 16
  %1027 = vst [vmem:[%s1026] sm:$0xff] %v1023
  %s1028 = smul.u32 3, 4
  %s1029 = smul.addr %s1028, 8
  %s1030 = scalar_lea.vmem [#allocation2], %s1029
  %v1031 = vld [vmem:[%s1030] sm:$0xff]
  %v1032 = vld [vmem:[%s1030 + $0x8] sm:$0xff]
  %v1033 = vld [vmem:[%s1030 + $0x10] sm:$0xff]
  %v1034 = vld [vmem:[%s1030 + $0x18] sm:$0xff]
  %v1035 = vld [vmem:[#allocation4] sm:$0xff]
  %1036 = vmatprep.subr.mxu0 %v477
  %1037 = vmatpush1.msra.mxu0 %v476
  %1038 = vmatprep.subr.mxu0 %v473
  %1039 = vmatpush1.msra.mxu0 %v472
  %1040 = vmatprep.subr.mxu0 %v469
  %1041 = vmatpush1.msra.mxu0 %v468
  %1042 = vmatprep.subr.mxu0 %v465
  %1043 = vmatpush1.msra.mxu0 %v464
  %1044 = vmatprep.subr.mxu0 %v461
  %1045 = vmatpush1.msra.mxu0 %v460
  %1046 = vmatprep.subr.mxu0 %v457
  %1047 = vmatpush1.msra.mxu0 %v456
  %1048 = vmatprep.subr.mxu0 %v453
  %1049 = vmatpush1.msra.mxu0 %v452
  %1050 = vmatprep.subr.mxu0 %v449
  %1051 = vmatpush1.msra.mxu0 %v448
  %1052 = vmatprep.subr.mxu0 %v445
  %1053 = vmatpush1.msra.mxu0 %v444
  %1054 = vmatprep.subr.mxu0 %v441
  %1055 = vmatpush1.msra.mxu0 %v440
  %1056 = vmatprep.subr.mxu0 %v437
  %1057 = vmatpush1.msra.mxu0 %v436
  %1058 = vmatprep.subr.mxu0 %v433
  %1059 = vmatpush1.msra.mxu0 %v432
  %1060 = vmatprep.subr.mxu0 %v429
  %1061 = vmatpush1.msra.mxu0 %v428
  %1062 = vmatprep.subr.mxu0 %v425
  %1063 = vmatpush1.msra.mxu0 %v424
  %1064 = vmatprep.subr.mxu0 %v421
  %1065 = vmatpush1.msra.mxu0 %v420
  %1066 = vmatprep.subr.mxu0 %v417
  %1067 = vmatpush1.msra.mxu0 %v416
  %1068 = vmatprep.subr.mxu0 0.0
  %1069 = vmatpush2.msra.mxu0 0.0
  %1070 = vmatprep.subr.mxu0 0.0
  %1071 = vmatpush2.msra.mxu0 0.0
  %1072 = vmatprep.subr.mxu0 0.0
  %1073 = vmatpush2.msra.mxu0 0.0
  %1074 = vmatprep.subr.mxu0 0.0
  %1075 = vmatpush2.msra.mxu0 0.0
  %1076 = vmatprep.subr.mxu0 0.0
  %1077 = vmatpush2.msra.mxu0 0.0
  %1078 = vmatprep.subr.mxu0 0.0
  %1079 = vmatpush2.msra.mxu0 0.0
  %1080 = vmatprep.subr.mxu0 0.0
  %1081 = vmatpush2.msra.mxu0 0.0
  %1082 = vmatprep.subr.mxu0 0.0
  %1083 = vmatpush2.msra.mxu0 0.0
  %1084 = vmatprep.subr.mxu0 0.0
  %1085 = vmatpush2.msra.mxu0 0.0
  %1086 = vmatprep.subr.mxu0 0.0
  %1087 = vmatpush2.msra.mxu0 0.0
  %1088 = vmatprep.subr.mxu0 0.0
  %1089 = vmatpush2.msra.mxu0 0.0
  %1090 = vmatprep.subr.mxu0 0.0
  %1091 = vmatpush2.msra.mxu0 0.0
  %1092 = vmatprep.subr.mxu0 0.0
  %1093 = vmatpush2.msra.mxu0 0.0
  %1094 = vmatprep.subr.mxu0 0.0
  %1095 = vmatpush2.msra.mxu0 0.0
  %1096 = vmatprep.subr.mxu0 0.0
  %1097 = vmatpush2.msra.mxu0 0.0
  %1098 = vmatprep.subr.mxu0 0.0
  %1099 = vmatpush2.msra.mxu0 0.0
  %1100 = vmatprep.mubr.f32.mxu0 0.0
  %1101 = vmatmul.mubr.f32.gmra.mxu0 %v1035
  %v1102 = vpop.f32.mrf.mxu0
  %v1103 = vadd.f32 0.0, %v1102
  %v1104 = vpop.f32.mrf.mxu0
  %v1105 = vadd.f32 0.0, %v1104
  %1106 = vdwg.mxu0
  %1107 = vmatprep.subr.mxu0 %v479
  %1108 = vmatpush1.msra.mxu0 %v478
  %1109 = vmatprep.subr.mxu0 %v475
  %1110 = vmatpush1.msra.mxu0 %v474
  %1111 = vmatprep.subr.mxu0 %v471
  %1112 = vmatpush1.msra.mxu0 %v470
  %1113 = vmatprep.subr.mxu0 %v467
  %1114 = vmatpush1.msra.mxu0 %v466
  %1115 = vmatprep.subr.mxu0 %v463
  %1116 = vmatpush1.msra.mxu0 %v462
  %1117 = vmatprep.subr.mxu0 %v459
  %1118 = vmatpush1.msra.mxu0 %v458
  %1119 = vmatprep.subr.mxu0 %v455
  %1120 = vmatpush1.msra.mxu0 %v454
  %1121 = vmatprep.subr.mxu0 %v451
  %1122 = vmatpush1.msra.mxu0 %v450
  %1123 = vmatprep.subr.mxu0 %v447
  %1124 = vmatpush1.msra.mxu0 %v446
  %1125 = vmatprep.subr.mxu0 %v443
  %1126 = vmatpush1.msra.mxu0 %v442
  %1127 = vmatprep.subr.mxu0 %v439
  %1128 = vmatpush1.msra.mxu0 %v438
  %1129 = vmatprep.subr.mxu0 %v435
  %1130 = vmatpush1.msra.mxu0 %v434
  %1131 = vmatprep.subr.mxu0 %v431
  %1132 = vmatpush1.msra.mxu0 %v430
  %1133 = vmatprep.subr.mxu0 %v427
  %1134 = vmatpush1.msra.mxu0 %v426
  %1135 = vmatprep.subr.mxu0 %v423
  %1136 = vmatpush1.msra.mxu0 %v422
  %1137 = vmatprep.subr.mxu0 %v419
  %1138 = vmatpush1.msra.mxu0 %v418
  %1139 = vmatprep.subr.mxu0 0.0
  %1140 = vmatpush2.msra.mxu0 0.0
  %1141 = vmatprep.subr.mxu0 0.0
  %1142 = vmatpush2.msra.mxu0 0.0
  %1143 = vmatprep.subr.mxu0 0.0
  %1144 = vmatpush2.msra.mxu0 0.0
  %1145 = vmatprep.subr.mxu0 0.0
  %1146 = vmatpush2.msra.mxu0 0.0
  %1147 = vmatprep.subr.mxu0 0.0
  %1148 = vmatpush2.msra.mxu0 0.0
  %1149 = vmatprep.subr.mxu0 0.0
  %1150 = vmatpush2.msra.mxu0 0.0
  %1151 = vmatprep.subr.mxu0 0.0
  %1152 = vmatpush2.msra.mxu0 0.0
  %1153 = vmatprep.subr.mxu0 0.0
  %1154 = vmatpush2.msra.mxu0 0.0
  %1155 = vmatprep.subr.mxu0 0.0
  %1156 = vmatpush2.msra.mxu0 0.0
  %1157 = vmatprep.subr.mxu0 0.0
  %1158 = vmatpush2.msra.mxu0 0.0
  %1159 = vmatprep.subr.mxu0 0.0
  %1160 = vmatpush2.msra.mxu0 0.0
  %1161 = vmatprep.subr.mxu0 0.0
  %1162 = vmatpush2.msra.mxu0 0.0
  %1163 = vmatprep.subr.mxu0 0.0
  %1164 = vmatpush2.msra.mxu0 0.0
  %1165 = vmatprep.subr.mxu0 0.0
  %1166 = vmatpush2.msra.mxu0 0.0
  %1167 = vmatprep.subr.mxu0 0.0
  %1168 = vmatpush2.msra.mxu0 0.0
  %1169 = vmatprep.subr.mxu0 0.0
  %1170 = vmatpush2.msra.mxu0 0.0
  %1171 = vmatprep.mubr.f32.mxu0 0.0
  %1172 = vmatmul.mubr.f32.gmra.mxu0 %v1035
  %v1173 = vpop.f32.mrf.mxu0
  %v1174 = vadd.f32 0.0, %v1173
  %v1175 = vpop.f32.mrf.mxu0
  %v1176 = vadd.f32 0.0, %v1175
  %1177 = vdwg.mxu0
  %v1178 = vadd.f32 %v1031, %v1103
  %v1179 = vadd.f32 %v1032, %v1105
  %v1180 = vadd.f32 %v1033, %v1174
  %v1181 = vadd.f32 %v1034, %v1176
  %v1182 = vxor.u32 %v1178, 2147483648
  %v1183 = vmul.f32 %v1182, 1.442695
  %v1184 = vpow.pop %v1183
  %v1185 = vadd.f32 %v1184, 1.0
  %v1186 = vrcp.pop %v1185
  %v1187 = vmul.f32 1.0, %v1186
  %v1188 = vxor.u32 %v1179, 2147483648
  %v1189 = vmul.f32 %v1188, 1.442695
  %v1190 = vpow.pop %v1189
  %v1191 = vadd.f32 %v1190, 1.0
  %v1192 = vrcp.pop %v1191
  %v1193 = vmul.f32 1.0, %v1192
  %v1194 = vtanh.pop %v1180
  %v1195 = vxor.u32 %v1181, 2147483648
  %v1196 = vmul.f32 %v1195, 1.442695
  %v1197 = vpow.pop %v1196
  %v1198 = vadd.f32 %v1197, 1.0
  %v1199 = vrcp.pop %v1198
  %v1200 = vmul.f32 1.0, %v1199
  %v1201 = vld [vmem:[#allocation5] sm:$0xff]
  %v1202 = vmul.f32 %v1193, %v1201
  %v1203 = vmul.f32 %v1187, %v1194
  %v1204 = vadd.f32 %v1202, %v1203
  %v1205 = vtanh.pop %v1204
  %v1206 = vmul.f32 %v1200, %v1205
  %1207 = vst [vmem:[#allocation5] sm:$0xff] %v1204
  %1208 = vst [vmem:[#allocation4] sm:$0xff] %v1206
  %s1209 = scalar_lea.vmem [#allocation3], 24
  %1210 = vst [vmem:[%s1209] sm:$0xff] %v1206
  %s1211 = smul.u32 4, 4
  %s1212 = smul.addr %s1211, 8
  %s1213 = scalar_lea.vmem [#allocation2], %s1212
  %v1214 = vld [vmem:[%s1213] sm:$0xff]
  %v1215 = vld [vmem:[%s1213 + $0x8] sm:$0xff]
  %v1216 = vld [vmem:[%s1213 + $0x10] sm:$0xff]
  %v1217 = vld [vmem:[%s1213 + $0x18] sm:$0xff]
  %v1218 = vld [vmem:[#allocation4] sm:$0xff]
  %1219 = vmatprep.subr.mxu0 %v477
  %1220 = vmatpush1.msra.mxu0 %v476
  %1221 = vmatprep.subr.mxu0 %v473
  %1222 = vmatpush1.msra.mxu0 %v472
  %1223 = vmatprep.subr.mxu0 %v469
  %1224 = vmatpush1.msra.mxu0 %v468
  %1225 = vmatprep.subr.mxu0 %v465
  %1226 = vmatpush1.msra.mxu0 %v464
  %1227 = vmatprep.subr.mxu0 %v461
  %1228 = vmatpush1.msra.mxu0 %v460
  %1229 = vmatprep.subr.mxu0 %v457
  %1230 = vmatpush1.msra.mxu0 %v456
  %1231 = vmatprep.subr.mxu0 %v453
  %1232 = vmatpush1.msra.mxu0 %v452
  %1233 = vmatprep.subr.mxu0 %v449
  %1234 = vmatpush1.msra.mxu0 %v448
  %1235 = vmatprep.subr.mxu0 %v445
  %1236 = vmatpush1.msra.mxu0 %v444
  %1237 = vmatprep.subr.mxu0 %v441
  %1238 = vmatpush1.msra.mxu0 %v440
  %1239 = vmatprep.subr.mxu0 %v437
  %1240 = vmatpush1.msra.mxu0 %v436
  %1241 = vmatprep.subr.mxu0 %v433
  %1242 = vmatpush1.msra.mxu0 %v432
  %1243 = vmatprep.subr.mxu0 %v429
  %1244 = vmatpush1.msra.mxu0 %v428
  %1245 = vmatprep.subr.mxu0 %v425
  %1246 = vmatpush1.msra.mxu0 %v424
  %1247 = vmatprep.subr.mxu0 %v421
  %1248 = vmatpush1.msra.mxu0 %v420
  %1249 = vmatprep.subr.mxu0 %v417
  %1250 = vmatpush1.msra.mxu0 %v416
  %1251 = vmatprep.subr.mxu0 0.0
  %1252 = vmatpush2.msra.mxu0 0.0
  %1253 = vmatprep.subr.mxu0 0.0
  %1254 = vmatpush2.msra.mxu0 0.0
  %1255 = vmatprep.subr.mxu0 0.0
  %1256 = vmatpush2.msra.mxu0 0.0
  %1257 = vmatprep.subr.mxu0 0.0
  %1258 = vmatpush2.msra.mxu0 0.0
  %1259 = vmatprep.subr.mxu0 0.0
  %1260 = vmatpush2.msra.mxu0 0.0
  %1261 = vmatprep.subr.mxu0 0.0
  %1262 = vmatpush2.msra.mxu0 0.0
  %1263 = vmatprep.subr.mxu0 0.0
  %1264 = vmatpush2.msra.mxu0 0.0
  %1265 = vmatprep.subr.mxu0 0.0
  %1266 = vmatpush2.msra.mxu0 0.0
  %1267 = vmatprep.subr.mxu0 0.0
  %1268 = vmatpush2.msra.mxu0 0.0
  %1269 = vmatprep.subr.mxu0 0.0
  %1270 = vmatpush2.msra.mxu0 0.0
  %1271 = vmatprep.subr.mxu0 0.0
  %1272 = vmatpush2.msra.mxu0 0.0
  %1273 = vmatprep.subr.mxu0 0.0
  %1274 = vmatpush2.msra.mxu0 0.0
  %1275 = vmatprep.subr.mxu0 0.0
  %1276 = vmatpush2.msra.mxu0 0.0
  %1277 = vmatprep.subr.mxu0 0.0
  %1278 = vmatpush2.msra.mxu0 0.0
  %1279 = vmatprep.subr.mxu0 0.0
  %1280 = vmatpush2.msra.mxu0 0.0
  %1281 = vmatprep.subr.mxu0 0.0
  %1282 = vmatpush2.msra.mxu0 0.0
  %1283 = vmatprep.mubr.f32.mxu0 0.0
  %1284 = vmatmul.mubr.f32.gmra.mxu0 %v1218
  %v1285 = vpop.f32.mrf.mxu0
  %v1286 = vadd.f32 0.0, %v1285
  %v1287 = vpop.f32.mrf.mxu0
  %v1288 = vadd.f32 0.0, %v1287
  %1289 = vdwg.mxu0
  %1290 = vmatprep.subr.mxu0 %v479
  %1291 = vmatpush1.msra.mxu0 %v478
  %1292 = vmatprep.subr.mxu0 %v475
  %1293 = vmatpush1.msra.mxu0 %v474
  %1294 = vmatprep.subr.mxu0 %v471
  %1295 = vmatpush1.msra.mxu0 %v470
  %1296 = vmatprep.subr.mxu0 %v467
  %1297 = vmatpush1.msra.mxu0 %v466
  %1298 = vmatprep.subr.mxu0 %v463
  %1299 = vmatpush1.msra.mxu0 %v462
  %1300 = vmatprep.subr.mxu0 %v459
  %1301 = vmatpush1.msra.mxu0 %v458
  %1302 = vmatprep.subr.mxu0 %v455
  %1303 = vmatpush1.msra.mxu0 %v454
  %1304 = vmatprep.subr.mxu0 %v451
  %1305 = vmatpush1.msra.mxu0 %v450
  %1306 = vmatprep.subr.mxu0 %v447
  %1307 = vmatpush1.msra.mxu0 %v446
  %1308 = vmatprep.subr.mxu0 %v443
  %1309 = vmatpush1.msra.mxu0 %v442
  %1310 = vmatprep.subr.mxu0 %v439
  %1311 = vmatpush1.msra.mxu0 %v438
  %1312 = vmatprep.subr.mxu0 %v435
  %1313 = vmatpush1.msra.mxu0 %v434
  %1314 = vmatprep.subr.mxu0 %v431
  %1315 = vmatpush1.msra.mxu0 %v430
  %1316 = vmatprep.subr.mxu0 %v427
  %1317 = vmatpush1.msra.mxu0 %v426
  %1318 = vmatprep.subr.mxu0 %v423
  %1319 = vmatpush1.msra.mxu0 %v422
  %1320 = vmatprep.subr.mxu0 %v419
  %1321 = vmatpush1.msra.mxu0 %v418
  %1322 = vmatprep.subr.mxu0 0.0
  %1323 = vmatpush2.msra.mxu0 0.0
  %1324 = vmatprep.subr.mxu0 0.0
  %1325 = vmatpush2.msra.mxu0 0.0
  %1326 = vmatprep.subr.mxu0 0.0
  %1327 = vmatpush2.msra.mxu0 0.0
  %1328 = vmatprep.subr.mxu0 0.0
  %1329 = vmatpush2.msra.mxu0 0.0
  %1330 = vmatprep.subr.mxu0 0.0
  %1331 = vmatpush2.msra.mxu0 0.0
  %1332 = vmatprep.subr.mxu0 0.0
  %1333 = vmatpush2.msra.mxu0 0.0
  %1334 = vmatprep.subr.mxu0 0.0
  %1335 = vmatpush2.msra.mxu0 0.0
  %1336 = vmatprep.subr.mxu0 0.0
  %1337 = vmatpush2.msra.mxu0 0.0
  %1338 = vmatprep.subr.mxu0 0.0
  %1339 = vmatpush2.msra.mxu0 0.0
  %1340 = vmatprep.subr.mxu0 0.0
  %1341 = vmatpush2.msra.mxu0 0.0
  %1342 = vmatprep.subr.mxu0 0.0
  %1343 = vmatpush2.msra.mxu0 0.0
  %1344 = vmatprep.subr.mxu0 0.0
  %1345 = vmatpush2.msra.mxu0 0.0
  %1346 = vmatprep.subr.mxu0 0.0
  %1347 = vmatpush2.msra.mxu0 0.0
  %1348 = vmatprep.subr.mxu0 0.0
  %1349 = vmatpush2.msra.mxu0 0.0
  %1350 = vmatprep.subr.mxu0 0.0
  %1351 = vmatpush2.msra.mxu0 0.0
  %1352 = vmatprep.subr.mxu0 0.0
  %1353 = vmatpush2.msra.mxu0 0.0
  %1354 = vmatprep.mubr.f32.mxu0 0.0
  %1355 = vmatmul.mubr.f32.gmra.mxu0 %v1218
  %v1356 = vpop.f32.mrf.mxu0
  %v1357 = vadd.f32 0.0, %v1356
  %v1358 = vpop.f32.mrf.mxu0
  %v1359 = vadd.f32 0.0, %v1358
  %1360 = vdwg.mxu0
  %v1361 = vadd.f32 %v1214, %v1286
  %v1362 = vadd.f32 %v1215, %v1288
  %v1363 = vadd.f32 %v1216, %v1357
  %v1364 = vadd.f32 %v1217, %v1359
  %v1365 = vxor.u32 %v1361, 2147483648
  %v1366 = vmul.f32 %v1365, 1.442695
  %v1367 = vpow.pop %v1366
  %v1368 = vadd.f32 %v1367, 1.0
  %v1369 = vrcp.pop %v1368
  %v1370 = vmul.f32 1.0, %v1369
  %v1371 = vxor.u32 %v1362, 2147483648
  %v1372 = vmul.f32 %v1371, 1.442695
  %v1373 = vpow.pop %v1372
  %v1374 = vadd.f32 %v1373, 1.0
  %v1375 = vrcp.pop %v1374
  %v1376 = vmul.f32 1.0, %v1375
  %v1377 = vtanh.pop %v1363
  %v1378 = vxor.u32 %v1364, 2147483648
  %v1379 = vmul.f32 %v1378, 1.442695
  %v1380 = vpow.pop %v1379
  %v1381 = vadd.f32 %v1380, 1.0
  %v1382 = vrcp.pop %v1381
  %v1383 = vmul.f32 1.0, %v1382
  %v1384 = vld [vmem:[#allocation5] sm:$0xff]
  %v1385 = vmul.f32 %v1376, %v1384
  %v1386 = vmul.f32 %v1370, %v1377
  %v1387 = vadd.f32 %v1385, %v1386
  %v1388 = vtanh.pop %v1387
  %v1389 = vmul.f32 %v1383, %v1388
  %1390 = vst [vmem:[#allocation5] sm:$0xff] %v1387
  %1391 = vst [vmem:[#allocation4] sm:$0xff] %v1389
  %s1392 = scalar_lea.vmem [#allocation3], 32
  %1393 = vst [vmem:[%s1392] sm:$0xff] %v1389
  %s1394 = smul.u32 5, 4
  %s1395 = smul.addr %s1394, 8
  %s1396 = scalar_lea.vmem [#allocation2], %s1395
  %v1397 = vld [vmem:[%s1396] sm:$0xff]
  %v1398 = vld [vmem:[%s1396 + $0x8] sm:$0xff]
  %v1399 = vld [vmem:[%s1396 + $0x10] sm:$0xff]
  %v1400 = vld [vmem:[%s1396 + $0x18] sm:$0xff]
  %v1401 = vld [vmem:[#allocation4] sm:$0xff]
  %1402 = vmatprep.subr.mxu0 %v477
  %1403 = vmatpush1.msra.mxu0 %v476
  %1404 = vmatprep.subr.mxu0 %v473
  %1405 = vmatpush1.msra.mxu0 %v472
  %1406 = vmatprep.subr.mxu0 %v469
  %1407 = vmatpush1.msra.mxu0 %v468
  %1408 = vmatprep.subr.mxu0 %v465
  %1409 = vmatpush1.msra.mxu0 %v464
  %1410 = vmatprep.subr.mxu0 %v461
  %1411 = vmatpush1.msra.mxu0 %v460
  %1412 = vmatprep.subr.mxu0 %v457
  %1413 = vmatpush1.msra.mxu0 %v456
  %1414 = vmatprep.subr.mxu0 %v453
  %1415 = vmatpush1.msra.mxu0 %v452
  %1416 = vmatprep.subr.mxu0 %v449
  %1417 = vmatpush1.msra.mxu0 %v448
  %1418 = vmatprep.subr.mxu0 %v445
  %1419 = vmatpush1.msra.mxu0 %v444
  %1420 = vmatprep.subr.mxu0 %v441
  %1421 = vmatpush1.msra.mxu0 %v440
  %1422 = vmatprep.subr.mxu0 %v437
  %1423 = vmatpush1.msra.mxu0 %v436
  %1424 = vmatprep.subr.mxu0 %v433
  %1425 = vmatpush1.msra.mxu0 %v432
  %1426 = vmatprep.subr.mxu0 %v429
  %1427 = vmatpush1.msra.mxu0 %v428
  %1428 = vmatprep.subr.mxu0 %v425
  %1429 = vmatpush1.msra.mxu0 %v424
  %1430 = vmatprep.subr.mxu0 %v421
  %1431 = vmatpush1.msra.mxu0 %v420
  %1432 = vmatprep.subr.mxu0 %v417
  %1433 = vmatpush1.msra.mxu0 %v416
  %1434 = vmatprep.subr.mxu0 0.0
  %1435 = vmatpush2.msra.mxu0 0.0
  %1436 = vmatprep.subr.mxu0 0.0
  %1437 = vmatpush2.msra.mxu0 0.0
  %1438 = vmatprep.subr.mxu0 0.0
  %1439 = vmatpush2.msra.mxu0 0.0
  %1440 = vmatprep.subr.mxu0 0.0
  %1441 = vmatpush2.msra.mxu0 0.0
  %1442 = vmatprep.subr.mxu0 0.0
  %1443 = vmatpush2.msra.mxu0 0.0
  %1444 = vmatprep.subr.mxu0 0.0
  %1445 = vmatpush2.msra.mxu0 0.0
  %1446 = vmatprep.subr.mxu0 0.0
  %1447 = vmatpush2.msra.mxu0 0.0
  %1448 = vmatprep.subr.mxu0 0.0
  %1449 = vmatpush2.msra.mxu0 0.0
  %1450 = vmatprep.subr.mxu0 0.0
  %1451 = vmatpush2.msra.mxu0 0.0
  %1452 = vmatprep.subr.mxu0 0.0
  %1453 = vmatpush2.msra.mxu0 0.0
  %1454 = vmatprep.subr.mxu0 0.0
  %1455 = vmatpush2.msra.mxu0 0.0
  %1456 = vmatprep.subr.mxu0 0.0
  %1457 = vmatpush2.msra.mxu0 0.0
  %1458 = vmatprep.subr.mxu0 0.0
  %1459 = vmatpush2.msra.mxu0 0.0
  %1460 = vmatprep.subr.mxu0 0.0
  %1461 = vmatpush2.msra.mxu0 0.0
  %1462 = vmatprep.subr.mxu0 0.0
  %1463 = vmatpush2.msra.mxu0 0.0
  %1464 = vmatprep.subr.mxu0 0.0
  %1465 = vmatpush2.msra.mxu0 0.0
  %1466 = vmatprep.mubr.f32.mxu0 0.0
  %1467 = vmatmul.mubr.f32.gmra.mxu0 %v1401
  %v1468 = vpop.f32.mrf.mxu0
  %v1469 = vadd.f32 0.0, %v1468
  %v1470 = vpop.f32.mrf.mxu0
  %v1471 = vadd.f32 0.0, %v1470
  %1472 = vdwg.mxu0
  %1473 = vmatprep.subr.mxu0 %v479
  %1474 = vmatpush1.msra.mxu0 %v478
  %1475 = vmatprep.subr.mxu0 %v475
  %1476 = vmatpush1.msra.mxu0 %v474
  %1477 = vmatprep.subr.mxu0 %v471
  %1478 = vmatpush1.msra.mxu0 %v470
  %1479 = vmatprep.subr.mxu0 %v467
  %1480 = vmatpush1.msra.mxu0 %v466
  %1481 = vmatprep.subr.mxu0 %v463
  %1482 = vmatpush1.msra.mxu0 %v462
  %1483 = vmatprep.subr.mxu0 %v459
  %1484 = vmatpush1.msra.mxu0 %v458
  %1485 = vmatprep.subr.mxu0 %v455
  %1486 = vmatpush1.msra.mxu0 %v454
  %1487 = vmatprep.subr.mxu0 %v451
  %1488 = vmatpush1.msra.mxu0 %v450
  %1489 = vmatprep.subr.mxu0 %v447
  %1490 = vmatpush1.msra.mxu0 %v446
  %1491 = vmatprep.subr.mxu0 %v443
  %1492 = vmatpush1.msra.mxu0 %v442
  %1493 = vmatprep.subr.mxu0 %v439
  %1494 = vmatpush1.msra.mxu0 %v438
  %1495 = vmatprep.subr.mxu0 %v435
  %1496 = vmatpush1.msra.mxu0 %v434
  %1497 = vmatprep.subr.mxu0 %v431
  %1498 = vmatpush1.msra.mxu0 %v430
  %1499 = vmatprep.subr.mxu0 %v427
  %1500 = vmatpush1.msra.mxu0 %v426
  %1501 = vmatprep.subr.mxu0 %v423
  %1502 = vmatpush1.msra.mxu0 %v422
  %1503 = vmatprep.subr.mxu0 %v419
  %1504 = vmatpush1.msra.mxu0 %v418
  %1505 = vmatprep.subr.mxu0 0.0
  %1506 = vmatpush2.msra.mxu0 0.0
  %1507 = vmatprep.subr.mxu0 0.0
  %1508 = vmatpush2.msra.mxu0 0.0
  %1509 = vmatprep.subr.mxu0 0.0
  %1510 = vmatpush2.msra.mxu0 0.0
  %1511 = vmatprep.subr.mxu0 0.0
  %1512 = vmatpush2.msra.mxu0 0.0
  %1513 = vmatprep.subr.mxu0 0.0
  %1514 = vmatpush2.msra.mxu0 0.0
  %1515 = vmatprep.subr.mxu0 0.0
  %1516 = vmatpush2.msra.mxu0 0.0
  %1517 = vmatprep.subr.mxu0 0.0
  %1518 = vmatpush2.msra.mxu0 0.0
  %1519 = vmatprep.subr.mxu0 0.0
  %1520 = vmatpush2.msra.mxu0 0.0
  %1521 = vmatprep.subr.mxu0 0.0
  %1522 = vmatpush2.msra.mxu0 0.0
  %1523 = vmatprep.subr.mxu0 0.0
  %1524 = vmatpush2.msra.mxu0 0.0
  %1525 = vmatprep.subr.mxu0 0.0
  %1526 = vmatpush2.msra.mxu0 0.0
  %1527 = vmatprep.subr.mxu0 0.0
  %1528 = vmatpush2.msra.mxu0 0.0
  %1529 = vmatprep.subr.mxu0 0.0
  %1530 = vmatpush2.msra.mxu0 0.0
  %1531 = vmatprep.subr.mxu0 0.0
  %1532 = vmatpush2.msra.mxu0 0.0
  %1533 = vmatprep.subr.mxu0 0.0
  %1534 = vmatpush2.msra.mxu0 0.0
  %1535 = vmatprep.subr.mxu0 0.0
  %1536 = vmatpush2.msra.mxu0 0.0
  %1537 = vmatprep.mubr.f32.mxu0 0.0
  %1538 = vmatmul.mubr.f32.gmra.mxu0 %v1401
  %v1539 = vpop.f32.mrf.mxu0
  %v1540 = vadd.f32 0.0, %v1539
  %v1541 = vpop.f32.mrf.mxu0
  %v1542 = vadd.f32 0.0, %v1541
  %1543 = vdwg.mxu0
  %v1544 = vadd.f32 %v1397, %v1469
  %v1545 = vadd.f32 %v1398, %v1471
  %v1546 = vadd.f32 %v1399, %v1540
  %v1547 = vadd.f32 %v1400, %v1542
  %v1548 = vxor.u32 %v1544, 2147483648
  %v1549 = vmul.f32 %v1548, 1.442695
  %v1550 = vpow.pop %v1549
  %v1551 = vadd.f32 %v1550, 1.0
  %v1552 = vrcp.pop %v1551
  %v1553 = vmul.f32 1.0, %v1552
  %v1554 = vxor.u32 %v1545, 2147483648
  %v1555 = vmul.f32 %v1554, 1.442695
  %v1556 = vpow.pop %v1555
  %v1557 = vadd.f32 %v1556, 1.0
  %v1558 = vrcp.pop %v1557
  %v1559 = vmul.f32 1.0, %v1558
  %v1560 = vtanh.pop %v1546
  %v1561 = vxor.u32 %v1547, 2147483648
  %v1562 = vmul.f32 %v1561, 1.442695
  %v1563 = vpow.pop %v1562
  %v1564 = vadd.f32 %v1563, 1.0
  %v1565 = vrcp.pop %v1564
  %v1566 = vmul.f32 1.0, %v1565
  %v1567 = vld [vmem:[#allocation5] sm:$0xff]
  %v1568 = vmul.f32 %v1559, %v1567
  %v1569 = vmul.f32 %v1553, %v1560
  %v1570 = vadd.f32 %v1568, %v1569
  %v1571 = vtanh.pop %v1570
  %v1572 = vmul.f32 %v1566, %v1571
  %1573 = vst [vmem:[#allocation5] sm:$0xff] %v1570
  %1574 = vst [vmem:[#allocation4] sm:$0xff] %v1572
  %s1575 = scalar_lea.vmem [#allocation3], 40
  %1576 = vst [vmem:[%s1575] sm:$0xff] %v1572
  %s1577 = smul.u32 6, 4
  %s1578 = smul.addr %s1577, 8
  %s1579 = scalar_lea.vmem [#allocation2], %s1578
  %v1580 = vld [vmem:[%s1579] sm:$0xff]
  %v1581 = vld [vmem:[%s1579 + $0x8] sm:$0xff]
  %v1582 = vld [vmem:[%s1579 + $0x10] sm:$0xff]
  %v1583 = vld [vmem:[%s1579 + $0x18] sm:$0xff]
  %v1584 = vld [vmem:[#allocation4] sm:$0xff]
  %1585 = vmatprep.subr.mxu0 %v477
  %1586 = vmatpush1.msra.mxu0 %v476
  %1587 = vmatprep.subr.mxu0 %v473
  %1588 = vmatpush1.msra.mxu0 %v472
  %1589 = vmatprep.subr.mxu0 %v469
  %1590 = vmatpush1.msra.mxu0 %v468
  %1591 = vmatprep.subr.mxu0 %v465
  %1592 = vmatpush1.msra.mxu0 %v464
  %1593 = vmatprep.subr.mxu0 %v461
  %1594 = vmatpush1.msra.mxu0 %v460
  %1595 = vmatprep.subr.mxu0 %v457
  %1596 = vmatpush1.msra.mxu0 %v456
  %1597 = vmatprep.subr.mxu0 %v453
  %1598 = vmatpush1.msra.mxu0 %v452
  %1599 = vmatprep.subr.mxu0 %v449
  %1600 = vmatpush1.msra.mxu0 %v448
  %1601 = vmatprep.subr.mxu0 %v445
  %1602 = vmatpush1.msra.mxu0 %v444
  %1603 = vmatprep.subr.mxu0 %v441
  %1604 = vmatpush1.msra.mxu0 %v440
  %1605 = vmatprep.subr.mxu0 %v437
  %1606 = vmatpush1.msra.mxu0 %v436
  %1607 = vmatprep.subr.mxu0 %v433
  %1608 = vmatpush1.msra.mxu0 %v432
  %1609 = vmatprep.subr.mxu0 %v429
  %1610 = vmatpush1.msra.mxu0 %v428
  %1611 = vmatprep.subr.mxu0 %v425
  %1612 = vmatpush1.msra.mxu0 %v424
  %1613 = vmatprep.subr.mxu0 %v421
  %1614 = vmatpush1.msra.mxu0 %v420
  %1615 = vmatprep.subr.mxu0 %v417
  %1616 = vmatpush1.msra.mxu0 %v416
  %1617 = vmatprep.subr.mxu0 0.0
  %1618 = vmatpush2.msra.mxu0 0.0
  %1619 = vmatprep.subr.mxu0 0.0
  %1620 = vmatpush2.msra.mxu0 0.0
  %1621 = vmatprep.subr.mxu0 0.0
  %1622 = vmatpush2.msra.mxu0 0.0
  %1623 = vmatprep.subr.mxu0 0.0
  %1624 = vmatpush2.msra.mxu0 0.0
  %1625 = vmatprep.subr.mxu0 0.0
  %1626 = vmatpush2.msra.mxu0 0.0
  %1627 = vmatprep.subr.mxu0 0.0
  %1628 = vmatpush2.msra.mxu0 0.0
  %1629 = vmatprep.subr.mxu0 0.0
  %1630 = vmatpush2.msra.mxu0 0.0
  %1631 = vmatprep.subr.mxu0 0.0
  %1632 = vmatpush2.msra.mxu0 0.0
  %1633 = vmatprep.subr.mxu0 0.0
  %1634 = vmatpush2.msra.mxu0 0.0
  %1635 = vmatprep.subr.mxu0 0.0
  %1636 = vmatpush2.msra.mxu0 0.0
  %1637 = vmatprep.subr.mxu0 0.0
  %1638 = vmatpush2.msra.mxu0 0.0
  %1639 = vmatprep.subr.mxu0 0.0
  %1640 = vmatpush2.msra.mxu0 0.0
  %1641 = vmatprep.subr.mxu0 0.0
  %1642 = vmatpush2.msra.mxu0 0.0
  %1643 = vmatprep.subr.mxu0 0.0
  %1644 = vmatpush2.msra.mxu0 0.0
  %1645 = vmatprep.subr.mxu0 0.0
  %1646 = vmatpush2.msra.mxu0 0.0
  %1647 = vmatprep.subr.mxu0 0.0
  %1648 = vmatpush2.msra.mxu0 0.0
  %1649 = vmatprep.mubr.f32.mxu0 0.0
  %1650 = vmatmul.mubr.f32.gmra.mxu0 %v1584
  %v1651 = vpop.f32.mrf.mxu0
  %v1652 = vadd.f32 0.0, %v1651
  %v1653 = vpop.f32.mrf.mxu0
  %v1654 = vadd.f32 0.0, %v1653
  %1655 = vdwg.mxu0
  %1656 = vmatprep.subr.mxu0 %v479
  %1657 = vmatpush1.msra.mxu0 %v478
  %1658 = vmatprep.subr.mxu0 %v475
  %1659 = vmatpush1.msra.mxu0 %v474
  %1660 = vmatprep.subr.mxu0 %v471
  %1661 = vmatpush1.msra.mxu0 %v470
  %1662 = vmatprep.subr.mxu0 %v467
  %1663 = vmatpush1.msra.mxu0 %v466
  %1664 = vmatprep.subr.mxu0 %v463
  %1665 = vmatpush1.msra.mxu0 %v462
  %1666 = vmatprep.subr.mxu0 %v459
  %1667 = vmatpush1.msra.mxu0 %v458
  %1668 = vmatprep.subr.mxu0 %v455
  %1669 = vmatpush1.msra.mxu0 %v454
  %1670 = vmatprep.subr.mxu0 %v451
  %1671 = vmatpush1.msra.mxu0 %v450
  %1672 = vmatprep.subr.mxu0 %v447
  %1673 = vmatpush1.msra.mxu0 %v446
  %1674 = vmatprep.subr.mxu0 %v443
  %1675 = vmatpush1.msra.mxu0 %v442
  %1676 = vmatprep.subr.mxu0 %v439
  %1677 = vmatpush1.msra.mxu0 %v438
  %1678 = vmatprep.subr.mxu0 %v435
  %1679 = vmatpush1.msra.mxu0 %v434
  %1680 = vmatprep.subr.mxu0 %v431
  %1681 = vmatpush1.msra.mxu0 %v430
  %1682 = vmatprep.subr.mxu0 %v427
  %1683 = vmatpush1.msra.mxu0 %v426
  %1684 = vmatprep.subr.mxu0 %v423
  %1685 = vmatpush1.msra.mxu0 %v422
  %1686 = vmatprep.subr.mxu0 %v419
  %1687 = vmatpush1.msra.mxu0 %v418
  %1688 = vmatprep.subr.mxu0 0.0
  %1689 = vmatpush2.msra.mxu0 0.0
  %1690 = vmatprep.subr.mxu0 0.0
  %1691 = vmatpush2.msra.mxu0 0.0
  %1692 = vmatprep.subr.mxu0 0.0
  %1693 = vmatpush2.msra.mxu0 0.0
  %1694 = vmatprep.subr.mxu0 0.0
  %1695 = vmatpush2.msra.mxu0 0.0
  %1696 = vmatprep.subr.mxu0 0.0
  %1697 = vmatpush2.msra.mxu0 0.0
  %1698 = vmatprep.subr.mxu0 0.0
  %1699 = vmatpush2.msra.mxu0 0.0
  %1700 = vmatprep.subr.mxu0 0.0
  %1701 = vmatpush2.msra.mxu0 0.0
  %1702 = vmatprep.subr.mxu0 0.0
  %1703 = vmatpush2.msra.mxu0 0.0
  %1704 = vmatprep.subr.mxu0 0.0
  %1705 = vmatpush2.msra.mxu0 0.0
  %1706 = vmatprep.subr.mxu0 0.0
  %1707 = vmatpush2.msra.mxu0 0.0
  %1708 = vmatprep.subr.mxu0 0.0
  %1709 = vmatpush2.msra.mxu0 0.0
  %1710 = vmatprep.subr.mxu0 0.0
  %1711 = vmatpush2.msra.mxu0 0.0
  %1712 = vmatprep.subr.mxu0 0.0
  %1713 = vmatpush2.msra.mxu0 0.0
  %1714 = vmatprep.subr.mxu0 0.0
  %1715 = vmatpush2.msra.mxu0 0.0
  %1716 = vmatprep.subr.mxu0 0.0
  %1717 = vmatpush2.msra.mxu0 0.0
  %1718 = vmatprep.subr.mxu0 0.0
  %1719 = vmatpush2.msra.mxu0 0.0
  %1720 = vmatprep.mubr.f32.mxu0 0.0
  %1721 = vmatmul.mubr.f32.gmra.mxu0 %v1584
  %v1722 = vpop.f32.mrf.mxu0
  %v1723 = vadd.f32 0.0, %v1722
  %v1724 = vpop.f32.mrf.mxu0
  %v1725 = vadd.f32 0.0, %v1724
  %1726 = vdwg.mxu0
  %v1727 = vadd.f32 %v1580, %v1652
  %v1728 = vadd.f32 %v1581, %v1654
  %v1729 = vadd.f32 %v1582, %v1723
  %v1730 = vadd.f32 %v1583, %v1725
  %v1731 = vxor.u32 %v1727, 2147483648
  %v1732 = vmul.f32 %v1731, 1.442695
  %v1733 = vpow.pop %v1732
  %v1734 = vadd.f32 %v1733, 1.0
  %v1735 = vrcp.pop %v1734
  %v1736 = vmul.f32 1.0, %v1735
  %v1737 = vxor.u32 %v1728, 2147483648
  %v1738 = vmul.f32 %v1737, 1.442695
  %v1739 = vpow.pop %v1738
  %v1740 = vadd.f32 %v1739, 1.0
  %v1741 = vrcp.pop %v1740
  %v1742 = vmul.f32 1.0, %v1741
  %v1743 = vtanh.pop %v1729
  %v1744 = vxor.u32 %v1730, 2147483648
  %v1745 = vmul.f32 %v1744, 1.442695
  %v1746 = vpow.pop %v1745
  %v1747 = vadd.f32 %v1746, 1.0
  %v1748 = vrcp.pop %v1747
  %v1749 = vmul.f32 1.0, %v1748
  %v1750 = vld [vmem:[#allocation5] sm:$0xff]
  %v1751 = vmul.f32 %v1742, %v1750
  %v1752 = vmul.f32 %v1736, %v1743
  %v1753 = vadd.f32 %v1751, %v1752
  %v1754 = vtanh.pop %v1753
  %v1755 = vmul.f32 %v1749, %v1754
  %1756 = vst [vmem:[#allocation5] sm:$0xff] %v1753
  %1757 = vst [vmem:[#allocation4] sm:$0xff] %v1755
  %s1758 = scalar_lea.vmem [#allocation3], 48
  %1759 = vst [vmem:[%s1758] sm:$0xff] %v1755
  %s1760 = smul.u32 7, 4
  %s1761 = smul.addr %s1760, 8
  %s1762 = scalar_lea.vmem [#allocation2], %s1761
  %v1763 = vld [vmem:[%s1762] sm:$0xff]
  %v1764 = vld [vmem:[%s1762 + $0x8] sm:$0xff]
  %v1765 = vld [vmem:[%s1762 + $0x10] sm:$0xff]
  %v1766 = vld [vmem:[%s1762 + $0x18] sm:$0xff]
  %v1767 = vld [vmem:[#allocation4] sm:$0xff]
  %1768 = vmatprep.subr.mxu0 %v477
  %1769 = vmatpush1.msra.mxu0 %v476
  %1770 = vmatprep.subr.mxu0 %v473
  %1771 = vmatpush1.msra.mxu0 %v472
  %1772 = vmatprep.subr.mxu0 %v469
  %1773 = vmatpush1.msra.mxu0 %v468
  %1774 = vmatprep.subr.mxu0 %v465
  %1775 = vmatpush1.msra.mxu0 %v464
  %1776 = vmatprep.subr.mxu0 %v461
  %1777 = vmatpush1.msra.mxu0 %v460
  %1778 = vmatprep.subr.mxu0 %v457
  %1779 = vmatpush1.msra.mxu0 %v456
  %1780 = vmatprep.subr.mxu0 %v453
  %1781 = vmatpush1.msra.mxu0 %v452
  %1782 = vmatprep.subr.mxu0 %v449
  %1783 = vmatpush1.msra.mxu0 %v448
  %1784 = vmatprep.subr.mxu0 %v445
  %1785 = vmatpush1.msra.mxu0 %v444
  %1786 = vmatprep.subr.mxu0 %v441
  %1787 = vmatpush1.msra.mxu0 %v440
  %1788 = vmatprep.subr.mxu0 %v437
  %1789 = vmatpush1.msra.mxu0 %v436
  %1790 = vmatprep.subr.mxu0 %v433
  %1791 = vmatpush1.msra.mxu0 %v432
  %1792 = vmatprep.subr.mxu0 %v429
  %1793 = vmatpush1.msra.mxu0 %v428
  %1794 = vmatprep.subr.mxu0 %v425
  %1795 = vmatpush1.msra.mxu0 %v424
  %1796 = vmatprep.subr.mxu0 %v421
  %1797 = vmatpush1.msra.mxu0 %v420
  %1798 = vmatprep.subr.mxu0 %v417
  %1799 = vmatpush1.msra.mxu0 %v416
  %1800 = vmatprep.subr.mxu0 0.0
  %1801 = vmatpush2.msra.mxu0 0.0
  %1802 = vmatprep.subr.mxu0 0.0
  %1803 = vmatpush2.msra.mxu0 0.0
  %1804 = vmatprep.subr.mxu0 0.0
  %1805 = vmatpush2.msra.mxu0 0.0
  %1806 = vmatprep.subr.mxu0 0.0
  %1807 = vmatpush2.msra.mxu0 0.0
  %1808 = vmatprep.subr.mxu0 0.0
  %1809 = vmatpush2.msra.mxu0 0.0
  %1810 = vmatprep.subr.mxu0 0.0
  %1811 = vmatpush2.msra.mxu0 0.0
  %1812 = vmatprep.subr.mxu0 0.0
  %1813 = vmatpush2.msra.mxu0 0.0
  %1814 = vmatprep.subr.mxu0 0.0
  %1815 = vmatpush2.msra.mxu0 0.0
  %1816 = vmatprep.subr.mxu0 0.0
  %1817 = vmatpush2.msra.mxu0 0.0
  %1818 = vmatprep.subr.mxu0 0.0
  %1819 = vmatpush2.msra.mxu0 0.0
  %1820 = vmatprep.subr.mxu0 0.0
  %1821 = vmatpush2.msra.mxu0 0.0
  %1822 = vmatprep.subr.mxu0 0.0
  %1823 = vmatpush2.msra.mxu0 0.0
  %1824 = vmatprep.subr.mxu0 0.0
  %1825 = vmatpush2.msra.mxu0 0.0
  %1826 = vmatprep.subr.mxu0 0.0
  %1827 = vmatpush2.msra.mxu0 0.0
  %1828 = vmatprep.subr.mxu0 0.0
  %1829 = vmatpush2.msra.mxu0 0.0
  %1830 = vmatprep.subr.mxu0 0.0
  %1831 = vmatpush2.msra.mxu0 0.0
  %1832 = vmatprep.mubr.f32.mxu0 0.0
  %1833 = vmatmul.mubr.f32.gmra.mxu0 %v1767
  %v1834 = vpop.f32.mrf.mxu0
  %v1835 = vadd.f32 0.0, %v1834
  %v1836 = vpop.f32.mrf.mxu0
  %v1837 = vadd.f32 0.0, %v1836
  %1838 = vdwg.mxu0
  %1839 = vmatprep.subr.mxu0 %v479
  %1840 = vmatpush1.msra.mxu0 %v478
  %1841 = vmatprep.subr.mxu0 %v475
  %1842 = vmatpush1.msra.mxu0 %v474
  %1843 = vmatprep.subr.mxu0 %v471
  %1844 = vmatpush1.msra.mxu0 %v470
  %1845 = vmatprep.subr.mxu0 %v467
  %1846 = vmatpush1.msra.mxu0 %v466
  %1847 = vmatprep.subr.mxu0 %v463
  %1848 = vmatpush1.msra.mxu0 %v462
  %1849 = vmatprep.subr.mxu0 %v459
  %1850 = vmatpush1.msra.mxu0 %v458
  %1851 = vmatprep.subr.mxu0 %v455
  %1852 = vmatpush1.msra.mxu0 %v454
  %1853 = vmatprep.subr.mxu0 %v451
  %1854 = vmatpush1.msra.mxu0 %v450
  %1855 = vmatprep.subr.mxu0 %v447
  %1856 = vmatpush1.msra.mxu0 %v446
  %1857 = vmatprep.subr.mxu0 %v443
  %1858 = vmatpush1.msra.mxu0 %v442
  %1859 = vmatprep.subr.mxu0 %v439
  %1860 = vmatpush1.msra.mxu0 %v438
  %1861 = vmatprep.subr.mxu0 %v435
  %1862 = vmatpush1.msra.mxu0 %v434
  %1863 = vmatprep.subr.mxu0 %v431
  %1864 = vmatpush1.msra.mxu0 %v430
  %1865 = vmatprep.subr.mxu0 %v427
  %1866 = vmatpush1.msra.mxu0 %v426
  %1867 = vmatprep.subr.mxu0 %v423
  %1868 = vmatpush1.msra.mxu0 %v422
  %1869 = vmatprep.subr.mxu0 %v419
  %1870 = vmatpush1.msra.mxu0 %v418
  %1871 = vmatprep.subr.mxu0 0.0
  %1872 = vmatpush2.msra.mxu0 0.0
  %1873 = vmatprep.subr.mxu0 0.0
  %1874 = vmatpush2.msra.mxu0 0.0
  %1875 = vmatprep.subr.mxu0 0.0
  %1876 = vmatpush2.msra.mxu0 0.0
  %1877 = vmatprep.subr.mxu0 0.0
  %1878 = vmatpush2.msra.mxu0 0.0
  %1879 = vmatprep.subr.mxu0 0.0
  %1880 = vmatpush2.msra.mxu0 0.0
  %1881 = vmatprep.subr.mxu0 0.0
  %1882 = vmatpush2.msra.mxu0 0.0
  %1883 = vmatprep.subr.mxu0 0.0
  %1884 = vmatpush2.msra.mxu0 0.0
  %1885 = vmatprep.subr.mxu0 0.0
  %1886 = vmatpush2.msra.mxu0 0.0
  %1887 = vmatprep.subr.mxu0 0.0
  %1888 = vmatpush2.msra.mxu0 0.0
  %1889 = vmatprep.subr.mxu0 0.0
  %1890 = vmatpush2.msra.mxu0 0.0
  %1891 = vmatprep.subr.mxu0 0.0
  %1892 = vmatpush2.msra.mxu0 0.0
  %1893 = vmatprep.subr.mxu0 0.0
  %1894 = vmatpush2.msra.mxu0 0.0
  %1895 = vmatprep.subr.mxu0 0.0
  %1896 = vmatpush2.msra.mxu0 0.0
  %1897 = vmatprep.subr.mxu0 0.0
  %1898 = vmatpush2.msra.mxu0 0.0
  %1899 = vmatprep.subr.mxu0 0.0
  %1900 = vmatpush2.msra.mxu0 0.0
  %1901 = vmatprep.subr.mxu0 0.0
  %1902 = vmatpush2.msra.mxu0 0.0
  %1903 = vmatprep.mubr.f32.mxu0 0.0
  %1904 = vmatmul.mubr.f32.gmra.mxu0 %v1767
  %v1905 = vpop.f32.mrf.mxu0
  %v1906 = vadd.f32 0.0, %v1905
  %v1907 = vpop.f32.mrf.mxu0
  %v1908 = vadd.f32 0.0, %v1907
  %1909 = vdwg.mxu0
  %v1910 = vadd.f32 %v1763, %v1835
  %v1911 = vadd.f32 %v1764, %v1837
  %v1912 = vadd.f32 %v1765, %v1906
  %v1913 = vadd.f32 %v1766, %v1908
  %v1914 = vxor.u32 %v1910, 2147483648
  %v1915 = vmul.f32 %v1914, 1.442695
  %v1916 = vpow.pop %v1915
  %v1917 = vadd.f32 %v1916, 1.0
  %v1918 = vrcp.pop %v1917
  %v1919 = vmul.f32 1.0, %v1918
  %v1920 = vxor.u32 %v1911, 2147483648
  %v1921 = vmul.f32 %v1920, 1.442695
  %v1922 = vpow.pop %v1921
  %v1923 = vadd.f32 %v1922, 1.0
  %v1924 = vrcp.pop %v1923
  %v1925 = vmul.f32 1.0, %v1924
  %v1926 = vtanh.pop %v1912
  %v1927 = vxor.u32 %v1913, 2147483648
  %v1928 = vmul.f32 %v1927, 1.442695
  %v1929 = vpow.pop %v1928
  %v1930 = vadd.f32 %v1929, 1.0
  %v1931 = vrcp.pop %v1930
  %v1932 = vmul.f32 1.0, %v1931
  %v1933 = vld [vmem:[#allocation5] sm:$0xff]
  %v1934 = vmul.f32 %v1925, %v1933
  %v1935 = vmul.f32 %v1919, %v1926
  %v1936 = vadd.f32 %v1934, %v1935
  %v1937 = vtanh.pop %v1936
  %v1938 = vmul.f32 %v1932, %v1937
  %1939 = vst [vmem:[#allocation5] sm:$0xff] %v1936
  %1940 = vst [vmem:[#allocation4] sm:$0xff] %v1938
  %s1941 = scalar_lea.vmem [#allocation3], 56
  %1942 = vst [vmem:[%s1941] sm:$0xff] %v1938
  %v1943 = vld [vmem:[#allocation3] sm:$0xff]
  %v1944 = vld [vmem:[#allocation3 + $0x8] sm:$0xff]
  %v1945 = vld [vmem:[#allocation3 + $0x10] sm:$0xff]
  %v1946 = vld [vmem:[#allocation3 + $0x18] sm:$0xff]
  %v1947 = vld [vmem:[#allocation3 + $0x20] sm:$0xff]
  %v1948 = vld [vmem:[#allocation3 + $0x28] sm:$0xff]
  %v1949 = vld [vmem:[#allocation3 + $0x30] sm:$0xff]
  %v1950 = vld [vmem:[#allocation3 + $0x38] sm:$0xff]
  %v1951 = vld [vmem:[%s4] sm:$0xff]
  %v1952 = vld [vmem:[%s4 + $0x8] sm:$0xff]
  %v1953 = vld [vmem:[%s4 + $0x10] sm:$0xff]
  %v1954 = vld [vmem:[%s4 + $0x18] sm:$0xff]
  %v1955 = vld [vmem:[%s4 + $0x20] sm:$0xff]
  %v1956 = vld [vmem:[%s4 + $0x28] sm:$0xff]
  %v1957 = vld [vmem:[%s4 + $0x30] sm:$0xff]
  %v1958 = vld [vmem:[%s4 + $0x38] sm:$0xff]
  %v1959 = vld [vmem:[%s4 + $0x40] sm:$0xff]
  %v1960 = vld [vmem:[%s4 + $0x48] sm:$0xff]
  %v1961 = vld [vmem:[%s4 + $0x50] sm:$0xff]
  %v1962 = vld [vmem:[%s4 + $0x58] sm:$0xff]
  %v1963 = vld [vmem:[%s4 + $0x60] sm:$0xff]
  %v1964 = vld [vmem:[%s4 + $0x68] sm:$0xff]
  %v1965 = vld [vmem:[%s4 + $0x70] sm:$0xff]
  %v1966 = vld [vmem:[%s4 + $0x78] sm:$0xff]
  %v1967 = vld [vmem:[%s4 + $0x80] sm:$0xff]
  %v1968 = vld [vmem:[%s4 + $0x88] sm:$0xff]
  %v1969 = vld [vmem:[%s4 + $0x90] sm:$0xff]
  %v1970 = vld [vmem:[%s4 + $0x98] sm:$0xff]
  %v1971 = vld [vmem:[%s4 + $0xa0] sm:$0xff]
  %v1972 = vld [vmem:[%s4 + $0xa8] sm:$0xff]
  %v1973 = vld [vmem:[%s4 + $0xb0] sm:$0xff]
  %v1974 = vld [vmem:[%s4 + $0xb8] sm:$0xff]
  %v1975 = vld [vmem:[%s4 + $0xc0] sm:$0xff]
  %v1976 = vld [vmem:[%s4 + $0xc8] sm:$0xff]
  %v1977 = vld [vmem:[%s4 + $0xd0] sm:$0xff]
  %v1978 = vld [vmem:[%s4 + $0xd8] sm:$0xff]
  %v1979 = vld [vmem:[%s4 + $0xe0] sm:$0xff]
  %v1980 = vld [vmem:[%s4 + $0xe8] sm:$0xff]
  %v1981 = vld [vmem:[%s4 + $0xf0] sm:$0xff]
  %v1982 = vld [vmem:[%s4 + $0xf8] sm:$0xff]
  %v1983 = vld [vmem:[%s4 + $0x100] sm:$0xff]
  %v1984 = vld [vmem:[%s4 + $0x108] sm:$0xff]
  %v1985 = vld [vmem:[%s4 + $0x110] sm:$0xff]
  %v1986 = vld [vmem:[%s4 + $0x118] sm:$0xff]
  %v1987 = vld [vmem:[%s4 + $0x120] sm:$0xff]
  %v1988 = vld [vmem:[%s4 + $0x128] sm:$0xff]
  %v1989 = vld [vmem:[%s4 + $0x130] sm:$0xff]
  %v1990 = vld [vmem:[%s4 + $0x138] sm:$0xff]
  %v1991 = vld [vmem:[%s4 + $0x140] sm:$0xff]
  %v1992 = vld [vmem:[%s4 + $0x148] sm:$0xff]
  %v1993 = vld [vmem:[%s4 + $0x150] sm:$0xff]
  %v1994 = vld [vmem:[%s4 + $0x158] sm:$0xff]
  %v1995 = vld [vmem:[%s4 + $0x160] sm:$0xff]
  %v1996 = vld [vmem:[%s4 + $0x168] sm:$0xff]
  %v1997 = vld [vmem:[%s4 + $0x170] sm:$0xff]
  %v1998 = vld [vmem:[%s4 + $0x178] sm:$0xff]
  %v1999 = vld [vmem:[%s4 + $0x180] sm:$0xff]
  %v2000 = vld [vmem:[%s4 + $0x188] sm:$0xff]
  %v2001 = vld [vmem:[%s4 + $0x190] sm:$0xff]
  %v2002 = vld [vmem:[%s4 + $0x198] sm:$0xff]
  %v2003 = vld [vmem:[%s4 + $0x1a0] sm:$0xff]
  %v2004 = vld [vmem:[%s4 + $0x1a8] sm:$0xff]
  %v2005 = vld [vmem:[%s4 + $0x1b0] sm:$0xff]
  %v2006 = vld [vmem:[%s4 + $0x1b8] sm:$0xff]
  %v2007 = vld [vmem:[%s4 + $0x1c0] sm:$0xff]
  %v2008 = vld [vmem:[%s4 + $0x1c8] sm:$0xff]
  %v2009 = vld [vmem:[%s4 + $0x1d0] sm:$0xff]
  %v2010 = vld [vmem:[%s4 + $0x1d8] sm:$0xff]
  %v2011 = vld [vmem:[%s4 + $0x1e0] sm:$0xff]
  %v2012 = vld [vmem:[%s4 + $0x1e8] sm:$0xff]
  %v2013 = vld [vmem:[%s4 + $0x1f0] sm:$0xff]
  %v2014 = vld [vmem:[%s4 + $0x1f8] sm:$0xff]
  %v2015 = vld [vmem:[%s6] sm:$0xf]
  %v2017 = vlaneseq
  %v2018 = vshrl.u32 %v2017, 7
  %v2019 = vsub.s32 0, %v2018
  %v2020 = vrot.slane %v2015, %v2019
  %v2021 = vlaneseq
  %v2022 = vshrl.u32 %v2021, 7
  %v2023 = vsub.s32 1, %v2022
  %v2024 = vrot.slane %v2015, %v2023
  %v2025 = vlaneseq
  %v2026 = vshrl.u32 %v2025, 7
  %v2027 = vsub.s32 2, %v2026
  %v2028 = vrot.slane %v2015, %v2027
  %v2029 = vlaneseq
  %v2030 = vshrl.u32 %v2029, 7
  %v2031 = vsub.s32 3, %v2030
  %v2032 = vrot.slane %v2015, %v2031
  %2037 = vmatprep.subr.mxu0 %v2012
  %2038 = vmatpush1.msra.mxu0 %v2011
  %2039 = vmatprep.subr.mxu0 %v2008
  %2040 = vmatpush1.msra.mxu0 %v2007
  %2041 = vmatprep.subr.mxu0 %v2004
  %2042 = vmatpush1.msra.mxu0 %v2003
  %2043 = vmatprep.subr.mxu0 %v2000
  %2044 = vmatpush1.msra.mxu0 %v1999
  %2045 = vmatprep.subr.mxu0 %v1996
  %2046 = vmatpush1.msra.mxu0 %v1995
  %2047 = vmatprep.subr.mxu0 %v1992
  %2048 = vmatpush1.msra.mxu0 %v1991
  %2049 = vmatprep.subr.mxu0 %v1988
  %2050 = vmatpush1.msra.mxu0 %v1987
  %2051 = vmatprep.subr.mxu0 %v1984
  %2052 = vmatpush1.msra.mxu0 %v1983
  %2053 = vmatprep.subr.mxu0 %v1980
  %2054 = vmatpush1.msra.mxu0 %v1979
  %2055 = vmatprep.subr.mxu0 %v1976
  %2056 = vmatpush1.msra.mxu0 %v1975
  %2057 = vmatprep.subr.mxu0 %v1972
  %2058 = vmatpush1.msra.mxu0 %v1971
  %2059 = vmatprep.subr.mxu0 %v1968
  %2060 = vmatpush1.msra.mxu0 %v1967
  %2061 = vmatprep.subr.mxu0 %v1964
  %2062 = vmatpush1.msra.mxu0 %v1963
  %2063 = vmatprep.subr.mxu0 %v1960
  %2064 = vmatpush1.msra.mxu0 %v1959
  %2065 = vmatprep.subr.mxu0 %v1956
  %2066 = vmatpush1.msra.mxu0 %v1955
  %2067 = vmatprep.subr.mxu0 %v1952
  %2068 = vmatpush1.msra.mxu0 %v1951
  %2069 = vmatprep.subr.mxu0 0.0
  %2070 = vmatpush2.msra.mxu0 0.0
  %2071 = vmatprep.subr.mxu0 0.0
  %2072 = vmatpush2.msra.mxu0 0.0
  %2073 = vmatprep.subr.mxu0 0.0
  %2074 = vmatpush2.msra.mxu0 0.0
  %2075 = vmatprep.subr.mxu0 0.0
  %2076 = vmatpush2.msra.mxu0 0.0
  %2077 = vmatprep.subr.mxu0 0.0
  %2078 = vmatpush2.msra.mxu0 0.0
  %2079 = vmatprep.subr.mxu0 0.0
  %2080 = vmatpush2.msra.mxu0 0.0
  %2081 = vmatprep.subr.mxu0 0.0
  %2082 = vmatpush2.msra.mxu0 0.0
  %2083 = vmatprep.subr.mxu0 0.0
  %2084 = vmatpush2.msra.mxu0 0.0
  %2085 = vmatprep.subr.mxu0 0.0
  %2086 = vmatpush2.msra.mxu0 0.0
  %2087 = vmatprep.subr.mxu0 0.0
  %2088 = vmatpush2.msra.mxu0 0.0
  %2089 = vmatprep.subr.mxu0 0.0
  %2090 = vmatpush2.msra.mxu0 0.0
  %2091 = vmatprep.subr.mxu0 0.0
  %2092 = vmatpush2.msra.mxu0 0.0
  %2093 = vmatprep.subr.mxu0 0.0
  %2094 = vmatpush2.msra.mxu0 0.0
  %2095 = vmatprep.subr.mxu0 0.0
  %2096 = vmatpush2.msra.mxu0 0.0
  %2097 = vmatprep.subr.mxu0 0.0
  %2098 = vmatpush2.msra.mxu0 0.0
  %2099 = vmatprep.subr.mxu0 0.0
  %2100 = vmatpush2.msra.mxu0 0.0
  %2101 = vmatprep.mubr.f32.mxu0 0.0
  %2102 = vmatmul.mubr.f32.gmra.mxu0 %v1943
  %v2103 = vpop.f32.mrf.mxu0
  %v2104 = vadd.f32 %v2020, %v2103
  %v2105 = vpop.f32.mrf.mxu0
  %v2106 = vadd.f32 %v2024, %v2105
  %2107 = vmatprep.mubr.f32.mxu0 0.0
  %2108 = vmatmul.mubr.f32.gmra.mxu0 %v1944
  %v2109 = vpop.f32.mrf.mxu0
  %v2110 = vadd.f32 %v2020, %v2109
  %v2111 = vpop.f32.mrf.mxu0
  %v2112 = vadd.f32 %v2024, %v2111
  %2113 = vmatprep.mubr.f32.mxu0 0.0
  %2114 = vmatmul.mubr.f32.gmra.mxu0 %v1945
  %v2115 = vpop.f32.mrf.mxu0
  %v2116 = vadd.f32 %v2020, %v2115
  %v2117 = vpop.f32.mrf.mxu0
  %v2118 = vadd.f32 %v2024, %v2117
  %2119 = vmatprep.mubr.f32.mxu0 0.0
  %2120 = vmatmul.mubr.f32.gmra.mxu0 %v1946
  %v2121 = vpop.f32.mrf.mxu0
  %v2122 = vadd.f32 %v2020, %v2121
  %v2123 = vpop.f32.mrf.mxu0
  %v2124 = vadd.f32 %v2024, %v2123
  %2125 = vmatprep.mubr.f32.mxu0 0.0
  %2126 = vmatmul.mubr.f32.gmra.mxu0 %v1947
  %v2127 = vpop.f32.mrf.mxu0
  %v2128 = vadd.f32 %v2020, %v2127
  %v2129 = vpop.f32.mrf.mxu0
  %v2130 = vadd.f32 %v2024, %v2129
  %2131 = vmatprep.mubr.f32.mxu0 0.0
  %2132 = vmatmul.mubr.f32.gmra.mxu0 %v1948
  %v2133 = vpop.f32.mrf.mxu0
  %v2134 = vadd.f32 %v2020, %v2133
  %v2135 = vpop.f32.mrf.mxu0
  %v2136 = vadd.f32 %v2024, %v2135
  %2137 = vmatprep.mubr.f32.mxu0 0.0
  %2138 = vmatmul.mubr.f32.gmra.mxu0 %v1949
  %v2139 = vpop.f32.mrf.mxu0
  %v2140 = vadd.f32 %v2020, %v2139
  %v2141 = vpop.f32.mrf.mxu0
  %v2142 = vadd.f32 %v2024, %v2141
  %2143 = vmatprep.mubr.f32.mxu0 0.0
  %2144 = vmatmul.mubr.f32.gmra.mxu0 %v1950
  %v2145 = vpop.f32.mrf.mxu0
  %v2146 = vadd.f32 %v2020, %v2145
  %v2147 = vpop.f32.mrf.mxu0
  %v2148 = vadd.f32 %v2024, %v2147
  %2149 = vdwg.mxu0
  %2150 = vmatprep.subr.mxu0 %v2014
  %2151 = vmatpush1.msra.mxu0 %v2013
  %2152 = vmatprep.subr.mxu0 %v2010
  %2153 = vmatpush1.msra.mxu0 %v2009
  %2154 = vmatprep.subr.mxu0 %v2006
  %2155 = vmatpush1.msra.mxu0 %v2005
  %2156 = vmatprep.subr.mxu0 %v2002
  %2157 = vmatpush1.msra.mxu0 %v2001
  %2158 = vmatprep.subr.mxu0 %v1998
  %2159 = vmatpush1.msra.mxu0 %v1997
  %2160 = vmatprep.subr.mxu0 %v1994
  %2161 = vmatpush1.msra.mxu0 %v1993
  %2162 = vmatprep.subr.mxu0 %v1990
  %2163 = vmatpush1.msra.mxu0 %v1989
  %2164 = vmatprep.subr.mxu0 %v1986
  %2165 = vmatpush1.msra.mxu0 %v1985
  %2166 = vmatprep.subr.mxu0 %v1982
  %2167 = vmatpush1.msra.mxu0 %v1981
  %2168 = vmatprep.subr.mxu0 %v1978
  %2169 = vmatpush1.msra.mxu0 %v1977
  %2170 = vmatprep.subr.mxu0 %v1974
  %2171 = vmatpush1.msra.mxu0 %v1973
  %2172 = vmatprep.subr.mxu0 %v1970
  %2173 = vmatpush1.msra.mxu0 %v1969
  %2174 = vmatprep.subr.mxu0 %v1966
  %2175 = vmatpush1.msra.mxu0 %v1965
  %2176 = vmatprep.subr.mxu0 %v1962
  %2177 = vmatpush1.msra.mxu0 %v1961
  %2178 = vmatprep.subr.mxu0 %v1958
  %2179 = vmatpush1.msra.mxu0 %v1957
  %2180 = vmatprep.subr.mxu0 %v1954
  %2181 = vmatpush1.msra.mxu0 %v1953
  %2182 = vmatprep.subr.mxu0 0.0
  %2183 = vmatpush2.msra.mxu0 0.0
  %2184 = vmatprep.subr.mxu0 0.0
  %2185 = vmatpush2.msra.mxu0 0.0
  %2186 = vmatprep.subr.mxu0 0.0
  %2187 = vmatpush2.msra.mxu0 0.0
  %2188 = vmatprep.subr.mxu0 0.0
  %2189 = vmatpush2.msra.mxu0 0.0
  %2190 = vmatprep.subr.mxu0 0.0
  %2191 = vmatpush2.msra.mxu0 0.0
  %2192 = vmatprep.subr.mxu0 0.0
  %2193 = vmatpush2.msra.mxu0 0.0
  %2194 = vmatprep.subr.mxu0 0.0
  %2195 = vmatpush2.msra.mxu0 0.0
  %2196 = vmatprep.subr.mxu0 0.0
  %2197 = vmatpush2.msra.mxu0 0.0
  %2198 = vmatprep.subr.mxu0 0.0
  %2199 = vmatpush2.msra.mxu0 0.0
  %2200 = vmatprep.subr.mxu0 0.0
  %2201 = vmatpush2.msra.mxu0 0.0
  %2202 = vmatprep.subr.mxu0 0.0
  %2203 = vmatpush2.msra.mxu0 0.0
  %2204 = vmatprep.subr.mxu0 0.0
  %2205 = vmatpush2.msra.mxu0 0.0
  %2206 = vmatprep.subr.mxu0 0.0
  %2207 = vmatpush2.msra.mxu0 0.0
  %2208 = vmatprep.subr.mxu0 0.0
  %2209 = vmatpush2.msra.mxu0 0.0
  %2210 = vmatprep.subr.mxu0 0.0
  %2211 = vmatpush2.msra.mxu0 0.0
  %2212 = vmatprep.subr.mxu0 0.0
  %2213 = vmatpush2.msra.mxu0 0.0
  %2214 = vmatprep.mubr.f32.mxu0 0.0
  %2215 = vmatmul.mubr.f32.gmra.mxu0 %v1943
  %v2216 = vpop.f32.mrf.mxu0
  %v2217 = vadd.f32 %v2028, %v2216
  %v2218 = vpop.f32.mrf.mxu0
  %v2219 = vadd.f32 %v2032, %v2218
  %2220 = vmatprep.mubr.f32.mxu0 0.0
  %2221 = vmatmul.mubr.f32.gmra.mxu0 %v1944
  %v2222 = vpop.f32.mrf.mxu0
  %v2223 = vadd.f32 %v2028, %v2222
  %v2224 = vpop.f32.mrf.mxu0
  %v2225 = vadd.f32 %v2032, %v2224
  %2226 = vmatprep.mubr.f32.mxu0 0.0
  %2227 = vmatmul.mubr.f32.gmra.mxu0 %v1945
  %v2228 = vpop.f32.mrf.mxu0
  %v2229 = vadd.f32 %v2028, %v2228
  %v2230 = vpop.f32.mrf.mxu0
  %v2231 = vadd.f32 %v2032, %v2230
  %2232 = vmatprep.mubr.f32.mxu0 0.0
  %2233 = vmatmul.mubr.f32.gmra.mxu0 %v1946
  %v2234 = vpop.f32.mrf.mxu0
  %v2235 = vadd.f32 %v2028, %v2234
  %v2236 = vpop.f32.mrf.mxu0
  %v2237 = vadd.f32 %v2032, %v2236
  %2238 = vmatprep.mubr.f32.mxu0 0.0
  %2239 = vmatmul.mubr.f32.gmra.mxu0 %v1947
  %v2240 = vpop.f32.mrf.mxu0
  %v2241 = vadd.f32 %v2028, %v2240
  %v2242 = vpop.f32.mrf.mxu0
  %v2243 = vadd.f32 %v2032, %v2242
  %2244 = vmatprep.mubr.f32.mxu0 0.0
  %2245 = vmatmul.mubr.f32.gmra.mxu0 %v1948
  %v2246 = vpop.f32.mrf.mxu0
  %v2247 = vadd.f32 %v2028, %v2246
  %v2248 = vpop.f32.mrf.mxu0
  %v2249 = vadd.f32 %v2032, %v2248
  %2250 = vmatprep.mubr.f32.mxu0 0.0
  %2251 = vmatmul.mubr.f32.gmra.mxu0 %v1949
  %v2252 = vpop.f32.mrf.mxu0
  %v2253 = vadd.f32 %v2028, %v2252
  %v2254 = vpop.f32.mrf.mxu0
  %v2255 = vadd.f32 %v2032, %v2254
  %2256 = vmatprep.mubr.f32.mxu0 0.0
  %2257 = vmatmul.mubr.f32.gmra.mxu0 %v1950
  %v2258 = vpop.f32.mrf.mxu0
  %v2259 = vadd.f32 %v2028, %v2258
  %v2260 = vpop.f32.mrf.mxu0
  %v2261 = vadd.f32 %v2032, %v2260
  %2262 = vdwg.mxu0
  %2263 = vst [vmem:[#allocation2] sm:$0xff] %v2104
  %2264 = vst [vmem:[#allocation2 + $0x8] sm:$0xff] %v2106
  %2265 = vst [vmem:[#allocation2 + $0x10] sm:$0xff] %v2217
  %2266 = vst [vmem:[#allocation2 + $0x18] sm:$0xff] %v2219
  %2267 = vst [vmem:[#allocation2 + $0x20] sm:$0xff] %v2110
  %2268 = vst [vmem:[#allocation2 + $0x28] sm:$0xff] %v2112
  %2269 = vst [vmem:[#allocation2 + $0x30] sm:$0xff] %v2223
  %2270 = vst [vmem:[#allocation2 + $0x38] sm:$0xff] %v2225
  %2271 = vst [vmem:[#allocation2 + $0x40] sm:$0xff] %v2116
  %2272 = vst [vmem:[#allocation2 + $0x48] sm:$0xff] %v2118
  %2273 = vst [vmem:[#allocation2 + $0x50] sm:$0xff] %v2229
  %2274 = vst [vmem:[#allocation2 + $0x58] sm:$0xff] %v2231
  %2275 = vst [vmem:[#allocation2 + $0x60] sm:$0xff] %v2122
  %2276 = vst [vmem:[#allocation2 + $0x68] sm:$0xff] %v2124
  %2277 = vst [vmem:[#allocation2 + $0x70] sm:$0xff] %v2235
  %2278 = vst [vmem:[#allocation2 + $0x78] sm:$0xff] %v2237
  %2279 = vst [vmem:[#allocation2 + $0x80] sm:$0xff] %v2128
  %2280 = vst [vmem:[#allocation2 + $0x88] sm:$0xff] %v2130
  %2281 = vst [vmem:[#allocation2 + $0x90] sm:$0xff] %v2241
  %2282 = vst [vmem:[#allocation2 + $0x98] sm:$0xff] %v2243
  %2283 = vst [vmem:[#allocation2 + $0xa0] sm:$0xff] %v2134
  %2284 = vst [vmem:[#allocation2 + $0xa8] sm:$0xff] %v2136
  %2285 = vst [vmem:[#allocation2 + $0xb0] sm:$0xff] %v2247
  %2286 = vst [vmem:[#allocation2 + $0xb8] sm:$0xff] %v2249
  %2287 = vst [vmem:[#allocation2 + $0xc0] sm:$0xff] %v2140
  %2288 = vst [vmem:[#allocation2 + $0xc8] sm:$0xff] %v2142
  %2289 = vst [vmem:[#allocation2 + $0xd0] sm:$0xff] %v2253
  %2290 = vst [vmem:[#allocation2 + $0xd8] sm:$0xff] %v2255
  %2291 = vst [vmem:[#allocation2 + $0xe0] sm:$0xff] %v2146
  %2292 = vst [vmem:[#allocation2 + $0xe8] sm:$0xff] %v2148
  %2293 = vst [vmem:[#allocation2 + $0xf0] sm:$0xff] %v2259
  %2294 = vst [vmem:[#allocation2 + $0xf8] sm:$0xff] %v2261
  %2295 = vst [vmem:[#allocation4] sm:$0xff] 0.0
  %2296 = vst [vmem:[#allocation5] sm:$0xff] 0.0
  %v2297 = vld [vmem:[%s5] sm:$0xff]
  %v2298 = vld [vmem:[%s5 + $0x8] sm:$0xff]
  %v2299 = vld [vmem:[%s5 + $0x10] sm:$0xff]
  %v2300 = vld [vmem:[%s5 + $0x18] sm:$0xff]
  %v2301 = vld [vmem:[%s5 + $0x20] sm:$0xff]
  %v2302 = vld [vmem:[%s5 + $0x28] sm:$0xff]
  %v2303 = vld [vmem:[%s5 + $0x30] sm:$0xff]
  %v2304 = vld [vmem:[%s5 + $0x38] sm:$0xff]
  %v2305 = vld [vmem:[%s5 + $0x40] sm:$0xff]
  %v2306 = vld [vmem:[%s5 + $0x48] sm:$0xff]
  %v2307 = vld [vmem:[%s5 + $0x50] sm:$0xff]
  %v2308 = vld [vmem:[%s5 + $0x58] sm:$0xff]
  %v2309 = vld [vmem:[%s5 + $0x60] sm:$0xff]
  %v2310 = vld [vmem:[%s5 + $0x68] sm:$0xff]
  %v2311 = vld [vmem:[%s5 + $0x70] sm:$0xff]
  %v2312 = vld [vmem:[%s5 + $0x78] sm:$0xff]
  %v2313 = vld [vmem:[%s5 + $0x80] sm:$0xff]
  %v2314 = vld [vmem:[%s5 + $0x88] sm:$0xff]
  %v2315 = vld [vmem:[%s5 + $0x90] sm:$0xff]
  %v2316 = vld [vmem:[%s5 + $0x98] sm:$0xff]
  %v2317 = vld [vmem:[%s5 + $0xa0] sm:$0xff]
  %v2318 = vld [vmem:[%s5 + $0xa8] sm:$0xff]
  %v2319 = vld [vmem:[%s5 + $0xb0] sm:$0xff]
  %v2320 = vld [vmem:[%s5 + $0xb8] sm:$0xff]
  %v2321 = vld [vmem:[%s5 + $0xc0] sm:$0xff]
  %v2322 = vld [vmem:[%s5 + $0xc8] sm:$0xff]
  %v2323 = vld [vmem:[%s5 + $0xd0] sm:$0xff]
  %v2324 = vld [vmem:[%s5 + $0xd8] sm:$0xff]
  %v2325 = vld [vmem:[%s5 + $0xe0] sm:$0xff]
  %v2326 = vld [vmem:[%s5 + $0xe8] sm:$0xff]
  %v2327 = vld [vmem:[%s5 + $0xf0] sm:$0xff]
  %v2328 = vld [vmem:[%s5 + $0xf8] sm:$0xff]
  %v2329 = vld [vmem:[%s5 + $0x100] sm:$0xff]
  %v2330 = vld [vmem:[%s5 + $0x108] sm:$0xff]
  %v2331 = vld [vmem:[%s5 + $0x110] sm:$0xff]
  %v2332 = vld [vmem:[%s5 + $0x118] sm:$0xff]
  %v2333 = vld [vmem:[%s5 + $0x120] sm:$0xff]
  %v2334 = vld [vmem:[%s5 + $0x128] sm:$0xff]
  %v2335 = vld [vmem:[%s5 + $0x130] sm:$0xff]
  %v2336 = vld [vmem:[%s5 + $0x138] sm:$0xff]
  %v2337 = vld [vmem:[%s5 + $0x140] sm:$0xff]
  %v2338 = vld [vmem:[%s5 + $0x148] sm:$0xff]
  %v2339 = vld [vmem:[%s5 + $0x150] sm:$0xff]
  %v2340 = vld [vmem:[%s5 + $0x158] sm:$0xff]
  %v2341 = vld [vmem:[%s5 + $0x160] sm:$0xff]
  %v2342 = vld [vmem:[%s5 + $0x168] sm:$0xff]
  %v2343 = vld [vmem:[%s5 + $0x170] sm:$0xff]
  %v2344 = vld [vmem:[%s5 + $0x178] sm:$0xff]
  %v2345 = vld [vmem:[%s5 + $0x180] sm:$0xff]
  %v2346 = vld [vmem:[%s5 + $0x188] sm:$0xff]
  %v2347 = vld [vmem:[%s5 + $0x190] sm:$0xff]
  %v2348 = vld [vmem:[%s5 + $0x198] sm:$0xff]
  %v2349 = vld [vmem:[%s5 + $0x1a0] sm:$0xff]
  %v2350 = vld [vmem:[%s5 + $0x1a8] sm:$0xff]
  %v2351 = vld [vmem:[%s5 + $0x1b0] sm:$0xff]
  %v2352 = vld [vmem:[%s5 + $0x1b8] sm:$0xff]
  %v2353 = vld [vmem:[%s5 + $0x1c0] sm:$0xff]
  %v2354 = vld [vmem:[%s5 + $0x1c8] sm:$0xff]
  %v2355 = vld [vmem:[%s5 + $0x1d0] sm:$0xff]
  %v2356 = vld [vmem:[%s5 + $0x1d8] sm:$0xff]
  %v2357 = vld [vmem:[%s5 + $0x1e0] sm:$0xff]
  %v2358 = vld [vmem:[%s5 + $0x1e8] sm:$0xff]
  %v2359 = vld [vmem:[%s5 + $0x1f0] sm:$0xff]
  %v2360 = vld [vmem:[%s5 + $0x1f8] sm:$0xff]
  %v2361 = vld [vmem:[%s482] sm:$0xff]
  %v2362 = vld [vmem:[%s482 + $0x8] sm:$0xff]
  %v2363 = vld [vmem:[%s482 + $0x10] sm:$0xff]
  %v2364 = vld [vmem:[%s482 + $0x18] sm:$0xff]
  %v2365 = vld [vmem:[#allocation4] sm:$0xff]
  %2366 = vmatprep.subr.mxu0 %v2358
  %2367 = vmatpush1.msra.mxu0 %v2357
  %2368 = vmatprep.subr.mxu0 %v2354
  %2369 = vmatpush1.msra.mxu0 %v2353
  %2370 = vmatprep.subr.mxu0 %v2350
  %2371 = vmatpush1.msra.mxu0 %v2349
  %2372 = vmatprep.subr.mxu0 %v2346
  %2373 = vmatpush1.msra.mxu0 %v2345
  %2374 = vmatprep.subr.mxu0 %v2342
  %2375 = vmatpush1.msra.mxu0 %v2341
  %2376 = vmatprep.subr.mxu0 %v2338
  %2377 = vmatpush1.msra.mxu0 %v2337
  %2378 = vmatprep.subr.mxu0 %v2334
  %2379 = vmatpush1.msra.mxu0 %v2333
  %2380 = vmatprep.subr.mxu0 %v2330
  %2381 = vmatpush1.msra.mxu0 %v2329
  %2382 = vmatprep.subr.mxu0 %v2326
  %2383 = vmatpush1.msra.mxu0 %v2325
  %2384 = vmatprep.subr.mxu0 %v2322
  %2385 = vmatpush1.msra.mxu0 %v2321
  %2386 = vmatprep.subr.mxu0 %v2318
  %2387 = vmatpush1.msra.mxu0 %v2317
  %2388 = vmatprep.subr.mxu0 %v2314
  %2389 = vmatpush1.msra.mxu0 %v2313
  %2390 = vmatprep.subr.mxu0 %v2310
  %2391 = vmatpush1.msra.mxu0 %v2309
  %2392 = vmatprep.subr.mxu0 %v2306
  %2393 = vmatpush1.msra.mxu0 %v2305
  %2394 = vmatprep.subr.mxu0 %v2302
  %2395 = vmatpush1.msra.mxu0 %v2301
  %2396 = vmatprep.subr.mxu0 %v2298
  %2397 = vmatpush1.msra.mxu0 %v2297
  %2398 = vmatprep.subr.mxu0 0.0
  %2399 = vmatpush2.msra.mxu0 0.0
  %2400 = vmatprep.subr.mxu0 0.0
  %2401 = vmatpush2.msra.mxu0 0.0
  %2402 = vmatprep.subr.mxu0 0.0
  %2403 = vmatpush2.msra.mxu0 0.0
  %2404 = vmatprep.subr.mxu0 0.0
  %2405 = vmatpush2.msra.mxu0 0.0
  %2406 = vmatprep.subr.mxu0 0.0
  %2407 = vmatpush2.msra.mxu0 0.0
  %2408 = vmatprep.subr.mxu0 0.0
  %2409 = vmatpush2.msra.mxu0 0.0
  %2410 = vmatprep.subr.mxu0 0.0
  %2411 = vmatpush2.msra.mxu0 0.0
  %2412 = vmatprep.subr.mxu0 0.0
  %2413 = vmatpush2.msra.mxu0 0.0
  %2414 = vmatprep.subr.mxu0 0.0
  %2415 = vmatpush2.msra.mxu0 0.0
  %2416 = vmatprep.subr.mxu0 0.0
  %2417 = vmatpush2.msra.mxu0 0.0
  %2418 = vmatprep.subr.mxu0 0.0
  %2419 = vmatpush2.msra.mxu0 0.0
  %2420 = vmatprep.subr.mxu0 0.0
  %2421 = vmatpush2.msra.mxu0 0.0
  %2422 = vmatprep.subr.mxu0 0.0
  %2423 = vmatpush2.msra.mxu0 0.0
  %2424 = vmatprep.subr.mxu0 0.0
  %2425 = vmatpush2.msra.mxu0 0.0
  %2426 = vmatprep.subr.mxu0 0.0
  %2427 = vmatpush2.msra.mxu0 0.0
  %2428 = vmatprep.subr.mxu0 0.0
  %2429 = vmatpush2.msra.mxu0 0.0
  %2430 = vmatprep.mubr.f32.mxu0 0.0
  %2431 = vmatmul.mubr.f32.gmra.mxu0 %v2365
  %v2432 = vpop.f32.mrf.mxu0
  %v2433 = vadd.f32 0.0, %v2432
  %v2434 = vpop.f32.mrf.mxu0
  %v2435 = vadd.f32 0.0, %v2434
  %2436 = vdwg.mxu0
  %2437 = vmatprep.subr.mxu0 %v2360
  %2438 = vmatpush1.msra.mxu0 %v2359
  %2439 = vmatprep.subr.mxu0 %v2356
  %2440 = vmatpush1.msra.mxu0 %v2355
  %2441 = vmatprep.subr.mxu0 %v2352
  %2442 = vmatpush1.msra.mxu0 %v2351
  %2443 = vmatprep.subr.mxu0 %v2348
  %2444 = vmatpush1.msra.mxu0 %v2347
  %2445 = vmatprep.subr.mxu0 %v2344
  %2446 = vmatpush1.msra.mxu0 %v2343
  %2447 = vmatprep.subr.mxu0 %v2340
  %2448 = vmatpush1.msra.mxu0 %v2339
  %2449 = vmatprep.subr.mxu0 %v2336
  %2450 = vmatpush1.msra.mxu0 %v2335
  %2451 = vmatprep.subr.mxu0 %v2332
  %2452 = vmatpush1.msra.mxu0 %v2331
  %2453 = vmatprep.subr.mxu0 %v2328
  %2454 = vmatpush1.msra.mxu0 %v2327
  %2455 = vmatprep.subr.mxu0 %v2324
  %2456 = vmatpush1.msra.mxu0 %v2323
  %2457 = vmatprep.subr.mxu0 %v2320
  %2458 = vmatpush1.msra.mxu0 %v2319
  %2459 = vmatprep.subr.mxu0 %v2316
  %2460 = vmatpush1.msra.mxu0 %v2315
  %2461 = vmatprep.subr.mxu0 %v2312
  %2462 = vmatpush1.msra.mxu0 %v2311
  %2463 = vmatprep.subr.mxu0 %v2308
  %2464 = vmatpush1.msra.mxu0 %v2307
  %2465 = vmatprep.subr.mxu0 %v2304
  %2466 = vmatpush1.msra.mxu0 %v2303
  %2467 = vmatprep.subr.mxu0 %v2300
  %2468 = vmatpush1.msra.mxu0 %v2299
  %2469 = vmatprep.subr.mxu0 0.0
  %2470 = vmatpush2.msra.mxu0 0.0
  %2471 = vmatprep.subr.mxu0 0.0
  %2472 = vmatpush2.msra.mxu0 0.0
  %2473 = vmatprep.subr.mxu0 0.0
  %2474 = vmatpush2.msra.mxu0 0.0
  %2475 = vmatprep.subr.mxu0 0.0
  %2476 = vmatpush2.msra.mxu0 0.0
  %2477 = vmatprep.subr.mxu0 0.0
  %2478 = vmatpush2.msra.mxu0 0.0
  %2479 = vmatprep.subr.mxu0 0.0
  %2480 = vmatpush2.msra.mxu0 0.0
  %2481 = vmatprep.subr.mxu0 0.0
  %2482 = vmatpush2.msra.mxu0 0.0
  %2483 = vmatprep.subr.mxu0 0.0
  %2484 = vmatpush2.msra.mxu0 0.0
  %2485 = vmatprep.subr.mxu0 0.0
  %2486 = vmatpush2.msra.mxu0 0.0
  %2487 = vmatprep.subr.mxu0 0.0
  %2488 = vmatpush2.msra.mxu0 0.0
  %2489 = vmatprep.subr.mxu0 0.0
  %2490 = vmatpush2.msra.mxu0 0.0
  %2491 = vmatprep.subr.mxu0 0.0
  %2492 = vmatpush2.msra.mxu0 0.0
  %2493 = vmatprep.subr.mxu0 0.0
  %2494 = vmatpush2.msra.mxu0 0.0
  %2495 = vmatprep.subr.mxu0 0.0
  %2496 = vmatpush2.msra.mxu0 0.0
  %2497 = vmatprep.subr.mxu0 0.0
  %2498 = vmatpush2.msra.mxu0 0.0
  %2499 = vmatprep.subr.mxu0 0.0
  %2500 = vmatpush2.msra.mxu0 0.0
  %2501 = vmatprep.mubr.f32.mxu0 0.0
  %2502 = vmatmul.mubr.f32.gmra.mxu0 %v2365
  %v2503 = vpop.f32.mrf.mxu0
  %v2504 = vadd.f32 0.0, %v2503
  %v2505 = vpop.f32.mrf.mxu0
  %v2506 = vadd.f32 0.0, %v2505
  %2507 = vdwg.mxu0
  %v2508 = vadd.f32 %v2361, %v2433
  %v2509 = vadd.f32 %v2362, %v2435
  %v2510 = vadd.f32 %v2363, %v2504
  %v2511 = vadd.f32 %v2364, %v2506
  %v2512 = vxor.u32 %v2508, 2147483648
  %v2513 = vmul.f32 %v2512, 1.442695
  %v2514 = vpow.pop %v2513
  %v2515 = vadd.f32 %v2514, 1.0
  %v2516 = vrcp.pop %v2515
  %v2517 = vmul.f32 1.0, %v2516
  %v2518 = vxor.u32 %v2509, 2147483648
  %v2519 = vmul.f32 %v2518, 1.442695
  %v2520 = vpow.pop %v2519
  %v2521 = vadd.f32 %v2520, 1.0
  %v2522 = vrcp.pop %v2521
  %v2523 = vmul.f32 1.0, %v2522
  %v2524 = vtanh.pop %v2510
  %v2525 = vxor.u32 %v2511, 2147483648
  %v2526 = vmul.f32 %v2525, 1.442695
  %v2527 = vpow.pop %v2526
  %v2528 = vadd.f32 %v2527, 1.0
  %v2529 = vrcp.pop %v2528
  %v2530 = vmul.f32 1.0, %v2529
  %v2531 = vld [vmem:[#allocation5] sm:$0xff]
  %v2532 = vmul.f32 %v2523, %v2531
  %v2533 = vmul.f32 %v2517, %v2524
  %v2534 = vadd.f32 %v2532, %v2533
  %v2535 = vtanh.pop %v2534
  %v2536 = vmul.f32 %v2530, %v2535
  %2537 = vst [vmem:[#allocation5] sm:$0xff] %v2534
  %2538 = vst [vmem:[#allocation4] sm:$0xff] %v2536
  %2539 = vst [vmem:[#allocation3] sm:$0xff] %v2536
  %v2540 = vld [vmem:[%s664] sm:$0xff]
  %v2541 = vld [vmem:[%s664 + $0x8] sm:$0xff]
  %v2542 = vld [vmem:[%s664 + $0x10] sm:$0xff]
  %v2543 = vld [vmem:[%s664 + $0x18] sm:$0xff]
  %v2544 = vld [vmem:[#allocation4] sm:$0xff]
  %2545 = vmatprep.subr.mxu0 %v2358
  %2546 = vmatpush1.msra.mxu0 %v2357
  %2547 = vmatprep.subr.mxu0 %v2354
  %2548 = vmatpush1.msra.mxu0 %v2353
  %2549 = vmatprep.subr.mxu0 %v2350
  %2550 = vmatpush1.msra.mxu0 %v2349
  %2551 = vmatprep.subr.mxu0 %v2346
  %2552 = vmatpush1.msra.mxu0 %v2345
  %2553 = vmatprep.subr.mxu0 %v2342
  %2554 = vmatpush1.msra.mxu0 %v2341
  %2555 = vmatprep.subr.mxu0 %v2338
  %2556 = vmatpush1.msra.mxu0 %v2337
  %2557 = vmatprep.subr.mxu0 %v2334
  %2558 = vmatpush1.msra.mxu0 %v2333
  %2559 = vmatprep.subr.mxu0 %v2330
  %2560 = vmatpush1.msra.mxu0 %v2329
  %2561 = vmatprep.subr.mxu0 %v2326
  %2562 = vmatpush1.msra.mxu0 %v2325
  %2563 = vmatprep.subr.mxu0 %v2322
  %2564 = vmatpush1.msra.mxu0 %v2321
  %2565 = vmatprep.subr.mxu0 %v2318
  %2566 = vmatpush1.msra.mxu0 %v2317
  %2567 = vmatprep.subr.mxu0 %v2314
  %2568 = vmatpush1.msra.mxu0 %v2313
  %2569 = vmatprep.subr.mxu0 %v2310
  %2570 = vmatpush1.msra.mxu0 %v2309
  %2571 = vmatprep.subr.mxu0 %v2306
  %2572 = vmatpush1.msra.mxu0 %v2305
  %2573 = vmatprep.subr.mxu0 %v2302
  %2574 = vmatpush1.msra.mxu0 %v2301
  %2575 = vmatprep.subr.mxu0 %v2298
  %2576 = vmatpush1.msra.mxu0 %v2297
  %2577 = vmatprep.subr.mxu0 0.0
  %2578 = vmatpush2.msra.mxu0 0.0
  %2579 = vmatprep.subr.mxu0 0.0
  %2580 = vmatpush2.msra.mxu0 0.0
  %2581 = vmatprep.subr.mxu0 0.0
  %2582 = vmatpush2.msra.mxu0 0.0
  %2583 = vmatprep.subr.mxu0 0.0
  %2584 = vmatpush2.msra.mxu0 0.0
  %2585 = vmatprep.subr.mxu0 0.0
  %2586 = vmatpush2.msra.mxu0 0.0
  %2587 = vmatprep.subr.mxu0 0.0
  %2588 = vmatpush2.msra.mxu0 0.0
  %2589 = vmatprep.subr.mxu0 0.0
  %2590 = vmatpush2.msra.mxu0 0.0
  %2591 = vmatprep.subr.mxu0 0.0
  %2592 = vmatpush2.msra.mxu0 0.0
  %2593 = vmatprep.subr.mxu0 0.0
  %2594 = vmatpush2.msra.mxu0 0.0
  %2595 = vmatprep.subr.mxu0 0.0
  %2596 = vmatpush2.msra.mxu0 0.0
  %2597 = vmatprep.subr.mxu0 0.0
  %2598 = vmatpush2.msra.mxu0 0.0
  %2599 = vmatprep.subr.mxu0 0.0
  %2600 = vmatpush2.msra.mxu0 0.0
  %2601 = vmatprep.subr.mxu0 0.0
  %2602 = vmatpush2.msra.mxu0 0.0
  %2603 = vmatprep.subr.mxu0 0.0
  %2604 = vmatpush2.msra.mxu0 0.0
  %2605 = vmatprep.subr.mxu0 0.0
  %2606 = vmatpush2.msra.mxu0 0.0
  %2607 = vmatprep.subr.mxu0 0.0
  %2608 = vmatpush2.msra.mxu0 0.0
  %2609 = vmatprep.mubr.f32.mxu0 0.0
  %2610 = vmatmul.mubr.f32.gmra.mxu0 %v2544
  %v2611 = vpop.f32.mrf.mxu0
  %v2612 = vadd.f32 0.0, %v2611
  %v2613 = vpop.f32.mrf.mxu0
  %v2614 = vadd.f32 0.0, %v2613
  %2615 = vdwg.mxu0
  %2616 = vmatprep.subr.mxu0 %v2360
  %2617 = vmatpush1.msra.mxu0 %v2359
  %2618 = vmatprep.subr.mxu0 %v2356
  %2619 = vmatpush1.msra.mxu0 %v2355
  %2620 = vmatprep.subr.mxu0 %v2352
  %2621 = vmatpush1.msra.mxu0 %v2351
  %2622 = vmatprep.subr.mxu0 %v2348
  %2623 = vmatpush1.msra.mxu0 %v2347
  %2624 = vmatprep.subr.mxu0 %v2344
  %2625 = vmatpush1.msra.mxu0 %v2343
  %2626 = vmatprep.subr.mxu0 %v2340
  %2627 = vmatpush1.msra.mxu0 %v2339
  %2628 = vmatprep.subr.mxu0 %v2336
  %2629 = vmatpush1.msra.mxu0 %v2335
  %2630 = vmatprep.subr.mxu0 %v2332
  %2631 = vmatpush1.msra.mxu0 %v2331
  %2632 = vmatprep.subr.mxu0 %v2328
  %2633 = vmatpush1.msra.mxu0 %v2327
  %2634 = vmatprep.subr.mxu0 %v2324
  %2635 = vmatpush1.msra.mxu0 %v2323
  %2636 = vmatprep.subr.mxu0 %v2320
  %2637 = vmatpush1.msra.mxu0 %v2319
  %2638 = vmatprep.subr.mxu0 %v2316
  %2639 = vmatpush1.msra.mxu0 %v2315
  %2640 = vmatprep.subr.mxu0 %v2312
  %2641 = vmatpush1.msra.mxu0 %v2311
  %2642 = vmatprep.subr.mxu0 %v2308
  %2643 = vmatpush1.msra.mxu0 %v2307
  %2644 = vmatprep.subr.mxu0 %v2304
  %2645 = vmatpush1.msra.mxu0 %v2303
  %2646 = vmatprep.subr.mxu0 %v2300
  %2647 = vmatpush1.msra.mxu0 %v2299
  %2648 = vmatprep.subr.mxu0 0.0
  %2649 = vmatpush2.msra.mxu0 0.0
  %2650 = vmatprep.subr.mxu0 0.0
  %2651 = vmatpush2.msra.mxu0 0.0
  %2652 = vmatprep.subr.mxu0 0.0
  %2653 = vmatpush2.msra.mxu0 0.0
  %2654 = vmatprep.subr.mxu0 0.0
  %2655 = vmatpush2.msra.mxu0 0.0
  %2656 = vmatprep.subr.mxu0 0.0
  %2657 = vmatpush2.msra.mxu0 0.0
  %2658 = vmatprep.subr.mxu0 0.0
  %2659 = vmatpush2.msra.mxu0 0.0
  %2660 = vmatprep.subr.mxu0 0.0
  %2661 = vmatpush2.msra.mxu0 0.0
  %2662 = vmatprep.subr.mxu0 0.0
  %2663 = vmatpush2.msra.mxu0 0.0
  %2664 = vmatprep.subr.mxu0 0.0
  %2665 = vmatpush2.msra.mxu0 0.0
  %2666 = vmatprep.subr.mxu0 0.0
  %2667 = vmatpush2.msra.mxu0 0.0
  %2668 = vmatprep.subr.mxu0 0.0
  %2669 = vmatpush2.msra.mxu0 0.0
  %2670 = vmatprep.subr.mxu0 0.0
  %2671 = vmatpush2.msra.mxu0 0.0
  %2672 = vmatprep.subr.mxu0 0.0
  %2673 = vmatpush2.msra.mxu0 0.0
  %2674 = vmatprep.subr.mxu0 0.0
  %2675 = vmatpush2.msra.mxu0 0.0
  %2676 = vmatprep.subr.mxu0 0.0
  %2677 = vmatpush2.msra.mxu0 0.0
  %2678 = vmatprep.subr.mxu0 0.0
  %2679 = vmatpush2.msra.mxu0 0.0
  %2680 = vmatprep.mubr.f32.mxu0 0.0
  %2681 = vmatmul.mubr.f32.gmra.mxu0 %v2544
  %v2682 = vpop.f32.mrf.mxu0
  %v2683 = vadd.f32 0.0, %v2682
  %v2684 = vpop.f32.mrf.mxu0
  %v2685 = vadd.f32 0.0, %v2684
  %2686 = vdwg.mxu0
  %v2687 = vadd.f32 %v2540, %v2612
  %v2688 = vadd.f32 %v2541, %v2614
  %v2689 = vadd.f32 %v2542, %v2683
  %v2690 = vadd.f32 %v2543, %v2685
  %v2691 = vxor.u32 %v2687, 2147483648
  %v2692 = vmul.f32 %v2691, 1.442695
  %v2693 = vpow.pop %v2692
  %v2694 = vadd.f32 %v2693, 1.0
  %v2695 = vrcp.pop %v2694
  %v2696 = vmul.f32 1.0, %v2695
  %v2697 = vxor.u32 %v2688, 2147483648
  %v2698 = vmul.f32 %v2697, 1.442695
  %v2699 = vpow.pop %v2698
  %v2700 = vadd.f32 %v2699, 1.0
  %v2701 = vrcp.pop %v2700
  %v2702 = vmul.f32 1.0, %v2701
  %v2703 = vtanh.pop %v2689
  %v2704 = vxor.u32 %v2690, 2147483648
  %v2705 = vmul.f32 %v2704, 1.442695
  %v2706 = vpow.pop %v2705
  %v2707 = vadd.f32 %v2706, 1.0
  %v2708 = vrcp.pop %v2707
  %v2709 = vmul.f32 1.0, %v2708
  %v2710 = vld [vmem:[#allocation5] sm:$0xff]
  %v2711 = vmul.f32 %v2702, %v2710
  %v2712 = vmul.f32 %v2696, %v2703
  %v2713 = vadd.f32 %v2711, %v2712
  %v2714 = vtanh.pop %v2713
  %v2715 = vmul.f32 %v2709, %v2714
  %2716 = vst [vmem:[#allocation5] sm:$0xff] %v2713
  %2717 = vst [vmem:[#allocation4] sm:$0xff] %v2715
  %2718 = vst [vmem:[%s843] sm:$0xff] %v2715
  %v2719 = vld [vmem:[%s847] sm:$0xff]
  %v2720 = vld [vmem:[%s847 + $0x8] sm:$0xff]
  %v2721 = vld [vmem:[%s847 + $0x10] sm:$0xff]
  %v2722 = vld [vmem:[%s847 + $0x18] sm:$0xff]
  %v2723 = vld [vmem:[#allocation4] sm:$0xff]
  %2724 = vmatprep.subr.mxu0 %v2358
  %2725 = vmatpush1.msra.mxu0 %v2357
  %2726 = vmatprep.subr.mxu0 %v2354
  %2727 = vmatpush1.msra.mxu0 %v2353
  %2728 = vmatprep.subr.mxu0 %v2350
  %2729 = vmatpush1.msra.mxu0 %v2349
  %2730 = vmatprep.subr.mxu0 %v2346
  %2731 = vmatpush1.msra.mxu0 %v2345
  %2732 = vmatprep.subr.mxu0 %v2342
  %2733 = vmatpush1.msra.mxu0 %v2341
  %2734 = vmatprep.subr.mxu0 %v2338
  %2735 = vmatpush1.msra.mxu0 %v2337
  %2736 = vmatprep.subr.mxu0 %v2334
  %2737 = vmatpush1.msra.mxu0 %v2333
  %2738 = vmatprep.subr.mxu0 %v2330
  %2739 = vmatpush1.msra.mxu0 %v2329
  %2740 = vmatprep.subr.mxu0 %v2326
  %2741 = vmatpush1.msra.mxu0 %v2325
  %2742 = vmatprep.subr.mxu0 %v2322
  %2743 = vmatpush1.msra.mxu0 %v2321
  %2744 = vmatprep.subr.mxu0 %v2318
  %2745 = vmatpush1.msra.mxu0 %v2317
  %2746 = vmatprep.subr.mxu0 %v2314
  %2747 = vmatpush1.msra.mxu0 %v2313
  %2748 = vmatprep.subr.mxu0 %v2310
  %2749 = vmatpush1.msra.mxu0 %v2309
  %2750 = vmatprep.subr.mxu0 %v2306
  %2751 = vmatpush1.msra.mxu0 %v2305
  %2752 = vmatprep.subr.mxu0 %v2302
  %2753 = vmatpush1.msra.mxu0 %v2301
  %2754 = vmatprep.subr.mxu0 %v2298
  %2755 = vmatpush1.msra.mxu0 %v2297
  %2756 = vmatprep.subr.mxu0 0.0
  %2757 = vmatpush2.msra.mxu0 0.0
  %2758 = vmatprep.subr.mxu0 0.0
  %2759 = vmatpush2.msra.mxu0 0.0
  %2760 = vmatprep.subr.mxu0 0.0
  %2761 = vmatpush2.msra.mxu0 0.0
  %2762 = vmatprep.subr.mxu0 0.0
  %2763 = vmatpush2.msra.mxu0 0.0
  %2764 = vmatprep.subr.mxu0 0.0
  %2765 = vmatpush2.msra.mxu0 0.0
  %2766 = vmatprep.subr.mxu0 0.0
  %2767 = vmatpush2.msra.mxu0 0.0
  %2768 = vmatprep.subr.mxu0 0.0
  %2769 = vmatpush2.msra.mxu0 0.0
  %2770 = vmatprep.subr.mxu0 0.0
  %2771 = vmatpush2.msra.mxu0 0.0
  %2772 = vmatprep.subr.mxu0 0.0
  %2773 = vmatpush2.msra.mxu0 0.0
  %2774 = vmatprep.subr.mxu0 0.0
  %2775 = vmatpush2.msra.mxu0 0.0
  %2776 = vmatprep.subr.mxu0 0.0
  %2777 = vmatpush2.msra.mxu0 0.0
  %2778 = vmatprep.subr.mxu0 0.0
  %2779 = vmatpush2.msra.mxu0 0.0
  %2780 = vmatprep.subr.mxu0 0.0
  %2781 = vmatpush2.msra.mxu0 0.0
  %2782 = vmatprep.subr.mxu0 0.0
  %2783 = vmatpush2.msra.mxu0 0.0
  %2784 = vmatprep.subr.mxu0 0.0
  %2785 = vmatpush2.msra.mxu0 0.0
  %2786 = vmatprep.subr.mxu0 0.0
  %2787 = vmatpush2.msra.mxu0 0.0
  %2788 = vmatprep.mubr.f32.mxu0 0.0
  %2789 = vmatmul.mubr.f32.gmra.mxu0 %v2723
  %v2790 = vpop.f32.mrf.mxu0
  %v2791 = vadd.f32 0.0, %v2790
  %v2792 = vpop.f32.mrf.mxu0
  %v2793 = vadd.f32 0.0, %v2792
  %2794 = vdwg.mxu0
  %2795 = vmatprep.subr.mxu0 %v2360
  %2796 = vmatpush1.msra.mxu0 %v2359
  %2797 = vmatprep.subr.mxu0 %v2356
  %2798 = vmatpush1.msra.mxu0 %v2355
  %2799 = vmatprep.subr.mxu0 %v2352
  %2800 = vmatpush1.msra.mxu0 %v2351
  %2801 = vmatprep.subr.mxu0 %v2348
  %2802 = vmatpush1.msra.mxu0 %v2347
  %2803 = vmatprep.subr.mxu0 %v2344
  %2804 = vmatpush1.msra.mxu0 %v2343
  %2805 = vmatprep.subr.mxu0 %v2340
  %2806 = vmatpush1.msra.mxu0 %v2339
  %2807 = vmatprep.subr.mxu0 %v2336
  %2808 = vmatpush1.msra.mxu0 %v2335
  %2809 = vmatprep.subr.mxu0 %v2332
  %2810 = vmatpush1.msra.mxu0 %v2331
  %2811 = vmatprep.subr.mxu0 %v2328
  %2812 = vmatpush1.msra.mxu0 %v2327
  %2813 = vmatprep.subr.mxu0 %v2324
  %2814 = vmatpush1.msra.mxu0 %v2323
  %2815 = vmatprep.subr.mxu0 %v2320
  %2816 = vmatpush1.msra.mxu0 %v2319
  %2817 = vmatprep.subr.mxu0 %v2316
  %2818 = vmatpush1.msra.mxu0 %v2315
  %2819 = vmatprep.subr.mxu0 %v2312
  %2820 = vmatpush1.msra.mxu0 %v2311
  %2821 = vmatprep.subr.mxu0 %v2308
  %2822 = vmatpush1.msra.mxu0 %v2307
  %2823 = vmatprep.subr.mxu0 %v2304
  %2824 = vmatpush1.msra.mxu0 %v2303
  %2825 = vmatprep.subr.mxu0 %v2300
  %2826 = vmatpush1.msra.mxu0 %v2299
  %2827 = vmatprep.subr.mxu0 0.0
  %2828 = vmatpush2.msra.mxu0 0.0
  %2829 = vmatprep.subr.mxu0 0.0
  %2830 = vmatpush2.msra.mxu0 0.0
  %2831 = vmatprep.subr.mxu0 0.0
  %2832 = vmatpush2.msra.mxu0 0.0
  %2833 = vmatprep.subr.mxu0 0.0
  %2834 = vmatpush2.msra.mxu0 0.0
  %2835 = vmatprep.subr.mxu0 0.0
  %2836 = vmatpush2.msra.mxu0 0.0
  %2837 = vmatprep.subr.mxu0 0.0
  %2838 = vmatpush2.msra.mxu0 0.0
  %2839 = vmatprep.subr.mxu0 0.0
  %2840 = vmatpush2.msra.mxu0 0.0
  %2841 = vmatprep.subr.mxu0 0.0
  %2842 = vmatpush2.msra.mxu0 0.0
  %2843 = vmatprep.subr.mxu0 0.0
  %2844 = vmatpush2.msra.mxu0 0.0
  %2845 = vmatprep.subr.mxu0 0.0
  %2846 = vmatpush2.msra.mxu0 0.0
  %2847 = vmatprep.subr.mxu0 0.0
  %2848 = vmatpush2.msra.mxu0 0.0
  %2849 = vmatprep.subr.mxu0 0.0
  %2850 = vmatpush2.msra.mxu0 0.0
  %2851 = vmatprep.subr.mxu0 0.0
  %2852 = vmatpush2.msra.mxu0 0.0
  %2853 = vmatprep.subr.mxu0 0.0
  %2854 = vmatpush2.msra.mxu0 0.0
  %2855 = vmatprep.subr.mxu0 0.0
  %2856 = vmatpush2.msra.mxu0 0.0
  %2857 = vmatprep.subr.mxu0 0.0
  %2858 = vmatpush2.msra.mxu0 0.0
  %2859 = vmatprep.mubr.f32.mxu0 0.0
  %2860 = vmatmul.mubr.f32.gmra.mxu0 %v2723
  %v2861 = vpop.f32.mrf.mxu0
  %v2862 = vadd.f32 0.0, %v2861
  %v2863 = vpop.f32.mrf.mxu0
  %v2864 = vadd.f32 0.0, %v2863
  %2865 = vdwg.mxu0
  %v2866 = vadd.f32 %v2719, %v2791
  %v2867 = vadd.f32 %v2720, %v2793
  %v2868 = vadd.f32 %v2721, %v2862
  %v2869 = vadd.f32 %v2722, %v2864
  %v2870 = vxor.u32 %v2866, 2147483648
  %v2871 = vmul.f32 %v2870, 1.442695
  %v2872 = vpow.pop %v2871
  %v2873 = vadd.f32 %v2872, 1.0
  %v2874 = vrcp.pop %v2873
  %v2875 = vmul.f32 1.0, %v2874
  %v2876 = vxor.u32 %v2867, 2147483648
  %v2877 = vmul.f32 %v2876, 1.442695
  %v2878 = vpow.pop %v2877
  %v2879 = vadd.f32 %v2878, 1.0
  %v2880 = vrcp.pop %v2879
  %v2881 = vmul.f32 1.0, %v2880
  %v2882 = vtanh.pop %v2868
  %v2883 = vxor.u32 %v2869, 2147483648
  %v2884 = vmul.f32 %v2883, 1.442695
  %v2885 = vpow.pop %v2884
  %v2886 = vadd.f32 %v2885, 1.0
  %v2887 = vrcp.pop %v2886
  %v2888 = vmul.f32 1.0, %v2887
  %v2889 = vld [vmem:[#allocation5] sm:$0xff]
  %v2890 = vmul.f32 %v2881, %v2889
  %v2891 = vmul.f32 %v2875, %v2882
  %v2892 = vadd.f32 %v2890, %v2891
  %v2893 = vtanh.pop %v2892
  %v2894 = vmul.f32 %v2888, %v2893
  %2895 = vst [vmem:[#allocation5] sm:$0xff] %v2892
  %2896 = vst [vmem:[#allocation4] sm:$0xff] %v2894
  %2897 = vst [vmem:[%s1026] sm:$0xff] %v2894
  %v2898 = vld [vmem:[%s1030] sm:$0xff]
  %v2899 = vld [vmem:[%s1030 + $0x8] sm:$0xff]
  %v2900 = vld [vmem:[%s1030 + $0x10] sm:$0xff]
  %v2901 = vld [vmem:[%s1030 + $0x18] sm:$0xff]
  %v2902 = vld [vmem:[#allocation4] sm:$0xff]
  %2903 = vmatprep.subr.mxu0 %v2358
  %2904 = vmatpush1.msra.mxu0 %v2357
  %2905 = vmatprep.subr.mxu0 %v2354
  %2906 = vmatpush1.msra.mxu0 %v2353
  %2907 = vmatprep.subr.mxu0 %v2350
  %2908 = vmatpush1.msra.mxu0 %v2349
  %2909 = vmatprep.subr.mxu0 %v2346
  %2910 = vmatpush1.msra.mxu0 %v2345
  %2911 = vmatprep.subr.mxu0 %v2342
  %2912 = vmatpush1.msra.mxu0 %v2341
  %2913 = vmatprep.subr.mxu0 %v2338
  %2914 = vmatpush1.msra.mxu0 %v2337
  %2915 = vmatprep.subr.mxu0 %v2334
  %2916 = vmatpush1.msra.mxu0 %v2333
  %2917 = vmatprep.subr.mxu0 %v2330
  %2918 = vmatpush1.msra.mxu0 %v2329
  %2919 = vmatprep.subr.mxu0 %v2326
  %2920 = vmatpush1.msra.mxu0 %v2325
  %2921 = vmatprep.subr.mxu0 %v2322
  %2922 = vmatpush1.msra.mxu0 %v2321
  %2923 = vmatprep.subr.mxu0 %v2318
  %2924 = vmatpush1.msra.mxu0 %v2317
  %2925 = vmatprep.subr.mxu0 %v2314
  %2926 = vmatpush1.msra.mxu0 %v2313
  %2927 = vmatprep.subr.mxu0 %v2310
  %2928 = vmatpush1.msra.mxu0 %v2309
  %2929 = vmatprep.subr.mxu0 %v2306
  %2930 = vmatpush1.msra.mxu0 %v2305
  %2931 = vmatprep.subr.mxu0 %v2302
  %2932 = vmatpush1.msra.mxu0 %v2301
  %2933 = vmatprep.subr.mxu0 %v2298
  %2934 = vmatpush1.msra.mxu0 %v2297
  %2935 = vmatprep.subr.mxu0 0.0
  %2936 = vmatpush2.msra.mxu0 0.0
  %2937 = vmatprep.subr.mxu0 0.0
  %2938 = vmatpush2.msra.mxu0 0.0
  %2939 = vmatprep.subr.mxu0 0.0
  %2940 = vmatpush2.msra.mxu0 0.0
  %2941 = vmatprep.subr.mxu0 0.0
  %2942 = vmatpush2.msra.mxu0 0.0
  %2943 = vmatprep.subr.mxu0 0.0
  %2944 = vmatpush2.msra.mxu0 0.0
  %2945 = vmatprep.subr.mxu0 0.0
  %2946 = vmatpush2.msra.mxu0 0.0
  %2947 = vmatprep.subr.mxu0 0.0
  %2948 = vmatpush2.msra.mxu0 0.0
  %2949 = vmatprep.subr.mxu0 0.0
  %2950 = vmatpush2.msra.mxu0 0.0
  %2951 = vmatprep.subr.mxu0 0.0
  %2952 = vmatpush2.msra.mxu0 0.0
  %2953 = vmatprep.subr.mxu0 0.0
  %2954 = vmatpush2.msra.mxu0 0.0
  %2955 = vmatprep.subr.mxu0 0.0
  %2956 = vmatpush2.msra.mxu0 0.0
  %2957 = vmatprep.subr.mxu0 0.0
  %2958 = vmatpush2.msra.mxu0 0.0
  %2959 = vmatprep.subr.mxu0 0.0
  %2960 = vmatpush2.msra.mxu0 0.0
  %2961 = vmatprep.subr.mxu0 0.0
  %2962 = vmatpush2.msra.mxu0 0.0
  %2963 = vmatprep.subr.mxu0 0.0
  %2964 = vmatpush2.msra.mxu0 0.0
  %2965 = vmatprep.subr.mxu0 0.0
  %2966 = vmatpush2.msra.mxu0 0.0
  %2967 = vmatprep.mubr.f32.mxu0 0.0
  %2968 = vmatmul.mubr.f32.gmra.mxu0 %v2902
  %v2969 = vpop.f32.mrf.mxu0
  %v2970 = vadd.f32 0.0, %v2969
  %v2971 = vpop.f32.mrf.mxu0
  %v2972 = vadd.f32 0.0, %v2971
  %2973 = vdwg.mxu0
  %2974 = vmatprep.subr.mxu0 %v2360
  %2975 = vmatpush1.msra.mxu0 %v2359
  %2976 = vmatprep.subr.mxu0 %v2356
  %2977 = vmatpush1.msra.mxu0 %v2355
  %2978 = vmatprep.subr.mxu0 %v2352
  %2979 = vmatpush1.msra.mxu0 %v2351
  %2980 = vmatprep.subr.mxu0 %v2348
  %2981 = vmatpush1.msra.mxu0 %v2347
  %2982 = vmatprep.subr.mxu0 %v2344
  %2983 = vmatpush1.msra.mxu0 %v2343
  %2984 = vmatprep.subr.mxu0 %v2340
  %2985 = vmatpush1.msra.mxu0 %v2339
  %2986 = vmatprep.subr.mxu0 %v2336
  %2987 = vmatpush1.msra.mxu0 %v2335
  %2988 = vmatprep.subr.mxu0 %v2332
  %2989 = vmatpush1.msra.mxu0 %v2331
  %2990 = vmatprep.subr.mxu0 %v2328
  %2991 = vmatpush1.msra.mxu0 %v2327
  %2992 = vmatprep.subr.mxu0 %v2324
  %2993 = vmatpush1.msra.mxu0 %v2323
  %2994 = vmatprep.subr.mxu0 %v2320
  %2995 = vmatpush1.msra.mxu0 %v2319
  %2996 = vmatprep.subr.mxu0 %v2316
  %2997 = vmatpush1.msra.mxu0 %v2315
  %2998 = vmatprep.subr.mxu0 %v2312
  %2999 = vmatpush1.msra.mxu0 %v2311
  %3000 = vmatprep.subr.mxu0 %v2308
  %3001 = vmatpush1.msra.mxu0 %v2307
  %3002 = vmatprep.subr.mxu0 %v2304
  %3003 = vmatpush1.msra.mxu0 %v2303
  %3004 = vmatprep.subr.mxu0 %v2300
  %3005 = vmatpush1.msra.mxu0 %v2299
  %3006 = vmatprep.subr.mxu0 0.0
  %3007 = vmatpush2.msra.mxu0 0.0
  %3008 = vmatprep.subr.mxu0 0.0
  %3009 = vmatpush2.msra.mxu0 0.0
  %3010 = vmatprep.subr.mxu0 0.0
  %3011 = vmatpush2.msra.mxu0 0.0
  %3012 = vmatprep.subr.mxu0 0.0
  %3013 = vmatpush2.msra.mxu0 0.0
  %3014 = vmatprep.subr.mxu0 0.0
  %3015 = vmatpush2.msra.mxu0 0.0
  %3016 = vmatprep.subr.mxu0 0.0
  %3017 = vmatpush2.msra.mxu0 0.0
  %3018 = vmatprep.subr.mxu0 0.0
  %3019 = vmatpush2.msra.mxu0 0.0
  %3020 = vmatprep.subr.mxu0 0.0
  %3021 = vmatpush2.msra.mxu0 0.0
  %3022 = vmatprep.subr.mxu0 0.0
  %3023 = vmatpush2.msra.mxu0 0.0
  %3024 = vmatprep.subr.mxu0 0.0
  %3025 = vmatpush2.msra.mxu0 0.0
  %3026 = vmatprep.subr.mxu0 0.0
  %3027 = vmatpush2.msra.mxu0 0.0
  %3028 = vmatprep.subr.mxu0 0.0
  %3029 = vmatpush2.msra.mxu0 0.0
  %3030 = vmatprep.subr.mxu0 0.0
  %3031 = vmatpush2.msra.mxu0 0.0
  %3032 = vmatprep.subr.mxu0 0.0
  %3033 = vmatpush2.msra.mxu0 0.0
  %3034 = vmatprep.subr.mxu0 0.0
  %3035 = vmatpush2.msra.mxu0 0.0
  %3036 = vmatprep.subr.mxu0 0.0
  %3037 = vmatpush2.msra.mxu0 0.0
  %3038 = vmatprep.mubr.f32.mxu0 0.0
  %3039 = vmatmul.mubr.f32.gmra.mxu0 %v2902
  %v3040 = vpop.f32.mrf.mxu0
  %v3041 = vadd.f32 0.0, %v3040
  %v3042 = vpop.f32.mrf.mxu0
  %v3043 = vadd.f32 0.0, %v3042
  %3044 = vdwg.mxu0
  %v3045 = vadd.f32 %v2898, %v2970
  %v3046 = vadd.f32 %v2899, %v2972
  %v3047 = vadd.f32 %v2900, %v3041
  %v3048 = vadd.f32 %v2901, %v3043
  %v3049 = vxor.u32 %v3045, 2147483648
  %v3050 = vmul.f32 %v3049, 1.442695
  %v3051 = vpow.pop %v3050
  %v3052 = vadd.f32 %v3051, 1.0
  %v3053 = vrcp.pop %v3052
  %v3054 = vmul.f32 1.0, %v3053
  %v3055 = vxor.u32 %v3046, 2147483648
  %v3056 = vmul.f32 %v3055, 1.442695
  %v3057 = vpow.pop %v3056
  %v3058 = vadd.f32 %v3057, 1.0
  %v3059 = vrcp.pop %v3058
  %v3060 = vmul.f32 1.0, %v3059
  %v3061 = vtanh.pop %v3047
  %v3062 = vxor.u32 %v3048, 2147483648
  %v3063 = vmul.f32 %v3062, 1.442695
  %v3064 = vpow.pop %v3063
  %v3065 = vadd.f32 %v3064, 1.0
  %v3066 = vrcp.pop %v3065
  %v3067 = vmul.f32 1.0, %v3066
  %v3068 = vld [vmem:[#allocation5] sm:$0xff]
  %v3069 = vmul.f32 %v3060, %v3068
  %v3070 = vmul.f32 %v3054, %v3061
  %v3071 = vadd.f32 %v3069, %v3070
  %v3072 = vtanh.pop %v3071
  %v3073 = vmul.f32 %v3067, %v3072
  %3074 = vst [vmem:[#allocation5] sm:$0xff] %v3071
  %3075 = vst [vmem:[#allocation4] sm:$0xff] %v3073
  %3076 = vst [vmem:[%s1209] sm:$0xff] %v3073
  %v3077 = vld [vmem:[%s1213] sm:$0xff]
  %v3078 = vld [vmem:[%s1213 + $0x8] sm:$0xff]
  %v3079 = vld [vmem:[%s1213 + $0x10] sm:$0xff]
  %v3080 = vld [vmem:[%s1213 + $0x18] sm:$0xff]
  %v3081 = vld [vmem:[#allocation4] sm:$0xff]
  %3082 = vmatprep.subr.mxu0 %v2358
  %3083 = vmatpush1.msra.mxu0 %v2357
  %3084 = vmatprep.subr.mxu0 %v2354
  %3085 = vmatpush1.msra.mxu0 %v2353
  %3086 = vmatprep.subr.mxu0 %v2350
  %3087 = vmatpush1.msra.mxu0 %v2349
  %3088 = vmatprep.subr.mxu0 %v2346
  %3089 = vmatpush1.msra.mxu0 %v2345
  %3090 = vmatprep.subr.mxu0 %v2342
  %3091 = vmatpush1.msra.mxu0 %v2341
  %3092 = vmatprep.subr.mxu0 %v2338
  %3093 = vmatpush1.msra.mxu0 %v2337
  %3094 = vmatprep.subr.mxu0 %v2334
  %3095 = vmatpush1.msra.mxu0 %v2333
  %3096 = vmatprep.subr.mxu0 %v2330
  %3097 = vmatpush1.msra.mxu0 %v2329
  %3098 = vmatprep.subr.mxu0 %v2326
  %3099 = vmatpush1.msra.mxu0 %v2325
  %3100 = vmatprep.subr.mxu0 %v2322
  %3101 = vmatpush1.msra.mxu0 %v2321
  %3102 = vmatprep.subr.mxu0 %v2318
  %3103 = vmatpush1.msra.mxu0 %v2317
  %3104 = vmatprep.subr.mxu0 %v2314
  %3105 = vmatpush1.msra.mxu0 %v2313
  %3106 = vmatprep.subr.mxu0 %v2310
  %3107 = vmatpush1.msra.mxu0 %v2309
  %3108 = vmatprep.subr.mxu0 %v2306
  %3109 = vmatpush1.msra.mxu0 %v2305
  %3110 = vmatprep.subr.mxu0 %v2302
  %3111 = vmatpush1.msra.mxu0 %v2301
  %3112 = vmatprep.subr.mxu0 %v2298
  %3113 = vmatpush1.msra.mxu0 %v2297
  %3114 = vmatprep.subr.mxu0 0.0
  %3115 = vmatpush2.msra.mxu0 0.0
  %3116 = vmatprep.subr.mxu0 0.0
  %3117 = vmatpush2.msra.mxu0 0.0
  %3118 = vmatprep.subr.mxu0 0.0
  %3119 = vmatpush2.msra.mxu0 0.0
  %3120 = vmatprep.subr.mxu0 0.0
  %3121 = vmatpush2.msra.mxu0 0.0
  %3122 = vmatprep.subr.mxu0 0.0
  %3123 = vmatpush2.msra.mxu0 0.0
  %3124 = vmatprep.subr.mxu0 0.0
  %3125 = vmatpush2.msra.mxu0 0.0
  %3126 = vmatprep.subr.mxu0 0.0
  %3127 = vmatpush2.msra.mxu0 0.0
  %3128 = vmatprep.subr.mxu0 0.0
  %3129 = vmatpush2.msra.mxu0 0.0
  %3130 = vmatprep.subr.mxu0 0.0
  %3131 = vmatpush2.msra.mxu0 0.0
  %3132 = vmatprep.subr.mxu0 0.0
  %3133 = vmatpush2.msra.mxu0 0.0
  %3134 = vmatprep.subr.mxu0 0.0
  %3135 = vmatpush2.msra.mxu0 0.0
  %3136 = vmatprep.subr.mxu0 0.0
  %3137 = vmatpush2.msra.mxu0 0.0
  %3138 = vmatprep.subr.mxu0 0.0
  %3139 = vmatpush2.msra.mxu0 0.0
  %3140 = vmatprep.subr.mxu0 0.0
  %3141 = vmatpush2.msra.mxu0 0.0
  %3142 = vmatprep.subr.mxu0 0.0
  %3143 = vmatpush2.msra.mxu0 0.0
  %3144 = vmatprep.subr.mxu0 0.0
  %3145 = vmatpush2.msra.mxu0 0.0
  %3146 = vmatprep.mubr.f32.mxu0 0.0
  %3147 = vmatmul.mubr.f32.gmra.mxu0 %v3081
  %v3148 = vpop.f32.mrf.mxu0
  %v3149 = vadd.f32 0.0, %v3148
  %v3150 = vpop.f32.mrf.mxu0
  %v3151 = vadd.f32 0.0, %v3150
  %3152 = vdwg.mxu0
  %3153 = vmatprep.subr.mxu0 %v2360
  %3154 = vmatpush1.msra.mxu0 %v2359
  %3155 = vmatprep.subr.mxu0 %v2356
  %3156 = vmatpush1.msra.mxu0 %v2355
  %3157 = vmatprep.subr.mxu0 %v2352
  %3158 = vmatpush1.msra.mxu0 %v2351
  %3159 = vmatprep.subr.mxu0 %v2348
  %3160 = vmatpush1.msra.mxu0 %v2347
  %3161 = vmatprep.subr.mxu0 %v2344
  %3162 = vmatpush1.msra.mxu0 %v2343
  %3163 = vmatprep.subr.mxu0 %v2340
  %3164 = vmatpush1.msra.mxu0 %v2339
  %3165 = vmatprep.subr.mxu0 %v2336
  %3166 = vmatpush1.msra.mxu0 %v2335
  %3167 = vmatprep.subr.mxu0 %v2332
  %3168 = vmatpush1.msra.mxu0 %v2331
  %3169 = vmatprep.subr.mxu0 %v2328
  %3170 = vmatpush1.msra.mxu0 %v2327
  %3171 = vmatprep.subr.mxu0 %v2324
  %3172 = vmatpush1.msra.mxu0 %v2323
  %3173 = vmatprep.subr.mxu0 %v2320
  %3174 = vmatpush1.msra.mxu0 %v2319
  %3175 = vmatprep.subr.mxu0 %v2316
  %3176 = vmatpush1.msra.mxu0 %v2315
  %3177 = vmatprep.subr.mxu0 %v2312
  %3178 = vmatpush1.msra.mxu0 %v2311
  %3179 = vmatprep.subr.mxu0 %v2308
  %3180 = vmatpush1.msra.mxu0 %v2307
  %3181 = vmatprep.subr.mxu0 %v2304
  %3182 = vmatpush1.msra.mxu0 %v2303
  %3183 = vmatprep.subr.mxu0 %v2300
  %3184 = vmatpush1.msra.mxu0 %v2299
  %3185 = vmatprep.subr.mxu0 0.0
  %3186 = vmatpush2.msra.mxu0 0.0
  %3187 = vmatprep.subr.mxu0 0.0
  %3188 = vmatpush2.msra.mxu0 0.0
  %3189 = vmatprep.subr.mxu0 0.0
  %3190 = vmatpush2.msra.mxu0 0.0
  %3191 = vmatprep.subr.mxu0 0.0
  %3192 = vmatpush2.msra.mxu0 0.0
  %3193 = vmatprep.subr.mxu0 0.0
  %3194 = vmatpush2.msra.mxu0 0.0
  %3195 = vmatprep.subr.mxu0 0.0
  %3196 = vmatpush2.msra.mxu0 0.0
  %3197 = vmatprep.subr.mxu0 0.0
  %3198 = vmatpush2.msra.mxu0 0.0
  %3199 = vmatprep.subr.mxu0 0.0
  %3200 = vmatpush2.msra.mxu0 0.0
  %3201 = vmatprep.subr.mxu0 0.0
  %3202 = vmatpush2.msra.mxu0 0.0
  %3203 = vmatprep.subr.mxu0 0.0
  %3204 = vmatpush2.msra.mxu0 0.0
  %3205 = vmatprep.subr.mxu0 0.0
  %3206 = vmatpush2.msra.mxu0 0.0
  %3207 = vmatprep.subr.mxu0 0.0
  %3208 = vmatpush2.msra.mxu0 0.0
  %3209 = vmatprep.subr.mxu0 0.0
  %3210 = vmatpush2.msra.mxu0 0.0
  %3211 = vmatprep.subr.mxu0 0.0
  %3212 = vmatpush2.msra.mxu0 0.0
  %3213 = vmatprep.subr.mxu0 0.0
  %3214 = vmatpush2.msra.mxu0 0.0
  %3215 = vmatprep.subr.mxu0 0.0
  %3216 = vmatpush2.msra.mxu0 0.0
  %3217 = vmatprep.mubr.f32.mxu0 0.0
  %3218 = vmatmul.mubr.f32.gmra.mxu0 %v3081
  %v3219 = vpop.f32.mrf.mxu0
  %v3220 = vadd.f32 0.0, %v3219
  %v3221 = vpop.f32.mrf.mxu0
  %v3222 = vadd.f32 0.0, %v3221
  %3223 = vdwg.mxu0
  %v3224 = vadd.f32 %v3077, %v3149
  %v3225 = vadd.f32 %v3078, %v3151
  %v3226 = vadd.f32 %v3079, %v3220
  %v3227 = vadd.f32 %v3080, %v3222
  %v3228 = vxor.u32 %v3224, 2147483648
  %v3229 = vmul.f32 %v3228, 1.442695
  %v3230 = vpow.pop %v3229
  %v3231 = vadd.f32 %v3230, 1.0
  %v3232 = vrcp.pop %v3231
  %v3233 = vmul.f32 1.0, %v3232
  %v3234 = vxor.u32 %v3225, 2147483648
  %v3235 = vmul.f32 %v3234, 1.442695
  %v3236 = vpow.pop %v3235
  %v3237 = vadd.f32 %v3236, 1.0
  %v3238 = vrcp.pop %v3237
  %v3239 = vmul.f32 1.0, %v3238
  %v3240 = vtanh.pop %v3226
  %v3241 = vxor.u32 %v3227, 2147483648
  %v3242 = vmul.f32 %v3241, 1.442695
  %v3243 = vpow.pop %v3242
  %v3244 = vadd.f32 %v3243, 1.0
  %v3245 = vrcp.pop %v3244
  %v3246 = vmul.f32 1.0, %v3245
  %v3247 = vld [vmem:[#allocation5] sm:$0xff]
  %v3248 = vmul.f32 %v3239, %v3247
  %v3249 = vmul.f32 %v3233, %v3240
  %v3250 = vadd.f32 %v3248, %v3249
  %v3251 = vtanh.pop %v3250
  %v3252 = vmul.f32 %v3246, %v3251
  %3253 = vst [vmem:[#allocation5] sm:$0xff] %v3250
  %3254 = vst [vmem:[#allocation4] sm:$0xff] %v3252
  %3255 = vst [vmem:[%s1392] sm:$0xff] %v3252
  %v3256 = vld [vmem:[%s1396] sm:$0xff]
  %v3257 = vld [vmem:[%s1396 + $0x8] sm:$0xff]
  %v3258 = vld [vmem:[%s1396 + $0x10] sm:$0xff]
  %v3259 = vld [vmem:[%s1396 + $0x18] sm:$0xff]
  %v3260 = vld [vmem:[#allocation4] sm:$0xff]
  %3261 = vmatprep.subr.mxu0 %v2358
  %3262 = vmatpush1.msra.mxu0 %v2357
  %3263 = vmatprep.subr.mxu0 %v2354
  %3264 = vmatpush1.msra.mxu0 %v2353
  %3265 = vmatprep.subr.mxu0 %v2350
  %3266 = vmatpush1.msra.mxu0 %v2349
  %3267 = vmatprep.subr.mxu0 %v2346
  %3268 = vmatpush1.msra.mxu0 %v2345
  %3269 = vmatprep.subr.mxu0 %v2342
  %3270 = vmatpush1.msra.mxu0 %v2341
  %3271 = vmatprep.subr.mxu0 %v2338
  %3272 = vmatpush1.msra.mxu0 %v2337
  %3273 = vmatprep.subr.mxu0 %v2334
  %3274 = vmatpush1.msra.mxu0 %v2333
  %3275 = vmatprep.subr.mxu0 %v2330
  %3276 = vmatpush1.msra.mxu0 %v2329
  %3277 = vmatprep.subr.mxu0 %v2326
  %3278 = vmatpush1.msra.mxu0 %v2325
  %3279 = vmatprep.subr.mxu0 %v2322
  %3280 = vmatpush1.msra.mxu0 %v2321
  %3281 = vmatprep.subr.mxu0 %v2318
  %3282 = vmatpush1.msra.mxu0 %v2317
  %3283 = vmatprep.subr.mxu0 %v2314
  %3284 = vmatpush1.msra.mxu0 %v2313
  %3285 = vmatprep.subr.mxu0 %v2310
  %3286 = vmatpush1.msra.mxu0 %v2309
  %3287 = vmatprep.subr.mxu0 %v2306
  %3288 = vmatpush1.msra.mxu0 %v2305
  %3289 = vmatprep.subr.mxu0 %v2302
  %3290 = vmatpush1.msra.mxu0 %v2301
  %3291 = vmatprep.subr.mxu0 %v2298
  %3292 = vmatpush1.msra.mxu0 %v2297
  %3293 = vmatprep.subr.mxu0 0.0
  %3294 = vmatpush2.msra.mxu0 0.0
  %3295 = vmatprep.subr.mxu0 0.0
  %3296 = vmatpush2.msra.mxu0 0.0
  %3297 = vmatprep.subr.mxu0 0.0
  %3298 = vmatpush2.msra.mxu0 0.0
  %3299 = vmatprep.subr.mxu0 0.0
  %3300 = vmatpush2.msra.mxu0 0.0
  %3301 = vmatprep.subr.mxu0 0.0
  %3302 = vmatpush2.msra.mxu0 0.0
  %3303 = vmatprep.subr.mxu0 0.0
  %3304 = vmatpush2.msra.mxu0 0.0
  %3305 = vmatprep.subr.mxu0 0.0
  %3306 = vmatpush2.msra.mxu0 0.0
  %3307 = vmatprep.subr.mxu0 0.0
  %3308 = vmatpush2.msra.mxu0 0.0
  %3309 = vmatprep.subr.mxu0 0.0
  %3310 = vmatpush2.msra.mxu0 0.0
  %3311 = vmatprep.subr.mxu0 0.0
  %3312 = vmatpush2.msra.mxu0 0.0
  %3313 = vmatprep.subr.mxu0 0.0
  %3314 = vmatpush2.msra.mxu0 0.0
  %3315 = vmatprep.subr.mxu0 0.0
  %3316 = vmatpush2.msra.mxu0 0.0
  %3317 = vmatprep.subr.mxu0 0.0
  %3318 = vmatpush2.msra.mxu0 0.0
  %3319 = vmatprep.subr.mxu0 0.0
  %3320 = vmatpush2.msra.mxu0 0.0
  %3321 = vmatprep.subr.mxu0 0.0
  %3322 = vmatpush2.msra.mxu0 0.0
  %3323 = vmatprep.subr.mxu0 0.0
  %3324 = vmatpush2.msra.mxu0 0.0
  %3325 = vmatprep.mubr.f32.mxu0 0.0
  %3326 = vmatmul.mubr.f32.gmra.mxu0 %v3260
  %v3327 = vpop.f32.mrf.mxu0
  %v3328 = vadd.f32 0.0, %v3327
  %v3329 = vpop.f32.mrf.mxu0
  %v3330 = vadd.f32 0.0, %v3329
  %3331 = vdwg.mxu0
  %3332 = vmatprep.subr.mxu0 %v2360
  %3333 = vmatpush1.msra.mxu0 %v2359
  %3334 = vmatprep.subr.mxu0 %v2356
  %3335 = vmatpush1.msra.mxu0 %v2355
  %3336 = vmatprep.subr.mxu0 %v2352
  %3337 = vmatpush1.msra.mxu0 %v2351
  %3338 = vmatprep.subr.mxu0 %v2348
  %3339 = vmatpush1.msra.mxu0 %v2347
  %3340 = vmatprep.subr.mxu0 %v2344
  %3341 = vmatpush1.msra.mxu0 %v2343
  %3342 = vmatprep.subr.mxu0 %v2340
  %3343 = vmatpush1.msra.mxu0 %v2339
  %3344 = vmatprep.subr.mxu0 %v2336
  %3345 = vmatpush1.msra.mxu0 %v2335
  %3346 = vmatprep.subr.mxu0 %v2332
  %3347 = vmatpush1.msra.mxu0 %v2331
  %3348 = vmatprep.subr.mxu0 %v2328
  %3349 = vmatpush1.msra.mxu0 %v2327
  %3350 = vmatprep.subr.mxu0 %v2324
  %3351 = vmatpush1.msra.mxu0 %v2323
  %3352 = vmatprep.subr.mxu0 %v2320
  %3353 = vmatpush1.msra.mxu0 %v2319
  %3354 = vmatprep.subr.mxu0 %v2316
  %3355 = vmatpush1.msra.mxu0 %v2315
  %3356 = vmatprep.subr.mxu0 %v2312
  %3357 = vmatpush1.msra.mxu0 %v2311
  %3358 = vmatprep.subr.mxu0 %v2308
  %3359 = vmatpush1.msra.mxu0 %v2307
  %3360 = vmatprep.subr.mxu0 %v2304
  %3361 = vmatpush1.msra.mxu0 %v2303
  %3362 = vmatprep.subr.mxu0 %v2300
  %3363 = vmatpush1.msra.mxu0 %v2299
  %3364 = vmatprep.subr.mxu0 0.0
  %3365 = vmatpush2.msra.mxu0 0.0
  %3366 = vmatprep.subr.mxu0 0.0
  %3367 = vmatpush2.msra.mxu0 0.0
  %3368 = vmatprep.subr.mxu0 0.0
  %3369 = vmatpush2.msra.mxu0 0.0
  %3370 = vmatprep.subr.mxu0 0.0
  %3371 = vmatpush2.msra.mxu0 0.0
  %3372 = vmatprep.subr.mxu0 0.0
  %3373 = vmatpush2.msra.mxu0 0.0
  %3374 = vmatprep.subr.mxu0 0.0
  %3375 = vmatpush2.msra.mxu0 0.0
  %3376 = vmatprep.subr.mxu0 0.0
  %3377 = vmatpush2.msra.mxu0 0.0
  %3378 = vmatprep.subr.mxu0 0.0
  %3379 = vmatpush2.msra.mxu0 0.0
  %3380 = vmatprep.subr.mxu0 0.0
  %3381 = vmatpush2.msra.mxu0 0.0
  %3382 = vmatprep.subr.mxu0 0.0
  %3383 = vmatpush2.msra.mxu0 0.0
  %3384 = vmatprep.subr.mxu0 0.0
  %3385 = vmatpush2.msra.mxu0 0.0
  %3386 = vmatprep.subr.mxu0 0.0
  %3387 = vmatpush2.msra.mxu0 0.0
  %3388 = vmatprep.subr.mxu0 0.0
  %3389 = vmatpush2.msra.mxu0 0.0
  %3390 = vmatprep.subr.mxu0 0.0
  %3391 = vmatpush2.msra.mxu0 0.0
  %3392 = vmatprep.subr.mxu0 0.0
  %3393 = vmatpush2.msra.mxu0 0.0
  %3394 = vmatprep.subr.mxu0 0.0
  %3395 = vmatpush2.msra.mxu0 0.0
  %3396 = vmatprep.mubr.f32.mxu0 0.0
  %3397 = vmatmul.mubr.f32.gmra.mxu0 %v3260
  %v3398 = vpop.f32.mrf.mxu0
  %v3399 = vadd.f32 0.0, %v3398
  %v3400 = vpop.f32.mrf.mxu0
  %v3401 = vadd.f32 0.0, %v3400
  %3402 = vdwg.mxu0
  %v3403 = vadd.f32 %v3256, %v3328
  %v3404 = vadd.f32 %v3257, %v3330
  %v3405 = vadd.f32 %v3258, %v3399
  %v3406 = vadd.f32 %v3259, %v3401
  %v3407 = vxor.u32 %v3403, 2147483648
  %v3408 = vmul.f32 %v3407, 1.442695
  %v3409 = vpow.pop %v3408
  %v3410 = vadd.f32 %v3409, 1.0
  %v3411 = vrcp.pop %v3410
  %v3412 = vmul.f32 1.0, %v3411
  %v3413 = vxor.u32 %v3404, 2147483648
  %v3414 = vmul.f32 %v3413, 1.442695
  %v3415 = vpow.pop %v3414
  %v3416 = vadd.f32 %v3415, 1.0
  %v3417 = vrcp.pop %v3416
  %v3418 = vmul.f32 1.0, %v3417
  %v3419 = vtanh.pop %v3405
  %v3420 = vxor.u32 %v3406, 2147483648
  %v3421 = vmul.f32 %v3420, 1.442695
  %v3422 = vpow.pop %v3421
  %v3423 = vadd.f32 %v3422, 1.0
  %v3424 = vrcp.pop %v3423
  %v3425 = vmul.f32 1.0, %v3424
  %v3426 = vld [vmem:[#allocation5] sm:$0xff]
  %v3427 = vmul.f32 %v3418, %v3426
  %v3428 = vmul.f32 %v3412, %v3419
  %v3429 = vadd.f32 %v3427, %v3428
  %v3430 = vtanh.pop %v3429
  %v3431 = vmul.f32 %v3425, %v3430
  %3432 = vst [vmem:[#allocation5] sm:$0xff] %v3429
  %3433 = vst [vmem:[#allocation4] sm:$0xff] %v3431
  %3434 = vst [vmem:[%s1575] sm:$0xff] %v3431
  %v3435 = vld [vmem:[%s1579] sm:$0xff]
  %v3436 = vld [vmem:[%s1579 + $0x8] sm:$0xff]
  %v3437 = vld [vmem:[%s1579 + $0x10] sm:$0xff]
  %v3438 = vld [vmem:[%s1579 + $0x18] sm:$0xff]
  %v3439 = vld [vmem:[#allocation4] sm:$0xff]
  %3440 = vmatprep.subr.mxu0 %v2358
  %3441 = vmatpush1.msra.mxu0 %v2357
  %3442 = vmatprep.subr.mxu0 %v2354
  %3443 = vmatpush1.msra.mxu0 %v2353
  %3444 = vmatprep.subr.mxu0 %v2350
  %3445 = vmatpush1.msra.mxu0 %v2349
  %3446 = vmatprep.subr.mxu0 %v2346
  %3447 = vmatpush1.msra.mxu0 %v2345
  %3448 = vmatprep.subr.mxu0 %v2342
  %3449 = vmatpush1.msra.mxu0 %v2341
  %3450 = vmatprep.subr.mxu0 %v2338
  %3451 = vmatpush1.msra.mxu0 %v2337
  %3452 = vmatprep.subr.mxu0 %v2334
  %3453 = vmatpush1.msra.mxu0 %v2333
  %3454 = vmatprep.subr.mxu0 %v2330
  %3455 = vmatpush1.msra.mxu0 %v2329
  %3456 = vmatprep.subr.mxu0 %v2326
  %3457 = vmatpush1.msra.mxu0 %v2325
  %3458 = vmatprep.subr.mxu0 %v2322
  %3459 = vmatpush1.msra.mxu0 %v2321
  %3460 = vmatprep.subr.mxu0 %v2318
  %3461 = vmatpush1.msra.mxu0 %v2317
  %3462 = vmatprep.subr.mxu0 %v2314
  %3463 = vmatpush1.msra.mxu0 %v2313
  %3464 = vmatprep.subr.mxu0 %v2310
  %3465 = vmatpush1.msra.mxu0 %v2309
  %3466 = vmatprep.subr.mxu0 %v2306
  %3467 = vmatpush1.msra.mxu0 %v2305
  %3468 = vmatprep.subr.mxu0 %v2302
  %3469 = vmatpush1.msra.mxu0 %v2301
  %3470 = vmatprep.subr.mxu0 %v2298
  %3471 = vmatpush1.msra.mxu0 %v2297
  %3472 = vmatprep.subr.mxu0 0.0
  %3473 = vmatpush2.msra.mxu0 0.0
  %3474 = vmatprep.subr.mxu0 0.0
  %3475 = vmatpush2.msra.mxu0 0.0
  %3476 = vmatprep.subr.mxu0 0.0
  %3477 = vmatpush2.msra.mxu0 0.0
  %3478 = vmatprep.subr.mxu0 0.0
  %3479 = vmatpush2.msra.mxu0 0.0
  %3480 = vmatprep.subr.mxu0 0.0
  %3481 = vmatpush2.msra.mxu0 0.0
  %3482 = vmatprep.subr.mxu0 0.0
  %3483 = vmatpush2.msra.mxu0 0.0
  %3484 = vmatprep.subr.mxu0 0.0
  %3485 = vmatpush2.msra.mxu0 0.0
  %3486 = vmatprep.subr.mxu0 0.0
  %3487 = vmatpush2.msra.mxu0 0.0
  %3488 = vmatprep.subr.mxu0 0.0
  %3489 = vmatpush2.msra.mxu0 0.0
  %3490 = vmatprep.subr.mxu0 0.0
  %3491 = vmatpush2.msra.mxu0 0.0
  %3492 = vmatprep.subr.mxu0 0.0
  %3493 = vmatpush2.msra.mxu0 0.0
  %3494 = vmatprep.subr.mxu0 0.0
  %3495 = vmatpush2.msra.mxu0 0.0
  %3496 = vmatprep.subr.mxu0 0.0
  %3497 = vmatpush2.msra.mxu0 0.0
  %3498 = vmatprep.subr.mxu0 0.0
  %3499 = vmatpush2.msra.mxu0 0.0
  %3500 = vmatprep.subr.mxu0 0.0
  %3501 = vmatpush2.msra.mxu0 0.0
  %3502 = vmatprep.subr.mxu0 0.0
  %3503 = vmatpush2.msra.mxu0 0.0
  %3504 = vmatprep.mubr.f32.mxu0 0.0
  %3505 = vmatmul.mubr.f32.gmra.mxu0 %v3439
  %v3506 = vpop.f32.mrf.mxu0
  %v3507 = vadd.f32 0.0, %v3506
  %v3508 = vpop.f32.mrf.mxu0
  %v3509 = vadd.f32 0.0, %v3508
  %3510 = vdwg.mxu0
  %3511 = vmatprep.subr.mxu0 %v2360
  %3512 = vmatpush1.msra.mxu0 %v2359
  %3513 = vmatprep.subr.mxu0 %v2356
  %3514 = vmatpush1.msra.mxu0 %v2355
  %3515 = vmatprep.subr.mxu0 %v2352
  %3516 = vmatpush1.msra.mxu0 %v2351
  %3517 = vmatprep.subr.mxu0 %v2348
  %3518 = vmatpush1.msra.mxu0 %v2347
  %3519 = vmatprep.subr.mxu0 %v2344
  %3520 = vmatpush1.msra.mxu0 %v2343
  %3521 = vmatprep.subr.mxu0 %v2340
  %3522 = vmatpush1.msra.mxu0 %v2339
  %3523 = vmatprep.subr.mxu0 %v2336
  %3524 = vmatpush1.msra.mxu0 %v2335
  %3525 = vmatprep.subr.mxu0 %v2332
  %3526 = vmatpush1.msra.mxu0 %v2331
  %3527 = vmatprep.subr.mxu0 %v2328
  %3528 = vmatpush1.msra.mxu0 %v2327
  %3529 = vmatprep.subr.mxu0 %v2324
  %3530 = vmatpush1.msra.mxu0 %v2323
  %3531 = vmatprep.subr.mxu0 %v2320
  %3532 = vmatpush1.msra.mxu0 %v2319
  %3533 = vmatprep.subr.mxu0 %v2316
  %3534 = vmatpush1.msra.mxu0 %v2315
  %3535 = vmatprep.subr.mxu0 %v2312
  %3536 = vmatpush1.msra.mxu0 %v2311
  %3537 = vmatprep.subr.mxu0 %v2308
  %3538 = vmatpush1.msra.mxu0 %v2307
  %3539 = vmatprep.subr.mxu0 %v2304
  %3540 = vmatpush1.msra.mxu0 %v2303
  %3541 = vmatprep.subr.mxu0 %v2300
  %3542 = vmatpush1.msra.mxu0 %v2299
  %3543 = vmatprep.subr.mxu0 0.0
  %3544 = vmatpush2.msra.mxu0 0.0
  %3545 = vmatprep.subr.mxu0 0.0
  %3546 = vmatpush2.msra.mxu0 0.0
  %3547 = vmatprep.subr.mxu0 0.0
  %3548 = vmatpush2.msra.mxu0 0.0
  %3549 = vmatprep.subr.mxu0 0.0
  %3550 = vmatpush2.msra.mxu0 0.0
  %3551 = vmatprep.subr.mxu0 0.0
  %3552 = vmatpush2.msra.mxu0 0.0
  %3553 = vmatprep.subr.mxu0 0.0
  %3554 = vmatpush2.msra.mxu0 0.0
  %3555 = vmatprep.subr.mxu0 0.0
  %3556 = vmatpush2.msra.mxu0 0.0
  %3557 = vmatprep.subr.mxu0 0.0
  %3558 = vmatpush2.msra.mxu0 0.0
  %3559 = vmatprep.subr.mxu0 0.0
  %3560 = vmatpush2.msra.mxu0 0.0
  %3561 = vmatprep.subr.mxu0 0.0
  %3562 = vmatpush2.msra.mxu0 0.0
  %3563 = vmatprep.subr.mxu0 0.0
  %3564 = vmatpush2.msra.mxu0 0.0
  %3565 = vmatprep.subr.mxu0 0.0
  %3566 = vmatpush2.msra.mxu0 0.0
  %3567 = vmatprep.subr.mxu0 0.0
  %3568 = vmatpush2.msra.mxu0 0.0
  %3569 = vmatprep.subr.mxu0 0.0
  %3570 = vmatpush2.msra.mxu0 0.0
  %3571 = vmatprep.subr.mxu0 0.0
  %3572 = vmatpush2.msra.mxu0 0.0
  %3573 = vmatprep.subr.mxu0 0.0
  %3574 = vmatpush2.msra.mxu0 0.0
  %3575 = vmatprep.mubr.f32.mxu0 0.0
  %3576 = vmatmul.mubr.f32.gmra.mxu0 %v3439
  %v3577 = vpop.f32.mrf.mxu0
  %v3578 = vadd.f32 0.0, %v3577
  %v3579 = vpop.f32.mrf.mxu0
  %v3580 = vadd.f32 0.0, %v3579
  %3581 = vdwg.mxu0
  %v3582 = vadd.f32 %v3435, %v3507
  %v3583 = vadd.f32 %v3436, %v3509
  %v3584 = vadd.f32 %v3437, %v3578
  %v3585 = vadd.f32 %v3438, %v3580
  %v3586 = vxor.u32 %v3582, 2147483648
  %v3587 = vmul.f32 %v3586, 1.442695
  %v3588 = vpow.pop %v3587
  %v3589 = vadd.f32 %v3588, 1.0
  %v3590 = vrcp.pop %v3589
  %v3591 = vmul.f32 1.0, %v3590
  %v3592 = vxor.u32 %v3583, 2147483648
  %v3593 = vmul.f32 %v3592, 1.442695
  %v3594 = vpow.pop %v3593
  %v3595 = vadd.f32 %v3594, 1.0
  %v3596 = vrcp.pop %v3595
  %v3597 = vmul.f32 1.0, %v3596
  %v3598 = vtanh.pop %v3584
  %v3599 = vxor.u32 %v3585, 2147483648
  %v3600 = vmul.f32 %v3599, 1.442695
  %v3601 = vpow.pop %v3600
  %v3602 = vadd.f32 %v3601, 1.0
  %v3603 = vrcp.pop %v3602
  %v3604 = vmul.f32 1.0, %v3603
  %v3605 = vld [vmem:[#allocation5] sm:$0xff]
  %v3606 = vmul.f32 %v3597, %v3605
  %v3607 = vmul.f32 %v3591, %v3598
  %v3608 = vadd.f32 %v3606, %v3607
  %v3609 = vtanh.pop %v3608
  %v3610 = vmul.f32 %v3604, %v3609
  %3611 = vst [vmem:[#allocation5] sm:$0xff] %v3608
  %3612 = vst [vmem:[#allocation4] sm:$0xff] %v3610
  %3613 = vst [vmem:[%s1758] sm:$0xff] %v3610
  %v3614 = vld [vmem:[%s1762] sm:$0xff]
  %v3615 = vld [vmem:[%s1762 + $0x8] sm:$0xff]
  %v3616 = vld [vmem:[%s1762 + $0x10] sm:$0xff]
  %v3617 = vld [vmem:[%s1762 + $0x18] sm:$0xff]
  %v3618 = vld [vmem:[#allocation4] sm:$0xff]
  %3619 = vmatprep.subr.mxu0 %v2358
  %3620 = vmatpush1.msra.mxu0 %v2357
  %3621 = vmatprep.subr.mxu0 %v2354
  %3622 = vmatpush1.msra.mxu0 %v2353
  %3623 = vmatprep.subr.mxu0 %v2350
  %3624 = vmatpush1.msra.mxu0 %v2349
  %3625 = vmatprep.subr.mxu0 %v2346
  %3626 = vmatpush1.msra.mxu0 %v2345
  %3627 = vmatprep.subr.mxu0 %v2342
  %3628 = vmatpush1.msra.mxu0 %v2341
  %3629 = vmatprep.subr.mxu0 %v2338
  %3630 = vmatpush1.msra.mxu0 %v2337
  %3631 = vmatprep.subr.mxu0 %v2334
  %3632 = vmatpush1.msra.mxu0 %v2333
  %3633 = vmatprep.subr.mxu0 %v2330
  %3634 = vmatpush1.msra.mxu0 %v2329
  %3635 = vmatprep.subr.mxu0 %v2326
  %3636 = vmatpush1.msra.mxu0 %v2325
  %3637 = vmatprep.subr.mxu0 %v2322
  %3638 = vmatpush1.msra.mxu0 %v2321
  %3639 = vmatprep.subr.mxu0 %v2318
  %3640 = vmatpush1.msra.mxu0 %v2317
  %3641 = vmatprep.subr.mxu0 %v2314
  %3642 = vmatpush1.msra.mxu0 %v2313
  %3643 = vmatprep.subr.mxu0 %v2310
  %3644 = vmatpush1.msra.mxu0 %v2309
  %3645 = vmatprep.subr.mxu0 %v2306
  %3646 = vmatpush1.msra.mxu0 %v2305
  %3647 = vmatprep.subr.mxu0 %v2302
  %3648 = vmatpush1.msra.mxu0 %v2301
  %3649 = vmatprep.subr.mxu0 %v2298
  %3650 = vmatpush1.msra.mxu0 %v2297
  %3651 = vmatprep.subr.mxu0 0.0
  %3652 = vmatpush2.msra.mxu0 0.0
  %3653 = vmatprep.subr.mxu0 0.0
  %3654 = vmatpush2.msra.mxu0 0.0
  %3655 = vmatprep.subr.mxu0 0.0
  %3656 = vmatpush2.msra.mxu0 0.0
  %3657 = vmatprep.subr.mxu0 0.0
  %3658 = vmatpush2.msra.mxu0 0.0
  %3659 = vmatprep.subr.mxu0 0.0
  %3660 = vmatpush2.msra.mxu0 0.0
  %3661 = vmatprep.subr.mxu0 0.0
  %3662 = vmatpush2.msra.mxu0 0.0
  %3663 = vmatprep.subr.mxu0 0.0
  %3664 = vmatpush2.msra.mxu0 0.0
  %3665 = vmatprep.subr.mxu0 0.0
  %3666 = vmatpush2.msra.mxu0 0.0
  %3667 = vmatprep.subr.mxu0 0.0
  %3668 = vmatpush2.msra.mxu0 0.0
  %3669 = vmatprep.subr.mxu0 0.0
  %3670 = vmatpush2.msra.mxu0 0.0
  %3671 = vmatprep.subr.mxu0 0.0
  %3672 = vmatpush2.msra.mxu0 0.0
  %3673 = vmatprep.subr.mxu0 0.0
  %3674 = vmatpush2.msra.mxu0 0.0
  %3675 = vmatprep.subr.mxu0 0.0
  %3676 = vmatpush2.msra.mxu0 0.0
  %3677 = vmatprep.subr.mxu0 0.0
  %3678 = vmatpush2.msra.mxu0 0.0
  %3679 = vmatprep.subr.mxu0 0.0
  %3680 = vmatpush2.msra.mxu0 0.0
  %3681 = vmatprep.subr.mxu0 0.0
  %3682 = vmatpush2.msra.mxu0 0.0
  %3683 = vmatprep.mubr.f32.mxu0 0.0
  %3684 = vmatmul.mubr.f32.gmra.mxu0 %v3618
  %v3685 = vpop.f32.mrf.mxu0
  %v3686 = vadd.f32 0.0, %v3685
  %v3687 = vpop.f32.mrf.mxu0
  %v3688 = vadd.f32 0.0, %v3687
  %3689 = vdwg.mxu0
  %3690 = vmatprep.subr.mxu0 %v2360
  %3691 = vmatpush1.msra.mxu0 %v2359
  %3692 = vmatprep.subr.mxu0 %v2356
  %3693 = vmatpush1.msra.mxu0 %v2355
  %3694 = vmatprep.subr.mxu0 %v2352
  %3695 = vmatpush1.msra.mxu0 %v2351
  %3696 = vmatprep.subr.mxu0 %v2348
  %3697 = vmatpush1.msra.mxu0 %v2347
  %3698 = vmatprep.subr.mxu0 %v2344
  %3699 = vmatpush1.msra.mxu0 %v2343
  %3700 = vmatprep.subr.mxu0 %v2340
  %3701 = vmatpush1.msra.mxu0 %v2339
  %3702 = vmatprep.subr.mxu0 %v2336
  %3703 = vmatpush1.msra.mxu0 %v2335
  %3704 = vmatprep.subr.mxu0 %v2332
  %3705 = vmatpush1.msra.mxu0 %v2331
  %3706 = vmatprep.subr.mxu0 %v2328
  %3707 = vmatpush1.msra.mxu0 %v2327
  %3708 = vmatprep.subr.mxu0 %v2324
  %3709 = vmatpush1.msra.mxu0 %v2323
  %3710 = vmatprep.subr.mxu0 %v2320
  %3711 = vmatpush1.msra.mxu0 %v2319
  %3712 = vmatprep.subr.mxu0 %v2316
  %3713 = vmatpush1.msra.mxu0 %v2315
  %3714 = vmatprep.subr.mxu0 %v2312
  %3715 = vmatpush1.msra.mxu0 %v2311
  %3716 = vmatprep.subr.mxu0 %v2308
  %3717 = vmatpush1.msra.mxu0 %v2307
  %3718 = vmatprep.subr.mxu0 %v2304
  %3719 = vmatpush1.msra.mxu0 %v2303
  %3720 = vmatprep.subr.mxu0 %v2300
  %3721 = vmatpush1.msra.mxu0 %v2299
  %3722 = vmatprep.subr.mxu0 0.0
  %3723 = vmatpush2.msra.mxu0 0.0
  %3724 = vmatprep.subr.mxu0 0.0
  %3725 = vmatpush2.msra.mxu0 0.0
  %3726 = vmatprep.subr.mxu0 0.0
  %3727 = vmatpush2.msra.mxu0 0.0
  %3728 = vmatprep.subr.mxu0 0.0
  %3729 = vmatpush2.msra.mxu0 0.0
  %3730 = vmatprep.subr.mxu0 0.0
  %3731 = vmatpush2.msra.mxu0 0.0
  %3732 = vmatprep.subr.mxu0 0.0
  %3733 = vmatpush2.msra.mxu0 0.0
  %3734 = vmatprep.subr.mxu0 0.0
  %3735 = vmatpush2.msra.mxu0 0.0
  %3736 = vmatprep.subr.mxu0 0.0
  %3737 = vmatpush2.msra.mxu0 0.0
  %3738 = vmatprep.subr.mxu0 0.0
  %3739 = vmatpush2.msra.mxu0 0.0
  %3740 = vmatprep.subr.mxu0 0.0
  %3741 = vmatpush2.msra.mxu0 0.0
  %3742 = vmatprep.subr.mxu0 0.0
  %3743 = vmatpush2.msra.mxu0 0.0
  %3744 = vmatprep.subr.mxu0 0.0
  %3745 = vmatpush2.msra.mxu0 0.0
  %3746 = vmatprep.subr.mxu0 0.0
  %3747 = vmatpush2.msra.mxu0 0.0
  %3748 = vmatprep.subr.mxu0 0.0
  %3749 = vmatpush2.msra.mxu0 0.0
  %3750 = vmatprep.subr.mxu0 0.0
  %3751 = vmatpush2.msra.mxu0 0.0
  %3752 = vmatprep.subr.mxu0 0.0
  %3753 = vmatpush2.msra.mxu0 0.0
  %3754 = vmatprep.mubr.f32.mxu0 0.0
  %3755 = vmatmul.mubr.f32.gmra.mxu0 %v3618
  %v3756 = vpop.f32.mrf.mxu0
  %v3757 = vadd.f32 0.0, %v3756
  %v3758 = vpop.f32.mrf.mxu0
  %v3759 = vadd.f32 0.0, %v3758
  %3760 = vdwg.mxu0
  %v3761 = vadd.f32 %v3614, %v3686
  %v3762 = vadd.f32 %v3615, %v3688
  %v3763 = vadd.f32 %v3616, %v3757
  %v3764 = vadd.f32 %v3617, %v3759
  %v3765 = vxor.u32 %v3761, 2147483648
  %v3766 = vmul.f32 %v3765, 1.442695
  %v3767 = vpow.pop %v3766
  %v3768 = vadd.f32 %v3767, 1.0
  %v3769 = vrcp.pop %v3768
  %v3770 = vmul.f32 1.0, %v3769
  %v3771 = vxor.u32 %v3762, 2147483648
  %v3772 = vmul.f32 %v3771, 1.442695
  %v3773 = vpow.pop %v3772
  %v3774 = vadd.f32 %v3773, 1.0
  %v3775 = vrcp.pop %v3774
  %v3776 = vmul.f32 1.0, %v3775
  %v3777 = vtanh.pop %v3763
  %v3778 = vxor.u32 %v3764, 2147483648
  %v3779 = vmul.f32 %v3778, 1.442695
  %v3780 = vpow.pop %v3779
  %v3781 = vadd.f32 %v3780, 1.0
  %v3782 = vrcp.pop %v3781
  %v3783 = vmul.f32 1.0, %v3782
  %v3784 = vld [vmem:[#allocation5] sm:$0xff]
  %v3785 = vmul.f32 %v3776, %v3784
  %v3786 = vmul.f32 %v3770, %v3777
  %v3787 = vadd.f32 %v3785, %v3786
  %v3788 = vtanh.pop %v3787
  %v3789 = vmul.f32 %v3783, %v3788
  %3790 = vst [vmem:[#allocation5] sm:$0xff] %v3787
  %3791 = vst [vmem:[#allocation4] sm:$0xff] %v3789
  %3792 = vst [vmem:[%s1941] sm:$0xff] %v3789
  %v3793 = vld [vmem:[#allocation4] sm:$0xff]
  %v3794 = vld [vmem:[#allocation3] sm:$0xff]
  %v3795 = vld [vmem:[#allocation3 + $0x8] sm:$0xff]
  %v3796 = vld [vmem:[#allocation3 + $0x10] sm:$0xff]
  %v3797 = vld [vmem:[#allocation3 + $0x18] sm:$0xff]
  %v3798 = vld [vmem:[#allocation3 + $0x20] sm:$0xff]
  %v3799 = vld [vmem:[#allocation3 + $0x28] sm:$0xff]
  %v3800 = vld [vmem:[#allocation3 + $0x30] sm:$0xff]
  %v3801 = vld [vmem:[#allocation3 + $0x38] sm:$0xff]
  %v3802 = vld [vmem:[%s7] sm:$0xff]
  %v3803 = vld [vmem:[%s7 + $0x8] sm:$0xff]
  %v3804 = vld [vmem:[%s7 + $0x10] sm:$0xff]
  %v3805 = vld [vmem:[%s7 + $0x18] sm:$0xff]
  %v3806 = vld [vmem:[%s7 + $0x20] sm:$0xff]
  %v3807 = vld [vmem:[%s7 + $0x28] sm:$0xff]
  %v3808 = vld [vmem:[%s7 + $0x30] sm:$0xff]
  %v3809 = vld [vmem:[%s7 + $0x38] sm:$0xff]
  %v3810 = vld [vmem:[%s7 + $0x40] sm:$0xff]
  %v3811 = vld [vmem:[%s7 + $0x48] sm:$0xff]
  %v3812 = vld [vmem:[%s7 + $0x50] sm:$0xff]
  %v3813 = vld [vmem:[%s7 + $0x58] sm:$0xff]
  %v3814 = vld [vmem:[%s7 + $0x60] sm:$0xff]
  %v3815 = vld [vmem:[%s7 + $0x68] sm:$0xff]
  %v3816 = vld [vmem:[%s7 + $0x70] sm:$0xff]
  %v3817 = vld [vmem:[%s7 + $0x78] sm:$0xff]
  %v3818 = vld [vmem:[%s7 + $0x80] sm:$0xff]
  %v3819 = vld [vmem:[%s7 + $0x88] sm:$0xff]
  %v3820 = vld [vmem:[%s7 + $0x90] sm:$0xff]
  %v3821 = vld [vmem:[%s7 + $0x98] sm:$0xff]
  %v3822 = vld [vmem:[%s7 + $0xa0] sm:$0xff]
  %v3823 = vld [vmem:[%s7 + $0xa8] sm:$0xff]
  %v3824 = vld [vmem:[%s7 + $0xb0] sm:$0xff]
  %v3825 = vld [vmem:[%s7 + $0xb8] sm:$0xff]
  %v3826 = vld [vmem:[%s7 + $0xc0] sm:$0xff]
  %v3827 = vld [vmem:[%s7 + $0xc8] sm:$0xff]
  %v3828 = vld [vmem:[%s7 + $0xd0] sm:$0xff]
  %v3829 = vld [vmem:[%s7 + $0xd8] sm:$0xff]
  %v3830 = vld [vmem:[%s7 + $0xe0] sm:$0xff]
  %v3831 = vld [vmem:[%s7 + $0xe8] sm:$0xff]
  %v3832 = vld [vmem:[%s7 + $0xf0] sm:$0xff]
  %v3833 = vld [vmem:[%s7 + $0xf8] sm:$0xff]
  %v3834 = vld [vmem:[%s7 + $0x100] sm:$0xff]
  %v3835 = vld [vmem:[%s7 + $0x108] sm:$0xff]
  %v3836 = vld [vmem:[%s7 + $0x110] sm:$0xff]
  %v3837 = vld [vmem:[%s7 + $0x118] sm:$0xff]
  %v3838 = vld [vmem:[%s7 + $0x120] sm:$0xff]
  %v3839 = vld [vmem:[%s7 + $0x128] sm:$0xff]
  %v3840 = vld [vmem:[%s7 + $0x130] sm:$0xff]
  %v3841 = vld [vmem:[%s7 + $0x138] sm:$0xff]
  %v3842 = vld [vmem:[%s7 + $0x140] sm:$0xff]
  %v3843 = vld [vmem:[%s7 + $0x148] sm:$0xff]
  %v3844 = vld [vmem:[%s7 + $0x150] sm:$0xff]
  %v3845 = vld [vmem:[%s7 + $0x158] sm:$0xff]
  %v3846 = vld [vmem:[%s7 + $0x160] sm:$0xff]
  %v3847 = vld [vmem:[%s7 + $0x168] sm:$0xff]
  %v3848 = vld [vmem:[%s7 + $0x170] sm:$0xff]
  %v3849 = vld [vmem:[%s7 + $0x178] sm:$0xff]
  %v3850 = vld [vmem:[%s7 + $0x180] sm:$0xff]
  %v3851 = vld [vmem:[%s7 + $0x188] sm:$0xff]
  %v3852 = vld [vmem:[%s7 + $0x190] sm:$0xff]
  %v3853 = vld [vmem:[%s7 + $0x198] sm:$0xff]
  %v3854 = vld [vmem:[%s7 + $0x1a0] sm:$0xff]
  %v3855 = vld [vmem:[%s7 + $0x1a8] sm:$0xff]
  %v3856 = vld [vmem:[%s7 + $0x1b0] sm:$0xff]
  %v3857 = vld [vmem:[%s7 + $0x1b8] sm:$0xff]
  %v3858 = vld [vmem:[%s7 + $0x1c0] sm:$0xff]
  %v3859 = vld [vmem:[%s7 + $0x1c8] sm:$0xff]
  %v3860 = vld [vmem:[%s7 + $0x1d0] sm:$0xff]
  %v3861 = vld [vmem:[%s7 + $0x1d8] sm:$0xff]
  %v3862 = vld [vmem:[%s7 + $0x1e0] sm:$0xff]
  %v3863 = vld [vmem:[%s7 + $0x1e8] sm:$0xff]
  %v3864 = vld [vmem:[%s7 + $0x1f0] sm:$0xff]
  %v3865 = vld [vmem:[%s7 + $0x1f8] sm:$0xff]
  %v3866 = vld [vmem:[%s9] sm:$0xf]
  %v3868 = vlaneseq
  %v3869 = vshrl.u32 %v3868, 7
  %v3870 = vsub.s32 0, %v3869
  %v3871 = vrot.slane %v3866, %v3870
  %v3872 = vlaneseq
  %v3873 = vshrl.u32 %v3872, 7
  %v3874 = vsub.s32 1, %v3873
  %v3875 = vrot.slane %v3866, %v3874
  %v3876 = vlaneseq
  %v3877 = vshrl.u32 %v3876, 7
  %v3878 = vsub.s32 2, %v3877
  %v3879 = vrot.slane %v3866, %v3878
  %v3880 = vlaneseq
  %v3881 = vshrl.u32 %v3880, 7
  %v3882 = vsub.s32 3, %v3881
  %v3883 = vrot.slane %v3866, %v3882
  %3888 = vmatprep.subr.mxu0 %v3863
  %3889 = vmatpush1.msra.mxu0 %v3862
  %3890 = vmatprep.subr.mxu0 %v3859
  %3891 = vmatpush1.msra.mxu0 %v3858
  %3892 = vmatprep.subr.mxu0 %v3855
  %3893 = vmatpush1.msra.mxu0 %v3854
  %3894 = vmatprep.subr.mxu0 %v3851
  %3895 = vmatpush1.msra.mxu0 %v3850
  %3896 = vmatprep.subr.mxu0 %v3847
  %3897 = vmatpush1.msra.mxu0 %v3846
  %3898 = vmatprep.subr.mxu0 %v3843
  %3899 = vmatpush1.msra.mxu0 %v3842
  %3900 = vmatprep.subr.mxu0 %v3839
  %3901 = vmatpush1.msra.mxu0 %v3838
  %3902 = vmatprep.subr.mxu0 %v3835
  %3903 = vmatpush1.msra.mxu0 %v3834
  %3904 = vmatprep.subr.mxu0 %v3831
  %3905 = vmatpush1.msra.mxu0 %v3830
  %3906 = vmatprep.subr.mxu0 %v3827
  %3907 = vmatpush1.msra.mxu0 %v3826
  %3908 = vmatprep.subr.mxu0 %v3823
  %3909 = vmatpush1.msra.mxu0 %v3822
  %3910 = vmatprep.subr.mxu0 %v3819
  %3911 = vmatpush1.msra.mxu0 %v3818
  %3912 = vmatprep.subr.mxu0 %v3815
  %3913 = vmatpush1.msra.mxu0 %v3814
  %3914 = vmatprep.subr.mxu0 %v3811
  %3915 = vmatpush1.msra.mxu0 %v3810
  %3916 = vmatprep.subr.mxu0 %v3807
  %3917 = vmatpush1.msra.mxu0 %v3806
  %3918 = vmatprep.subr.mxu0 %v3803
  %3919 = vmatpush1.msra.mxu0 %v3802
  %3920 = vmatprep.subr.mxu0 0.0
  %3921 = vmatpush2.msra.mxu0 0.0
  %3922 = vmatprep.subr.mxu0 0.0
  %3923 = vmatpush2.msra.mxu0 0.0
  %3924 = vmatprep.subr.mxu0 0.0
  %3925 = vmatpush2.msra.mxu0 0.0
  %3926 = vmatprep.subr.mxu0 0.0
  %3927 = vmatpush2.msra.mxu0 0.0
  %3928 = vmatprep.subr.mxu0 0.0
  %3929 = vmatpush2.msra.mxu0 0.0
  %3930 = vmatprep.subr.mxu0 0.0
  %3931 = vmatpush2.msra.mxu0 0.0
  %3932 = vmatprep.subr.mxu0 0.0
  %3933 = vmatpush2.msra.mxu0 0.0
  %3934 = vmatprep.subr.mxu0 0.0
  %3935 = vmatpush2.msra.mxu0 0.0
  %3936 = vmatprep.subr.mxu0 0.0
  %3937 = vmatpush2.msra.mxu0 0.0
  %3938 = vmatprep.subr.mxu0 0.0
  %3939 = vmatpush2.msra.mxu0 0.0
  %3940 = vmatprep.subr.mxu0 0.0
  %3941 = vmatpush2.msra.mxu0 0.0
  %3942 = vmatprep.subr.mxu0 0.0
  %3943 = vmatpush2.msra.mxu0 0.0
  %3944 = vmatprep.subr.mxu0 0.0
  %3945 = vmatpush2.msra.mxu0 0.0
  %3946 = vmatprep.subr.mxu0 0.0
  %3947 = vmatpush2.msra.mxu0 0.0
  %3948 = vmatprep.subr.mxu0 0.0
  %3949 = vmatpush2.msra.mxu0 0.0
  %3950 = vmatprep.subr.mxu0 0.0
  %3951 = vmatpush2.msra.mxu0 0.0
  %3952 = vmatprep.mubr.f32.mxu0 0.0
  %3953 = vmatmul.mubr.f32.gmra.mxu0 %v3794
  %v3954 = vpop.f32.mrf.mxu0
  %v3955 = vadd.f32 %v3871, %v3954
  %v3956 = vpop.f32.mrf.mxu0
  %v3957 = vadd.f32 %v3875, %v3956
  %3958 = vmatprep.mubr.f32.mxu0 0.0
  %3959 = vmatmul.mubr.f32.gmra.mxu0 %v3795
  %v3960 = vpop.f32.mrf.mxu0
  %v3961 = vadd.f32 %v3871, %v3960
  %v3962 = vpop.f32.mrf.mxu0
  %v3963 = vadd.f32 %v3875, %v3962
  %3964 = vmatprep.mubr.f32.mxu0 0.0
  %3965 = vmatmul.mubr.f32.gmra.mxu0 %v3796
  %v3966 = vpop.f32.mrf.mxu0
  %v3967 = vadd.f32 %v3871, %v3966
  %v3968 = vpop.f32.mrf.mxu0
  %v3969 = vadd.f32 %v3875, %v3968
  %3970 = vmatprep.mubr.f32.mxu0 0.0
  %3971 = vmatmul.mubr.f32.gmra.mxu0 %v3797
  %v3972 = vpop.f32.mrf.mxu0
  %v3973 = vadd.f32 %v3871, %v3972
  %v3974 = vpop.f32.mrf.mxu0
  %v3975 = vadd.f32 %v3875, %v3974
  %3976 = vmatprep.mubr.f32.mxu0 0.0
  %3977 = vmatmul.mubr.f32.gmra.mxu0 %v3798
  %v3978 = vpop.f32.mrf.mxu0
  %v3979 = vadd.f32 %v3871, %v3978
  %v3980 = vpop.f32.mrf.mxu0
  %v3981 = vadd.f32 %v3875, %v3980
  %3982 = vmatprep.mubr.f32.mxu0 0.0
  %3983 = vmatmul.mubr.f32.gmra.mxu0 %v3799
  %v3984 = vpop.f32.mrf.mxu0
  %v3985 = vadd.f32 %v3871, %v3984
  %v3986 = vpop.f32.mrf.mxu0
  %v3987 = vadd.f32 %v3875, %v3986
  %3988 = vmatprep.mubr.f32.mxu0 0.0
  %3989 = vmatmul.mubr.f32.gmra.mxu0 %v3800
  %v3990 = vpop.f32.mrf.mxu0
  %v3991 = vadd.f32 %v3871, %v3990
  %v3992 = vpop.f32.mrf.mxu0
  %v3993 = vadd.f32 %v3875, %v3992
  %3994 = vmatprep.mubr.f32.mxu0 0.0
  %3995 = vmatmul.mubr.f32.gmra.mxu0 %v3801
  %v3996 = vpop.f32.mrf.mxu0
  %v3997 = vadd.f32 %v3871, %v3996
  %v3998 = vpop.f32.mrf.mxu0
  %v3999 = vadd.f32 %v3875, %v3998
  %4000 = vdwg.mxu0
  %4001 = vmatprep.subr.mxu0 %v3865
  %4002 = vmatpush1.msra.mxu0 %v3864
  %4003 = vmatprep.subr.mxu0 %v3861
  %4004 = vmatpush1.msra.mxu0 %v3860
  %4005 = vmatprep.subr.mxu0 %v3857
  %4006 = vmatpush1.msra.mxu0 %v3856
  %4007 = vmatprep.subr.mxu0 %v3853
  %4008 = vmatpush1.msra.mxu0 %v3852
  %4009 = vmatprep.subr.mxu0 %v3849
  %4010 = vmatpush1.msra.mxu0 %v3848
  %4011 = vmatprep.subr.mxu0 %v3845
  %4012 = vmatpush1.msra.mxu0 %v3844
  %4013 = vmatprep.subr.mxu0 %v3841
  %4014 = vmatpush1.msra.mxu0 %v3840
  %4015 = vmatprep.subr.mxu0 %v3837
  %4016 = vmatpush1.msra.mxu0 %v3836
  %4017 = vmatprep.subr.mxu0 %v3833
  %4018 = vmatpush1.msra.mxu0 %v3832
  %4019 = vmatprep.subr.mxu0 %v3829
  %4020 = vmatpush1.msra.mxu0 %v3828
  %4021 = vmatprep.subr.mxu0 %v3825
  %4022 = vmatpush1.msra.mxu0 %v3824
  %4023 = vmatprep.subr.mxu0 %v3821
  %4024 = vmatpush1.msra.mxu0 %v3820
  %4025 = vmatprep.subr.mxu0 %v3817
  %4026 = vmatpush1.msra.mxu0 %v3816
  %4027 = vmatprep.subr.mxu0 %v3813
  %4028 = vmatpush1.msra.mxu0 %v3812
  %4029 = vmatprep.subr.mxu0 %v3809
  %4030 = vmatpush1.msra.mxu0 %v3808
  %4031 = vmatprep.subr.mxu0 %v3805
  %4032 = vmatpush1.msra.mxu0 %v3804
  %4033 = vmatprep.subr.mxu0 0.0
  %4034 = vmatpush2.msra.mxu0 0.0
  %4035 = vmatprep.subr.mxu0 0.0
  %4036 = vmatpush2.msra.mxu0 0.0
  %4037 = vmatprep.subr.mxu0 0.0
  %4038 = vmatpush2.msra.mxu0 0.0
  %4039 = vmatprep.subr.mxu0 0.0
  %4040 = vmatpush2.msra.mxu0 0.0
  %4041 = vmatprep.subr.mxu0 0.0
  %4042 = vmatpush2.msra.mxu0 0.0
  %4043 = vmatprep.subr.mxu0 0.0
  %4044 = vmatpush2.msra.mxu0 0.0
  %4045 = vmatprep.subr.mxu0 0.0
  %4046 = vmatpush2.msra.mxu0 0.0
  %4047 = vmatprep.subr.mxu0 0.0
  %4048 = vmatpush2.msra.mxu0 0.0
  %4049 = vmatprep.subr.mxu0 0.0
  %4050 = vmatpush2.msra.mxu0 0.0
  %4051 = vmatprep.subr.mxu0 0.0
  %4052 = vmatpush2.msra.mxu0 0.0
  %4053 = vmatprep.subr.mxu0 0.0
  %4054 = vmatpush2.msra.mxu0 0.0
  %4055 = vmatprep.subr.mxu0 0.0
  %4056 = vmatpush2.msra.mxu0 0.0
  %4057 = vmatprep.subr.mxu0 0.0
  %4058 = vmatpush2.msra.mxu0 0.0
  %4059 = vmatprep.subr.mxu0 0.0
  %4060 = vmatpush2.msra.mxu0 0.0
  %4061 = vmatprep.subr.mxu0 0.0
  %4062 = vmatpush2.msra.mxu0 0.0
  %4063 = vmatprep.subr.mxu0 0.0
  %4064 = vmatpush2.msra.mxu0 0.0
  %4065 = vmatprep.mubr.f32.mxu0 0.0
  %4066 = vmatmul.mubr.f32.gmra.mxu0 %v3794
  %v4067 = vpop.f32.mrf.mxu0
  %v4068 = vadd.f32 %v3879, %v4067
  %v4069 = vpop.f32.mrf.mxu0
  %v4070 = vadd.f32 %v3883, %v4069
  %4071 = vmatprep.mubr.f32.mxu0 0.0
  %4072 = vmatmul.mubr.f32.gmra.mxu0 %v3795
  %v4073 = vpop.f32.mrf.mxu0
  %v4074 = vadd.f32 %v3879, %v4073
  %v4075 = vpop.f32.mrf.mxu0
  %v4076 = vadd.f32 %v3883, %v4075
  %4077 = vmatprep.mubr.f32.mxu0 0.0
  %4078 = vmatmul.mubr.f32.gmra.mxu0 %v3796
  %v4079 = vpop.f32.mrf.mxu0
  %v4080 = vadd.f32 %v3879, %v4079
  %v4081 = vpop.f32.mrf.mxu0
  %v4082 = vadd.f32 %v3883, %v4081
  %4083 = vmatprep.mubr.f32.mxu0 0.0
  %4084 = vmatmul.mubr.f32.gmra.mxu0 %v3797
  %v4085 = vpop.f32.mrf.mxu0
  %v4086 = vadd.f32 %v3879, %v4085
  %v4087 = vpop.f32.mrf.mxu0
  %v4088 = vadd.f32 %v3883, %v4087
  %4089 = vmatprep.mubr.f32.mxu0 0.0
  %4090 = vmatmul.mubr.f32.gmra.mxu0 %v3798
  %v4091 = vpop.f32.mrf.mxu0
  %v4092 = vadd.f32 %v3879, %v4091
  %v4093 = vpop.f32.mrf.mxu0
  %v4094 = vadd.f32 %v3883, %v4093
  %4095 = vmatprep.mubr.f32.mxu0 0.0
  %4096 = vmatmul.mubr.f32.gmra.mxu0 %v3799
  %v4097 = vpop.f32.mrf.mxu0
  %v4098 = vadd.f32 %v3879, %v4097
  %v4099 = vpop.f32.mrf.mxu0
  %v4100 = vadd.f32 %v3883, %v4099
  %4101 = vmatprep.mubr.f32.mxu0 0.0
  %4102 = vmatmul.mubr.f32.gmra.mxu0 %v3800
  %v4103 = vpop.f32.mrf.mxu0
  %v4104 = vadd.f32 %v3879, %v4103
  %v4105 = vpop.f32.mrf.mxu0
  %v4106 = vadd.f32 %v3883, %v4105
  %4107 = vmatprep.mubr.f32.mxu0 0.0
  %4108 = vmatmul.mubr.f32.gmra.mxu0 %v3801
  %v4109 = vpop.f32.mrf.mxu0
  %v4110 = vadd.f32 %v3879, %v4109
  %v4111 = vpop.f32.mrf.mxu0
  %v4112 = vadd.f32 %v3883, %v4111
  %4113 = vdwg.mxu0
  %4114 = vst [vmem:[#allocation2] sm:$0xff] %v3955
  %4115 = vst [vmem:[#allocation2 + $0x8] sm:$0xff] %v3957
  %4116 = vst [vmem:[#allocation2 + $0x10] sm:$0xff] %v4068
  %4117 = vst [vmem:[#allocation2 + $0x18] sm:$0xff] %v4070
  %4118 = vst [vmem:[#allocation2 + $0x20] sm:$0xff] %v3961
  %4119 = vst [vmem:[#allocation2 + $0x28] sm:$0xff] %v3963
  %4120 = vst [vmem:[#allocation2 + $0x30] sm:$0xff] %v4074
  %4121 = vst [vmem:[#allocation2 + $0x38] sm:$0xff] %v4076
  %4122 = vst [vmem:[#allocation2 + $0x40] sm:$0xff] %v3967
  %4123 = vst [vmem:[#allocation2 + $0x48] sm:$0xff] %v3969
  %4124 = vst [vmem:[#allocation2 + $0x50] sm:$0xff] %v4080
  %4125 = vst [vmem:[#allocation2 + $0x58] sm:$0xff] %v4082
  %4126 = vst [vmem:[#allocation2 + $0x60] sm:$0xff] %v3973
  %4127 = vst [vmem:[#allocation2 + $0x68] sm:$0xff] %v3975
  %4128 = vst [vmem:[#allocation2 + $0x70] sm:$0xff] %v4086
  %4129 = vst [vmem:[#allocation2 + $0x78] sm:$0xff] %v4088
  %4130 = vst [vmem:[#allocation2 + $0x80] sm:$0xff] %v3979
  %4131 = vst [vmem:[#allocation2 + $0x88] sm:$0xff] %v3981
  %4132 = vst [vmem:[#allocation2 + $0x90] sm:$0xff] %v4092
  %4133 = vst [vmem:[#allocation2 + $0x98] sm:$0xff] %v4094
  %4134 = vst [vmem:[#allocation2 + $0xa0] sm:$0xff] %v3985
  %4135 = vst [vmem:[#allocation2 + $0xa8] sm:$0xff] %v3987
  %4136 = vst [vmem:[#allocation2 + $0xb0] sm:$0xff] %v4098
  %4137 = vst [vmem:[#allocation2 + $0xb8] sm:$0xff] %v4100
  %4138 = vst [vmem:[#allocation2 + $0xc0] sm:$0xff] %v3991
  %4139 = vst [vmem:[#allocation2 + $0xc8] sm:$0xff] %v3993
  %4140 = vst [vmem:[#allocation2 + $0xd0] sm:$0xff] %v4104
  %4141 = vst [vmem:[#allocation2 + $0xd8] sm:$0xff] %v4106
  %4142 = vst [vmem:[#allocation2 + $0xe0] sm:$0xff] %v3997
  %4143 = vst [vmem:[#allocation2 + $0xe8] sm:$0xff] %v3999
  %4144 = vst [vmem:[#allocation2 + $0xf0] sm:$0xff] %v4110
  %4145 = vst [vmem:[#allocation2 + $0xf8] sm:$0xff] %v4112
  %4146 = vst [vmem:[#allocation4] sm:$0xff] 0.0
  %4147 = vst [vmem:[#allocation5] sm:$0xff] 0.0
  %v4148 = vld [vmem:[%s8] sm:$0xff]
  %v4149 = vld [vmem:[%s8 + $0x8] sm:$0xff]
  %v4150 = vld [vmem:[%s8 + $0x10] sm:$0xff]
  %v4151 = vld [vmem:[%s8 + $0x18] sm:$0xff]
  %v4152 = vld [vmem:[%s8 + $0x20] sm:$0xff]
  %v4153 = vld [vmem:[%s8 + $0x28] sm:$0xff]
  %v4154 = vld [vmem:[%s8 + $0x30] sm:$0xff]
  %v4155 = vld [vmem:[%s8 + $0x38] sm:$0xff]
  %v4156 = vld [vmem:[%s8 + $0x40] sm:$0xff]
  %v4157 = vld [vmem:[%s8 + $0x48] sm:$0xff]
  %v4158 = vld [vmem:[%s8 + $0x50] sm:$0xff]
  %v4159 = vld [vmem:[%s8 + $0x58] sm:$0xff]
  %v4160 = vld [vmem:[%s8 + $0x60] sm:$0xff]
  %v4161 = vld [vmem:[%s8 + $0x68] sm:$0xff]
  %v4162 = vld [vmem:[%s8 + $0x70] sm:$0xff]
  %v4163 = vld [vmem:[%s8 + $0x78] sm:$0xff]
  %v4164 = vld [vmem:[%s8 + $0x80] sm:$0xff]
  %v4165 = vld [vmem:[%s8 + $0x88] sm:$0xff]
  %v4166 = vld [vmem:[%s8 + $0x90] sm:$0xff]
  %v4167 = vld [vmem:[%s8 + $0x98] sm:$0xff]
  %v4168 = vld [vmem:[%s8 + $0xa0] sm:$0xff]
  %v4169 = vld [vmem:[%s8 + $0xa8] sm:$0xff]
  %v4170 = vld [vmem:[%s8 + $0xb0] sm:$0xff]
  %v4171 = vld [vmem:[%s8 + $0xb8] sm:$0xff]
  %v4172 = vld [vmem:[%s8 + $0xc0] sm:$0xff]
  %v4173 = vld [vmem:[%s8 + $0xc8] sm:$0xff]
  %v4174 = vld [vmem:[%s8 + $0xd0] sm:$0xff]
  %v4175 = vld [vmem:[%s8 + $0xd8] sm:$0xff]
  %v4176 = vld [vmem:[%s8 + $0xe0] sm:$0xff]
  %v4177 = vld [vmem:[%s8 + $0xe8] sm:$0xff]
  %v4178 = vld [vmem:[%s8 + $0xf0] sm:$0xff]
  %v4179 = vld [vmem:[%s8 + $0xf8] sm:$0xff]
  %v4180 = vld [vmem:[%s8 + $0x100] sm:$0xff]
  %v4181 = vld [vmem:[%s8 + $0x108] sm:$0xff]
  %v4182 = vld [vmem:[%s8 + $0x110] sm:$0xff]
  %v4183 = vld [vmem:[%s8 + $0x118] sm:$0xff]
  %v4184 = vld [vmem:[%s8 + $0x120] sm:$0xff]
  %v4185 = vld [vmem:[%s8 + $0x128] sm:$0xff]
  %v4186 = vld [vmem:[%s8 + $0x130] sm:$0xff]
  %v4187 = vld [vmem:[%s8 + $0x138] sm:$0xff]
  %v4188 = vld [vmem:[%s8 + $0x140] sm:$0xff]
  %v4189 = vld [vmem:[%s8 + $0x148] sm:$0xff]
  %v4190 = vld [vmem:[%s8 + $0x150] sm:$0xff]
  %v4191 = vld [vmem:[%s8 + $0x158] sm:$0xff]
  %v4192 = vld [vmem:[%s8 + $0x160] sm:$0xff]
  %v4193 = vld [vmem:[%s8 + $0x168] sm:$0xff]
  %v4194 = vld [vmem:[%s8 + $0x170] sm:$0xff]
  %v4195 = vld [vmem:[%s8 + $0x178] sm:$0xff]
  %v4196 = vld [vmem:[%s8 + $0x180] sm:$0xff]
  %v4197 = vld [vmem:[%s8 + $0x188] sm:$0xff]
  %v4198 = vld [vmem:[%s8 + $0x190] sm:$0xff]
  %v4199 = vld [vmem:[%s8 + $0x198] sm:$0xff]
  %v4200 = vld [vmem:[%s8 + $0x1a0] sm:$0xff]
  %v4201 = vld [vmem:[%s8 + $0x1a8] sm:$0xff]
  %v4202 = vld [vmem:[%s8 + $0x1b0] sm:$0xff]
  %v4203 = vld [vmem:[%s8 + $0x1b8] sm:$0xff]
  %v4204 = vld [vmem:[%s8 + $0x1c0] sm:$0xff]
  %v4205 = vld [vmem:[%s8 + $0x1c8] sm:$0xff]
  %v4206 = vld [vmem:[%s8 + $0x1d0] sm:$0xff]
  %v4207 = vld [vmem:[%s8 + $0x1d8] sm:$0xff]
  %v4208 = vld [vmem:[%s8 + $0x1e0] sm:$0xff]
  %v4209 = vld [vmem:[%s8 + $0x1e8] sm:$0xff]
  %v4210 = vld [vmem:[%s8 + $0x1f0] sm:$0xff]
  %v4211 = vld [vmem:[%s8 + $0x1f8] sm:$0xff]
  %v4212 = vld [vmem:[%s482] sm:$0xff]
  %v4213 = vld [vmem:[%s482 + $0x8] sm:$0xff]
  %v4214 = vld [vmem:[%s482 + $0x10] sm:$0xff]
  %v4215 = vld [vmem:[%s482 + $0x18] sm:$0xff]
  %v4216 = vld [vmem:[#allocation4] sm:$0xff]
  %4217 = vmatprep.subr.mxu0 %v4209
  %4218 = vmatpush1.msra.mxu0 %v4208
  %4219 = vmatprep.subr.mxu0 %v4205
  %4220 = vmatpush1.msra.mxu0 %v4204
  %4221 = vmatprep.subr.mxu0 %v4201
  %4222 = vmatpush1.msra.mxu0 %v4200
  %4223 = vmatprep.subr.mxu0 %v4197
  %4224 = vmatpush1.msra.mxu0 %v4196
  %4225 = vmatprep.subr.mxu0 %v4193
  %4226 = vmatpush1.msra.mxu0 %v4192
  %4227 = vmatprep.subr.mxu0 %v4189
  %4228 = vmatpush1.msra.mxu0 %v4188
  %4229 = vmatprep.subr.mxu0 %v4185
  %4230 = vmatpush1.msra.mxu0 %v4184
  %4231 = vmatprep.subr.mxu0 %v4181
  %4232 = vmatpush1.msra.mxu0 %v4180
  %4233 = vmatprep.subr.mxu0 %v4177
  %4234 = vmatpush1.msra.mxu0 %v4176
  %4235 = vmatprep.subr.mxu0 %v4173
  %4236 = vmatpush1.msra.mxu0 %v4172
  %4237 = vmatprep.subr.mxu0 %v4169
  %4238 = vmatpush1.msra.mxu0 %v4168
  %4239 = vmatprep.subr.mxu0 %v4165
  %4240 = vmatpush1.msra.mxu0 %v4164
  %4241 = vmatprep.subr.mxu0 %v4161
  %4242 = vmatpush1.msra.mxu0 %v4160
  %4243 = vmatprep.subr.mxu0 %v4157
  %4244 = vmatpush1.msra.mxu0 %v4156
  %4245 = vmatprep.subr.mxu0 %v4153
  %4246 = vmatpush1.msra.mxu0 %v4152
  %4247 = vmatprep.subr.mxu0 %v4149
  %4248 = vmatpush1.msra.mxu0 %v4148
  %4249 = vmatprep.subr.mxu0 0.0
  %4250 = vmatpush2.msra.mxu0 0.0
  %4251 = vmatprep.subr.mxu0 0.0
  %4252 = vmatpush2.msra.mxu0 0.0
  %4253 = vmatprep.subr.mxu0 0.0
  %4254 = vmatpush2.msra.mxu0 0.0
  %4255 = vmatprep.subr.mxu0 0.0
  %4256 = vmatpush2.msra.mxu0 0.0
  %4257 = vmatprep.subr.mxu0 0.0
  %4258 = vmatpush2.msra.mxu0 0.0
  %4259 = vmatprep.subr.mxu0 0.0
  %4260 = vmatpush2.msra.mxu0 0.0
  %4261 = vmatprep.subr.mxu0 0.0
  %4262 = vmatpush2.msra.mxu0 0.0
  %4263 = vmatprep.subr.mxu0 0.0
  %4264 = vmatpush2.msra.mxu0 0.0
  %4265 = vmatprep.subr.mxu0 0.0
  %4266 = vmatpush2.msra.mxu0 0.0
  %4267 = vmatprep.subr.mxu0 0.0
  %4268 = vmatpush2.msra.mxu0 0.0
  %4269 = vmatprep.subr.mxu0 0.0
  %4270 = vmatpush2.msra.mxu0 0.0
  %4271 = vmatprep.subr.mxu0 0.0
  %4272 = vmatpush2.msra.mxu0 0.0
  %4273 = vmatprep.subr.mxu0 0.0
  %4274 = vmatpush2.msra.mxu0 0.0
  %4275 = vmatprep.subr.mxu0 0.0
  %4276 = vmatpush2.msra.mxu0 0.0
  %4277 = vmatprep.subr.mxu0 0.0
  %4278 = vmatpush2.msra.mxu0 0.0
  %4279 = vmatprep.subr.mxu0 0.0
  %4280 = vmatpush2.msra.mxu0 0.0
  %4281 = vmatprep.mubr.f32.mxu0 0.0
  %4282 = vmatmul.mubr.f32.gmra.mxu0 %v4216
  %v4283 = vpop.f32.mrf.mxu0
  %v4284 = vadd.f32 0.0, %v4283
  %v4285 = vpop.f32.mrf.mxu0
  %v4286 = vadd.f32 0.0, %v4285
  %4287 = vdwg.mxu0
  %4288 = vmatprep.subr.mxu0 %v4211
  %4289 = vmatpush1.msra.mxu0 %v4210
  %4290 = vmatprep.subr.mxu0 %v4207
  %4291 = vmatpush1.msra.mxu0 %v4206
  %4292 = vmatprep.subr.mxu0 %v4203
  %4293 = vmatpush1.msra.mxu0 %v4202
  %4294 = vmatprep.subr.mxu0 %v4199
  %4295 = vmatpush1.msra.mxu0 %v4198
  %4296 = vmatprep.subr.mxu0 %v4195
  %4297 = vmatpush1.msra.mxu0 %v4194
  %4298 = vmatprep.subr.mxu0 %v4191
  %4299 = vmatpush1.msra.mxu0 %v4190
  %4300 = vmatprep.subr.mxu0 %v4187
  %4301 = vmatpush1.msra.mxu0 %v4186
  %4302 = vmatprep.subr.mxu0 %v4183
  %4303 = vmatpush1.msra.mxu0 %v4182
  %4304 = vmatprep.subr.mxu0 %v4179
  %4305 = vmatpush1.msra.mxu0 %v4178
  %4306 = vmatprep.subr.mxu0 %v4175
  %4307 = vmatpush1.msra.mxu0 %v4174
  %4308 = vmatprep.subr.mxu0 %v4171
  %4309 = vmatpush1.msra.mxu0 %v4170
  %4310 = vmatprep.subr.mxu0 %v4167
  %4311 = vmatpush1.msra.mxu0 %v4166
  %4312 = vmatprep.subr.mxu0 %v4163
  %4313 = vmatpush1.msra.mxu0 %v4162
  %4314 = vmatprep.subr.mxu0 %v4159
  %4315 = vmatpush1.msra.mxu0 %v4158
  %4316 = vmatprep.subr.mxu0 %v4155
  %4317 = vmatpush1.msra.mxu0 %v4154
  %4318 = vmatprep.subr.mxu0 %v4151
  %4319 = vmatpush1.msra.mxu0 %v4150
  %4320 = vmatprep.subr.mxu0 0.0
  %4321 = vmatpush2.msra.mxu0 0.0
  %4322 = vmatprep.subr.mxu0 0.0
  %4323 = vmatpush2.msra.mxu0 0.0
  %4324 = vmatprep.subr.mxu0 0.0
  %4325 = vmatpush2.msra.mxu0 0.0
  %4326 = vmatprep.subr.mxu0 0.0
  %4327 = vmatpush2.msra.mxu0 0.0
  %4328 = vmatprep.subr.mxu0 0.0
  %4329 = vmatpush2.msra.mxu0 0.0
  %4330 = vmatprep.subr.mxu0 0.0
  %4331 = vmatpush2.msra.mxu0 0.0
  %4332 = vmatprep.subr.mxu0 0.0
  %4333 = vmatpush2.msra.mxu0 0.0
  %4334 = vmatprep.subr.mxu0 0.0
  %4335 = vmatpush2.msra.mxu0 0.0
  %4336 = vmatprep.subr.mxu0 0.0
  %4337 = vmatpush2.msra.mxu0 0.0
  %4338 = vmatprep.subr.mxu0 0.0
  %4339 = vmatpush2.msra.mxu0 0.0
  %4340 = vmatprep.subr.mxu0 0.0
  %4341 = vmatpush2.msra.mxu0 0.0
  %4342 = vmatprep.subr.mxu0 0.0
  %4343 = vmatpush2.msra.mxu0 0.0
  %4344 = vmatprep.subr.mxu0 0.0
  %4345 = vmatpush2.msra.mxu0 0.0
  %4346 = vmatprep.subr.mxu0 0.0
  %4347 = vmatpush2.msra.mxu0 0.0
  %4348 = vmatprep.subr.mxu0 0.0
  %4349 = vmatpush2.msra.mxu0 0.0
  %4350 = vmatprep.subr.mxu0 0.0
  %4351 = vmatpush2.msra.mxu0 0.0
  %4352 = vmatprep.mubr.f32.mxu0 0.0
  %4353 = vmatmul.mubr.f32.gmra.mxu0 %v4216
  %v4354 = vpop.f32.mrf.mxu0
  %v4355 = vadd.f32 0.0, %v4354
  %v4356 = vpop.f32.mrf.mxu0
  %v4357 = vadd.f32 0.0, %v4356
  %4358 = vdwg.mxu0
  %v4359 = vadd.f32 %v4212, %v4284
  %v4360 = vadd.f32 %v4213, %v4286
  %v4361 = vadd.f32 %v4214, %v4355
  %v4362 = vadd.f32 %v4215, %v4357
  %v4363 = vxor.u32 %v4359, 2147483648
  %v4364 = vmul.f32 %v4363, 1.442695
  %v4365 = vpow.pop %v4364
  %v4366 = vadd.f32 %v4365, 1.0
  %v4367 = vrcp.pop %v4366
  %v4368 = vmul.f32 1.0, %v4367
  %v4369 = vxor.u32 %v4360, 2147483648
  %v4370 = vmul.f32 %v4369, 1.442695
  %v4371 = vpow.pop %v4370
  %v4372 = vadd.f32 %v4371, 1.0
  %v4373 = vrcp.pop %v4372
  %v4374 = vmul.f32 1.0, %v4373
  %v4375 = vtanh.pop %v4361
  %v4376 = vxor.u32 %v4362, 2147483648
  %v4377 = vmul.f32 %v4376, 1.442695
  %v4378 = vpow.pop %v4377
  %v4379 = vadd.f32 %v4378, 1.0
  %v4380 = vrcp.pop %v4379
  %v4381 = vmul.f32 1.0, %v4380
  %v4382 = vld [vmem:[#allocation5] sm:$0xff]
  %v4383 = vmul.f32 %v4374, %v4382
  %v4384 = vmul.f32 %v4368, %v4375
  %v4385 = vadd.f32 %v4383, %v4384
  %v4386 = vtanh.pop %v4385
  %v4387 = vmul.f32 %v4381, %v4386
  %4388 = vst [vmem:[#allocation5] sm:$0xff] %v4385
  %4389 = vst [vmem:[#allocation4] sm:$0xff] %v4387
  %4390 = vst [vmem:[#allocation3] sm:$0xff] %v4387
  %v4391 = vld [vmem:[%s664] sm:$0xff]
  %v4392 = vld [vmem:[%s664 + $0x8] sm:$0xff]
  %v4393 = vld [vmem:[%s664 + $0x10] sm:$0xff]
  %v4394 = vld [vmem:[%s664 + $0x18] sm:$0xff]
  %v4395 = vld [vmem:[#allocation4] sm:$0xff]
  %4396 = vmatprep.subr.mxu0 %v4209
  %4397 = vmatpush1.msra.mxu0 %v4208
  %4398 = vmatprep.subr.mxu0 %v4205
  %4399 = vmatpush1.msra.mxu0 %v4204
  %4400 = vmatprep.subr.mxu0 %v4201
  %4401 = vmatpush1.msra.mxu0 %v4200
  %4402 = vmatprep.subr.mxu0 %v4197
  %4403 = vmatpush1.msra.mxu0 %v4196
  %4404 = vmatprep.subr.mxu0 %v4193
  %4405 = vmatpush1.msra.mxu0 %v4192
  %4406 = vmatprep.subr.mxu0 %v4189
  %4407 = vmatpush1.msra.mxu0 %v4188
  %4408 = vmatprep.subr.mxu0 %v4185
  %4409 = vmatpush1.msra.mxu0 %v4184
  %4410 = vmatprep.subr.mxu0 %v4181
  %4411 = vmatpush1.msra.mxu0 %v4180
  %4412 = vmatprep.subr.mxu0 %v4177
  %4413 = vmatpush1.msra.mxu0 %v4176
  %4414 = vmatprep.subr.mxu0 %v4173
  %4415 = vmatpush1.msra.mxu0 %v4172
  %4416 = vmatprep.subr.mxu0 %v4169
  %4417 = vmatpush1.msra.mxu0 %v4168
  %4418 = vmatprep.subr.mxu0 %v4165
  %4419 = vmatpush1.msra.mxu0 %v4164
  %4420 = vmatprep.subr.mxu0 %v4161
  %4421 = vmatpush1.msra.mxu0 %v4160
  %4422 = vmatprep.subr.mxu0 %v4157
  %4423 = vmatpush1.msra.mxu0 %v4156
  %4424 = vmatprep.subr.mxu0 %v4153
  %4425 = vmatpush1.msra.mxu0 %v4152
  %4426 = vmatprep.subr.mxu0 %v4149
  %4427 = vmatpush1.msra.mxu0 %v4148
  %4428 = vmatprep.subr.mxu0 0.0
  %4429 = vmatpush2.msra.mxu0 0.0
  %4430 = vmatprep.subr.mxu0 0.0
  %4431 = vmatpush2.msra.mxu0 0.0
  %4432 = vmatprep.subr.mxu0 0.0
  %4433 = vmatpush2.msra.mxu0 0.0
  %4434 = vmatprep.subr.mxu0 0.0
  %4435 = vmatpush2.msra.mxu0 0.0
  %4436 = vmatprep.subr.mxu0 0.0
  %4437 = vmatpush2.msra.mxu0 0.0
  %4438 = vmatprep.subr.mxu0 0.0
  %4439 = vmatpush2.msra.mxu0 0.0
  %4440 = vmatprep.subr.mxu0 0.0
  %4441 = vmatpush2.msra.mxu0 0.0
  %4442 = vmatprep.subr.mxu0 0.0
  %4443 = vmatpush2.msra.mxu0 0.0
  %4444 = vmatprep.subr.mxu0 0.0
  %4445 = vmatpush2.msra.mxu0 0.0
  %4446 = vmatprep.subr.mxu0 0.0
  %4447 = vmatpush2.msra.mxu0 0.0
  %4448 = vmatprep.subr.mxu0 0.0
  %4449 = vmatpush2.msra.mxu0 0.0
  %4450 = vmatprep.subr.mxu0 0.0
  %4451 = vmatpush2.msra.mxu0 0.0
  %4452 = vmatprep.subr.mxu0 0.0
  %4453 = vmatpush2.msra.mxu0 0.0
  %4454 = vmatprep.subr.mxu0 0.0
  %4455 = vmatpush2.msra.mxu0 0.0
  %4456 = vmatprep.subr.mxu0 0.0
  %4457 = vmatpush2.msra.mxu0 0.0
  %4458 = vmatprep.subr.mxu0 0.0
  %4459 = vmatpush2.msra.mxu0 0.0
  %4460 = vmatprep.mubr.f32.mxu0 0.0
  %4461 = vmatmul.mubr.f32.gmra.mxu0 %v4395
  %v4462 = vpop.f32.mrf.mxu0
  %v4463 = vadd.f32 0.0, %v4462
  %v4464 = vpop.f32.mrf.mxu0
  %v4465 = vadd.f32 0.0, %v4464
  %4466 = vdwg.mxu0
  %4467 = vmatprep.subr.mxu0 %v4211
  %4468 = vmatpush1.msra.mxu0 %v4210
  %4469 = vmatprep.subr.mxu0 %v4207
  %4470 = vmatpush1.msra.mxu0 %v4206
  %4471 = vmatprep.subr.mxu0 %v4203
  %4472 = vmatpush1.msra.mxu0 %v4202
  %4473 = vmatprep.subr.mxu0 %v4199
  %4474 = vmatpush1.msra.mxu0 %v4198
  %4475 = vmatprep.subr.mxu0 %v4195
  %4476 = vmatpush1.msra.mxu0 %v4194
  %4477 = vmatprep.subr.mxu0 %v4191
  %4478 = vmatpush1.msra.mxu0 %v4190
  %4479 = vmatprep.subr.mxu0 %v4187
  %4480 = vmatpush1.msra.mxu0 %v4186
  %4481 = vmatprep.subr.mxu0 %v4183
  %4482 = vmatpush1.msra.mxu0 %v4182
  %4483 = vmatprep.subr.mxu0 %v4179
  %4484 = vmatpush1.msra.mxu0 %v4178
  %4485 = vmatprep.subr.mxu0 %v4175
  %4486 = vmatpush1.msra.mxu0 %v4174
  %4487 = vmatprep.subr.mxu0 %v4171
  %4488 = vmatpush1.msra.mxu0 %v4170
  %4489 = vmatprep.subr.mxu0 %v4167
  %4490 = vmatpush1.msra.mxu0 %v4166
  %4491 = vmatprep.subr.mxu0 %v4163
  %4492 = vmatpush1.msra.mxu0 %v4162
  %4493 = vmatprep.subr.mxu0 %v4159
  %4494 = vmatpush1.msra.mxu0 %v4158
  %4495 = vmatprep.subr.mxu0 %v4155
  %4496 = vmatpush1.msra.mxu0 %v4154
  %4497 = vmatprep.subr.mxu0 %v4151
  %4498 = vmatpush1.msra.mxu0 %v4150
  %4499 = vmatprep.subr.mxu0 0.0
  %4500 = vmatpush2.msra.mxu0 0.0
  %4501 = vmatprep.subr.mxu0 0.0
  %4502 = vmatpush2.msra.mxu0 0.0
  %4503 = vmatprep.subr.mxu0 0.0
  %4504 = vmatpush2.msra.mxu0 0.0
  %4505 = vmatprep.subr.mxu0 0.0
  %4506 = vmatpush2.msra.mxu0 0.0
  %4507 = vmatprep.subr.mxu0 0.0
  %4508 = vmatpush2.msra.mxu0 0.0
  %4509 = vmatprep.subr.mxu0 0.0
  %4510 = vmatpush2.msra.mxu0 0.0
  %4511 = vmatprep.subr.mxu0 0.0
  %4512 = vmatpush2.msra.mxu0 0.0
  %4513 = vmatprep.subr.mxu0 0.0
  %4514 = vmatpush2.msra.mxu0 0.0
  %4515 = vmatprep.subr.mxu0 0.0
  %4516 = vmatpush2.msra.mxu0 0.0
  %4517 = vmatprep.subr.mxu0 0.0
  %4518 = vmatpush2.msra.mxu0 0.0
  %4519 = vmatprep.subr.mxu0 0.0
  %4520 = vmatpush2.msra.mxu0 0.0
  %4521 = vmatprep.subr.mxu0 0.0
  %4522 = vmatpush2.msra.mxu0 0.0
  %4523 = vmatprep.subr.mxu0 0.0
  %4524 = vmatpush2.msra.mxu0 0.0
  %4525 = vmatprep.subr.mxu0 0.0
  %4526 = vmatpush2.msra.mxu0 0.0
  %4527 = vmatprep.subr.mxu0 0.0
  %4528 = vmatpush2.msra.mxu0 0.0
  %4529 = vmatprep.subr.mxu0 0.0
  %4530 = vmatpush2.msra.mxu0 0.0
  %4531 = vmatprep.mubr.f32.mxu0 0.0
  %4532 = vmatmul.mubr.f32.gmra.mxu0 %v4395
  %v4533 = vpop.f32.mrf.mxu0
  %v4534 = vadd.f32 0.0, %v4533
  %v4535 = vpop.f32.mrf.mxu0
  %v4536 = vadd.f32 0.0, %v4535
  %4537 = vdwg.mxu0
  %v4538 = vadd.f32 %v4391, %v4463
  %v4539 = vadd.f32 %v4392, %v4465
  %v4540 = vadd.f32 %v4393, %v4534
  %v4541 = vadd.f32 %v4394, %v4536
  %v4542 = vxor.u32 %v4538, 2147483648
  %v4543 = vmul.f32 %v4542, 1.442695
  %v4544 = vpow.pop %v4543
  %v4545 = vadd.f32 %v4544, 1.0
  %v4546 = vrcp.pop %v4545
  %v4547 = vmul.f32 1.0, %v4546
  %v4548 = vxor.u32 %v4539, 2147483648
  %v4549 = vmul.f32 %v4548, 1.442695
  %v4550 = vpow.pop %v4549
  %v4551 = vadd.f32 %v4550, 1.0
  %v4552 = vrcp.pop %v4551
  %v4553 = vmul.f32 1.0, %v4552
  %v4554 = vtanh.pop %v4540
  %v4555 = vxor.u32 %v4541, 2147483648
  %v4556 = vmul.f32 %v4555, 1.442695
  %v4557 = vpow.pop %v4556
  %v4558 = vadd.f32 %v4557, 1.0
  %v4559 = vrcp.pop %v4558
  %v4560 = vmul.f32 1.0, %v4559
  %v4561 = vld [vmem:[#allocation5] sm:$0xff]
  %v4562 = vmul.f32 %v4553, %v4561
  %v4563 = vmul.f32 %v4547, %v4554
  %v4564 = vadd.f32 %v4562, %v4563
  %v4565 = vtanh.pop %v4564
  %v4566 = vmul.f32 %v4560, %v4565
  %4567 = vst [vmem:[#allocation5] sm:$0xff] %v4564
  %4568 = vst [vmem:[#allocation4] sm:$0xff] %v4566
  %4569 = vst [vmem:[%s843] sm:$0xff] %v4566
  %v4570 = vld [vmem:[%s847] sm:$0xff]
  %v4571 = vld [vmem:[%s847 + $0x8] sm:$0xff]
  %v4572 = vld [vmem:[%s847 + $0x10] sm:$0xff]
  %v4573 = vld [vmem:[%s847 + $0x18] sm:$0xff]
  %v4574 = vld [vmem:[#allocation4] sm:$0xff]
  %4575 = vmatprep.subr.mxu0 %v4209
  %4576 = vmatpush1.msra.mxu0 %v4208
  %4577 = vmatprep.subr.mxu0 %v4205
  %4578 = vmatpush1.msra.mxu0 %v4204
  %4579 = vmatprep.subr.mxu0 %v4201
  %4580 = vmatpush1.msra.mxu0 %v4200
  %4581 = vmatprep.subr.mxu0 %v4197
  %4582 = vmatpush1.msra.mxu0 %v4196
  %4583 = vmatprep.subr.mxu0 %v4193
  %4584 = vmatpush1.msra.mxu0 %v4192
  %4585 = vmatprep.subr.mxu0 %v4189
  %4586 = vmatpush1.msra.mxu0 %v4188
  %4587 = vmatprep.subr.mxu0 %v4185
  %4588 = vmatpush1.msra.mxu0 %v4184
  %4589 = vmatprep.subr.mxu0 %v4181
  %4590 = vmatpush1.msra.mxu0 %v4180
  %4591 = vmatprep.subr.mxu0 %v4177
  %4592 = vmatpush1.msra.mxu0 %v4176
  %4593 = vmatprep.subr.mxu0 %v4173
  %4594 = vmatpush1.msra.mxu0 %v4172
  %4595 = vmatprep.subr.mxu0 %v4169
  %4596 = vmatpush1.msra.mxu0 %v4168
  %4597 = vmatprep.subr.mxu0 %v4165
  %4598 = vmatpush1.msra.mxu0 %v4164
  %4599 = vmatprep.subr.mxu0 %v4161
  %4600 = vmatpush1.msra.mxu0 %v4160
  %4601 = vmatprep.subr.mxu0 %v4157
  %4602 = vmatpush1.msra.mxu0 %v4156
  %4603 = vmatprep.subr.mxu0 %v4153
  %4604 = vmatpush1.msra.mxu0 %v4152
  %4605 = vmatprep.subr.mxu0 %v4149
  %4606 = vmatpush1.msra.mxu0 %v4148
  %4607 = vmatprep.subr.mxu0 0.0
  %4608 = vmatpush2.msra.mxu0 0.0
  %4609 = vmatprep.subr.mxu0 0.0
  %4610 = vmatpush2.msra.mxu0 0.0
  %4611 = vmatprep.subr.mxu0 0.0
  %4612 = vmatpush2.msra.mxu0 0.0
  %4613 = vmatprep.subr.mxu0 0.0
  %4614 = vmatpush2.msra.mxu0 0.0
  %4615 = vmatprep.subr.mxu0 0.0
  %4616 = vmatpush2.msra.mxu0 0.0
  %4617 = vmatprep.subr.mxu0 0.0
  %4618 = vmatpush2.msra.mxu0 0.0
  %4619 = vmatprep.subr.mxu0 0.0
  %4620 = vmatpush2.msra.mxu0 0.0
  %4621 = vmatprep.subr.mxu0 0.0
  %4622 = vmatpush2.msra.mxu0 0.0
  %4623 = vmatprep.subr.mxu0 0.0
  %4624 = vmatpush2.msra.mxu0 0.0
  %4625 = vmatprep.subr.mxu0 0.0
  %4626 = vmatpush2.msra.mxu0 0.0
  %4627 = vmatprep.subr.mxu0 0.0
  %4628 = vmatpush2.msra.mxu0 0.0
  %4629 = vmatprep.subr.mxu0 0.0
  %4630 = vmatpush2.msra.mxu0 0.0
  %4631 = vmatprep.subr.mxu0 0.0
  %4632 = vmatpush2.msra.mxu0 0.0
  %4633 = vmatprep.subr.mxu0 0.0
  %4634 = vmatpush2.msra.mxu0 0.0
  %4635 = vmatprep.subr.mxu0 0.0
  %4636 = vmatpush2.msra.mxu0 0.0
  %4637 = vmatprep.subr.mxu0 0.0
  %4638 = vmatpush2.msra.mxu0 0.0
  %4639 = vmatprep.mubr.f32.mxu0 0.0
  %4640 = vmatmul.mubr.f32.gmra.mxu0 %v4574
  %v4641 = vpop.f32.mrf.mxu0
  %v4642 = vadd.f32 0.0, %v4641
  %v4643 = vpop.f32.mrf.mxu0
  %v4644 = vadd.f32 0.0, %v4643
  %4645 = vdwg.mxu0
  %4646 = vmatprep.subr.mxu0 %v4211
  %4647 = vmatpush1.msra.mxu0 %v4210
  %4648 = vmatprep.subr.mxu0 %v4207
  %4649 = vmatpush1.msra.mxu0 %v4206
  %4650 = vmatprep.subr.mxu0 %v4203
  %4651 = vmatpush1.msra.mxu0 %v4202
  %4652 = vmatprep.subr.mxu0 %v4199
  %4653 = vmatpush1.msra.mxu0 %v4198
  %4654 = vmatprep.subr.mxu0 %v4195
  %4655 = vmatpush1.msra.mxu0 %v4194
  %4656 = vmatprep.subr.mxu0 %v4191
  %4657 = vmatpush1.msra.mxu0 %v4190
  %4658 = vmatprep.subr.mxu0 %v4187
  %4659 = vmatpush1.msra.mxu0 %v4186
  %4660 = vmatprep.subr.mxu0 %v4183
  %4661 = vmatpush1.msra.mxu0 %v4182
  %4662 = vmatprep.subr.mxu0 %v4179
  %4663 = vmatpush1.msra.mxu0 %v4178
  %4664 = vmatprep.subr.mxu0 %v4175
  %4665 = vmatpush1.msra.mxu0 %v4174
  %4666 = vmatprep.subr.mxu0 %v4171
  %4667 = vmatpush1.msra.mxu0 %v4170
  %4668 = vmatprep.subr.mxu0 %v4167
  %4669 = vmatpush1.msra.mxu0 %v4166
  %4670 = vmatprep.subr.mxu0 %v4163
  %4671 = vmatpush1.msra.mxu0 %v4162
  %4672 = vmatprep.subr.mxu0 %v4159
  %4673 = vmatpush1.msra.mxu0 %v4158
  %4674 = vmatprep.subr.mxu0 %v4155
  %4675 = vmatpush1.msra.mxu0 %v4154
  %4676 = vmatprep.subr.mxu0 %v4151
  %4677 = vmatpush1.msra.mxu0 %v4150
  %4678 = vmatprep.subr.mxu0 0.0
  %4679 = vmatpush2.msra.mxu0 0.0
  %4680 = vmatprep.subr.mxu0 0.0
  %4681 = vmatpush2.msra.mxu0 0.0
  %4682 = vmatprep.subr.mxu0 0.0
  %4683 = vmatpush2.msra.mxu0 0.0
  %4684 = vmatprep.subr.mxu0 0.0
  %4685 = vmatpush2.msra.mxu0 0.0
  %4686 = vmatprep.subr.mxu0 0.0
  %4687 = vmatpush2.msra.mxu0 0.0
  %4688 = vmatprep.subr.mxu0 0.0
  %4689 = vmatpush2.msra.mxu0 0.0
  %4690 = vmatprep.subr.mxu0 0.0
  %4691 = vmatpush2.msra.mxu0 0.0
  %4692 = vmatprep.subr.mxu0 0.0
  %4693 = vmatpush2.msra.mxu0 0.0
  %4694 = vmatprep.subr.mxu0 0.0
  %4695 = vmatpush2.msra.mxu0 0.0
  %4696 = vmatprep.subr.mxu0 0.0
  %4697 = vmatpush2.msra.mxu0 0.0
  %4698 = vmatprep.subr.mxu0 0.0
  %4699 = vmatpush2.msra.mxu0 0.0
  %4700 = vmatprep.subr.mxu0 0.0
  %4701 = vmatpush2.msra.mxu0 0.0
  %4702 = vmatprep.subr.mxu0 0.0
  %4703 = vmatpush2.msra.mxu0 0.0
  %4704 = vmatprep.subr.mxu0 0.0
  %4705 = vmatpush2.msra.mxu0 0.0
  %4706 = vmatprep.subr.mxu0 0.0
  %4707 = vmatpush2.msra.mxu0 0.0
  %4708 = vmatprep.subr.mxu0 0.0
  %4709 = vmatpush2.msra.mxu0 0.0
  %4710 = vmatprep.mubr.f32.mxu0 0.0
  %4711 = vmatmul.mubr.f32.gmra.mxu0 %v4574
  %v4712 = vpop.f32.mrf.mxu0
  %v4713 = vadd.f32 0.0, %v4712
  %v4714 = vpop.f32.mrf.mxu0
  %v4715 = vadd.f32 0.0, %v4714
  %4716 = vdwg.mxu0
  %v4717 = vadd.f32 %v4570, %v4642
  %v4718 = vadd.f32 %v4571, %v4644
  %v4719 = vadd.f32 %v4572, %v4713
  %v4720 = vadd.f32 %v4573, %v4715
  %v4721 = vxor.u32 %v4717, 2147483648
  %v4722 = vmul.f32 %v4721, 1.442695
  %v4723 = vpow.pop %v4722
  %v4724 = vadd.f32 %v4723, 1.0
  %v4725 = vrcp.pop %v4724
  %v4726 = vmul.f32 1.0, %v4725
  %v4727 = vxor.u32 %v4718, 2147483648
  %v4728 = vmul.f32 %v4727, 1.442695
  %v4729 = vpow.pop %v4728
  %v4730 = vadd.f32 %v4729, 1.0
  %v4731 = vrcp.pop %v4730
  %v4732 = vmul.f32 1.0, %v4731
  %v4733 = vtanh.pop %v4719
  %v4734 = vxor.u32 %v4720, 2147483648
  %v4735 = vmul.f32 %v4734, 1.442695
  %v4736 = vpow.pop %v4735
  %v4737 = vadd.f32 %v4736, 1.0
  %v4738 = vrcp.pop %v4737
  %v4739 = vmul.f32 1.0, %v4738
  %v4740 = vld [vmem:[#allocation5] sm:$0xff]
  %v4741 = vmul.f32 %v4732, %v4740
  %v4742 = vmul.f32 %v4726, %v4733
  %v4743 = vadd.f32 %v4741, %v4742
  %v4744 = vtanh.pop %v4743
  %v4745 = vmul.f32 %v4739, %v4744
  %4746 = vst [vmem:[#allocation5] sm:$0xff] %v4743
  %4747 = vst [vmem:[#allocation4] sm:$0xff] %v4745
  %4748 = vst [vmem:[%s1026] sm:$0xff] %v4745
  %v4749 = vld [vmem:[%s1030] sm:$0xff]
  %v4750 = vld [vmem:[%s1030 + $0x8] sm:$0xff]
  %v4751 = vld [vmem:[%s1030 + $0x10] sm:$0xff]
  %v4752 = vld [vmem:[%s1030 + $0x18] sm:$0xff]
  %v4753 = vld [vmem:[#allocation4] sm:$0xff]
  %4754 = vmatprep.subr.mxu0 %v4209
  %4755 = vmatpush1.msra.mxu0 %v4208
  %4756 = vmatprep.subr.mxu0 %v4205
  %4757 = vmatpush1.msra.mxu0 %v4204
  %4758 = vmatprep.subr.mxu0 %v4201
  %4759 = vmatpush1.msra.mxu0 %v4200
  %4760 = vmatprep.subr.mxu0 %v4197
  %4761 = vmatpush1.msra.mxu0 %v4196
  %4762 = vmatprep.subr.mxu0 %v4193
  %4763 = vmatpush1.msra.mxu0 %v4192
  %4764 = vmatprep.subr.mxu0 %v4189
  %4765 = vmatpush1.msra.mxu0 %v4188
  %4766 = vmatprep.subr.mxu0 %v4185
  %4767 = vmatpush1.msra.mxu0 %v4184
  %4768 = vmatprep.subr.mxu0 %v4181
  %4769 = vmatpush1.msra.mxu0 %v4180
  %4770 = vmatprep.subr.mxu0 %v4177
  %4771 = vmatpush1.msra.mxu0 %v4176
  %4772 = vmatprep.subr.mxu0 %v4173
  %4773 = vmatpush1.msra.mxu0 %v4172
  %4774 = vmatprep.subr.mxu0 %v4169
  %4775 = vmatpush1.msra.mxu0 %v4168
  %4776 = vmatprep.subr.mxu0 %v4165
  %4777 = vmatpush1.msra.mxu0 %v4164
  %4778 = vmatprep.subr.mxu0 %v4161
  %4779 = vmatpush1.msra.mxu0 %v4160
  %4780 = vmatprep.subr.mxu0 %v4157
  %4781 = vmatpush1.msra.mxu0 %v4156
  %4782 = vmatprep.subr.mxu0 %v4153
  %4783 = vmatpush1.msra.mxu0 %v4152
  %4784 = vmatprep.subr.mxu0 %v4149
  %4785 = vmatpush1.msra.mxu0 %v4148
  %4786 = vmatprep.subr.mxu0 0.0
  %4787 = vmatpush2.msra.mxu0 0.0
  %4788 = vmatprep.subr.mxu0 0.0
  %4789 = vmatpush2.msra.mxu0 0.0
  %4790 = vmatprep.subr.mxu0 0.0
  %4791 = vmatpush2.msra.mxu0 0.0
  %4792 = vmatprep.subr.mxu0 0.0
  %4793 = vmatpush2.msra.mxu0 0.0
  %4794 = vmatprep.subr.mxu0 0.0
  %4795 = vmatpush2.msra.mxu0 0.0
  %4796 = vmatprep.subr.mxu0 0.0
  %4797 = vmatpush2.msra.mxu0 0.0
  %4798 = vmatprep.subr.mxu0 0.0
  %4799 = vmatpush2.msra.mxu0 0.0
  %4800 = vmatprep.subr.mxu0 0.0
  %4801 = vmatpush2.msra.mxu0 0.0
  %4802 = vmatprep.subr.mxu0 0.0
  %4803 = vmatpush2.msra.mxu0 0.0
  %4804 = vmatprep.subr.mxu0 0.0
  %4805 = vmatpush2.msra.mxu0 0.0
  %4806 = vmatprep.subr.mxu0 0.0
  %4807 = vmatpush2.msra.mxu0 0.0
  %4808 = vmatprep.subr.mxu0 0.0
  %4809 = vmatpush2.msra.mxu0 0.0
  %4810 = vmatprep.subr.mxu0 0.0
  %4811 = vmatpush2.msra.mxu0 0.0
  %4812 = vmatprep.subr.mxu0 0.0
  %4813 = vmatpush2.msra.mxu0 0.0
  %4814 = vmatprep.subr.mxu0 0.0
  %4815 = vmatpush2.msra.mxu0 0.0
  %4816 = vmatprep.subr.mxu0 0.0
  %4817 = vmatpush2.msra.mxu0 0.0
  %4818 = vmatprep.mubr.f32.mxu0 0.0
  %4819 = vmatmul.mubr.f32.gmra.mxu0 %v4753
  %v4820 = vpop.f32.mrf.mxu0
  %v4821 = vadd.f32 0.0, %v4820
  %v4822 = vpop.f32.mrf.mxu0
  %v4823 = vadd.f32 0.0, %v4822
  %4824 = vdwg.mxu0
  %4825 = vmatprep.subr.mxu0 %v4211
  %4826 = vmatpush1.msra.mxu0 %v4210
  %4827 = vmatprep.subr.mxu0 %v4207
  %4828 = vmatpush1.msra.mxu0 %v4206
  %4829 = vmatprep.subr.mxu0 %v4203
  %4830 = vmatpush1.msra.mxu0 %v4202
  %4831 = vmatprep.subr.mxu0 %v4199
  %4832 = vmatpush1.msra.mxu0 %v4198
  %4833 = vmatprep.subr.mxu0 %v4195
  %4834 = vmatpush1.msra.mxu0 %v4194
  %4835 = vmatprep.subr.mxu0 %v4191
  %4836 = vmatpush1.msra.mxu0 %v4190
  %4837 = vmatprep.subr.mxu0 %v4187
  %4838 = vmatpush1.msra.mxu0 %v4186
  %4839 = vmatprep.subr.mxu0 %v4183
  %4840 = vmatpush1.msra.mxu0 %v4182
  %4841 = vmatprep.subr.mxu0 %v4179
  %4842 = vmatpush1.msra.mxu0 %v4178
  %4843 = vmatprep.subr.mxu0 %v4175
  %4844 = vmatpush1.msra.mxu0 %v4174
  %4845 = vmatprep.subr.mxu0 %v4171
  %4846 = vmatpush1.msra.mxu0 %v4170
  %4847 = vmatprep.subr.mxu0 %v4167
  %4848 = vmatpush1.msra.mxu0 %v4166
  %4849 = vmatprep.subr.mxu0 %v4163
  %4850 = vmatpush1.msra.mxu0 %v4162
  %4851 = vmatprep.subr.mxu0 %v4159
  %4852 = vmatpush1.msra.mxu0 %v4158
  %4853 = vmatprep.subr.mxu0 %v4155
  %4854 = vmatpush1.msra.mxu0 %v4154
  %4855 = vmatprep.subr.mxu0 %v4151
  %4856 = vmatpush1.msra.mxu0 %v4150
  %4857 = vmatprep.subr.mxu0 0.0
  %4858 = vmatpush2.msra.mxu0 0.0
  %4859 = vmatprep.subr.mxu0 0.0
  %4860 = vmatpush2.msra.mxu0 0.0
  %4861 = vmatprep.subr.mxu0 0.0
  %4862 = vmatpush2.msra.mxu0 0.0
  %4863 = vmatprep.subr.mxu0 0.0
  %4864 = vmatpush2.msra.mxu0 0.0
  %4865 = vmatprep.subr.mxu0 0.0
  %4866 = vmatpush2.msra.mxu0 0.0
  %4867 = vmatprep.subr.mxu0 0.0
  %4868 = vmatpush2.msra.mxu0 0.0
  %4869 = vmatprep.subr.mxu0 0.0
  %4870 = vmatpush2.msra.mxu0 0.0
  %4871 = vmatprep.subr.mxu0 0.0
  %4872 = vmatpush2.msra.mxu0 0.0
  %4873 = vmatprep.subr.mxu0 0.0
  %4874 = vmatpush2.msra.mxu0 0.0
  %4875 = vmatprep.subr.mxu0 0.0
  %4876 = vmatpush2.msra.mxu0 0.0
  %4877 = vmatprep.subr.mxu0 0.0
  %4878 = vmatpush2.msra.mxu0 0.0
  %4879 = vmatprep.subr.mxu0 0.0
  %4880 = vmatpush2.msra.mxu0 0.0
  %4881 = vmatprep.subr.mxu0 0.0
  %4882 = vmatpush2.msra.mxu0 0.0
  %4883 = vmatprep.subr.mxu0 0.0
  %4884 = vmatpush2.msra.mxu0 0.0
  %4885 = vmatprep.subr.mxu0 0.0
  %4886 = vmatpush2.msra.mxu0 0.0
  %4887 = vmatprep.subr.mxu0 0.0
  %4888 = vmatpush2.msra.mxu0 0.0
  %4889 = vmatprep.mubr.f32.mxu0 0.0
  %4890 = vmatmul.mubr.f32.gmra.mxu0 %v4753
  %v4891 = vpop.f32.mrf.mxu0
  %v4892 = vadd.f32 0.0, %v4891
  %v4893 = vpop.f32.mrf.mxu0
  %v4894 = vadd.f32 0.0, %v4893
  %4895 = vdwg.mxu0
  %v4896 = vadd.f32 %v4749, %v4821
  %v4897 = vadd.f32 %v4750, %v4823
  %v4898 = vadd.f32 %v4751, %v4892
  %v4899 = vadd.f32 %v4752, %v4894
  %v4900 = vxor.u32 %v4896, 2147483648
  %v4901 = vmul.f32 %v4900, 1.442695
  %v4902 = vpow.pop %v4901
  %v4903 = vadd.f32 %v4902, 1.0
  %v4904 = vrcp.pop %v4903
  %v4905 = vmul.f32 1.0, %v4904
  %v4906 = vxor.u32 %v4897, 2147483648
  %v4907 = vmul.f32 %v4906, 1.442695
  %v4908 = vpow.pop %v4907
  %v4909 = vadd.f32 %v4908, 1.0
  %v4910 = vrcp.pop %v4909
  %v4911 = vmul.f32 1.0, %v4910
  %v4912 = vtanh.pop %v4898
  %v4913 = vxor.u32 %v4899, 2147483648
  %v4914 = vmul.f32 %v4913, 1.442695
  %v4915 = vpow.pop %v4914
  %v4916 = vadd.f32 %v4915, 1.0
  %v4917 = vrcp.pop %v4916
  %v4918 = vmul.f32 1.0, %v4917
  %v4919 = vld [vmem:[#allocation5] sm:$0xff]
  %v4920 = vmul.f32 %v4911, %v4919
  %v4921 = vmul.f32 %v4905, %v4912
  %v4922 = vadd.f32 %v4920, %v4921
  %v4923 = vtanh.pop %v4922
  %v4924 = vmul.f32 %v4918, %v4923
  %4925 = vst [vmem:[#allocation5] sm:$0xff] %v4922
  %4926 = vst [vmem:[#allocation4] sm:$0xff] %v4924
  %4927 = vst [vmem:[%s1209] sm:$0xff] %v4924
  %v4928 = vld [vmem:[%s1213] sm:$0xff]
  %v4929 = vld [vmem:[%s1213 + $0x8] sm:$0xff]
  %v4930 = vld [vmem:[%s1213 + $0x10] sm:$0xff]
  %v4931 = vld [vmem:[%s1213 + $0x18] sm:$0xff]
  %v4932 = vld [vmem:[#allocation4] sm:$0xff]
  %4933 = vmatprep.subr.mxu0 %v4209
  %4934 = vmatpush1.msra.mxu0 %v4208
  %4935 = vmatprep.subr.mxu0 %v4205
  %4936 = vmatpush1.msra.mxu0 %v4204
  %4937 = vmatprep.subr.mxu0 %v4201
  %4938 = vmatpush1.msra.mxu0 %v4200
  %4939 = vmatprep.subr.mxu0 %v4197
  %4940 = vmatpush1.msra.mxu0 %v4196
  %4941 = vmatprep.subr.mxu0 %v4193
  %4942 = vmatpush1.msra.mxu0 %v4192
  %4943 = vmatprep.subr.mxu0 %v4189
  %4944 = vmatpush1.msra.mxu0 %v4188
  %4945 = vmatprep.subr.mxu0 %v4185
  %4946 = vmatpush1.msra.mxu0 %v4184
  %4947 = vmatprep.subr.mxu0 %v4181
  %4948 = vmatpush1.msra.mxu0 %v4180
  %4949 = vmatprep.subr.mxu0 %v4177
  %4950 = vmatpush1.msra.mxu0 %v4176
  %4951 = vmatprep.subr.mxu0 %v4173
  %4952 = vmatpush1.msra.mxu0 %v4172
  %4953 = vmatprep.subr.mxu0 %v4169
  %4954 = vmatpush1.msra.mxu0 %v4168
  %4955 = vmatprep.subr.mxu0 %v4165
  %4956 = vmatpush1.msra.mxu0 %v4164
  %4957 = vmatprep.subr.mxu0 %v4161
  %4958 = vmatpush1.msra.mxu0 %v4160
  %4959 = vmatprep.subr.mxu0 %v4157
  %4960 = vmatpush1.msra.mxu0 %v4156
  %4961 = vmatprep.subr.mxu0 %v4153
  %4962 = vmatpush1.msra.mxu0 %v4152
  %4963 = vmatprep.subr.mxu0 %v4149
  %4964 = vmatpush1.msra.mxu0 %v4148
  %4965 = vmatprep.subr.mxu0 0.0
  %4966 = vmatpush2.msra.mxu0 0.0
  %4967 = vmatprep.subr.mxu0 0.0
  %4968 = vmatpush2.msra.mxu0 0.0
  %4969 = vmatprep.subr.mxu0 0.0
  %4970 = vmatpush2.msra.mxu0 0.0
  %4971 = vmatprep.subr.mxu0 0.0
  %4972 = vmatpush2.msra.mxu0 0.0
  %4973 = vmatprep.subr.mxu0 0.0
  %4974 = vmatpush2.msra.mxu0 0.0
  %4975 = vmatprep.subr.mxu0 0.0
  %4976 = vmatpush2.msra.mxu0 0.0
  %4977 = vmatprep.subr.mxu0 0.0
  %4978 = vmatpush2.msra.mxu0 0.0
  %4979 = vmatprep.subr.mxu0 0.0
  %4980 = vmatpush2.msra.mxu0 0.0
  %4981 = vmatprep.subr.mxu0 0.0
  %4982 = vmatpush2.msra.mxu0 0.0
  %4983 = vmatprep.subr.mxu0 0.0
  %4984 = vmatpush2.msra.mxu0 0.0
  %4985 = vmatprep.subr.mxu0 0.0
  %4986 = vmatpush2.msra.mxu0 0.0
  %4987 = vmatprep.subr.mxu0 0.0
  %4988 = vmatpush2.msra.mxu0 0.0
  %4989 = vmatprep.subr.mxu0 0.0
  %4990 = vmatpush2.msra.mxu0 0.0
  %4991 = vmatprep.subr.mxu0 0.0
  %4992 = vmatpush2.msra.mxu0 0.0
  %4993 = vmatprep.subr.mxu0 0.0
  %4994 = vmatpush2.msra.mxu0 0.0
  %4995 = vmatprep.subr.mxu0 0.0
  %4996 = vmatpush2.msra.mxu0 0.0
  %4997 = vmatprep.mubr.f32.mxu0 0.0
  %4998 = vmatmul.mubr.f32.gmra.mxu0 %v4932
  %v4999 = vpop.f32.mrf.mxu0
  %v5000 = vadd.f32 0.0, %v4999
  %v5001 = vpop.f32.mrf.mxu0
  %v5002 = vadd.f32 0.0, %v5001
  %5003 = vdwg.mxu0
  %5004 = vmatprep.subr.mxu0 %v4211
  %5005 = vmatpush1.msra.mxu0 %v4210
  %5006 = vmatprep.subr.mxu0 %v4207
  %5007 = vmatpush1.msra.mxu0 %v4206
  %5008 = vmatprep.subr.mxu0 %v4203
  %5009 = vmatpush1.msra.mxu0 %v4202
  %5010 = vmatprep.subr.mxu0 %v4199
  %5011 = vmatpush1.msra.mxu0 %v4198
  %5012 = vmatprep.subr.mxu0 %v4195
  %5013 = vmatpush1.msra.mxu0 %v4194
  %5014 = vmatprep.subr.mxu0 %v4191
  %5015 = vmatpush1.msra.mxu0 %v4190
  %5016 = vmatprep.subr.mxu0 %v4187
  %5017 = vmatpush1.msra.mxu0 %v4186
  %5018 = vmatprep.subr.mxu0 %v4183
  %5019 = vmatpush1.msra.mxu0 %v4182
  %5020 = vmatprep.subr.mxu0 %v4179
  %5021 = vmatpush1.msra.mxu0 %v4178
  %5022 = vmatprep.subr.mxu0 %v4175
  %5023 = vmatpush1.msra.mxu0 %v4174
  %5024 = vmatprep.subr.mxu0 %v4171
  %5025 = vmatpush1.msra.mxu0 %v4170
  %5026 = vmatprep.subr.mxu0 %v4167
  %5027 = vmatpush1.msra.mxu0 %v4166
  %5028 = vmatprep.subr.mxu0 %v4163
  %5029 = vmatpush1.msra.mxu0 %v4162
  %5030 = vmatprep.subr.mxu0 %v4159
  %5031 = vmatpush1.msra.mxu0 %v4158
  %5032 = vmatprep.subr.mxu0 %v4155
  %5033 = vmatpush1.msra.mxu0 %v4154
  %5034 = vmatprep.subr.mxu0 %v4151
  %5035 = vmatpush1.msra.mxu0 %v4150
  %5036 = vmatprep.subr.mxu0 0.0
  %5037 = vmatpush2.msra.mxu0 0.0
  %5038 = vmatprep.subr.mxu0 0.0
  %5039 = vmatpush2.msra.mxu0 0.0
  %5040 = vmatprep.subr.mxu0 0.0
  %5041 = vmatpush2.msra.mxu0 0.0
  %5042 = vmatprep.subr.mxu0 0.0
  %5043 = vmatpush2.msra.mxu0 0.0
  %5044 = vmatprep.subr.mxu0 0.0
  %5045 = vmatpush2.msra.mxu0 0.0
  %5046 = vmatprep.subr.mxu0 0.0
  %5047 = vmatpush2.msra.mxu0 0.0
  %5048 = vmatprep.subr.mxu0 0.0
  %5049 = vmatpush2.msra.mxu0 0.0
  %5050 = vmatprep.subr.mxu0 0.0
  %5051 = vmatpush2.msra.mxu0 0.0
  %5052 = vmatprep.subr.mxu0 0.0
  %5053 = vmatpush2.msra.mxu0 0.0
  %5054 = vmatprep.subr.mxu0 0.0
  %5055 = vmatpush2.msra.mxu0 0.0
  %5056 = vmatprep.subr.mxu0 0.0
  %5057 = vmatpush2.msra.mxu0 0.0
  %5058 = vmatprep.subr.mxu0 0.0
  %5059 = vmatpush2.msra.mxu0 0.0
  %5060 = vmatprep.subr.mxu0 0.0
  %5061 = vmatpush2.msra.mxu0 0.0
  %5062 = vmatprep.subr.mxu0 0.0
  %5063 = vmatpush2.msra.mxu0 0.0
  %5064 = vmatprep.subr.mxu0 0.0
  %5065 = vmatpush2.msra.mxu0 0.0
  %5066 = vmatprep.subr.mxu0 0.0
  %5067 = vmatpush2.msra.mxu0 0.0
  %5068 = vmatprep.mubr.f32.mxu0 0.0
  %5069 = vmatmul.mubr.f32.gmra.mxu0 %v4932
  %v5070 = vpop.f32.mrf.mxu0
  %v5071 = vadd.f32 0.0, %v5070
  %v5072 = vpop.f32.mrf.mxu0
  %v5073 = vadd.f32 0.0, %v5072
  %5074 = vdwg.mxu0
  %v5075 = vadd.f32 %v4928, %v5000
  %v5076 = vadd.f32 %v4929, %v5002
  %v5077 = vadd.f32 %v4930, %v5071
  %v5078 = vadd.f32 %v4931, %v5073
  %v5079 = vxor.u32 %v5075, 2147483648
  %v5080 = vmul.f32 %v5079, 1.442695
  %v5081 = vpow.pop %v5080
  %v5082 = vadd.f32 %v5081, 1.0
  %v5083 = vrcp.pop %v5082
  %v5084 = vmul.f32 1.0, %v5083
  %v5085 = vxor.u32 %v5076, 2147483648
  %v5086 = vmul.f32 %v5085, 1.442695
  %v5087 = vpow.pop %v5086
  %v5088 = vadd.f32 %v5087, 1.0
  %v5089 = vrcp.pop %v5088
  %v5090 = vmul.f32 1.0, %v5089
  %v5091 = vtanh.pop %v5077
  %v5092 = vxor.u32 %v5078, 2147483648
  %v5093 = vmul.f32 %v5092, 1.442695
  %v5094 = vpow.pop %v5093
  %v5095 = vadd.f32 %v5094, 1.0
  %v5096 = vrcp.pop %v5095
  %v5097 = vmul.f32 1.0, %v5096
  %v5098 = vld [vmem:[#allocation5] sm:$0xff]
  %v5099 = vmul.f32 %v5090, %v5098
  %v5100 = vmul.f32 %v5084, %v5091
  %v5101 = vadd.f32 %v5099, %v5100
  %v5102 = vtanh.pop %v5101
  %v5103 = vmul.f32 %v5097, %v5102
  %5104 = vst [vmem:[#allocation5] sm:$0xff] %v5101
  %5105 = vst [vmem:[#allocation4] sm:$0xff] %v5103
  %5106 = vst [vmem:[%s1392] sm:$0xff] %v5103
  %v5107 = vld [vmem:[%s1396] sm:$0xff]
  %v5108 = vld [vmem:[%s1396 + $0x8] sm:$0xff]
  %v5109 = vld [vmem:[%s1396 + $0x10] sm:$0xff]
  %v5110 = vld [vmem:[%s1396 + $0x18] sm:$0xff]
  %v5111 = vld [vmem:[#allocation4] sm:$0xff]
  %5112 = vmatprep.subr.mxu0 %v4209
  %5113 = vmatpush1.msra.mxu0 %v4208
  %5114 = vmatprep.subr.mxu0 %v4205
  %5115 = vmatpush1.msra.mxu0 %v4204
  %5116 = vmatprep.subr.mxu0 %v4201
  %5117 = vmatpush1.msra.mxu0 %v4200
  %5118 = vmatprep.subr.mxu0 %v4197
  %5119 = vmatpush1.msra.mxu0 %v4196
  %5120 = vmatprep.subr.mxu0 %v4193
  %5121 = vmatpush1.msra.mxu0 %v4192
  %5122 = vmatprep.subr.mxu0 %v4189
  %5123 = vmatpush1.msra.mxu0 %v4188
  %5124 = vmatprep.subr.mxu0 %v4185
  %5125 = vmatpush1.msra.mxu0 %v4184
  %5126 = vmatprep.subr.mxu0 %v4181
  %5127 = vmatpush1.msra.mxu0 %v4180
  %5128 = vmatprep.subr.mxu0 %v4177
  %5129 = vmatpush1.msra.mxu0 %v4176
  %5130 = vmatprep.subr.mxu0 %v4173
  %5131 = vmatpush1.msra.mxu0 %v4172
  %5132 = vmatprep.subr.mxu0 %v4169
  %5133 = vmatpush1.msra.mxu0 %v4168
  %5134 = vmatprep.subr.mxu0 %v4165
  %5135 = vmatpush1.msra.mxu0 %v4164
  %5136 = vmatprep.subr.mxu0 %v4161
  %5137 = vmatpush1.msra.mxu0 %v4160
  %5138 = vmatprep.subr.mxu0 %v4157
  %5139 = vmatpush1.msra.mxu0 %v4156
  %5140 = vmatprep.subr.mxu0 %v4153
  %5141 = vmatpush1.msra.mxu0 %v4152
  %5142 = vmatprep.subr.mxu0 %v4149
  %5143 = vmatpush1.msra.mxu0 %v4148
  %5144 = vmatprep.subr.mxu0 0.0
  %5145 = vmatpush2.msra.mxu0 0.0
  %5146 = vmatprep.subr.mxu0 0.0
  %5147 = vmatpush2.msra.mxu0 0.0
  %5148 = vmatprep.subr.mxu0 0.0
  %5149 = vmatpush2.msra.mxu0 0.0
  %5150 = vmatprep.subr.mxu0 0.0
  %5151 = vmatpush2.msra.mxu0 0.0
  %5152 = vmatprep.subr.mxu0 0.0
  %5153 = vmatpush2.msra.mxu0 0.0
  %5154 = vmatprep.subr.mxu0 0.0
  %5155 = vmatpush2.msra.mxu0 0.0
  %5156 = vmatprep.subr.mxu0 0.0
  %5157 = vmatpush2.msra.mxu0 0.0
  %5158 = vmatprep.subr.mxu0 0.0
  %5159 = vmatpush2.msra.mxu0 0.0
  %5160 = vmatprep.subr.mxu0 0.0
  %5161 = vmatpush2.msra.mxu0 0.0
  %5162 = vmatprep.subr.mxu0 0.0
  %5163 = vmatpush2.msra.mxu0 0.0
  %5164 = vmatprep.subr.mxu0 0.0
  %5165 = vmatpush2.msra.mxu0 0.0
  %5166 = vmatprep.subr.mxu0 0.0
  %5167 = vmatpush2.msra.mxu0 0.0
  %5168 = vmatprep.subr.mxu0 0.0
  %5169 = vmatpush2.msra.mxu0 0.0
  %5170 = vmatprep.subr.mxu0 0.0
  %5171 = vmatpush2.msra.mxu0 0.0
  %5172 = vmatprep.subr.mxu0 0.0
  %5173 = vmatpush2.msra.mxu0 0.0
  %5174 = vmatprep.subr.mxu0 0.0
  %5175 = vmatpush2.msra.mxu0 0.0
  %5176 = vmatprep.mubr.f32.mxu0 0.0
  %5177 = vmatmul.mubr.f32.gmra.mxu0 %v5111
  %v5178 = vpop.f32.mrf.mxu0
  %v5179 = vadd.f32 0.0, %v5178
  %v5180 = vpop.f32.mrf.mxu0
  %v5181 = vadd.f32 0.0, %v5180
  %5182 = vdwg.mxu0
  %5183 = vmatprep.subr.mxu0 %v4211
  %5184 = vmatpush1.msra.mxu0 %v4210
  %5185 = vmatprep.subr.mxu0 %v4207
  %5186 = vmatpush1.msra.mxu0 %v4206
  %5187 = vmatprep.subr.mxu0 %v4203
  %5188 = vmatpush1.msra.mxu0 %v4202
  %5189 = vmatprep.subr.mxu0 %v4199
  %5190 = vmatpush1.msra.mxu0 %v4198
  %5191 = vmatprep.subr.mxu0 %v4195
  %5192 = vmatpush1.msra.mxu0 %v4194
  %5193 = vmatprep.subr.mxu0 %v4191
  %5194 = vmatpush1.msra.mxu0 %v4190
  %5195 = vmatprep.subr.mxu0 %v4187
  %5196 = vmatpush1.msra.mxu0 %v4186
  %5197 = vmatprep.subr.mxu0 %v4183
  %5198 = vmatpush1.msra.mxu0 %v4182
  %5199 = vmatprep.subr.mxu0 %v4179
  %5200 = vmatpush1.msra.mxu0 %v4178
  %5201 = vmatprep.subr.mxu0 %v4175
  %5202 = vmatpush1.msra.mxu0 %v4174
  %5203 = vmatprep.subr.mxu0 %v4171
  %5204 = vmatpush1.msra.mxu0 %v4170
  %5205 = vmatprep.subr.mxu0 %v4167
  %5206 = vmatpush1.msra.mxu0 %v4166
  %5207 = vmatprep.subr.mxu0 %v4163
  %5208 = vmatpush1.msra.mxu0 %v4162
  %5209 = vmatprep.subr.mxu0 %v4159
  %5210 = vmatpush1.msra.mxu0 %v4158
  %5211 = vmatprep.subr.mxu0 %v4155
  %5212 = vmatpush1.msra.mxu0 %v4154
  %5213 = vmatprep.subr.mxu0 %v4151
  %5214 = vmatpush1.msra.mxu0 %v4150
  %5215 = vmatprep.subr.mxu0 0.0
  %5216 = vmatpush2.msra.mxu0 0.0
  %5217 = vmatprep.subr.mxu0 0.0
  %5218 = vmatpush2.msra.mxu0 0.0
  %5219 = vmatprep.subr.mxu0 0.0
  %5220 = vmatpush2.msra.mxu0 0.0
  %5221 = vmatprep.subr.mxu0 0.0
  %5222 = vmatpush2.msra.mxu0 0.0
  %5223 = vmatprep.subr.mxu0 0.0
  %5224 = vmatpush2.msra.mxu0 0.0
  %5225 = vmatprep.subr.mxu0 0.0
  %5226 = vmatpush2.msra.mxu0 0.0
  %5227 = vmatprep.subr.mxu0 0.0
  %5228 = vmatpush2.msra.mxu0 0.0
  %5229 = vmatprep.subr.mxu0 0.0
  %5230 = vmatpush2.msra.mxu0 0.0
  %5231 = vmatprep.subr.mxu0 0.0
  %5232 = vmatpush2.msra.mxu0 0.0
  %5233 = vmatprep.subr.mxu0 0.0
  %5234 = vmatpush2.msra.mxu0 0.0
  %5235 = vmatprep.subr.mxu0 0.0
  %5236 = vmatpush2.msra.mxu0 0.0
  %5237 = vmatprep.subr.mxu0 0.0
  %5238 = vmatpush2.msra.mxu0 0.0
  %5239 = vmatprep.subr.mxu0 0.0
  %5240 = vmatpush2.msra.mxu0 0.0
  %5241 = vmatprep.subr.mxu0 0.0
  %5242 = vmatpush2.msra.mxu0 0.0
  %5243 = vmatprep.subr.mxu0 0.0
  %5244 = vmatpush2.msra.mxu0 0.0
  %5245 = vmatprep.subr.mxu0 0.0
  %5246 = vmatpush2.msra.mxu0 0.0
  %5247 = vmatprep.mubr.f32.mxu0 0.0
  %5248 = vmatmul.mubr.f32.gmra.mxu0 %v5111
  %v5249 = vpop.f32.mrf.mxu0
  %v5250 = vadd.f32 0.0, %v5249
  %v5251 = vpop.f32.mrf.mxu0
  %v5252 = vadd.f32 0.0, %v5251
  %5253 = vdwg.mxu0
  %v5254 = vadd.f32 %v5107, %v5179
  %v5255 = vadd.f32 %v5108, %v5181
  %v5256 = vadd.f32 %v5109, %v5250
  %v5257 = vadd.f32 %v5110, %v5252
  %v5258 = vxor.u32 %v5254, 2147483648
  %v5259 = vmul.f32 %v5258, 1.442695
  %v5260 = vpow.pop %v5259
  %v5261 = vadd.f32 %v5260, 1.0
  %v5262 = vrcp.pop %v5261
  %v5263 = vmul.f32 1.0, %v5262
  %v5264 = vxor.u32 %v5255, 2147483648
  %v5265 = vmul.f32 %v5264, 1.442695
  %v5266 = vpow.pop %v5265
  %v5267 = vadd.f32 %v5266, 1.0
  %v5268 = vrcp.pop %v5267
  %v5269 = vmul.f32 1.0, %v5268
  %v5270 = vtanh.pop %v5256
  %v5271 = vxor.u32 %v5257, 2147483648
  %v5272 = vmul.f32 %v5271, 1.442695
  %v5273 = vpow.pop %v5272
  %v5274 = vadd.f32 %v5273, 1.0
  %v5275 = vrcp.pop %v5274
  %v5276 = vmul.f32 1.0, %v5275
  %v5277 = vld [vmem:[#allocation5] sm:$0xff]
  %v5278 = vmul.f32 %v5269, %v5277
  %v5279 = vmul.f32 %v5263, %v5270
  %v5280 = vadd.f32 %v5278, %v5279
  %v5281 = vtanh.pop %v5280
  %v5282 = vmul.f32 %v5276, %v5281
  %5283 = vst [vmem:[#allocation5] sm:$0xff] %v5280
  %5284 = vst [vmem:[#allocation4] sm:$0xff] %v5282
  %5285 = vst [vmem:[%s1575] sm:$0xff] %v5282
  %v5286 = vld [vmem:[%s1579] sm:$0xff]
  %v5287 = vld [vmem:[%s1579 + $0x8] sm:$0xff]
  %v5288 = vld [vmem:[%s1579 + $0x10] sm:$0xff]
  %v5289 = vld [vmem:[%s1579 + $0x18] sm:$0xff]
  %v5290 = vld [vmem:[#allocation4] sm:$0xff]
  %5291 = vmatprep.subr.mxu0 %v4209
  %5292 = vmatpush1.msra.mxu0 %v4208
  %5293 = vmatprep.subr.mxu0 %v4205
  %5294 = vmatpush1.msra.mxu0 %v4204
  %5295 = vmatprep.subr.mxu0 %v4201
  %5296 = vmatpush1.msra.mxu0 %v4200
  %5297 = vmatprep.subr.mxu0 %v4197
  %5298 = vmatpush1.msra.mxu0 %v4196
  %5299 = vmatprep.subr.mxu0 %v4193
  %5300 = vmatpush1.msra.mxu0 %v4192
  %5301 = vmatprep.subr.mxu0 %v4189
  %5302 = vmatpush1.msra.mxu0 %v4188
  %5303 = vmatprep.subr.mxu0 %v4185
  %5304 = vmatpush1.msra.mxu0 %v4184
  %5305 = vmatprep.subr.mxu0 %v4181
  %5306 = vmatpush1.msra.mxu0 %v4180
  %5307 = vmatprep.subr.mxu0 %v4177
  %5308 = vmatpush1.msra.mxu0 %v4176
  %5309 = vmatprep.subr.mxu0 %v4173
  %5310 = vmatpush1.msra.mxu0 %v4172
  %5311 = vmatprep.subr.mxu0 %v4169
  %5312 = vmatpush1.msra.mxu0 %v4168
  %5313 = vmatprep.subr.mxu0 %v4165
  %5314 = vmatpush1.msra.mxu0 %v4164
  %5315 = vmatprep.subr.mxu0 %v4161
  %5316 = vmatpush1.msra.mxu0 %v4160
  %5317 = vmatprep.subr.mxu0 %v4157
  %5318 = vmatpush1.msra.mxu0 %v4156
  %5319 = vmatprep.subr.mxu0 %v4153
  %5320 = vmatpush1.msra.mxu0 %v4152
  %5321 = vmatprep.subr.mxu0 %v4149
  %5322 = vmatpush1.msra.mxu0 %v4148
  %5323 = vmatprep.subr.mxu0 0.0
  %5324 = vmatpush2.msra.mxu0 0.0
  %5325 = vmatprep.subr.mxu0 0.0
  %5326 = vmatpush2.msra.mxu0 0.0
  %5327 = vmatprep.subr.mxu0 0.0
  %5328 = vmatpush2.msra.mxu0 0.0
  %5329 = vmatprep.subr.mxu0 0.0
  %5330 = vmatpush2.msra.mxu0 0.0
  %5331 = vmatprep.subr.mxu0 0.0
  %5332 = vmatpush2.msra.mxu0 0.0
  %5333 = vmatprep.subr.mxu0 0.0
  %5334 = vmatpush2.msra.mxu0 0.0
  %5335 = vmatprep.subr.mxu0 0.0
  %5336 = vmatpush2.msra.mxu0 0.0
  %5337 = vmatprep.subr.mxu0 0.0
  %5338 = vmatpush2.msra.mxu0 0.0
  %5339 = vmatprep.subr.mxu0 0.0
  %5340 = vmatpush2.msra.mxu0 0.0
  %5341 = vmatprep.subr.mxu0 0.0
  %5342 = vmatpush2.msra.mxu0 0.0
  %5343 = vmatprep.subr.mxu0 0.0
  %5344 = vmatpush2.msra.mxu0 0.0
  %5345 = vmatprep.subr.mxu0 0.0
  %5346 = vmatpush2.msra.mxu0 0.0
  %5347 = vmatprep.subr.mxu0 0.0
  %5348 = vmatpush2.msra.mxu0 0.0
  %5349 = vmatprep.subr.mxu0 0.0
  %5350 = vmatpush2.msra.mxu0 0.0
  %5351 = vmatprep.subr.mxu0 0.0
  %5352 = vmatpush2.msra.mxu0 0.0
  %5353 = vmatprep.subr.mxu0 0.0
  %5354 = vmatpush2.msra.mxu0 0.0
  %5355 = vmatprep.mubr.f32.mxu0 0.0
  %5356 = vmatmul.mubr.f32.gmra.mxu0 %v5290
  %v5357 = vpop.f32.mrf.mxu0
  %v5358 = vadd.f32 0.0, %v5357
  %v5359 = vpop.f32.mrf.mxu0
  %v5360 = vadd.f32 0.0, %v5359
  %5361 = vdwg.mxu0
  %5362 = vmatprep.subr.mxu0 %v4211
  %5363 = vmatpush1.msra.mxu0 %v4210
  %5364 = vmatprep.subr.mxu0 %v4207
  %5365 = vmatpush1.msra.mxu0 %v4206
  %5366 = vmatprep.subr.mxu0 %v4203
  %5367 = vmatpush1.msra.mxu0 %v4202
  %5368 = vmatprep.subr.mxu0 %v4199
  %5369 = vmatpush1.msra.mxu0 %v4198
  %5370 = vmatprep.subr.mxu0 %v4195
  %5371 = vmatpush1.msra.mxu0 %v4194
  %5372 = vmatprep.subr.mxu0 %v4191
  %5373 = vmatpush1.msra.mxu0 %v4190
  %5374 = vmatprep.subr.mxu0 %v4187
  %5375 = vmatpush1.msra.mxu0 %v4186
  %5376 = vmatprep.subr.mxu0 %v4183
  %5377 = vmatpush1.msra.mxu0 %v4182
  %5378 = vmatprep.subr.mxu0 %v4179
  %5379 = vmatpush1.msra.mxu0 %v4178
  %5380 = vmatprep.subr.mxu0 %v4175
  %5381 = vmatpush1.msra.mxu0 %v4174
  %5382 = vmatprep.subr.mxu0 %v4171
  %5383 = vmatpush1.msra.mxu0 %v4170
  %5384 = vmatprep.subr.mxu0 %v4167
  %5385 = vmatpush1.msra.mxu0 %v4166
  %5386 = vmatprep.subr.mxu0 %v4163
  %5387 = vmatpush1.msra.mxu0 %v4162
  %5388 = vmatprep.subr.mxu0 %v4159
  %5389 = vmatpush1.msra.mxu0 %v4158
  %5390 = vmatprep.subr.mxu0 %v4155
  %5391 = vmatpush1.msra.mxu0 %v4154
  %5392 = vmatprep.subr.mxu0 %v4151
  %5393 = vmatpush1.msra.mxu0 %v4150
  %5394 = vmatprep.subr.mxu0 0.0
  %5395 = vmatpush2.msra.mxu0 0.0
  %5396 = vmatprep.subr.mxu0 0.0
  %5397 = vmatpush2.msra.mxu0 0.0
  %5398 = vmatprep.subr.mxu0 0.0
  %5399 = vmatpush2.msra.mxu0 0.0
  %5400 = vmatprep.subr.mxu0 0.0
  %5401 = vmatpush2.msra.mxu0 0.0
  %5402 = vmatprep.subr.mxu0 0.0
  %5403 = vmatpush2.msra.mxu0 0.0
  %5404 = vmatprep.subr.mxu0 0.0
  %5405 = vmatpush2.msra.mxu0 0.0
  %5406 = vmatprep.subr.mxu0 0.0
  %5407 = vmatpush2.msra.mxu0 0.0
  %5408 = vmatprep.subr.mxu0 0.0
  %5409 = vmatpush2.msra.mxu0 0.0
  %5410 = vmatprep.subr.mxu0 0.0
  %5411 = vmatpush2.msra.mxu0 0.0
  %5412 = vmatprep.subr.mxu0 0.0
  %5413 = vmatpush2.msra.mxu0 0.0
  %5414 = vmatprep.subr.mxu0 0.0
  %5415 = vmatpush2.msra.mxu0 0.0
  %5416 = vmatprep.subr.mxu0 0.0
  %5417 = vmatpush2.msra.mxu0 0.0
  %5418 = vmatprep.subr.mxu0 0.0
  %5419 = vmatpush2.msra.mxu0 0.0
  %5420 = vmatprep.subr.mxu0 0.0
  %5421 = vmatpush2.msra.mxu0 0.0
  %5422 = vmatprep.subr.mxu0 0.0
  %5423 = vmatpush2.msra.mxu0 0.0
  %5424 = vmatprep.subr.mxu0 0.0
  %5425 = vmatpush2.msra.mxu0 0.0
  %5426 = vmatprep.mubr.f32.mxu0 0.0
  %5427 = vmatmul.mubr.f32.gmra.mxu0 %v5290
  %v5428 = vpop.f32.mrf.mxu0
  %v5429 = vadd.f32 0.0, %v5428
  %v5430 = vpop.f32.mrf.mxu0
  %v5431 = vadd.f32 0.0, %v5430
  %5432 = vdwg.mxu0
  %v5433 = vadd.f32 %v5286, %v5358
  %v5434 = vadd.f32 %v5287, %v5360
  %v5435 = vadd.f32 %v5288, %v5429
  %v5436 = vadd.f32 %v5289, %v5431
  %v5437 = vxor.u32 %v5433, 2147483648
  %v5438 = vmul.f32 %v5437, 1.442695
  %v5439 = vpow.pop %v5438
  %v5440 = vadd.f32 %v5439, 1.0
  %v5441 = vrcp.pop %v5440
  %v5442 = vmul.f32 1.0, %v5441
  %v5443 = vxor.u32 %v5434, 2147483648
  %v5444 = vmul.f32 %v5443, 1.442695
  %v5445 = vpow.pop %v5444
  %v5446 = vadd.f32 %v5445, 1.0
  %v5447 = vrcp.pop %v5446
  %v5448 = vmul.f32 1.0, %v5447
  %v5449 = vtanh.pop %v5435
  %v5450 = vxor.u32 %v5436, 2147483648
  %v5451 = vmul.f32 %v5450, 1.442695
  %v5452 = vpow.pop %v5451
  %v5453 = vadd.f32 %v5452, 1.0
  %v5454 = vrcp.pop %v5453
  %v5455 = vmul.f32 1.0, %v5454
  %v5456 = vld [vmem:[#allocation5] sm:$0xff]
  %v5457 = vmul.f32 %v5448, %v5456
  %v5458 = vmul.f32 %v5442, %v5449
  %v5459 = vadd.f32 %v5457, %v5458
  %v5460 = vtanh.pop %v5459
  %v5461 = vmul.f32 %v5455, %v5460
  %5462 = vst [vmem:[#allocation5] sm:$0xff] %v5459
  %5463 = vst [vmem:[#allocation4] sm:$0xff] %v5461
  %5464 = vst [vmem:[%s1758] sm:$0xff] %v5461
  %v5465 = vld [vmem:[%s1762] sm:$0xff]
  %v5466 = vld [vmem:[%s1762 + $0x8] sm:$0xff]
  %v5467 = vld [vmem:[%s1762 + $0x10] sm:$0xff]
  %v5468 = vld [vmem:[%s1762 + $0x18] sm:$0xff]
  %v5469 = vld [vmem:[#allocation4] sm:$0xff]
  %5470 = vmatprep.subr.mxu0 %v4209
  %5471 = vmatpush1.msra.mxu0 %v4208
  %5472 = vmatprep.subr.mxu0 %v4205
  %5473 = vmatpush1.msra.mxu0 %v4204
  %5474 = vmatprep.subr.mxu0 %v4201
  %5475 = vmatpush1.msra.mxu0 %v4200
  %5476 = vmatprep.subr.mxu0 %v4197
  %5477 = vmatpush1.msra.mxu0 %v4196
  %5478 = vmatprep.subr.mxu0 %v4193
  %5479 = vmatpush1.msra.mxu0 %v4192
  %5480 = vmatprep.subr.mxu0 %v4189
  %5481 = vmatpush1.msra.mxu0 %v4188
  %5482 = vmatprep.subr.mxu0 %v4185
  %5483 = vmatpush1.msra.mxu0 %v4184
  %5484 = vmatprep.subr.mxu0 %v4181
  %5485 = vmatpush1.msra.mxu0 %v4180
  %5486 = vmatprep.subr.mxu0 %v4177
  %5487 = vmatpush1.msra.mxu0 %v4176
  %5488 = vmatprep.subr.mxu0 %v4173
  %5489 = vmatpush1.msra.mxu0 %v4172
  %5490 = vmatprep.subr.mxu0 %v4169
  %5491 = vmatpush1.msra.mxu0 %v4168
  %5492 = vmatprep.subr.mxu0 %v4165
  %5493 = vmatpush1.msra.mxu0 %v4164
  %5494 = vmatprep.subr.mxu0 %v4161
  %5495 = vmatpush1.msra.mxu0 %v4160
  %5496 = vmatprep.subr.mxu0 %v4157
  %5497 = vmatpush1.msra.mxu0 %v4156
  %5498 = vmatprep.subr.mxu0 %v4153
  %5499 = vmatpush1.msra.mxu0 %v4152
  %5500 = vmatprep.subr.mxu0 %v4149
  %5501 = vmatpush1.msra.mxu0 %v4148
  %5502 = vmatprep.subr.mxu0 0.0
  %5503 = vmatpush2.msra.mxu0 0.0
  %5504 = vmatprep.subr.mxu0 0.0
  %5505 = vmatpush2.msra.mxu0 0.0
  %5506 = vmatprep.subr.mxu0 0.0
  %5507 = vmatpush2.msra.mxu0 0.0
  %5508 = vmatprep.subr.mxu0 0.0
  %5509 = vmatpush2.msra.mxu0 0.0
  %5510 = vmatprep.subr.mxu0 0.0
  %5511 = vmatpush2.msra.mxu0 0.0
  %5512 = vmatprep.subr.mxu0 0.0
  %5513 = vmatpush2.msra.mxu0 0.0
  %5514 = vmatprep.subr.mxu0 0.0
  %5515 = vmatpush2.msra.mxu0 0.0
  %5516 = vmatprep.subr.mxu0 0.0
  %5517 = vmatpush2.msra.mxu0 0.0
  %5518 = vmatprep.subr.mxu0 0.0
  %5519 = vmatpush2.msra.mxu0 0.0
  %5520 = vmatprep.subr.mxu0 0.0
  %5521 = vmatpush2.msra.mxu0 0.0
  %5522 = vmatprep.subr.mxu0 0.0
  %5523 = vmatpush2.msra.mxu0 0.0
  %5524 = vmatprep.subr.mxu0 0.0
  %5525 = vmatpush2.msra.mxu0 0.0
  %5526 = vmatprep.subr.mxu0 0.0
  %5527 = vmatpush2.msra.mxu0 0.0
  %5528 = vmatprep.subr.mxu0 0.0
  %5529 = vmatpush2.msra.mxu0 0.0
  %5530 = vmatprep.subr.mxu0 0.0
  %5531 = vmatpush2.msra.mxu0 0.0
  %5532 = vmatprep.subr.mxu0 0.0
  %5533 = vmatpush2.msra.mxu0 0.0
  %5534 = vmatprep.mubr.f32.mxu0 0.0
  %5535 = vmatmul.mubr.f32.gmra.mxu0 %v5469
  %v5536 = vpop.f32.mrf.mxu0
  %v5537 = vadd.f32 0.0, %v5536
  %v5538 = vpop.f32.mrf.mxu0
  %v5539 = vadd.f32 0.0, %v5538
  %5540 = vdwg.mxu0
  %5541 = vmatprep.subr.mxu0 %v4211
  %5542 = vmatpush1.msra.mxu0 %v4210
  %5543 = vmatprep.subr.mxu0 %v4207
  %5544 = vmatpush1.msra.mxu0 %v4206
  %5545 = vmatprep.subr.mxu0 %v4203
  %5546 = vmatpush1.msra.mxu0 %v4202
  %5547 = vmatprep.subr.mxu0 %v4199
  %5548 = vmatpush1.msra.mxu0 %v4198
  %5549 = vmatprep.subr.mxu0 %v4195
  %5550 = vmatpush1.msra.mxu0 %v4194
  %5551 = vmatprep.subr.mxu0 %v4191
  %5552 = vmatpush1.msra.mxu0 %v4190
  %5553 = vmatprep.subr.mxu0 %v4187
  %5554 = vmatpush1.msra.mxu0 %v4186
  %5555 = vmatprep.subr.mxu0 %v4183
  %5556 = vmatpush1.msra.mxu0 %v4182
  %5557 = vmatprep.subr.mxu0 %v4179
  %5558 = vmatpush1.msra.mxu0 %v4178
  %5559 = vmatprep.subr.mxu0 %v4175
  %5560 = vmatpush1.msra.mxu0 %v4174
  %5561 = vmatprep.subr.mxu0 %v4171
  %5562 = vmatpush1.msra.mxu0 %v4170
  %5563 = vmatprep.subr.mxu0 %v4167
  %5564 = vmatpush1.msra.mxu0 %v4166
  %5565 = vmatprep.subr.mxu0 %v4163
  %5566 = vmatpush1.msra.mxu0 %v4162
  %5567 = vmatprep.subr.mxu0 %v4159
  %5568 = vmatpush1.msra.mxu0 %v4158
  %5569 = vmatprep.subr.mxu0 %v4155
  %5570 = vmatpush1.msra.mxu0 %v4154
  %5571 = vmatprep.subr.mxu0 %v4151
  %5572 = vmatpush1.msra.mxu0 %v4150
  %5573 = vmatprep.subr.mxu0 0.0
  %5574 = vmatpush2.msra.mxu0 0.0
  %5575 = vmatprep.subr.mxu0 0.0
  %5576 = vmatpush2.msra.mxu0 0.0
  %5577 = vmatprep.subr.mxu0 0.0
  %5578 = vmatpush2.msra.mxu0 0.0
  %5579 = vmatprep.subr.mxu0 0.0
  %5580 = vmatpush2.msra.mxu0 0.0
  %5581 = vmatprep.subr.mxu0 0.0
  %5582 = vmatpush2.msra.mxu0 0.0
  %5583 = vmatprep.subr.mxu0 0.0
  %5584 = vmatpush2.msra.mxu0 0.0
  %5585 = vmatprep.subr.mxu0 0.0
  %5586 = vmatpush2.msra.mxu0 0.0
  %5587 = vmatprep.subr.mxu0 0.0
  %5588 = vmatpush2.msra.mxu0 0.0
  %5589 = vmatprep.subr.mxu0 0.0
  %5590 = vmatpush2.msra.mxu0 0.0
  %5591 = vmatprep.subr.mxu0 0.0
  %5592 = vmatpush2.msra.mxu0 0.0
  %5593 = vmatprep.subr.mxu0 0.0
  %5594 = vmatpush2.msra.mxu0 0.0
  %5595 = vmatprep.subr.mxu0 0.0
  %5596 = vmatpush2.msra.mxu0 0.0
  %5597 = vmatprep.subr.mxu0 0.0
  %5598 = vmatpush2.msra.mxu0 0.0
  %5599 = vmatprep.subr.mxu0 0.0
  %5600 = vmatpush2.msra.mxu0 0.0
  %5601 = vmatprep.subr.mxu0 0.0
  %5602 = vmatpush2.msra.mxu0 0.0
  %5603 = vmatprep.subr.mxu0 0.0
  %5604 = vmatpush2.msra.mxu0 0.0
  %5605 = vmatprep.mubr.f32.mxu0 0.0
  %5606 = vmatmul.mubr.f32.gmra.mxu0 %v5469
  %v5607 = vpop.f32.mrf.mxu0
  %v5608 = vadd.f32 0.0, %v5607
  %v5609 = vpop.f32.mrf.mxu0
  %v5610 = vadd.f32 0.0, %v5609
  %5611 = vdwg.mxu0
  %v5612 = vadd.f32 %v5465, %v5537
  %v5613 = vadd.f32 %v5466, %v5539
  %v5614 = vadd.f32 %v5467, %v5608
  %v5615 = vadd.f32 %v5468, %v5610
  %v5616 = vxor.u32 %v5612, 2147483648
  %v5617 = vmul.f32 %v5616, 1.442695
  %v5618 = vpow.pop %v5617
  %v5619 = vadd.f32 %v5618, 1.0
  %v5620 = vrcp.pop %v5619
  %v5621 = vmul.f32 1.0, %v5620
  %v5622 = vxor.u32 %v5613, 2147483648
  %v5623 = vmul.f32 %v5622, 1.442695
  %v5624 = vpow.pop %v5623
  %v5625 = vadd.f32 %v5624, 1.0
  %v5626 = vrcp.pop %v5625
  %v5627 = vmul.f32 1.0, %v5626
  %v5628 = vtanh.pop %v5614
  %v5629 = vxor.u32 %v5615, 2147483648
  %v5630 = vmul.f32 %v5629, 1.442695
  %v5631 = vpow.pop %v5630
  %v5632 = vadd.f32 %v5631, 1.0
  %v5633 = vrcp.pop %v5632
  %v5634 = vmul.f32 1.0, %v5633
  %v5635 = vld [vmem:[#allocation5] sm:$0xff]
  %v5636 = vmul.f32 %v5627, %v5635
  %v5637 = vmul.f32 %v5621, %v5628
  %v5638 = vadd.f32 %v5636, %v5637
  %v5639 = vtanh.pop %v5638
  %v5640 = vmul.f32 %v5634, %v5639
  %5641 = vst [vmem:[#allocation5] sm:$0xff] %v5638
  %5642 = vst [vmem:[#allocation4] sm:$0xff] %v5640
  %5643 = vst [vmem:[%s1941] sm:$0xff] %v5640
  %v5644 = vld [vmem:[#allocation3] sm:$0xff]
  %v5645 = vld [vmem:[#allocation3 + $0x8] sm:$0xff]
  %v5646 = vld [vmem:[#allocation3 + $0x10] sm:$0xff]
  %v5647 = vld [vmem:[#allocation3 + $0x18] sm:$0xff]
  %v5648 = vld [vmem:[#allocation3 + $0x20] sm:$0xff]
  %v5649 = vld [vmem:[#allocation3 + $0x28] sm:$0xff]
  %v5650 = vld [vmem:[#allocation3 + $0x30] sm:$0xff]
  %v5651 = vld [vmem:[#allocation3 + $0x38] sm:$0xff]
  %v5652 = vld [vmem:[%s10] sm:$0xff]
  %v5653 = vld [vmem:[%s10 + $0x8] sm:$0xff]
  %v5654 = vld [vmem:[%s10 + $0x10] sm:$0xff]
  %v5655 = vld [vmem:[%s10 + $0x18] sm:$0xff]
  %v5656 = vld [vmem:[%s10 + $0x20] sm:$0xff]
  %v5657 = vld [vmem:[%s10 + $0x28] sm:$0xff]
  %v5658 = vld [vmem:[%s10 + $0x30] sm:$0xff]
  %v5659 = vld [vmem:[%s10 + $0x38] sm:$0xff]
  %v5660 = vld [vmem:[%s10 + $0x40] sm:$0xff]
  %v5661 = vld [vmem:[%s10 + $0x48] sm:$0xff]
  %v5662 = vld [vmem:[%s10 + $0x50] sm:$0xff]
  %v5663 = vld [vmem:[%s10 + $0x58] sm:$0xff]
  %v5664 = vld [vmem:[%s10 + $0x60] sm:$0xff]
  %v5665 = vld [vmem:[%s10 + $0x68] sm:$0xff]
  %v5666 = vld [vmem:[%s10 + $0x70] sm:$0xff]
  %v5667 = vld [vmem:[%s10 + $0x78] sm:$0xff]
  %v5668 = vld [vmem:[%s10 + $0x80] sm:$0xff]
  %v5669 = vld [vmem:[%s10 + $0x88] sm:$0xff]
  %v5670 = vld [vmem:[%s10 + $0x90] sm:$0xff]
  %v5671 = vld [vmem:[%s10 + $0x98] sm:$0xff]
  %v5672 = vld [vmem:[%s10 + $0xa0] sm:$0xff]
  %v5673 = vld [vmem:[%s10 + $0xa8] sm:$0xff]
  %v5674 = vld [vmem:[%s10 + $0xb0] sm:$0xff]
  %v5675 = vld [vmem:[%s10 + $0xb8] sm:$0xff]
  %v5676 = vld [vmem:[%s10 + $0xc0] sm:$0xff]
  %v5677 = vld [vmem:[%s10 + $0xc8] sm:$0xff]
  %v5678 = vld [vmem:[%s10 + $0xd0] sm:$0xff]
  %v5679 = vld [vmem:[%s10 + $0xd8] sm:$0xff]
  %v5680 = vld [vmem:[%s10 + $0xe0] sm:$0xff]
  %v5681 = vld [vmem:[%s10 + $0xe8] sm:$0xff]
  %v5682 = vld [vmem:[%s10 + $0xf0] sm:$0xff]
  %v5683 = vld [vmem:[%s10 + $0xf8] sm:$0xff]
  %v5684 = vld [vmem:[%s10 + $0x100] sm:$0xff]
  %v5685 = vld [vmem:[%s10 + $0x108] sm:$0xff]
  %v5686 = vld [vmem:[%s10 + $0x110] sm:$0xff]
  %v5687 = vld [vmem:[%s10 + $0x118] sm:$0xff]
  %v5688 = vld [vmem:[%s10 + $0x120] sm:$0xff]
  %v5689 = vld [vmem:[%s10 + $0x128] sm:$0xff]
  %v5690 = vld [vmem:[%s10 + $0x130] sm:$0xff]
  %v5691 = vld [vmem:[%s10 + $0x138] sm:$0xff]
  %v5692 = vld [vmem:[%s10 + $0x140] sm:$0xff]
  %v5693 = vld [vmem:[%s10 + $0x148] sm:$0xff]
  %v5694 = vld [vmem:[%s10 + $0x150] sm:$0xff]
  %v5695 = vld [vmem:[%s10 + $0x158] sm:$0xff]
  %v5696 = vld [vmem:[%s10 + $0x160] sm:$0xff]
  %v5697 = vld [vmem:[%s10 + $0x168] sm:$0xff]
  %v5698 = vld [vmem:[%s10 + $0x170] sm:$0xff]
  %v5699 = vld [vmem:[%s10 + $0x178] sm:$0xff]
  %v5700 = vld [vmem:[%s10 + $0x180] sm:$0xff]
  %v5701 = vld [vmem:[%s10 + $0x188] sm:$0xff]
  %v5702 = vld [vmem:[%s10 + $0x190] sm:$0xff]
  %v5703 = vld [vmem:[%s10 + $0x198] sm:$0xff]
  %v5704 = vld [vmem:[%s10 + $0x1a0] sm:$0xff]
  %v5705 = vld [vmem:[%s10 + $0x1a8] sm:$0xff]
  %v5706 = vld [vmem:[%s10 + $0x1b0] sm:$0xff]
  %v5707 = vld [vmem:[%s10 + $0x1b8] sm:$0xff]
  %v5708 = vld [vmem:[%s10 + $0x1c0] sm:$0xff]
  %v5709 = vld [vmem:[%s10 + $0x1c8] sm:$0xff]
  %v5710 = vld [vmem:[%s10 + $0x1d0] sm:$0xff]
  %v5711 = vld [vmem:[%s10 + $0x1d8] sm:$0xff]
  %v5712 = vld [vmem:[%s10 + $0x1e0] sm:$0xff]
  %v5713 = vld [vmem:[%s10 + $0x1e8] sm:$0xff]
  %v5714 = vld [vmem:[%s10 + $0x1f0] sm:$0xff]
  %v5715 = vld [vmem:[%s10 + $0x1f8] sm:$0xff]
  %v5716 = vld [vmem:[%s12] sm:$0xf]
  %v5718 = vlaneseq
  %v5719 = vshrl.u32 %v5718, 7
  %v5720 = vsub.s32 0, %v5719
  %v5721 = vrot.slane %v5716, %v5720
  %v5722 = vlaneseq
  %v5723 = vshrl.u32 %v5722, 7
  %v5724 = vsub.s32 1, %v5723
  %v5725 = vrot.slane %v5716, %v5724
  %v5726 = vlaneseq
  %v5727 = vshrl.u32 %v5726, 7
  %v5728 = vsub.s32 2, %v5727
  %v5729 = vrot.slane %v5716, %v5728
  %v5730 = vlaneseq
  %v5731 = vshrl.u32 %v5730, 7
  %v5732 = vsub.s32 3, %v5731
  %v5733 = vrot.slane %v5716, %v5732
  %5738 = vmatprep.subr.mxu0 %v5713
  %5739 = vmatpush1.msra.mxu0 %v5712
  %5740 = vmatprep.subr.mxu0 %v5709
  %5741 = vmatpush1.msra.mxu0 %v5708
  %5742 = vmatprep.subr.mxu0 %v5705
  %5743 = vmatpush1.msra.mxu0 %v5704
  %5744 = vmatprep.subr.mxu0 %v5701
  %5745 = vmatpush1.msra.mxu0 %v5700
  %5746 = vmatprep.subr.mxu0 %v5697
  %5747 = vmatpush1.msra.mxu0 %v5696
  %5748 = vmatprep.subr.mxu0 %v5693
  %5749 = vmatpush1.msra.mxu0 %v5692
  %5750 = vmatprep.subr.mxu0 %v5689
  %5751 = vmatpush1.msra.mxu0 %v5688
  %5752 = vmatprep.subr.mxu0 %v5685
  %5753 = vmatpush1.msra.mxu0 %v5684
  %5754 = vmatprep.subr.mxu0 %v5681
  %5755 = vmatpush1.msra.mxu0 %v5680
  %5756 = vmatprep.subr.mxu0 %v5677
  %5757 = vmatpush1.msra.mxu0 %v5676
  %5758 = vmatprep.subr.mxu0 %v5673
  %5759 = vmatpush1.msra.mxu0 %v5672
  %5760 = vmatprep.subr.mxu0 %v5669
  %5761 = vmatpush1.msra.mxu0 %v5668
  %5762 = vmatprep.subr.mxu0 %v5665
  %5763 = vmatpush1.msra.mxu0 %v5664
  %5764 = vmatprep.subr.mxu0 %v5661
  %5765 = vmatpush1.msra.mxu0 %v5660
  %5766 = vmatprep.subr.mxu0 %v5657
  %5767 = vmatpush1.msra.mxu0 %v5656
  %5768 = vmatprep.subr.mxu0 %v5653
  %5769 = vmatpush1.msra.mxu0 %v5652
  %5770 = vmatprep.subr.mxu0 0.0
  %5771 = vmatpush2.msra.mxu0 0.0
  %5772 = vmatprep.subr.mxu0 0.0
  %5773 = vmatpush2.msra.mxu0 0.0
  %5774 = vmatprep.subr.mxu0 0.0
  %5775 = vmatpush2.msra.mxu0 0.0
  %5776 = vmatprep.subr.mxu0 0.0
  %5777 = vmatpush2.msra.mxu0 0.0
  %5778 = vmatprep.subr.mxu0 0.0
  %5779 = vmatpush2.msra.mxu0 0.0
  %5780 = vmatprep.subr.mxu0 0.0
  %5781 = vmatpush2.msra.mxu0 0.0
  %5782 = vmatprep.subr.mxu0 0.0
  %5783 = vmatpush2.msra.mxu0 0.0
  %5784 = vmatprep.subr.mxu0 0.0
  %5785 = vmatpush2.msra.mxu0 0.0
  %5786 = vmatprep.subr.mxu0 0.0
  %5787 = vmatpush2.msra.mxu0 0.0
  %5788 = vmatprep.subr.mxu0 0.0
  %5789 = vmatpush2.msra.mxu0 0.0
  %5790 = vmatprep.subr.mxu0 0.0
  %5791 = vmatpush2.msra.mxu0 0.0
  %5792 = vmatprep.subr.mxu0 0.0
  %5793 = vmatpush2.msra.mxu0 0.0
  %5794 = vmatprep.subr.mxu0 0.0
  %5795 = vmatpush2.msra.mxu0 0.0
  %5796 = vmatprep.subr.mxu0 0.0
  %5797 = vmatpush2.msra.mxu0 0.0
  %5798 = vmatprep.subr.mxu0 0.0
  %5799 = vmatpush2.msra.mxu0 0.0
  %5800 = vmatprep.subr.mxu0 0.0
  %5801 = vmatpush2.msra.mxu0 0.0
  %5802 = vmatprep.mubr.f32.mxu0 0.0
  %5803 = vmatmul.mubr.f32.gmra.mxu0 %v5644
  %v5804 = vpop.f32.mrf.mxu0
  %v5805 = vadd.f32 %v5721, %v5804
  %v5806 = vpop.f32.mrf.mxu0
  %v5807 = vadd.f32 %v5725, %v5806
  %5808 = vmatprep.mubr.f32.mxu0 0.0
  %5809 = vmatmul.mubr.f32.gmra.mxu0 %v5645
  %v5810 = vpop.f32.mrf.mxu0
  %v5811 = vadd.f32 %v5721, %v5810
  %v5812 = vpop.f32.mrf.mxu0
  %v5813 = vadd.f32 %v5725, %v5812
  %5814 = vmatprep.mubr.f32.mxu0 0.0
  %5815 = vmatmul.mubr.f32.gmra.mxu0 %v5646
  %v5816 = vpop.f32.mrf.mxu0
  %v5817 = vadd.f32 %v5721, %v5816
  %v5818 = vpop.f32.mrf.mxu0
  %v5819 = vadd.f32 %v5725, %v5818
  %5820 = vmatprep.mubr.f32.mxu0 0.0
  %5821 = vmatmul.mubr.f32.gmra.mxu0 %v5647
  %v5822 = vpop.f32.mrf.mxu0
  %v5823 = vadd.f32 %v5721, %v5822
  %v5824 = vpop.f32.mrf.mxu0
  %v5825 = vadd.f32 %v5725, %v5824
  %5826 = vmatprep.mubr.f32.mxu0 0.0
  %5827 = vmatmul.mubr.f32.gmra.mxu0 %v5648
  %v5828 = vpop.f32.mrf.mxu0
  %v5829 = vadd.f32 %v5721, %v5828
  %v5830 = vpop.f32.mrf.mxu0
  %v5831 = vadd.f32 %v5725, %v5830
  %5832 = vmatprep.mubr.f32.mxu0 0.0
  %5833 = vmatmul.mubr.f32.gmra.mxu0 %v5649
  %v5834 = vpop.f32.mrf.mxu0
  %v5835 = vadd.f32 %v5721, %v5834
  %v5836 = vpop.f32.mrf.mxu0
  %v5837 = vadd.f32 %v5725, %v5836
  %5838 = vmatprep.mubr.f32.mxu0 0.0
  %5839 = vmatmul.mubr.f32.gmra.mxu0 %v5650
  %v5840 = vpop.f32.mrf.mxu0
  %v5841 = vadd.f32 %v5721, %v5840
  %v5842 = vpop.f32.mrf.mxu0
  %v5843 = vadd.f32 %v5725, %v5842
  %5844 = vmatprep.mubr.f32.mxu0 0.0
  %5845 = vmatmul.mubr.f32.gmra.mxu0 %v5651
  %v5846 = vpop.f32.mrf.mxu0
  %v5847 = vadd.f32 %v5721, %v5846
  %v5848 = vpop.f32.mrf.mxu0
  %v5849 = vadd.f32 %v5725, %v5848
  %5850 = vdwg.mxu0
  %5851 = vmatprep.subr.mxu0 %v5715
  %5852 = vmatpush1.msra.mxu0 %v5714
  %5853 = vmatprep.subr.mxu0 %v5711
  %5854 = vmatpush1.msra.mxu0 %v5710
  %5855 = vmatprep.subr.mxu0 %v5707
  %5856 = vmatpush1.msra.mxu0 %v5706
  %5857 = vmatprep.subr.mxu0 %v5703
  %5858 = vmatpush1.msra.mxu0 %v5702
  %5859 = vmatprep.subr.mxu0 %v5699
  %5860 = vmatpush1.msra.mxu0 %v5698
  %5861 = vmatprep.subr.mxu0 %v5695
  %5862 = vmatpush1.msra.mxu0 %v5694
  %5863 = vmatprep.subr.mxu0 %v5691
  %5864 = vmatpush1.msra.mxu0 %v5690
  %5865 = vmatprep.subr.mxu0 %v5687
  %5866 = vmatpush1.msra.mxu0 %v5686
  %5867 = vmatprep.subr.mxu0 %v5683
  %5868 = vmatpush1.msra.mxu0 %v5682
  %5869 = vmatprep.subr.mxu0 %v5679
  %5870 = vmatpush1.msra.mxu0 %v5678
  %5871 = vmatprep.subr.mxu0 %v5675
  %5872 = vmatpush1.msra.mxu0 %v5674
  %5873 = vmatprep.subr.mxu0 %v5671
  %5874 = vmatpush1.msra.mxu0 %v5670
  %5875 = vmatprep.subr.mxu0 %v5667
  %5876 = vmatpush1.msra.mxu0 %v5666
  %5877 = vmatprep.subr.mxu0 %v5663
  %5878 = vmatpush1.msra.mxu0 %v5662
  %5879 = vmatprep.subr.mxu0 %v5659
  %5880 = vmatpush1.msra.mxu0 %v5658
  %5881 = vmatprep.subr.mxu0 %v5655
  %5882 = vmatpush1.msra.mxu0 %v5654
  %5883 = vmatprep.subr.mxu0 0.0
  %5884 = vmatpush2.msra.mxu0 0.0
  %5885 = vmatprep.subr.mxu0 0.0
  %5886 = vmatpush2.msra.mxu0 0.0
  %5887 = vmatprep.subr.mxu0 0.0
  %5888 = vmatpush2.msra.mxu0 0.0
  %5889 = vmatprep.subr.mxu0 0.0
  %5890 = vmatpush2.msra.mxu0 0.0
  %5891 = vmatprep.subr.mxu0 0.0
  %5892 = vmatpush2.msra.mxu0 0.0
  %5893 = vmatprep.subr.mxu0 0.0
  %5894 = vmatpush2.msra.mxu0 0.0
  %5895 = vmatprep.subr.mxu0 0.0
  %5896 = vmatpush2.msra.mxu0 0.0
  %5897 = vmatprep.subr.mxu0 0.0
  %5898 = vmatpush2.msra.mxu0 0.0
  %5899 = vmatprep.subr.mxu0 0.0
  %5900 = vmatpush2.msra.mxu0 0.0
  %5901 = vmatprep.subr.mxu0 0.0
  %5902 = vmatpush2.msra.mxu0 0.0
  %5903 = vmatprep.subr.mxu0 0.0
  %5904 = vmatpush2.msra.mxu0 0.0
  %5905 = vmatprep.subr.mxu0 0.0
  %5906 = vmatpush2.msra.mxu0 0.0
  %5907 = vmatprep.subr.mxu0 0.0
  %5908 = vmatpush2.msra.mxu0 0.0
  %5909 = vmatprep.subr.mxu0 0.0
  %5910 = vmatpush2.msra.mxu0 0.0
  %5911 = vmatprep.subr.mxu0 0.0
  %5912 = vmatpush2.msra.mxu0 0.0
  %5913 = vmatprep.subr.mxu0 0.0
  %5914 = vmatpush2.msra.mxu0 0.0
  %5915 = vmatprep.mubr.f32.mxu0 0.0
  %5916 = vmatmul.mubr.f32.gmra.mxu0 %v5644
  %v5917 = vpop.f32.mrf.mxu0
  %v5918 = vadd.f32 %v5729, %v5917
  %v5919 = vpop.f32.mrf.mxu0
  %v5920 = vadd.f32 %v5733, %v5919
  %5921 = vmatprep.mubr.f32.mxu0 0.0
  %5922 = vmatmul.mubr.f32.gmra.mxu0 %v5645
  %v5923 = vpop.f32.mrf.mxu0
  %v5924 = vadd.f32 %v5729, %v5923
  %v5925 = vpop.f32.mrf.mxu0
  %v5926 = vadd.f32 %v5733, %v5925
  %5927 = vmatprep.mubr.f32.mxu0 0.0
  %5928 = vmatmul.mubr.f32.gmra.mxu0 %v5646
  %v5929 = vpop.f32.mrf.mxu0
  %v5930 = vadd.f32 %v5729, %v5929
  %v5931 = vpop.f32.mrf.mxu0
  %v5932 = vadd.f32 %v5733, %v5931
  %5933 = vmatprep.mubr.f32.mxu0 0.0
  %5934 = vmatmul.mubr.f32.gmra.mxu0 %v5647
  %v5935 = vpop.f32.mrf.mxu0
  %v5936 = vadd.f32 %v5729, %v5935
  %v5937 = vpop.f32.mrf.mxu0
  %v5938 = vadd.f32 %v5733, %v5937
  %5939 = vmatprep.mubr.f32.mxu0 0.0
  %5940 = vmatmul.mubr.f32.gmra.mxu0 %v5648
  %v5941 = vpop.f32.mrf.mxu0
  %v5942 = vadd.f32 %v5729, %v5941
  %v5943 = vpop.f32.mrf.mxu0
  %v5944 = vadd.f32 %v5733, %v5943
  %5945 = vmatprep.mubr.f32.mxu0 0.0
  %5946 = vmatmul.mubr.f32.gmra.mxu0 %v5649
  %v5947 = vpop.f32.mrf.mxu0
  %v5948 = vadd.f32 %v5729, %v5947
  %v5949 = vpop.f32.mrf.mxu0
  %v5950 = vadd.f32 %v5733, %v5949
  %5951 = vmatprep.mubr.f32.mxu0 0.0
  %5952 = vmatmul.mubr.f32.gmra.mxu0 %v5650
  %v5953 = vpop.f32.mrf.mxu0
  %v5954 = vadd.f32 %v5729, %v5953
  %v5955 = vpop.f32.mrf.mxu0
  %v5956 = vadd.f32 %v5733, %v5955
  %5957 = vmatprep.mubr.f32.mxu0 0.0
  %5958 = vmatmul.mubr.f32.gmra.mxu0 %v5651
  %v5959 = vpop.f32.mrf.mxu0
  %v5960 = vadd.f32 %v5729, %v5959
  %v5961 = vpop.f32.mrf.mxu0
  %v5962 = vadd.f32 %v5733, %v5961
  %5963 = vdwg.mxu0
  %5964 = vst [vmem:[#allocation2] sm:$0xff] %v5805
  %5965 = vst [vmem:[#allocation2 + $0x8] sm:$0xff] %v5807
  %5966 = vst [vmem:[#allocation2 + $0x10] sm:$0xff] %v5918
  %5967 = vst [vmem:[#allocation2 + $0x18] sm:$0xff] %v5920
  %5968 = vst [vmem:[#allocation2 + $0x20] sm:$0xff] %v5811
  %5969 = vst [vmem:[#allocation2 + $0x28] sm:$0xff] %v5813
  %5970 = vst [vmem:[#allocation2 + $0x30] sm:$0xff] %v5924
  %5971 = vst [vmem:[#allocation2 + $0x38] sm:$0xff] %v5926
  %5972 = vst [vmem:[#allocation2 + $0x40] sm:$0xff] %v5817
  %5973 = vst [vmem:[#allocation2 + $0x48] sm:$0xff] %v5819
  %5974 = vst [vmem:[#allocation2 + $0x50] sm:$0xff] %v5930
  %5975 = vst [vmem:[#allocation2 + $0x58] sm:$0xff] %v5932
  %5976 = vst [vmem:[#allocation2 + $0x60] sm:$0xff] %v5823
  %5977 = vst [vmem:[#allocation2 + $0x68] sm:$0xff] %v5825
  %5978 = vst [vmem:[#allocation2 + $0x70] sm:$0xff] %v5936
  %5979 = vst [vmem:[#allocation2 + $0x78] sm:$0xff] %v5938
  %5980 = vst [vmem:[#allocation2 + $0x80] sm:$0xff] %v5829
  %5981 = vst [vmem:[#allocation2 + $0x88] sm:$0xff] %v5831
  %5982 = vst [vmem:[#allocation2 + $0x90] sm:$0xff] %v5942
  %5983 = vst [vmem:[#allocation2 + $0x98] sm:$0xff] %v5944
  %5984 = vst [vmem:[#allocation2 + $0xa0] sm:$0xff] %v5835
  %5985 = vst [vmem:[#allocation2 + $0xa8] sm:$0xff] %v5837
  %5986 = vst [vmem:[#allocation2 + $0xb0] sm:$0xff] %v5948
  %5987 = vst [vmem:[#allocation2 + $0xb8] sm:$0xff] %v5950
  %5988 = vst [vmem:[#allocation2 + $0xc0] sm:$0xff] %v5841
  %5989 = vst [vmem:[#allocation2 + $0xc8] sm:$0xff] %v5843
  %5990 = vst [vmem:[#allocation2 + $0xd0] sm:$0xff] %v5954
  %5991 = vst [vmem:[#allocation2 + $0xd8] sm:$0xff] %v5956
  %5992 = vst [vmem:[#allocation2 + $0xe0] sm:$0xff] %v5847
  %5993 = vst [vmem:[#allocation2 + $0xe8] sm:$0xff] %v5849
  %5994 = vst [vmem:[#allocation2 + $0xf0] sm:$0xff] %v5960
  %5995 = vst [vmem:[#allocation2 + $0xf8] sm:$0xff] %v5962
  %5996 = vst [vmem:[#allocation4] sm:$0xff] 0.0
  %5997 = vst [vmem:[#allocation5] sm:$0xff] 0.0
  %v5998 = vld [vmem:[%s11] sm:$0xff]
  %v5999 = vld [vmem:[%s11 + $0x8] sm:$0xff]
  %v6000 = vld [vmem:[%s11 + $0x10] sm:$0xff]
  %v6001 = vld [vmem:[%s11 + $0x18] sm:$0xff]
  %v6002 = vld [vmem:[%s11 + $0x20] sm:$0xff]
  %v6003 = vld [vmem:[%s11 + $0x28] sm:$0xff]
  %v6004 = vld [vmem:[%s11 + $0x30] sm:$0xff]
  %v6005 = vld [vmem:[%s11 + $0x38] sm:$0xff]
  %v6006 = vld [vmem:[%s11 + $0x40] sm:$0xff]
  %v6007 = vld [vmem:[%s11 + $0x48] sm:$0xff]
  %v6008 = vld [vmem:[%s11 + $0x50] sm:$0xff]
  %v6009 = vld [vmem:[%s11 + $0x58] sm:$0xff]
  %v6010 = vld [vmem:[%s11 + $0x60] sm:$0xff]
  %v6011 = vld [vmem:[%s11 + $0x68] sm:$0xff]
  %v6012 = vld [vmem:[%s11 + $0x70] sm:$0xff]
  %v6013 = vld [vmem:[%s11 + $0x78] sm:$0xff]
  %v6014 = vld [vmem:[%s11 + $0x80] sm:$0xff]
  %v6015 = vld [vmem:[%s11 + $0x88] sm:$0xff]
  %v6016 = vld [vmem:[%s11 + $0x90] sm:$0xff]
  %v6017 = vld [vmem:[%s11 + $0x98] sm:$0xff]
  %v6018 = vld [vmem:[%s11 + $0xa0] sm:$0xff]
  %v6019 = vld [vmem:[%s11 + $0xa8] sm:$0xff]
  %v6020 = vld [vmem:[%s11 + $0xb0] sm:$0xff]
  %v6021 = vld [vmem:[%s11 + $0xb8] sm:$0xff]
  %v6022 = vld [vmem:[%s11 + $0xc0] sm:$0xff]
  %v6023 = vld [vmem:[%s11 + $0xc8] sm:$0xff]
  %v6024 = vld [vmem:[%s11 + $0xd0] sm:$0xff]
  %v6025 = vld [vmem:[%s11 + $0xd8] sm:$0xff]
  %v6026 = vld [vmem:[%s11 + $0xe0] sm:$0xff]
  %v6027 = vld [vmem:[%s11 + $0xe8] sm:$0xff]
  %v6028 = vld [vmem:[%s11 + $0xf0] sm:$0xff]
  %v6029 = vld [vmem:[%s11 + $0xf8] sm:$0xff]
  %v6030 = vld [vmem:[%s11 + $0x100] sm:$0xff]
  %v6031 = vld [vmem:[%s11 + $0x108] sm:$0xff]
  %v6032 = vld [vmem:[%s11 + $0x110] sm:$0xff]
  %v6033 = vld [vmem:[%s11 + $0x118] sm:$0xff]
  %v6034 = vld [vmem:[%s11 + $0x120] sm:$0xff]
  %v6035 = vld [vmem:[%s11 + $0x128] sm:$0xff]
  %v6036 = vld [vmem:[%s11 + $0x130] sm:$0xff]
  %v6037 = vld [vmem:[%s11 + $0x138] sm:$0xff]
  %v6038 = vld [vmem:[%s11 + $0x140] sm:$0xff]
  %v6039 = vld [vmem:[%s11 + $0x148] sm:$0xff]
  %v6040 = vld [vmem:[%s11 + $0x150] sm:$0xff]
  %v6041 = vld [vmem:[%s11 + $0x158] sm:$0xff]
  %v6042 = vld [vmem:[%s11 + $0x160] sm:$0xff]
  %v6043 = vld [vmem:[%s11 + $0x168] sm:$0xff]
  %v6044 = vld [vmem:[%s11 + $0x170] sm:$0xff]
  %v6045 = vld [vmem:[%s11 + $0x178] sm:$0xff]
  %v6046 = vld [vmem:[%s11 + $0x180] sm:$0xff]
  %v6047 = vld [vmem:[%s11 + $0x188] sm:$0xff]
  %v6048 = vld [vmem:[%s11 + $0x190] sm:$0xff]
  %v6049 = vld [vmem:[%s11 + $0x198] sm:$0xff]
  %v6050 = vld [vmem:[%s11 + $0x1a0] sm:$0xff]
  %v6051 = vld [vmem:[%s11 + $0x1a8] sm:$0xff]
  %v6052 = vld [vmem:[%s11 + $0x1b0] sm:$0xff]
  %v6053 = vld [vmem:[%s11 + $0x1b8] sm:$0xff]
  %v6054 = vld [vmem:[%s11 + $0x1c0] sm:$0xff]
  %v6055 = vld [vmem:[%s11 + $0x1c8] sm:$0xff]
  %v6056 = vld [vmem:[%s11 + $0x1d0] sm:$0xff]
  %v6057 = vld [vmem:[%s11 + $0x1d8] sm:$0xff]
  %v6058 = vld [vmem:[%s11 + $0x1e0] sm:$0xff]
  %v6059 = vld [vmem:[%s11 + $0x1e8] sm:$0xff]
  %v6060 = vld [vmem:[%s11 + $0x1f0] sm:$0xff]
  %v6061 = vld [vmem:[%s11 + $0x1f8] sm:$0xff]
  %v6062 = vld [vmem:[%s482] sm:$0xff]
  %v6063 = vld [vmem:[%s482 + $0x8] sm:$0xff]
  %v6064 = vld [vmem:[%s482 + $0x10] sm:$0xff]
  %v6065 = vld [vmem:[%s482 + $0x18] sm:$0xff]
  %v6066 = vld [vmem:[#allocation4] sm:$0xff]
  %6067 = vmatprep.subr.mxu0 %v6059
  %6068 = vmatpush1.msra.mxu0 %v6058
  %6069 = vmatprep.subr.mxu0 %v6055
  %6070 = vmatpush1.msra.mxu0 %v6054
  %6071 = vmatprep.subr.mxu0 %v6051
  %6072 = vmatpush1.msra.mxu0 %v6050
  %6073 = vmatprep.subr.mxu0 %v6047
  %6074 = vmatpush1.msra.mxu0 %v6046
  %6075 = vmatprep.subr.mxu0 %v6043
  %6076 = vmatpush1.msra.mxu0 %v6042
  %6077 = vmatprep.subr.mxu0 %v6039
  %6078 = vmatpush1.msra.mxu0 %v6038
  %6079 = vmatprep.subr.mxu0 %v6035
  %6080 = vmatpush1.msra.mxu0 %v6034
  %6081 = vmatprep.subr.mxu0 %v6031
  %6082 = vmatpush1.msra.mxu0 %v6030
  %6083 = vmatprep.subr.mxu0 %v6027
  %6084 = vmatpush1.msra.mxu0 %v6026
  %6085 = vmatprep.subr.mxu0 %v6023
  %6086 = vmatpush1.msra.mxu0 %v6022
  %6087 = vmatprep.subr.mxu0 %v6019
  %6088 = vmatpush1.msra.mxu0 %v6018
  %6089 = vmatprep.subr.mxu0 %v6015
  %6090 = vmatpush1.msra.mxu0 %v6014
  %6091 = vmatprep.subr.mxu0 %v6011
  %6092 = vmatpush1.msra.mxu0 %v6010
  %6093 = vmatprep.subr.mxu0 %v6007
  %6094 = vmatpush1.msra.mxu0 %v6006
  %6095 = vmatprep.subr.mxu0 %v6003
  %6096 = vmatpush1.msra.mxu0 %v6002
  %6097 = vmatprep.subr.mxu0 %v5999
  %6098 = vmatpush1.msra.mxu0 %v5998
  %6099 = vmatprep.subr.mxu0 0.0
  %6100 = vmatpush2.msra.mxu0 0.0
  %6101 = vmatprep.subr.mxu0 0.0
  %6102 = vmatpush2.msra.mxu0 0.0
  %6103 = vmatprep.subr.mxu0 0.0
  %6104 = vmatpush2.msra.mxu0 0.0
  %6105 = vmatprep.subr.mxu0 0.0
  %6106 = vmatpush2.msra.mxu0 0.0
  %6107 = vmatprep.subr.mxu0 0.0
  %6108 = vmatpush2.msra.mxu0 0.0
  %6109 = vmatprep.subr.mxu0 0.0
  %6110 = vmatpush2.msra.mxu0 0.0
  %6111 = vmatprep.subr.mxu0 0.0
  %6112 = vmatpush2.msra.mxu0 0.0
  %6113 = vmatprep.subr.mxu0 0.0
  %6114 = vmatpush2.msra.mxu0 0.0
  %6115 = vmatprep.subr.mxu0 0.0
  %6116 = vmatpush2.msra.mxu0 0.0
  %6117 = vmatprep.subr.mxu0 0.0
  %6118 = vmatpush2.msra.mxu0 0.0
  %6119 = vmatprep.subr.mxu0 0.0
  %6120 = vmatpush2.msra.mxu0 0.0
  %6121 = vmatprep.subr.mxu0 0.0
  %6122 = vmatpush2.msra.mxu0 0.0
  %6123 = vmatprep.subr.mxu0 0.0
  %6124 = vmatpush2.msra.mxu0 0.0
  %6125 = vmatprep.subr.mxu0 0.0
  %6126 = vmatpush2.msra.mxu0 0.0
  %6127 = vmatprep.subr.mxu0 0.0
  %6128 = vmatpush2.msra.mxu0 0.0
  %6129 = vmatprep.subr.mxu0 0.0
  %6130 = vmatpush2.msra.mxu0 0.0
  %6131 = vmatprep.mubr.f32.mxu0 0.0
  %6132 = vmatmul.mubr.f32.gmra.mxu0 %v6066
  %v6133 = vpop.f32.mrf.mxu0
  %v6134 = vadd.f32 0.0, %v6133
  %v6135 = vpop.f32.mrf.mxu0
  %v6136 = vadd.f32 0.0, %v6135
  %6137 = vdwg.mxu0
  %6138 = vmatprep.subr.mxu0 %v6061
  %6139 = vmatpush1.msra.mxu0 %v6060
  %6140 = vmatprep.subr.mxu0 %v6057
  %6141 = vmatpush1.msra.mxu0 %v6056
  %6142 = vmatprep.subr.mxu0 %v6053
  %6143 = vmatpush1.msra.mxu0 %v6052
  %6144 = vmatprep.subr.mxu0 %v6049
  %6145 = vmatpush1.msra.mxu0 %v6048
  %6146 = vmatprep.subr.mxu0 %v6045
  %6147 = vmatpush1.msra.mxu0 %v6044
  %6148 = vmatprep.subr.mxu0 %v6041
  %6149 = vmatpush1.msra.mxu0 %v6040
  %6150 = vmatprep.subr.mxu0 %v6037
  %6151 = vmatpush1.msra.mxu0 %v6036
  %6152 = vmatprep.subr.mxu0 %v6033
  %6153 = vmatpush1.msra.mxu0 %v6032
  %6154 = vmatprep.subr.mxu0 %v6029
  %6155 = vmatpush1.msra.mxu0 %v6028
  %6156 = vmatprep.subr.mxu0 %v6025
  %6157 = vmatpush1.msra.mxu0 %v6024
  %6158 = vmatprep.subr.mxu0 %v6021
  %6159 = vmatpush1.msra.mxu0 %v6020
  %6160 = vmatprep.subr.mxu0 %v6017
  %6161 = vmatpush1.msra.mxu0 %v6016
  %6162 = vmatprep.subr.mxu0 %v6013
  %6163 = vmatpush1.msra.mxu0 %v6012
  %6164 = vmatprep.subr.mxu0 %v6009
  %6165 = vmatpush1.msra.mxu0 %v6008
  %6166 = vmatprep.subr.mxu0 %v6005
  %6167 = vmatpush1.msra.mxu0 %v6004
  %6168 = vmatprep.subr.mxu0 %v6001
  %6169 = vmatpush1.msra.mxu0 %v6000
  %6170 = vmatprep.subr.mxu0 0.0
  %6171 = vmatpush2.msra.mxu0 0.0
  %6172 = vmatprep.subr.mxu0 0.0
  %6173 = vmatpush2.msra.mxu0 0.0
  %6174 = vmatprep.subr.mxu0 0.0
  %6175 = vmatpush2.msra.mxu0 0.0
  %6176 = vmatprep.subr.mxu0 0.0
  %6177 = vmatpush2.msra.mxu0 0.0
  %6178 = vmatprep.subr.mxu0 0.0
  %6179 = vmatpush2.msra.mxu0 0.0
  %6180 = vmatprep.subr.mxu0 0.0
  %6181 = vmatpush2.msra.mxu0 0.0
  %6182 = vmatprep.subr.mxu0 0.0
  %6183 = vmatpush2.msra.mxu0 0.0
  %6184 = vmatprep.subr.mxu0 0.0
  %6185 = vmatpush2.msra.mxu0 0.0
  %6186 = vmatprep.subr.mxu0 0.0
  %6187 = vmatpush2.msra.mxu0 0.0
  %6188 = vmatprep.subr.mxu0 0.0
  %6189 = vmatpush2.msra.mxu0 0.0
  %6190 = vmatprep.subr.mxu0 0.0
  %6191 = vmatpush2.msra.mxu0 0.0
  %6192 = vmatprep.subr.mxu0 0.0
  %6193 = vmatpush2.msra.mxu0 0.0
  %6194 = vmatprep.subr.mxu0 0.0
  %6195 = vmatpush2.msra.mxu0 0.0
  %6196 = vmatprep.subr.mxu0 0.0
  %6197 = vmatpush2.msra.mxu0 0.0
  %6198 = vmatprep.subr.mxu0 0.0
  %6199 = vmatpush2.msra.mxu0 0.0
  %6200 = vmatprep.subr.mxu0 0.0
  %6201 = vmatpush2.msra.mxu0 0.0
  %6202 = vmatprep.mubr.f32.mxu0 0.0
  %6203 = vmatmul.mubr.f32.gmra.mxu0 %v6066
  %v6204 = vpop.f32.mrf.mxu0
  %v6205 = vadd.f32 0.0, %v6204
  %v6206 = vpop.f32.mrf.mxu0
  %v6207 = vadd.f32 0.0, %v6206
  %6208 = vdwg.mxu0
  %v6209 = vadd.f32 %v6062, %v6134
  %v6210 = vadd.f32 %v6063, %v6136
  %v6211 = vadd.f32 %v6064, %v6205
  %v6212 = vadd.f32 %v6065, %v6207
  %v6213 = vxor.u32 %v6209, 2147483648
  %v6214 = vmul.f32 %v6213, 1.442695
  %v6215 = vpow.pop %v6214
  %v6216 = vadd.f32 %v6215, 1.0
  %v6217 = vrcp.pop %v6216
  %v6218 = vmul.f32 1.0, %v6217
  %v6219 = vxor.u32 %v6210, 2147483648
  %v6220 = vmul.f32 %v6219, 1.442695
  %v6221 = vpow.pop %v6220
  %v6222 = vadd.f32 %v6221, 1.0
  %v6223 = vrcp.pop %v6222
  %v6224 = vmul.f32 1.0, %v6223
  %v6225 = vtanh.pop %v6211
  %v6226 = vxor.u32 %v6212, 2147483648
  %v6227 = vmul.f32 %v6226, 1.442695
  %v6228 = vpow.pop %v6227
  %v6229 = vadd.f32 %v6228, 1.0
  %v6230 = vrcp.pop %v6229
  %v6231 = vmul.f32 1.0, %v6230
  %v6232 = vld [vmem:[#allocation5] sm:$0xff]
  %v6233 = vmul.f32 %v6224, %v6232
  %v6234 = vmul.f32 %v6218, %v6225
  %v6235 = vadd.f32 %v6233, %v6234
  %v6236 = vtanh.pop %v6235
  %v6237 = vmul.f32 %v6231, %v6236
  %6238 = vst [vmem:[#allocation5] sm:$0xff] %v6235
  %6239 = vst [vmem:[#allocation4] sm:$0xff] %v6237
  %v6240 = vld [vmem:[%s664] sm:$0xff]
  %v6241 = vld [vmem:[%s664 + $0x8] sm:$0xff]
  %v6242 = vld [vmem:[%s664 + $0x10] sm:$0xff]
  %v6243 = vld [vmem:[%s664 + $0x18] sm:$0xff]
  %v6244 = vld [vmem:[#allocation4] sm:$0xff]
  %6245 = vmatprep.subr.mxu0 %v6059
  %6246 = vmatpush1.msra.mxu0 %v6058
  %6247 = vmatprep.subr.mxu0 %v6055
  %6248 = vmatpush1.msra.mxu0 %v6054
  %6249 = vmatprep.subr.mxu0 %v6051
  %6250 = vmatpush1.msra.mxu0 %v6050
  %6251 = vmatprep.subr.mxu0 %v6047
  %6252 = vmatpush1.msra.mxu0 %v6046
  %6253 = vmatprep.subr.mxu0 %v6043
  %6254 = vmatpush1.msra.mxu0 %v6042
  %6255 = vmatprep.subr.mxu0 %v6039
  %6256 = vmatpush1.msra.mxu0 %v6038
  %6257 = vmatprep.subr.mxu0 %v6035
  %6258 = vmatpush1.msra.mxu0 %v6034
  %6259 = vmatprep.subr.mxu0 %v6031
  %6260 = vmatpush1.msra.mxu0 %v6030
  %6261 = vmatprep.subr.mxu0 %v6027
  %6262 = vmatpush1.msra.mxu0 %v6026
  %6263 = vmatprep.subr.mxu0 %v6023
  %6264 = vmatpush1.msra.mxu0 %v6022
  %6265 = vmatprep.subr.mxu0 %v6019
  %6266 = vmatpush1.msra.mxu0 %v6018
  %6267 = vmatprep.subr.mxu0 %v6015
  %6268 = vmatpush1.msra.mxu0 %v6014
  %6269 = vmatprep.subr.mxu0 %v6011
  %6270 = vmatpush1.msra.mxu0 %v6010
  %6271 = vmatprep.subr.mxu0 %v6007
  %6272 = vmatpush1.msra.mxu0 %v6006
  %6273 = vmatprep.subr.mxu0 %v6003
  %6274 = vmatpush1.msra.mxu0 %v6002
  %6275 = vmatprep.subr.mxu0 %v5999
  %6276 = vmatpush1.msra.mxu0 %v5998
  %6277 = vmatprep.subr.mxu0 0.0
  %6278 = vmatpush2.msra.mxu0 0.0
  %6279 = vmatprep.subr.mxu0 0.0
  %6280 = vmatpush2.msra.mxu0 0.0
  %6281 = vmatprep.subr.mxu0 0.0
  %6282 = vmatpush2.msra.mxu0 0.0
  %6283 = vmatprep.subr.mxu0 0.0
  %6284 = vmatpush2.msra.mxu0 0.0
  %6285 = vmatprep.subr.mxu0 0.0
  %6286 = vmatpush2.msra.mxu0 0.0
  %6287 = vmatprep.subr.mxu0 0.0
  %6288 = vmatpush2.msra.mxu0 0.0
  %6289 = vmatprep.subr.mxu0 0.0
  %6290 = vmatpush2.msra.mxu0 0.0
  %6291 = vmatprep.subr.mxu0 0.0
  %6292 = vmatpush2.msra.mxu0 0.0
  %6293 = vmatprep.subr.mxu0 0.0
  %6294 = vmatpush2.msra.mxu0 0.0
  %6295 = vmatprep.subr.mxu0 0.0
  %6296 = vmatpush2.msra.mxu0 0.0
  %6297 = vmatprep.subr.mxu0 0.0
  %6298 = vmatpush2.msra.mxu0 0.0
  %6299 = vmatprep.subr.mxu0 0.0
  %6300 = vmatpush2.msra.mxu0 0.0
  %6301 = vmatprep.subr.mxu0 0.0
  %6302 = vmatpush2.msra.mxu0 0.0
  %6303 = vmatprep.subr.mxu0 0.0
  %6304 = vmatpush2.msra.mxu0 0.0
  %6305 = vmatprep.subr.mxu0 0.0
  %6306 = vmatpush2.msra.mxu0 0.0
  %6307 = vmatprep.subr.mxu0 0.0
  %6308 = vmatpush2.msra.mxu0 0.0
  %6309 = vmatprep.mubr.f32.mxu0 0.0
  %6310 = vmatmul.mubr.f32.gmra.mxu0 %v6244
  %v6311 = vpop.f32.mrf.mxu0
  %v6312 = vadd.f32 0.0, %v6311
  %v6313 = vpop.f32.mrf.mxu0
  %v6314 = vadd.f32 0.0, %v6313
  %6315 = vdwg.mxu0
  %6316 = vmatprep.subr.mxu0 %v6061
  %6317 = vmatpush1.msra.mxu0 %v6060
  %6318 = vmatprep.subr.mxu0 %v6057
  %6319 = vmatpush1.msra.mxu0 %v6056
  %6320 = vmatprep.subr.mxu0 %v6053
  %6321 = vmatpush1.msra.mxu0 %v6052
  %6322 = vmatprep.subr.mxu0 %v6049
  %6323 = vmatpush1.msra.mxu0 %v6048
  %6324 = vmatprep.subr.mxu0 %v6045
  %6325 = vmatpush1.msra.mxu0 %v6044
  %6326 = vmatprep.subr.mxu0 %v6041
  %6327 = vmatpush1.msra.mxu0 %v6040
  %6328 = vmatprep.subr.mxu0 %v6037
  %6329 = vmatpush1.msra.mxu0 %v6036
  %6330 = vmatprep.subr.mxu0 %v6033
  %6331 = vmatpush1.msra.mxu0 %v6032
  %6332 = vmatprep.subr.mxu0 %v6029
  %6333 = vmatpush1.msra.mxu0 %v6028
  %6334 = vmatprep.subr.mxu0 %v6025
  %6335 = vmatpush1.msra.mxu0 %v6024
  %6336 = vmatprep.subr.mxu0 %v6021
  %6337 = vmatpush1.msra.mxu0 %v6020
  %6338 = vmatprep.subr.mxu0 %v6017
  %6339 = vmatpush1.msra.mxu0 %v6016
  %6340 = vmatprep.subr.mxu0 %v6013
  %6341 = vmatpush1.msra.mxu0 %v6012
  %6342 = vmatprep.subr.mxu0 %v6009
  %6343 = vmatpush1.msra.mxu0 %v6008
  %6344 = vmatprep.subr.mxu0 %v6005
  %6345 = vmatpush1.msra.mxu0 %v6004
  %6346 = vmatprep.subr.mxu0 %v6001
  %6347 = vmatpush1.msra.mxu0 %v6000
  %6348 = vmatprep.subr.mxu0 0.0
  %6349 = vmatpush2.msra.mxu0 0.0
  %6350 = vmatprep.subr.mxu0 0.0
  %6351 = vmatpush2.msra.mxu0 0.0
  %6352 = vmatprep.subr.mxu0 0.0
  %6353 = vmatpush2.msra.mxu0 0.0
  %6354 = vmatprep.subr.mxu0 0.0
  %6355 = vmatpush2.msra.mxu0 0.0
  %6356 = vmatprep.subr.mxu0 0.0
  %6357 = vmatpush2.msra.mxu0 0.0
  %6358 = vmatprep.subr.mxu0 0.0
  %6359 = vmatpush2.msra.mxu0 0.0
  %6360 = vmatprep.subr.mxu0 0.0
  %6361 = vmatpush2.msra.mxu0 0.0
  %6362 = vmatprep.subr.mxu0 0.0
  %6363 = vmatpush2.msra.mxu0 0.0
  %6364 = vmatprep.subr.mxu0 0.0
  %6365 = vmatpush2.msra.mxu0 0.0
  %6366 = vmatprep.subr.mxu0 0.0
  %6367 = vmatpush2.msra.mxu0 0.0
  %6368 = vmatprep.subr.mxu0 0.0
  %6369 = vmatpush2.msra.mxu0 0.0
  %6370 = vmatprep.subr.mxu0 0.0
  %6371 = vmatpush2.msra.mxu0 0.0
  %6372 = vmatprep.subr.mxu0 0.0
  %6373 = vmatpush2.msra.mxu0 0.0
  %6374 = vmatprep.subr.mxu0 0.0
  %6375 = vmatpush2.msra.mxu0 0.0
  %6376 = vmatprep.subr.mxu0 0.0
  %6377 = vmatpush2.msra.mxu0 0.0
  %6378 = vmatprep.subr.mxu0 0.0
  %6379 = vmatpush2.msra.mxu0 0.0
  %6380 = vmatprep.mubr.f32.mxu0 0.0
  %6381 = vmatmul.mubr.f32.gmra.mxu0 %v6244
  %v6382 = vpop.f32.mrf.mxu0
  %v6383 = vadd.f32 0.0, %v6382
  %v6384 = vpop.f32.mrf.mxu0
  %v6385 = vadd.f32 0.0, %v6384
  %6386 = vdwg.mxu0
  %v6387 = vadd.f32 %v6240, %v6312
  %v6388 = vadd.f32 %v6241, %v6314
  %v6389 = vadd.f32 %v6242, %v6383
  %v6390 = vadd.f32 %v6243, %v6385
  %v6391 = vxor.u32 %v6387, 2147483648
  %v6392 = vmul.f32 %v6391, 1.442695
  %v6393 = vpow.pop %v6392
  %v6394 = vadd.f32 %v6393, 1.0
  %v6395 = vrcp.pop %v6394
  %v6396 = vmul.f32 1.0, %v6395
  %v6397 = vxor.u32 %v6388, 2147483648
  %v6398 = vmul.f32 %v6397, 1.442695
  %v6399 = vpow.pop %v6398
  %v6400 = vadd.f32 %v6399, 1.0
  %v6401 = vrcp.pop %v6400
  %v6402 = vmul.f32 1.0, %v6401
  %v6403 = vtanh.pop %v6389
  %v6404 = vxor.u32 %v6390, 2147483648
  %v6405 = vmul.f32 %v6404, 1.442695
  %v6406 = vpow.pop %v6405
  %v6407 = vadd.f32 %v6406, 1.0
  %v6408 = vrcp.pop %v6407
  %v6409 = vmul.f32 1.0, %v6408
  %v6410 = vld [vmem:[#allocation5] sm:$0xff]
  %v6411 = vmul.f32 %v6402, %v6410
  %v6412 = vmul.f32 %v6396, %v6403
  %v6413 = vadd.f32 %v6411, %v6412
  %v6414 = vtanh.pop %v6413
  %v6415 = vmul.f32 %v6409, %v6414
  %6416 = vst [vmem:[#allocation5] sm:$0xff] %v6413
  %6417 = vst [vmem:[#allocation4] sm:$0xff] %v6415
  %v6418 = vld [vmem:[%s847] sm:$0xff]
  %v6419 = vld [vmem:[%s847 + $0x8] sm:$0xff]
  %v6420 = vld [vmem:[%s847 + $0x10] sm:$0xff]
  %v6421 = vld [vmem:[%s847 + $0x18] sm:$0xff]
  %v6422 = vld [vmem:[#allocation4] sm:$0xff]
  %6423 = vmatprep.subr.mxu0 %v6059
  %6424 = vmatpush1.msra.mxu0 %v6058
  %6425 = vmatprep.subr.mxu0 %v6055
  %6426 = vmatpush1.msra.mxu0 %v6054
  %6427 = vmatprep.subr.mxu0 %v6051
  %6428 = vmatpush1.msra.mxu0 %v6050
  %6429 = vmatprep.subr.mxu0 %v6047
  %6430 = vmatpush1.msra.mxu0 %v6046
  %6431 = vmatprep.subr.mxu0 %v6043
  %6432 = vmatpush1.msra.mxu0 %v6042
  %6433 = vmatprep.subr.mxu0 %v6039
  %6434 = vmatpush1.msra.mxu0 %v6038
  %6435 = vmatprep.subr.mxu0 %v6035
  %6436 = vmatpush1.msra.mxu0 %v6034
  %6437 = vmatprep.subr.mxu0 %v6031
  %6438 = vmatpush1.msra.mxu0 %v6030
  %6439 = vmatprep.subr.mxu0 %v6027
  %6440 = vmatpush1.msra.mxu0 %v6026
  %6441 = vmatprep.subr.mxu0 %v6023
  %6442 = vmatpush1.msra.mxu0 %v6022
  %6443 = vmatprep.subr.mxu0 %v6019
  %6444 = vmatpush1.msra.mxu0 %v6018
  %6445 = vmatprep.subr.mxu0 %v6015
  %6446 = vmatpush1.msra.mxu0 %v6014
  %6447 = vmatprep.subr.mxu0 %v6011
  %6448 = vmatpush1.msra.mxu0 %v6010
  %6449 = vmatprep.subr.mxu0 %v6007
  %6450 = vmatpush1.msra.mxu0 %v6006
  %6451 = vmatprep.subr.mxu0 %v6003
  %6452 = vmatpush1.msra.mxu0 %v6002
  %6453 = vmatprep.subr.mxu0 %v5999
  %6454 = vmatpush1.msra.mxu0 %v5998
  %6455 = vmatprep.subr.mxu0 0.0
  %6456 = vmatpush2.msra.mxu0 0.0
  %6457 = vmatprep.subr.mxu0 0.0
  %6458 = vmatpush2.msra.mxu0 0.0
  %6459 = vmatprep.subr.mxu0 0.0
  %6460 = vmatpush2.msra.mxu0 0.0
  %6461 = vmatprep.subr.mxu0 0.0
  %6462 = vmatpush2.msra.mxu0 0.0
  %6463 = vmatprep.subr.mxu0 0.0
  %6464 = vmatpush2.msra.mxu0 0.0
  %6465 = vmatprep.subr.mxu0 0.0
  %6466 = vmatpush2.msra.mxu0 0.0
  %6467 = vmatprep.subr.mxu0 0.0
  %6468 = vmatpush2.msra.mxu0 0.0
  %6469 = vmatprep.subr.mxu0 0.0
  %6470 = vmatpush2.msra.mxu0 0.0
  %6471 = vmatprep.subr.mxu0 0.0
  %6472 = vmatpush2.msra.mxu0 0.0
  %6473 = vmatprep.subr.mxu0 0.0
  %6474 = vmatpush2.msra.mxu0 0.0
  %6475 = vmatprep.subr.mxu0 0.0
  %6476 = vmatpush2.msra.mxu0 0.0
  %6477 = vmatprep.subr.mxu0 0.0
  %6478 = vmatpush2.msra.mxu0 0.0
  %6479 = vmatprep.subr.mxu0 0.0
  %6480 = vmatpush2.msra.mxu0 0.0
  %6481 = vmatprep.subr.mxu0 0.0
  %6482 = vmatpush2.msra.mxu0 0.0
  %6483 = vmatprep.subr.mxu0 0.0
  %6484 = vmatpush2.msra.mxu0 0.0
  %6485 = vmatprep.subr.mxu0 0.0
  %6486 = vmatpush2.msra.mxu0 0.0
  %6487 = vmatprep.mubr.f32.mxu0 0.0
  %6488 = vmatmul.mubr.f32.gmra.mxu0 %v6422
  %v6489 = vpop.f32.mrf.mxu0
  %v6490 = vadd.f32 0.0, %v6489
  %v6491 = vpop.f32.mrf.mxu0
  %v6492 = vadd.f32 0.0, %v6491
  %6493 = vdwg.mxu0
  %6494 = vmatprep.subr.mxu0 %v6061
  %6495 = vmatpush1.msra.mxu0 %v6060
  %6496 = vmatprep.subr.mxu0 %v6057
  %6497 = vmatpush1.msra.mxu0 %v6056
  %6498 = vmatprep.subr.mxu0 %v6053
  %6499 = vmatpush1.msra.mxu0 %v6052
  %6500 = vmatprep.subr.mxu0 %v6049
  %6501 = vmatpush1.msra.mxu0 %v6048
  %6502 = vmatprep.subr.mxu0 %v6045
  %6503 = vmatpush1.msra.mxu0 %v6044
  %6504 = vmatprep.subr.mxu0 %v6041
  %6505 = vmatpush1.msra.mxu0 %v6040
  %6506 = vmatprep.subr.mxu0 %v6037
  %6507 = vmatpush1.msra.mxu0 %v6036
  %6508 = vmatprep.subr.mxu0 %v6033
  %6509 = vmatpush1.msra.mxu0 %v6032
  %6510 = vmatprep.subr.mxu0 %v6029
  %6511 = vmatpush1.msra.mxu0 %v6028
  %6512 = vmatprep.subr.mxu0 %v6025
  %6513 = vmatpush1.msra.mxu0 %v6024
  %6514 = vmatprep.subr.mxu0 %v6021
  %6515 = vmatpush1.msra.mxu0 %v6020
  %6516 = vmatprep.subr.mxu0 %v6017
  %6517 = vmatpush1.msra.mxu0 %v6016
  %6518 = vmatprep.subr.mxu0 %v6013
  %6519 = vmatpush1.msra.mxu0 %v6012
  %6520 = vmatprep.subr.mxu0 %v6009
  %6521 = vmatpush1.msra.mxu0 %v6008
  %6522 = vmatprep.subr.mxu0 %v6005
  %6523 = vmatpush1.msra.mxu0 %v6004
  %6524 = vmatprep.subr.mxu0 %v6001
  %6525 = vmatpush1.msra.mxu0 %v6000
  %6526 = vmatprep.subr.mxu0 0.0
  %6527 = vmatpush2.msra.mxu0 0.0
  %6528 = vmatprep.subr.mxu0 0.0
  %6529 = vmatpush2.msra.mxu0 0.0
  %6530 = vmatprep.subr.mxu0 0.0
  %6531 = vmatpush2.msra.mxu0 0.0
  %6532 = vmatprep.subr.mxu0 0.0
  %6533 = vmatpush2.msra.mxu0 0.0
  %6534 = vmatprep.subr.mxu0 0.0
  %6535 = vmatpush2.msra.mxu0 0.0
  %6536 = vmatprep.subr.mxu0 0.0
  %6537 = vmatpush2.msra.mxu0 0.0
  %6538 = vmatprep.subr.mxu0 0.0
  %6539 = vmatpush2.msra.mxu0 0.0
  %6540 = vmatprep.subr.mxu0 0.0
  %6541 = vmatpush2.msra.mxu0 0.0
  %6542 = vmatprep.subr.mxu0 0.0
  %6543 = vmatpush2.msra.mxu0 0.0
  %6544 = vmatprep.subr.mxu0 0.0
  %6545 = vmatpush2.msra.mxu0 0.0
  %6546 = vmatprep.subr.mxu0 0.0
  %6547 = vmatpush2.msra.mxu0 0.0
  %6548 = vmatprep.subr.mxu0 0.0
  %6549 = vmatpush2.msra.mxu0 0.0
  %6550 = vmatprep.subr.mxu0 0.0
  %6551 = vmatpush2.msra.mxu0 0.0
  %6552 = vmatprep.subr.mxu0 0.0
  %6553 = vmatpush2.msra.mxu0 0.0
  %6554 = vmatprep.subr.mxu0 0.0
  %6555 = vmatpush2.msra.mxu0 0.0
  %6556 = vmatprep.subr.mxu0 0.0
  %6557 = vmatpush2.msra.mxu0 0.0
  %6558 = vmatprep.mubr.f32.mxu0 0.0
  %6559 = vmatmul.mubr.f32.gmra.mxu0 %v6422
  %v6560 = vpop.f32.mrf.mxu0
  %v6561 = vadd.f32 0.0, %v6560
  %v6562 = vpop.f32.mrf.mxu0
  %v6563 = vadd.f32 0.0, %v6562
  %6564 = vdwg.mxu0
  %v6565 = vadd.f32 %v6418, %v6490
  %v6566 = vadd.f32 %v6419, %v6492
  %v6567 = vadd.f32 %v6420, %v6561
  %v6568 = vadd.f32 %v6421, %v6563
  %v6569 = vxor.u32 %v6565, 2147483648
  %v6570 = vmul.f32 %v6569, 1.442695
  %v6571 = vpow.pop %v6570
  %v6572 = vadd.f32 %v6571, 1.0
  %v6573 = vrcp.pop %v6572
  %v6574 = vmul.f32 1.0, %v6573
  %v6575 = vxor.u32 %v6566, 2147483648
  %v6576 = vmul.f32 %v6575, 1.442695
  %v6577 = vpow.pop %v6576
  %v6578 = vadd.f32 %v6577, 1.0
  %v6579 = vrcp.pop %v6578
  %v6580 = vmul.f32 1.0, %v6579
  %v6581 = vtanh.pop %v6567
  %v6582 = vxor.u32 %v6568, 2147483648
  %v6583 = vmul.f32 %v6582, 1.442695
  %v6584 = vpow.pop %v6583
  %v6585 = vadd.f32 %v6584, 1.0
  %v6586 = vrcp.pop %v6585
  %v6587 = vmul.f32 1.0, %v6586
  %v6588 = vld [vmem:[#allocation5] sm:$0xff]
  %v6589 = vmul.f32 %v6580, %v6588
  %v6590 = vmul.f32 %v6574, %v6581
  %v6591 = vadd.f32 %v6589, %v6590
  %v6592 = vtanh.pop %v6591
  %v6593 = vmul.f32 %v6587, %v6592
  %6594 = vst [vmem:[#allocation5] sm:$0xff] %v6591
  %6595 = vst [vmem:[#allocation4] sm:$0xff] %v6593
  %v6596 = vld [vmem:[%s1030] sm:$0xff]
  %v6597 = vld [vmem:[%s1030 + $0x8] sm:$0xff]
  %v6598 = vld [vmem:[%s1030 + $0x10] sm:$0xff]
  %v6599 = vld [vmem:[%s1030 + $0x18] sm:$0xff]
  %v6600 = vld [vmem:[#allocation4] sm:$0xff]
  %6601 = vmatprep.subr.mxu0 %v6059
  %6602 = vmatpush1.msra.mxu0 %v6058
  %6603 = vmatprep.subr.mxu0 %v6055
  %6604 = vmatpush1.msra.mxu0 %v6054
  %6605 = vmatprep.subr.mxu0 %v6051
  %6606 = vmatpush1.msra.mxu0 %v6050
  %6607 = vmatprep.subr.mxu0 %v6047
  %6608 = vmatpush1.msra.mxu0 %v6046
  %6609 = vmatprep.subr.mxu0 %v6043
  %6610 = vmatpush1.msra.mxu0 %v6042
  %6611 = vmatprep.subr.mxu0 %v6039
  %6612 = vmatpush1.msra.mxu0 %v6038
  %6613 = vmatprep.subr.mxu0 %v6035
  %6614 = vmatpush1.msra.mxu0 %v6034
  %6615 = vmatprep.subr.mxu0 %v6031
  %6616 = vmatpush1.msra.mxu0 %v6030
  %6617 = vmatprep.subr.mxu0 %v6027
  %6618 = vmatpush1.msra.mxu0 %v6026
  %6619 = vmatprep.subr.mxu0 %v6023
  %6620 = vmatpush1.msra.mxu0 %v6022
  %6621 = vmatprep.subr.mxu0 %v6019
  %6622 = vmatpush1.msra.mxu0 %v6018
  %6623 = vmatprep.subr.mxu0 %v6015
  %6624 = vmatpush1.msra.mxu0 %v6014
  %6625 = vmatprep.subr.mxu0 %v6011
  %6626 = vmatpush1.msra.mxu0 %v6010
  %6627 = vmatprep.subr.mxu0 %v6007
  %6628 = vmatpush1.msra.mxu0 %v6006
  %6629 = vmatprep.subr.mxu0 %v6003
  %6630 = vmatpush1.msra.mxu0 %v6002
  %6631 = vmatprep.subr.mxu0 %v5999
  %6632 = vmatpush1.msra.mxu0 %v5998
  %6633 = vmatprep.subr.mxu0 0.0
  %6634 = vmatpush2.msra.mxu0 0.0
  %6635 = vmatprep.subr.mxu0 0.0
  %6636 = vmatpush2.msra.mxu0 0.0
  %6637 = vmatprep.subr.mxu0 0.0
  %6638 = vmatpush2.msra.mxu0 0.0
  %6639 = vmatprep.subr.mxu0 0.0
  %6640 = vmatpush2.msra.mxu0 0.0
  %6641 = vmatprep.subr.mxu0 0.0
  %6642 = vmatpush2.msra.mxu0 0.0
  %6643 = vmatprep.subr.mxu0 0.0
  %6644 = vmatpush2.msra.mxu0 0.0
  %6645 = vmatprep.subr.mxu0 0.0
  %6646 = vmatpush2.msra.mxu0 0.0
  %6647 = vmatprep.subr.mxu0 0.0
  %6648 = vmatpush2.msra.mxu0 0.0
  %6649 = vmatprep.subr.mxu0 0.0
  %6650 = vmatpush2.msra.mxu0 0.0
  %6651 = vmatprep.subr.mxu0 0.0
  %6652 = vmatpush2.msra.mxu0 0.0
  %6653 = vmatprep.subr.mxu0 0.0
  %6654 = vmatpush2.msra.mxu0 0.0
  %6655 = vmatprep.subr.mxu0 0.0
  %6656 = vmatpush2.msra.mxu0 0.0
  %6657 = vmatprep.subr.mxu0 0.0
  %6658 = vmatpush2.msra.mxu0 0.0
  %6659 = vmatprep.subr.mxu0 0.0
  %6660 = vmatpush2.msra.mxu0 0.0
  %6661 = vmatprep.subr.mxu0 0.0
  %6662 = vmatpush2.msra.mxu0 0.0
  %6663 = vmatprep.subr.mxu0 0.0
  %6664 = vmatpush2.msra.mxu0 0.0
  %6665 = vmatprep.mubr.f32.mxu0 0.0
  %6666 = vmatmul.mubr.f32.gmra.mxu0 %v6600
  %v6667 = vpop.f32.mrf.mxu0
  %v6668 = vadd.f32 0.0, %v6667
  %v6669 = vpop.f32.mrf.mxu0
  %v6670 = vadd.f32 0.0, %v6669
  %6671 = vdwg.mxu0
  %6672 = vmatprep.subr.mxu0 %v6061
  %6673 = vmatpush1.msra.mxu0 %v6060
  %6674 = vmatprep.subr.mxu0 %v6057
  %6675 = vmatpush1.msra.mxu0 %v6056
  %6676 = vmatprep.subr.mxu0 %v6053
  %6677 = vmatpush1.msra.mxu0 %v6052
  %6678 = vmatprep.subr.mxu0 %v6049
  %6679 = vmatpush1.msra.mxu0 %v6048
  %6680 = vmatprep.subr.mxu0 %v6045
  %6681 = vmatpush1.msra.mxu0 %v6044
  %6682 = vmatprep.subr.mxu0 %v6041
  %6683 = vmatpush1.msra.mxu0 %v6040
  %6684 = vmatprep.subr.mxu0 %v6037
  %6685 = vmatpush1.msra.mxu0 %v6036
  %6686 = vmatprep.subr.mxu0 %v6033
  %6687 = vmatpush1.msra.mxu0 %v6032
  %6688 = vmatprep.subr.mxu0 %v6029
  %6689 = vmatpush1.msra.mxu0 %v6028
  %6690 = vmatprep.subr.mxu0 %v6025
  %6691 = vmatpush1.msra.mxu0 %v6024
  %6692 = vmatprep.subr.mxu0 %v6021
  %6693 = vmatpush1.msra.mxu0 %v6020
  %6694 = vmatprep.subr.mxu0 %v6017
  %6695 = vmatpush1.msra.mxu0 %v6016
  %6696 = vmatprep.subr.mxu0 %v6013
  %6697 = vmatpush1.msra.mxu0 %v6012
  %6698 = vmatprep.subr.mxu0 %v6009
  %6699 = vmatpush1.msra.mxu0 %v6008
  %6700 = vmatprep.subr.mxu0 %v6005
  %6701 = vmatpush1.msra.mxu0 %v6004
  %6702 = vmatprep.subr.mxu0 %v6001
  %6703 = vmatpush1.msra.mxu0 %v6000
  %6704 = vmatprep.subr.mxu0 0.0
  %6705 = vmatpush2.msra.mxu0 0.0
  %6706 = vmatprep.subr.mxu0 0.0
  %6707 = vmatpush2.msra.mxu0 0.0
  %6708 = vmatprep.subr.mxu0 0.0
  %6709 = vmatpush2.msra.mxu0 0.0
  %6710 = vmatprep.subr.mxu0 0.0
  %6711 = vmatpush2.msra.mxu0 0.0
  %6712 = vmatprep.subr.mxu0 0.0
  %6713 = vmatpush2.msra.mxu0 0.0
  %6714 = vmatprep.subr.mxu0 0.0
  %6715 = vmatpush2.msra.mxu0 0.0
  %6716 = vmatprep.subr.mxu0 0.0
  %6717 = vmatpush2.msra.mxu0 0.0
  %6718 = vmatprep.subr.mxu0 0.0
  %6719 = vmatpush2.msra.mxu0 0.0
  %6720 = vmatprep.subr.mxu0 0.0
  %6721 = vmatpush2.msra.mxu0 0.0
  %6722 = vmatprep.subr.mxu0 0.0
  %6723 = vmatpush2.msra.mxu0 0.0
  %6724 = vmatprep.subr.mxu0 0.0
  %6725 = vmatpush2.msra.mxu0 0.0
  %6726 = vmatprep.subr.mxu0 0.0
  %6727 = vmatpush2.msra.mxu0 0.0
  %6728 = vmatprep.subr.mxu0 0.0
  %6729 = vmatpush2.msra.mxu0 0.0
  %6730 = vmatprep.subr.mxu0 0.0
  %6731 = vmatpush2.msra.mxu0 0.0
  %6732 = vmatprep.subr.mxu0 0.0
  %6733 = vmatpush2.msra.mxu0 0.0
  %6734 = vmatprep.subr.mxu0 0.0
  %6735 = vmatpush2.msra.mxu0 0.0
  %6736 = vmatprep.mubr.f32.mxu0 0.0
  %6737 = vmatmul.mubr.f32.gmra.mxu0 %v6600
  %v6738 = vpop.f32.mrf.mxu0
  %v6739 = vadd.f32 0.0, %v6738
  %v6740 = vpop.f32.mrf.mxu0
  %v6741 = vadd.f32 0.0, %v6740
  %6742 = vdwg.mxu0
  %v6743 = vadd.f32 %v6596, %v6668
  %v6744 = vadd.f32 %v6597, %v6670
  %v6745 = vadd.f32 %v6598, %v6739
  %v6746 = vadd.f32 %v6599, %v6741
  %v6747 = vxor.u32 %v6743, 2147483648
  %v6748 = vmul.f32 %v6747, 1.442695
  %v6749 = vpow.pop %v6748
  %v6750 = vadd.f32 %v6749, 1.0
  %v6751 = vrcp.pop %v6750
  %v6752 = vmul.f32 1.0, %v6751
  %v6753 = vxor.u32 %v6744, 2147483648
  %v6754 = vmul.f32 %v6753, 1.442695
  %v6755 = vpow.pop %v6754
  %v6756 = vadd.f32 %v6755, 1.0
  %v6757 = vrcp.pop %v6756
  %v6758 = vmul.f32 1.0, %v6757
  %v6759 = vtanh.pop %v6745
  %v6760 = vxor.u32 %v6746, 2147483648
  %v6761 = vmul.f32 %v6760, 1.442695
  %v6762 = vpow.pop %v6761
  %v6763 = vadd.f32 %v6762, 1.0
  %v6764 = vrcp.pop %v6763
  %v6765 = vmul.f32 1.0, %v6764
  %v6766 = vld [vmem:[#allocation5] sm:$0xff]
  %v6767 = vmul.f32 %v6758, %v6766
  %v6768 = vmul.f32 %v6752, %v6759
  %v6769 = vadd.f32 %v6767, %v6768
  %v6770 = vtanh.pop %v6769
  %v6771 = vmul.f32 %v6765, %v6770
  %6772 = vst [vmem:[#allocation5] sm:$0xff] %v6769
  %6773 = vst [vmem:[#allocation4] sm:$0xff] %v6771
  %v6774 = vld [vmem:[%s1213] sm:$0xff]
  %v6775 = vld [vmem:[%s1213 + $0x8] sm:$0xff]
  %v6776 = vld [vmem:[%s1213 + $0x10] sm:$0xff]
  %v6777 = vld [vmem:[%s1213 + $0x18] sm:$0xff]
  %v6778 = vld [vmem:[#allocation4] sm:$0xff]
  %6779 = vmatprep.subr.mxu0 %v6059
  %6780 = vmatpush1.msra.mxu0 %v6058
  %6781 = vmatprep.subr.mxu0 %v6055
  %6782 = vmatpush1.msra.mxu0 %v6054
  %6783 = vmatprep.subr.mxu0 %v6051
  %6784 = vmatpush1.msra.mxu0 %v6050
  %6785 = vmatprep.subr.mxu0 %v6047
  %6786 = vmatpush1.msra.mxu0 %v6046
  %6787 = vmatprep.subr.mxu0 %v6043
  %6788 = vmatpush1.msra.mxu0 %v6042
  %6789 = vmatprep.subr.mxu0 %v6039
  %6790 = vmatpush1.msra.mxu0 %v6038
  %6791 = vmatprep.subr.mxu0 %v6035
  %6792 = vmatpush1.msra.mxu0 %v6034
  %6793 = vmatprep.subr.mxu0 %v6031
  %6794 = vmatpush1.msra.mxu0 %v6030
  %6795 = vmatprep.subr.mxu0 %v6027
  %6796 = vmatpush1.msra.mxu0 %v6026
  %6797 = vmatprep.subr.mxu0 %v6023
  %6798 = vmatpush1.msra.mxu0 %v6022
  %6799 = vmatprep.subr.mxu0 %v6019
  %6800 = vmatpush1.msra.mxu0 %v6018
  %6801 = vmatprep.subr.mxu0 %v6015
  %6802 = vmatpush1.msra.mxu0 %v6014
  %6803 = vmatprep.subr.mxu0 %v6011
  %6804 = vmatpush1.msra.mxu0 %v6010
  %6805 = vmatprep.subr.mxu0 %v6007
  %6806 = vmatpush1.msra.mxu0 %v6006
  %6807 = vmatprep.subr.mxu0 %v6003
  %6808 = vmatpush1.msra.mxu0 %v6002
  %6809 = vmatprep.subr.mxu0 %v5999
  %6810 = vmatpush1.msra.mxu0 %v5998
  %6811 = vmatprep.subr.mxu0 0.0
  %6812 = vmatpush2.msra.mxu0 0.0
  %6813 = vmatprep.subr.mxu0 0.0
  %6814 = vmatpush2.msra.mxu0 0.0
  %6815 = vmatprep.subr.mxu0 0.0
  %6816 = vmatpush2.msra.mxu0 0.0
  %6817 = vmatprep.subr.mxu0 0.0
  %6818 = vmatpush2.msra.mxu0 0.0
  %6819 = vmatprep.subr.mxu0 0.0
  %6820 = vmatpush2.msra.mxu0 0.0
  %6821 = vmatprep.subr.mxu0 0.0
  %6822 = vmatpush2.msra.mxu0 0.0
  %6823 = vmatprep.subr.mxu0 0.0
  %6824 = vmatpush2.msra.mxu0 0.0
  %6825 = vmatprep.subr.mxu0 0.0
  %6826 = vmatpush2.msra.mxu0 0.0
  %6827 = vmatprep.subr.mxu0 0.0
  %6828 = vmatpush2.msra.mxu0 0.0
  %6829 = vmatprep.subr.mxu0 0.0
  %6830 = vmatpush2.msra.mxu0 0.0
  %6831 = vmatprep.subr.mxu0 0.0
  %6832 = vmatpush2.msra.mxu0 0.0
  %6833 = vmatprep.subr.mxu0 0.0
  %6834 = vmatpush2.msra.mxu0 0.0
  %6835 = vmatprep.subr.mxu0 0.0
  %6836 = vmatpush2.msra.mxu0 0.0
  %6837 = vmatprep.subr.mxu0 0.0
  %6838 = vmatpush2.msra.mxu0 0.0
  %6839 = vmatprep.subr.mxu0 0.0
  %6840 = vmatpush2.msra.mxu0 0.0
  %6841 = vmatprep.subr.mxu0 0.0
  %6842 = vmatpush2.msra.mxu0 0.0
  %6843 = vmatprep.mubr.f32.mxu0 0.0
  %6844 = vmatmul.mubr.f32.gmra.mxu0 %v6778
  %v6845 = vpop.f32.mrf.mxu0
  %v6846 = vadd.f32 0.0, %v6845
  %v6847 = vpop.f32.mrf.mxu0
  %v6848 = vadd.f32 0.0, %v6847
  %6849 = vdwg.mxu0
  %6850 = vmatprep.subr.mxu0 %v6061
  %6851 = vmatpush1.msra.mxu0 %v6060
  %6852 = vmatprep.subr.mxu0 %v6057
  %6853 = vmatpush1.msra.mxu0 %v6056
  %6854 = vmatprep.subr.mxu0 %v6053
  %6855 = vmatpush1.msra.mxu0 %v6052
  %6856 = vmatprep.subr.mxu0 %v6049
  %6857 = vmatpush1.msra.mxu0 %v6048
  %6858 = vmatprep.subr.mxu0 %v6045
  %6859 = vmatpush1.msra.mxu0 %v6044
  %6860 = vmatprep.subr.mxu0 %v6041
  %6861 = vmatpush1.msra.mxu0 %v6040
  %6862 = vmatprep.subr.mxu0 %v6037
  %6863 = vmatpush1.msra.mxu0 %v6036
  %6864 = vmatprep.subr.mxu0 %v6033
  %6865 = vmatpush1.msra.mxu0 %v6032
  %6866 = vmatprep.subr.mxu0 %v6029
  %6867 = vmatpush1.msra.mxu0 %v6028
  %6868 = vmatprep.subr.mxu0 %v6025
  %6869 = vmatpush1.msra.mxu0 %v6024
  %6870 = vmatprep.subr.mxu0 %v6021
  %6871 = vmatpush1.msra.mxu0 %v6020
  %6872 = vmatprep.subr.mxu0 %v6017
  %6873 = vmatpush1.msra.mxu0 %v6016
  %6874 = vmatprep.subr.mxu0 %v6013
  %6875 = vmatpush1.msra.mxu0 %v6012
  %6876 = vmatprep.subr.mxu0 %v6009
  %6877 = vmatpush1.msra.mxu0 %v6008
  %6878 = vmatprep.subr.mxu0 %v6005
  %6879 = vmatpush1.msra.mxu0 %v6004
  %6880 = vmatprep.subr.mxu0 %v6001
  %6881 = vmatpush1.msra.mxu0 %v6000
  %6882 = vmatprep.subr.mxu0 0.0
  %6883 = vmatpush2.msra.mxu0 0.0
  %6884 = vmatprep.subr.mxu0 0.0
  %6885 = vmatpush2.msra.mxu0 0.0
  %6886 = vmatprep.subr.mxu0 0.0
  %6887 = vmatpush2.msra.mxu0 0.0
  %6888 = vmatprep.subr.mxu0 0.0
  %6889 = vmatpush2.msra.mxu0 0.0
  %6890 = vmatprep.subr.mxu0 0.0
  %6891 = vmatpush2.msra.mxu0 0.0
  %6892 = vmatprep.subr.mxu0 0.0
  %6893 = vmatpush2.msra.mxu0 0.0
  %6894 = vmatprep.subr.mxu0 0.0
  %6895 = vmatpush2.msra.mxu0 0.0
  %6896 = vmatprep.subr.mxu0 0.0
  %6897 = vmatpush2.msra.mxu0 0.0
  %6898 = vmatprep.subr.mxu0 0.0
  %6899 = vmatpush2.msra.mxu0 0.0
  %6900 = vmatprep.subr.mxu0 0.0
  %6901 = vmatpush2.msra.mxu0 0.0
  %6902 = vmatprep.subr.mxu0 0.0
  %6903 = vmatpush2.msra.mxu0 0.0
  %6904 = vmatprep.subr.mxu0 0.0
  %6905 = vmatpush2.msra.mxu0 0.0
  %6906 = vmatprep.subr.mxu0 0.0
  %6907 = vmatpush2.msra.mxu0 0.0
  %6908 = vmatprep.subr.mxu0 0.0
  %6909 = vmatpush2.msra.mxu0 0.0
  %6910 = vmatprep.subr.mxu0 0.0
  %6911 = vmatpush2.msra.mxu0 0.0
  %6912 = vmatprep.subr.mxu0 0.0
  %6913 = vmatpush2.msra.mxu0 0.0
  %6914 = vmatprep.mubr.f32.mxu0 0.0
  %6915 = vmatmul.mubr.f32.gmra.mxu0 %v6778
  %v6916 = vpop.f32.mrf.mxu0
  %v6917 = vadd.f32 0.0, %v6916
  %v6918 = vpop.f32.mrf.mxu0
  %v6919 = vadd.f32 0.0, %v6918
  %6920 = vdwg.mxu0
  %v6921 = vadd.f32 %v6774, %v6846
  %v6922 = vadd.f32 %v6775, %v6848
  %v6923 = vadd.f32 %v6776, %v6917
  %v6924 = vadd.f32 %v6777, %v6919
  %v6925 = vxor.u32 %v6921, 2147483648
  %v6926 = vmul.f32 %v6925, 1.442695
  %v6927 = vpow.pop %v6926
  %v6928 = vadd.f32 %v6927, 1.0
  %v6929 = vrcp.pop %v6928
  %v6930 = vmul.f32 1.0, %v6929
  %v6931 = vxor.u32 %v6922, 2147483648
  %v6932 = vmul.f32 %v6931, 1.442695
  %v6933 = vpow.pop %v6932
  %v6934 = vadd.f32 %v6933, 1.0
  %v6935 = vrcp.pop %v6934
  %v6936 = vmul.f32 1.0, %v6935
  %v6937 = vtanh.pop %v6923
  %v6938 = vxor.u32 %v6924, 2147483648
  %v6939 = vmul.f32 %v6938, 1.442695
  %v6940 = vpow.pop %v6939
  %v6941 = vadd.f32 %v6940, 1.0
  %v6942 = vrcp.pop %v6941
  %v6943 = vmul.f32 1.0, %v6942
  %v6944 = vld [vmem:[#allocation5] sm:$0xff]
  %v6945 = vmul.f32 %v6936, %v6944
  %v6946 = vmul.f32 %v6930, %v6937
  %v6947 = vadd.f32 %v6945, %v6946
  %v6948 = vtanh.pop %v6947
  %v6949 = vmul.f32 %v6943, %v6948
  %6950 = vst [vmem:[#allocation5] sm:$0xff] %v6947
  %6951 = vst [vmem:[#allocation4] sm:$0xff] %v6949
  %v6952 = vld [vmem:[%s1396] sm:$0xff]
  %v6953 = vld [vmem:[%s1396 + $0x8] sm:$0xff]
  %v6954 = vld [vmem:[%s1396 + $0x10] sm:$0xff]
  %v6955 = vld [vmem:[%s1396 + $0x18] sm:$0xff]
  %v6956 = vld [vmem:[#allocation4] sm:$0xff]
  %6957 = vmatprep.subr.mxu0 %v6059
  %6958 = vmatpush1.msra.mxu0 %v6058
  %6959 = vmatprep.subr.mxu0 %v6055
  %6960 = vmatpush1.msra.mxu0 %v6054
  %6961 = vmatprep.subr.mxu0 %v6051
  %6962 = vmatpush1.msra.mxu0 %v6050
  %6963 = vmatprep.subr.mxu0 %v6047
  %6964 = vmatpush1.msra.mxu0 %v6046
  %6965 = vmatprep.subr.mxu0 %v6043
  %6966 = vmatpush1.msra.mxu0 %v6042
  %6967 = vmatprep.subr.mxu0 %v6039
  %6968 = vmatpush1.msra.mxu0 %v6038
  %6969 = vmatprep.subr.mxu0 %v6035
  %6970 = vmatpush1.msra.mxu0 %v6034
  %6971 = vmatprep.subr.mxu0 %v6031
  %6972 = vmatpush1.msra.mxu0 %v6030
  %6973 = vmatprep.subr.mxu0 %v6027
  %6974 = vmatpush1.msra.mxu0 %v6026
  %6975 = vmatprep.subr.mxu0 %v6023
  %6976 = vmatpush1.msra.mxu0 %v6022
  %6977 = vmatprep.subr.mxu0 %v6019
  %6978 = vmatpush1.msra.mxu0 %v6018
  %6979 = vmatprep.subr.mxu0 %v6015
  %6980 = vmatpush1.msra.mxu0 %v6014
  %6981 = vmatprep.subr.mxu0 %v6011
  %6982 = vmatpush1.msra.mxu0 %v6010
  %6983 = vmatprep.subr.mxu0 %v6007
  %6984 = vmatpush1.msra.mxu0 %v6006
  %6985 = vmatprep.subr.mxu0 %v6003
  %6986 = vmatpush1.msra.mxu0 %v6002
  %6987 = vmatprep.subr.mxu0 %v5999
  %6988 = vmatpush1.msra.mxu0 %v5998
  %6989 = vmatprep.subr.mxu0 0.0
  %6990 = vmatpush2.msra.mxu0 0.0
  %6991 = vmatprep.subr.mxu0 0.0
  %6992 = vmatpush2.msra.mxu0 0.0
  %6993 = vmatprep.subr.mxu0 0.0
  %6994 = vmatpush2.msra.mxu0 0.0
  %6995 = vmatprep.subr.mxu0 0.0
  %6996 = vmatpush2.msra.mxu0 0.0
  %6997 = vmatprep.subr.mxu0 0.0
  %6998 = vmatpush2.msra.mxu0 0.0
  %6999 = vmatprep.subr.mxu0 0.0
  %7000 = vmatpush2.msra.mxu0 0.0
  %7001 = vmatprep.subr.mxu0 0.0
  %7002 = vmatpush2.msra.mxu0 0.0
  %7003 = vmatprep.subr.mxu0 0.0
  %7004 = vmatpush2.msra.mxu0 0.0
  %7005 = vmatprep.subr.mxu0 0.0
  %7006 = vmatpush2.msra.mxu0 0.0
  %7007 = vmatprep.subr.mxu0 0.0
  %7008 = vmatpush2.msra.mxu0 0.0
  %7009 = vmatprep.subr.mxu0 0.0
  %7010 = vmatpush2.msra.mxu0 0.0
  %7011 = vmatprep.subr.mxu0 0.0
  %7012 = vmatpush2.msra.mxu0 0.0
  %7013 = vmatprep.subr.mxu0 0.0
  %7014 = vmatpush2.msra.mxu0 0.0
  %7015 = vmatprep.subr.mxu0 0.0
  %7016 = vmatpush2.msra.mxu0 0.0
  %7017 = vmatprep.subr.mxu0 0.0
  %7018 = vmatpush2.msra.mxu0 0.0
  %7019 = vmatprep.subr.mxu0 0.0
  %7020 = vmatpush2.msra.mxu0 0.0
  %7021 = vmatprep.mubr.f32.mxu0 0.0
  %7022 = vmatmul.mubr.f32.gmra.mxu0 %v6956
  %v7023 = vpop.f32.mrf.mxu0
  %v7024 = vadd.f32 0.0, %v7023
  %v7025 = vpop.f32.mrf.mxu0
  %v7026 = vadd.f32 0.0, %v7025
  %7027 = vdwg.mxu0
  %7028 = vmatprep.subr.mxu0 %v6061
  %7029 = vmatpush1.msra.mxu0 %v6060
  %7030 = vmatprep.subr.mxu0 %v6057
  %7031 = vmatpush1.msra.mxu0 %v6056
  %7032 = vmatprep.subr.mxu0 %v6053
  %7033 = vmatpush1.msra.mxu0 %v6052
  %7034 = vmatprep.subr.mxu0 %v6049
  %7035 = vmatpush1.msra.mxu0 %v6048
  %7036 = vmatprep.subr.mxu0 %v6045
  %7037 = vmatpush1.msra.mxu0 %v6044
  %7038 = vmatprep.subr.mxu0 %v6041
  %7039 = vmatpush1.msra.mxu0 %v6040
  %7040 = vmatprep.subr.mxu0 %v6037
  %7041 = vmatpush1.msra.mxu0 %v6036
  %7042 = vmatprep.subr.mxu0 %v6033
  %7043 = vmatpush1.msra.mxu0 %v6032
  %7044 = vmatprep.subr.mxu0 %v6029
  %7045 = vmatpush1.msra.mxu0 %v6028
  %7046 = vmatprep.subr.mxu0 %v6025
  %7047 = vmatpush1.msra.mxu0 %v6024
  %7048 = vmatprep.subr.mxu0 %v6021
  %7049 = vmatpush1.msra.mxu0 %v6020
  %7050 = vmatprep.subr.mxu0 %v6017
  %7051 = vmatpush1.msra.mxu0 %v6016
  %7052 = vmatprep.subr.mxu0 %v6013
  %7053 = vmatpush1.msra.mxu0 %v6012
  %7054 = vmatprep.subr.mxu0 %v6009
  %7055 = vmatpush1.msra.mxu0 %v6008
  %7056 = vmatprep.subr.mxu0 %v6005
  %7057 = vmatpush1.msra.mxu0 %v6004
  %7058 = vmatprep.subr.mxu0 %v6001
  %7059 = vmatpush1.msra.mxu0 %v6000
  %7060 = vmatprep.subr.mxu0 0.0
  %7061 = vmatpush2.msra.mxu0 0.0
  %7062 = vmatprep.subr.mxu0 0.0
  %7063 = vmatpush2.msra.mxu0 0.0
  %7064 = vmatprep.subr.mxu0 0.0
  %7065 = vmatpush2.msra.mxu0 0.0
  %7066 = vmatprep.subr.mxu0 0.0
  %7067 = vmatpush2.msra.mxu0 0.0
  %7068 = vmatprep.subr.mxu0 0.0
  %7069 = vmatpush2.msra.mxu0 0.0
  %7070 = vmatprep.subr.mxu0 0.0
  %7071 = vmatpush2.msra.mxu0 0.0
  %7072 = vmatprep.subr.mxu0 0.0
  %7073 = vmatpush2.msra.mxu0 0.0
  %7074 = vmatprep.subr.mxu0 0.0
  %7075 = vmatpush2.msra.mxu0 0.0
  %7076 = vmatprep.subr.mxu0 0.0
  %7077 = vmatpush2.msra.mxu0 0.0
  %7078 = vmatprep.subr.mxu0 0.0
  %7079 = vmatpush2.msra.mxu0 0.0
  %7080 = vmatprep.subr.mxu0 0.0
  %7081 = vmatpush2.msra.mxu0 0.0
  %7082 = vmatprep.subr.mxu0 0.0
  %7083 = vmatpush2.msra.mxu0 0.0
  %7084 = vmatprep.subr.mxu0 0.0
  %7085 = vmatpush2.msra.mxu0 0.0
  %7086 = vmatprep.subr.mxu0 0.0
  %7087 = vmatpush2.msra.mxu0 0.0
  %7088 = vmatprep.subr.mxu0 0.0
  %7089 = vmatpush2.msra.mxu0 0.0
  %7090 = vmatprep.subr.mxu0 0.0
  %7091 = vmatpush2.msra.mxu0 0.0
  %7092 = vmatprep.mubr.f32.mxu0 0.0
  %7093 = vmatmul.mubr.f32.gmra.mxu0 %v6956
  %v7094 = vpop.f32.mrf.mxu0
  %v7095 = vadd.f32 0.0, %v7094
  %v7096 = vpop.f32.mrf.mxu0
  %v7097 = vadd.f32 0.0, %v7096
  %7098 = vdwg.mxu0
  %v7099 = vadd.f32 %v6952, %v7024
  %v7100 = vadd.f32 %v6953, %v7026
  %v7101 = vadd.f32 %v6954, %v7095
  %v7102 = vadd.f32 %v6955, %v7097
  %v7103 = vxor.u32 %v7099, 2147483648
  %v7104 = vmul.f32 %v7103, 1.442695
  %v7105 = vpow.pop %v7104
  %v7106 = vadd.f32 %v7105, 1.0
  %v7107 = vrcp.pop %v7106
  %v7108 = vmul.f32 1.0, %v7107
  %v7109 = vxor.u32 %v7100, 2147483648
  %v7110 = vmul.f32 %v7109, 1.442695
  %v7111 = vpow.pop %v7110
  %v7112 = vadd.f32 %v7111, 1.0
  %v7113 = vrcp.pop %v7112
  %v7114 = vmul.f32 1.0, %v7113
  %v7115 = vtanh.pop %v7101
  %v7116 = vxor.u32 %v7102, 2147483648
  %v7117 = vmul.f32 %v7116, 1.442695
  %v7118 = vpow.pop %v7117
  %v7119 = vadd.f32 %v7118, 1.0
  %v7120 = vrcp.pop %v7119
  %v7121 = vmul.f32 1.0, %v7120
  %v7122 = vld [vmem:[#allocation5] sm:$0xff]
  %v7123 = vmul.f32 %v7114, %v7122
  %v7124 = vmul.f32 %v7108, %v7115
  %v7125 = vadd.f32 %v7123, %v7124
  %v7126 = vtanh.pop %v7125
  %v7127 = vmul.f32 %v7121, %v7126
  %7128 = vst [vmem:[#allocation5] sm:$0xff] %v7125
  %7129 = vst [vmem:[#allocation4] sm:$0xff] %v7127
  %v7130 = vld [vmem:[%s1579] sm:$0xff]
  %v7131 = vld [vmem:[%s1579 + $0x8] sm:$0xff]
  %v7132 = vld [vmem:[%s1579 + $0x10] sm:$0xff]
  %v7133 = vld [vmem:[%s1579 + $0x18] sm:$0xff]
  %v7134 = vld [vmem:[#allocation4] sm:$0xff]
  %7135 = vmatprep.subr.mxu0 %v6059
  %7136 = vmatpush1.msra.mxu0 %v6058
  %7137 = vmatprep.subr.mxu0 %v6055
  %7138 = vmatpush1.msra.mxu0 %v6054
  %7139 = vmatprep.subr.mxu0 %v6051
  %7140 = vmatpush1.msra.mxu0 %v6050
  %7141 = vmatprep.subr.mxu0 %v6047
  %7142 = vmatpush1.msra.mxu0 %v6046
  %7143 = vmatprep.subr.mxu0 %v6043
  %7144 = vmatpush1.msra.mxu0 %v6042
  %7145 = vmatprep.subr.mxu0 %v6039
  %7146 = vmatpush1.msra.mxu0 %v6038
  %7147 = vmatprep.subr.mxu0 %v6035
  %7148 = vmatpush1.msra.mxu0 %v6034
  %7149 = vmatprep.subr.mxu0 %v6031
  %7150 = vmatpush1.msra.mxu0 %v6030
  %7151 = vmatprep.subr.mxu0 %v6027
  %7152 = vmatpush1.msra.mxu0 %v6026
  %7153 = vmatprep.subr.mxu0 %v6023
  %7154 = vmatpush1.msra.mxu0 %v6022
  %7155 = vmatprep.subr.mxu0 %v6019
  %7156 = vmatpush1.msra.mxu0 %v6018
  %7157 = vmatprep.subr.mxu0 %v6015
  %7158 = vmatpush1.msra.mxu0 %v6014
  %7159 = vmatprep.subr.mxu0 %v6011
  %7160 = vmatpush1.msra.mxu0 %v6010
  %7161 = vmatprep.subr.mxu0 %v6007
  %7162 = vmatpush1.msra.mxu0 %v6006
  %7163 = vmatprep.subr.mxu0 %v6003
  %7164 = vmatpush1.msra.mxu0 %v6002
  %7165 = vmatprep.subr.mxu0 %v5999
  %7166 = vmatpush1.msra.mxu0 %v5998
  %7167 = vmatprep.subr.mxu0 0.0
  %7168 = vmatpush2.msra.mxu0 0.0
  %7169 = vmatprep.subr.mxu0 0.0
  %7170 = vmatpush2.msra.mxu0 0.0
  %7171 = vmatprep.subr.mxu0 0.0
  %7172 = vmatpush2.msra.mxu0 0.0
  %7173 = vmatprep.subr.mxu0 0.0
  %7174 = vmatpush2.msra.mxu0 0.0
  %7175 = vmatprep.subr.mxu0 0.0
  %7176 = vmatpush2.msra.mxu0 0.0
  %7177 = vmatprep.subr.mxu0 0.0
  %7178 = vmatpush2.msra.mxu0 0.0
  %7179 = vmatprep.subr.mxu0 0.0
  %7180 = vmatpush2.msra.mxu0 0.0
  %7181 = vmatprep.subr.mxu0 0.0
  %7182 = vmatpush2.msra.mxu0 0.0
  %7183 = vmatprep.subr.mxu0 0.0
  %7184 = vmatpush2.msra.mxu0 0.0
  %7185 = vmatprep.subr.mxu0 0.0
  %7186 = vmatpush2.msra.mxu0 0.0
  %7187 = vmatprep.subr.mxu0 0.0
  %7188 = vmatpush2.msra.mxu0 0.0
  %7189 = vmatprep.subr.mxu0 0.0
  %7190 = vmatpush2.msra.mxu0 0.0
  %7191 = vmatprep.subr.mxu0 0.0
  %7192 = vmatpush2.msra.mxu0 0.0
  %7193 = vmatprep.subr.mxu0 0.0
  %7194 = vmatpush2.msra.mxu0 0.0
  %7195 = vmatprep.subr.mxu0 0.0
  %7196 = vmatpush2.msra.mxu0 0.0
  %7197 = vmatprep.subr.mxu0 0.0
  %7198 = vmatpush2.msra.mxu0 0.0
  %7199 = vmatprep.mubr.f32.mxu0 0.0
  %7200 = vmatmul.mubr.f32.gmra.mxu0 %v7134
  %v7201 = vpop.f32.mrf.mxu0
  %v7202 = vadd.f32 0.0, %v7201
  %v7203 = vpop.f32.mrf.mxu0
  %v7204 = vadd.f32 0.0, %v7203
  %7205 = vdwg.mxu0
  %7206 = vmatprep.subr.mxu0 %v6061
  %7207 = vmatpush1.msra.mxu0 %v6060
  %7208 = vmatprep.subr.mxu0 %v6057
  %7209 = vmatpush1.msra.mxu0 %v6056
  %7210 = vmatprep.subr.mxu0 %v6053
  %7211 = vmatpush1.msra.mxu0 %v6052
  %7212 = vmatprep.subr.mxu0 %v6049
  %7213 = vmatpush1.msra.mxu0 %v6048
  %7214 = vmatprep.subr.mxu0 %v6045
  %7215 = vmatpush1.msra.mxu0 %v6044
  %7216 = vmatprep.subr.mxu0 %v6041
  %7217 = vmatpush1.msra.mxu0 %v6040
  %7218 = vmatprep.subr.mxu0 %v6037
  %7219 = vmatpush1.msra.mxu0 %v6036
  %7220 = vmatprep.subr.mxu0 %v6033
  %7221 = vmatpush1.msra.mxu0 %v6032
  %7222 = vmatprep.subr.mxu0 %v6029
  %7223 = vmatpush1.msra.mxu0 %v6028
  %7224 = vmatprep.subr.mxu0 %v6025
  %7225 = vmatpush1.msra.mxu0 %v6024
  %7226 = vmatprep.subr.mxu0 %v6021
  %7227 = vmatpush1.msra.mxu0 %v6020
  %7228 = vmatprep.subr.mxu0 %v6017
  %7229 = vmatpush1.msra.mxu0 %v6016
  %7230 = vmatprep.subr.mxu0 %v6013
  %7231 = vmatpush1.msra.mxu0 %v6012
  %7232 = vmatprep.subr.mxu0 %v6009
  %7233 = vmatpush1.msra.mxu0 %v6008
  %7234 = vmatprep.subr.mxu0 %v6005
  %7235 = vmatpush1.msra.mxu0 %v6004
  %7236 = vmatprep.subr.mxu0 %v6001
  %7237 = vmatpush1.msra.mxu0 %v6000
  %7238 = vmatprep.subr.mxu0 0.0
  %7239 = vmatpush2.msra.mxu0 0.0
  %7240 = vmatprep.subr.mxu0 0.0
  %7241 = vmatpush2.msra.mxu0 0.0
  %7242 = vmatprep.subr.mxu0 0.0
  %7243 = vmatpush2.msra.mxu0 0.0
  %7244 = vmatprep.subr.mxu0 0.0
  %7245 = vmatpush2.msra.mxu0 0.0
  %7246 = vmatprep.subr.mxu0 0.0
  %7247 = vmatpush2.msra.mxu0 0.0
  %7248 = vmatprep.subr.mxu0 0.0
  %7249 = vmatpush2.msra.mxu0 0.0
  %7250 = vmatprep.subr.mxu0 0.0
  %7251 = vmatpush2.msra.mxu0 0.0
  %7252 = vmatprep.subr.mxu0 0.0
  %7253 = vmatpush2.msra.mxu0 0.0
  %7254 = vmatprep.subr.mxu0 0.0
  %7255 = vmatpush2.msra.mxu0 0.0
  %7256 = vmatprep.subr.mxu0 0.0
  %7257 = vmatpush2.msra.mxu0 0.0
  %7258 = vmatprep.subr.mxu0 0.0
  %7259 = vmatpush2.msra.mxu0 0.0
  %7260 = vmatprep.subr.mxu0 0.0
  %7261 = vmatpush2.msra.mxu0 0.0
  %7262 = vmatprep.subr.mxu0 0.0
  %7263 = vmatpush2.msra.mxu0 0.0
  %7264 = vmatprep.subr.mxu0 0.0
  %7265 = vmatpush2.msra.mxu0 0.0
  %7266 = vmatprep.subr.mxu0 0.0
  %7267 = vmatpush2.msra.mxu0 0.0
  %7268 = vmatprep.subr.mxu0 0.0
  %7269 = vmatpush2.msra.mxu0 0.0
  %7270 = vmatprep.mubr.f32.mxu0 0.0
  %7271 = vmatmul.mubr.f32.gmra.mxu0 %v7134
  %v7272 = vpop.f32.mrf.mxu0
  %v7273 = vadd.f32 0.0, %v7272
  %v7274 = vpop.f32.mrf.mxu0
  %v7275 = vadd.f32 0.0, %v7274
  %7276 = vdwg.mxu0
  %v7277 = vadd.f32 %v7130, %v7202
  %v7278 = vadd.f32 %v7131, %v7204
  %v7279 = vadd.f32 %v7132, %v7273
  %v7280 = vadd.f32 %v7133, %v7275
  %v7281 = vxor.u32 %v7277, 2147483648
  %v7282 = vmul.f32 %v7281, 1.442695
  %v7283 = vpow.pop %v7282
  %v7284 = vadd.f32 %v7283, 1.0
  %v7285 = vrcp.pop %v7284
  %v7286 = vmul.f32 1.0, %v7285
  %v7287 = vxor.u32 %v7278, 2147483648
  %v7288 = vmul.f32 %v7287, 1.442695
  %v7289 = vpow.pop %v7288
  %v7290 = vadd.f32 %v7289, 1.0
  %v7291 = vrcp.pop %v7290
  %v7292 = vmul.f32 1.0, %v7291
  %v7293 = vtanh.pop %v7279
  %v7294 = vxor.u32 %v7280, 2147483648
  %v7295 = vmul.f32 %v7294, 1.442695
  %v7296 = vpow.pop %v7295
  %v7297 = vadd.f32 %v7296, 1.0
  %v7298 = vrcp.pop %v7297
  %v7299 = vmul.f32 1.0, %v7298
  %v7300 = vld [vmem:[#allocation5] sm:$0xff]
  %v7301 = vmul.f32 %v7292, %v7300
  %v7302 = vmul.f32 %v7286, %v7293
  %v7303 = vadd.f32 %v7301, %v7302
  %v7304 = vtanh.pop %v7303
  %v7305 = vmul.f32 %v7299, %v7304
  %7306 = vst [vmem:[#allocation5] sm:$0xff] %v7303
  %7307 = vst [vmem:[#allocation4] sm:$0xff] %v7305
  %v7308 = vld [vmem:[%s1762] sm:$0xff]
  %v7309 = vld [vmem:[%s1762 + $0x8] sm:$0xff]
  %v7310 = vld [vmem:[%s1762 + $0x10] sm:$0xff]
  %v7311 = vld [vmem:[%s1762 + $0x18] sm:$0xff]
  %v7312 = vld [vmem:[#allocation4] sm:$0xff]
  %7313 = vmatprep.subr.mxu0 %v6059
  %7314 = vmatpush1.msra.mxu0 %v6058
  %7315 = vmatprep.subr.mxu0 %v6055
  %7316 = vmatpush1.msra.mxu0 %v6054
  %7317 = vmatprep.subr.mxu0 %v6051
  %7318 = vmatpush1.msra.mxu0 %v6050
  %7319 = vmatprep.subr.mxu0 %v6047
  %7320 = vmatpush1.msra.mxu0 %v6046
  %7321 = vmatprep.subr.mxu0 %v6043
  %7322 = vmatpush1.msra.mxu0 %v6042
  %7323 = vmatprep.subr.mxu0 %v6039
  %7324 = vmatpush1.msra.mxu0 %v6038
  %7325 = vmatprep.subr.mxu0 %v6035
  %7326 = vmatpush1.msra.mxu0 %v6034
  %7327 = vmatprep.subr.mxu0 %v6031
  %7328 = vmatpush1.msra.mxu0 %v6030
  %7329 = vmatprep.subr.mxu0 %v6027
  %7330 = vmatpush1.msra.mxu0 %v6026
  %7331 = vmatprep.subr.mxu0 %v6023
  %7332 = vmatpush1.msra.mxu0 %v6022
  %7333 = vmatprep.subr.mxu0 %v6019
  %7334 = vmatpush1.msra.mxu0 %v6018
  %7335 = vmatprep.subr.mxu0 %v6015
  %7336 = vmatpush1.msra.mxu0 %v6014
  %7337 = vmatprep.subr.mxu0 %v6011
  %7338 = vmatpush1.msra.mxu0 %v6010
  %7339 = vmatprep.subr.mxu0 %v6007
  %7340 = vmatpush1.msra.mxu0 %v6006
  %7341 = vmatprep.subr.mxu0 %v6003
  %7342 = vmatpush1.msra.mxu0 %v6002
  %7343 = vmatprep.subr.mxu0 %v5999
  %7344 = vmatpush1.msra.mxu0 %v5998
  %7345 = vmatprep.subr.mxu0 0.0
  %7346 = vmatpush2.msra.mxu0 0.0
  %7347 = vmatprep.subr.mxu0 0.0
  %7348 = vmatpush2.msra.mxu0 0.0
  %7349 = vmatprep.subr.mxu0 0.0
  %7350 = vmatpush2.msra.mxu0 0.0
  %7351 = vmatprep.subr.mxu0 0.0
  %7352 = vmatpush2.msra.mxu0 0.0
  %7353 = vmatprep.subr.mxu0 0.0
  %7354 = vmatpush2.msra.mxu0 0.0
  %7355 = vmatprep.subr.mxu0 0.0
  %7356 = vmatpush2.msra.mxu0 0.0
  %7357 = vmatprep.subr.mxu0 0.0
  %7358 = vmatpush2.msra.mxu0 0.0
  %7359 = vmatprep.subr.mxu0 0.0
  %7360 = vmatpush2.msra.mxu0 0.0
  %7361 = vmatprep.subr.mxu0 0.0
  %7362 = vmatpush2.msra.mxu0 0.0
  %7363 = vmatprep.subr.mxu0 0.0
  %7364 = vmatpush2.msra.mxu0 0.0
  %7365 = vmatprep.subr.mxu0 0.0
  %7366 = vmatpush2.msra.mxu0 0.0
  %7367 = vmatprep.subr.mxu0 0.0
  %7368 = vmatpush2.msra.mxu0 0.0
  %7369 = vmatprep.subr.mxu0 0.0
  %7370 = vmatpush2.msra.mxu0 0.0
  %7371 = vmatprep.subr.mxu0 0.0
  %7372 = vmatpush2.msra.mxu0 0.0
  %7373 = vmatprep.subr.mxu0 0.0
  %7374 = vmatpush2.msra.mxu0 0.0
  %7375 = vmatprep.subr.mxu0 0.0
  %7376 = vmatpush2.msra.mxu0 0.0
  %7377 = vmatprep.mubr.f32.mxu0 0.0
  %7378 = vmatmul.mubr.f32.gmra.mxu0 %v7312
  %v7379 = vpop.f32.mrf.mxu0
  %v7380 = vadd.f32 0.0, %v7379
  %v7381 = vpop.f32.mrf.mxu0
  %v7382 = vadd.f32 0.0, %v7381
  %7383 = vdwg.mxu0
  %7384 = vmatprep.subr.mxu0 %v6061
  %7385 = vmatpush1.msra.mxu0 %v6060
  %7386 = vmatprep.subr.mxu0 %v6057
  %7387 = vmatpush1.msra.mxu0 %v6056
  %7388 = vmatprep.subr.mxu0 %v6053
  %7389 = vmatpush1.msra.mxu0 %v6052
  %7390 = vmatprep.subr.mxu0 %v6049
  %7391 = vmatpush1.msra.mxu0 %v6048
  %7392 = vmatprep.subr.mxu0 %v6045
  %7393 = vmatpush1.msra.mxu0 %v6044
  %7394 = vmatprep.subr.mxu0 %v6041
  %7395 = vmatpush1.msra.mxu0 %v6040
  %7396 = vmatprep.subr.mxu0 %v6037
  %7397 = vmatpush1.msra.mxu0 %v6036
  %7398 = vmatprep.subr.mxu0 %v6033
  %7399 = vmatpush1.msra.mxu0 %v6032
  %7400 = vmatprep.subr.mxu0 %v6029
  %7401 = vmatpush1.msra.mxu0 %v6028
  %7402 = vmatprep.subr.mxu0 %v6025
  %7403 = vmatpush1.msra.mxu0 %v6024
  %7404 = vmatprep.subr.mxu0 %v6021
  %7405 = vmatpush1.msra.mxu0 %v6020
  %7406 = vmatprep.subr.mxu0 %v6017
  %7407 = vmatpush1.msra.mxu0 %v6016
  %7408 = vmatprep.subr.mxu0 %v6013
  %7409 = vmatpush1.msra.mxu0 %v6012
  %7410 = vmatprep.subr.mxu0 %v6009
  %7411 = vmatpush1.msra.mxu0 %v6008
  %7412 = vmatprep.subr.mxu0 %v6005
  %7413 = vmatpush1.msra.mxu0 %v6004
  %7414 = vmatprep.subr.mxu0 %v6001
  %7415 = vmatpush1.msra.mxu0 %v6000
  %7416 = vmatprep.subr.mxu0 0.0
  %7417 = vmatpush2.msra.mxu0 0.0
  %7418 = vmatprep.subr.mxu0 0.0
  %7419 = vmatpush2.msra.mxu0 0.0
  %7420 = vmatprep.subr.mxu0 0.0
  %7421 = vmatpush2.msra.mxu0 0.0
  %7422 = vmatprep.subr.mxu0 0.0
  %7423 = vmatpush2.msra.mxu0 0.0
  %7424 = vmatprep.subr.mxu0 0.0
  %7425 = vmatpush2.msra.mxu0 0.0
  %7426 = vmatprep.subr.mxu0 0.0
  %7427 = vmatpush2.msra.mxu0 0.0
  %7428 = vmatprep.subr.mxu0 0.0
  %7429 = vmatpush2.msra.mxu0 0.0
  %7430 = vmatprep.subr.mxu0 0.0
  %7431 = vmatpush2.msra.mxu0 0.0
  %7432 = vmatprep.subr.mxu0 0.0
  %7433 = vmatpush2.msra.mxu0 0.0
  %7434 = vmatprep.subr.mxu0 0.0
  %7435 = vmatpush2.msra.mxu0 0.0
  %7436 = vmatprep.subr.mxu0 0.0
  %7437 = vmatpush2.msra.mxu0 0.0
  %7438 = vmatprep.subr.mxu0 0.0
  %7439 = vmatpush2.msra.mxu0 0.0
  %7440 = vmatprep.subr.mxu0 0.0
  %7441 = vmatpush2.msra.mxu0 0.0
  %7442 = vmatprep.subr.mxu0 0.0
  %7443 = vmatpush2.msra.mxu0 0.0
  %7444 = vmatprep.subr.mxu0 0.0
  %7445 = vmatpush2.msra.mxu0 0.0
  %7446 = vmatprep.subr.mxu0 0.0
  %7447 = vmatpush2.msra.mxu0 0.0
  %7448 = vmatprep.mubr.f32.mxu0 0.0
  %7449 = vmatmul.mubr.f32.gmra.mxu0 %v7312
  %v7450 = vpop.f32.mrf.mxu0
  %v7451 = vadd.f32 0.0, %v7450
  %v7452 = vpop.f32.mrf.mxu0
  %v7453 = vadd.f32 0.0, %v7452
  %7454 = vdwg.mxu0
  %v7455 = vadd.f32 %v7308, %v7380
  %v7456 = vadd.f32 %v7309, %v7382
  %v7457 = vadd.f32 %v7310, %v7451
  %v7458 = vadd.f32 %v7311, %v7453
  %v7459 = vxor.u32 %v7455, 2147483648
  %v7460 = vmul.f32 %v7459, 1.442695
  %v7461 = vpow.pop %v7460
  %v7462 = vadd.f32 %v7461, 1.0
  %v7463 = vrcp.pop %v7462
  %v7464 = vmul.f32 1.0, %v7463
  %v7465 = vxor.u32 %v7456, 2147483648
  %v7466 = vmul.f32 %v7465, 1.442695
  %v7467 = vpow.pop %v7466
  %v7468 = vadd.f32 %v7467, 1.0
  %v7469 = vrcp.pop %v7468
  %v7470 = vmul.f32 1.0, %v7469
  %v7471 = vtanh.pop %v7457
  %v7472 = vxor.u32 %v7458, 2147483648
  %v7473 = vmul.f32 %v7472, 1.442695
  %v7474 = vpow.pop %v7473
  %v7475 = vadd.f32 %v7474, 1.0
  %v7476 = vrcp.pop %v7475
  %v7477 = vmul.f32 1.0, %v7476
  %v7478 = vld [vmem:[#allocation5] sm:$0xff]
  %v7479 = vmul.f32 %v7470, %v7478
  %v7480 = vmul.f32 %v7464, %v7471
  %v7481 = vadd.f32 %v7479, %v7480
  %v7482 = vtanh.pop %v7481
  %v7483 = vmul.f32 %v7477, %v7482
  %7484 = vst [vmem:[#allocation5] sm:$0xff] %v7481
  %7485 = vst [vmem:[#allocation4] sm:$0xff] %v7483
  %v7486 = vld [vmem:[#allocation4] sm:$0xff]
  %v7487 = vadd.f32 %v7486, %v3793
  %v7488 = vmax.f32 %v7487, 0.0
  %v7489 = vld [vmem:[%s13] sm:$0xff]
  %v7490 = vld [vmem:[%s13 + $0x8] sm:$0xff]
  %v7491 = vld [vmem:[%s13 + $0x10] sm:$0xff]
  %v7492 = vld [vmem:[%s13 + $0x18] sm:$0xff]
  %v7493 = vld [vmem:[%s13 + $0x20] sm:$0xff]
  %v7494 = vld [vmem:[%s13 + $0x28] sm:$0xff]
  %v7495 = vld [vmem:[%s13 + $0x30] sm:$0xff]
  %v7496 = vld [vmem:[%s13 + $0x38] sm:$0xff]
  %v7497 = vld [vmem:[%s13 + $0x40] sm:$0xff]
  %v7498 = vld [vmem:[%s13 + $0x48] sm:$0xff]
  %v7499 = vld [vmem:[%s13 + $0x50] sm:$0xff]
  %v7500 = vld [vmem:[%s13 + $0x58] sm:$0xff]
  %v7501 = vld [vmem:[%s13 + $0x60] sm:$0xff]
  %v7502 = vld [vmem:[%s13 + $0x68] sm:$0xff]
  %v7503 = vld [vmem:[%s13 + $0x70] sm:$0xff]
  %v7504 = vld [vmem:[%s13 + $0x78] sm:$0xff]
  %v7505 = vld [vmem:[%s14] sm:$0x1]
  %v7507 = vlaneseq
  %v7508 = vshrl.u32 %v7507, 7
  %v7509 = vsub.s32 0, %v7508
  %v7510 = vrot.slane %v7505, %v7509
  %7512 = vmatprep.subr.mxu0 0.0
  %7513 = vmatpush1.msra.mxu0 %v7504
  %7514 = vmatprep.subr.mxu0 0.0
  %7515 = vmatpush1.msra.mxu0 %v7503
  %7516 = vmatprep.subr.mxu0 0.0
  %7517 = vmatpush1.msra.mxu0 %v7502
  %7518 = vmatprep.subr.mxu0 0.0
  %7519 = vmatpush1.msra.mxu0 %v7501
  %7520 = vmatprep.subr.mxu0 0.0
  %7521 = vmatpush1.msra.mxu0 %v7500
  %7522 = vmatprep.subr.mxu0 0.0
  %7523 = vmatpush1.msra.mxu0 %v7499
  %7524 = vmatprep.subr.mxu0 0.0
  %7525 = vmatpush1.msra.mxu0 %v7498
  %7526 = vmatprep.subr.mxu0 0.0
  %7527 = vmatpush1.msra.mxu0 %v7497
  %7528 = vmatprep.subr.mxu0 0.0
  %7529 = vmatpush1.msra.mxu0 %v7496
  %7530 = vmatprep.subr.mxu0 0.0
  %7531 = vmatpush1.msra.mxu0 %v7495
  %7532 = vmatprep.subr.mxu0 0.0
  %7533 = vmatpush1.msra.mxu0 %v7494
  %7534 = vmatprep.subr.mxu0 0.0
  %7535 = vmatpush1.msra.mxu0 %v7493
  %7536 = vmatprep.subr.mxu0 0.0
  %7537 = vmatpush1.msra.mxu0 %v7492
  %7538 = vmatprep.subr.mxu0 0.0
  %7539 = vmatpush1.msra.mxu0 %v7491
  %7540 = vmatprep.subr.mxu0 0.0
  %7541 = vmatpush1.msra.mxu0 %v7490
  %7542 = vmatprep.subr.mxu0 0.0
  %7543 = vmatpush1.msra.mxu0 %v7489
  %7544 = vmatprep.subr.mxu0 0.0
  %7545 = vmatpush2.msra.mxu0 0.0
  %7546 = vmatprep.subr.mxu0 0.0
  %7547 = vmatpush2.msra.mxu0 0.0
  %7548 = vmatprep.subr.mxu0 0.0
  %7549 = vmatpush2.msra.mxu0 0.0
  %7550 = vmatprep.subr.mxu0 0.0
  %7551 = vmatpush2.msra.mxu0 0.0
  %7552 = vmatprep.subr.mxu0 0.0
  %7553 = vmatpush2.msra.mxu0 0.0
  %7554 = vmatprep.subr.mxu0 0.0
  %7555 = vmatpush2.msra.mxu0 0.0
  %7556 = vmatprep.subr.mxu0 0.0
  %7557 = vmatpush2.msra.mxu0 0.0
  %7558 = vmatprep.subr.mxu0 0.0
  %7559 = vmatpush2.msra.mxu0 0.0
  %7560 = vmatprep.subr.mxu0 0.0
  %7561 = vmatpush2.msra.mxu0 0.0
  %7562 = vmatprep.subr.mxu0 0.0
  %7563 = vmatpush2.msra.mxu0 0.0
  %7564 = vmatprep.subr.mxu0 0.0
  %7565 = vmatpush2.msra.mxu0 0.0
  %7566 = vmatprep.subr.mxu0 0.0
  %7567 = vmatpush2.msra.mxu0 0.0
  %7568 = vmatprep.subr.mxu0 0.0
  %7569 = vmatpush2.msra.mxu0 0.0
  %7570 = vmatprep.subr.mxu0 0.0
  %7571 = vmatpush2.msra.mxu0 0.0
  %7572 = vmatprep.subr.mxu0 0.0
  %7573 = vmatpush2.msra.mxu0 0.0
  %7574 = vmatprep.subr.mxu0 0.0
  %7575 = vmatpush2.msra.mxu0 0.0
  %7576 = vmatprep.mubr.f32.mxu0 0.0
  %7577 = vmatmul.mubr.f32.gmra.mxu0 %v7488
  %v7578 = vpop.f32.mrf.mxu0
  %v7579 = vadd.f32 %v7510, %v7578
  %v7580 = vpop.f32.mrf.mxu0
  %7581 = vdwg.mxu0
  %v7582 = vmax.f32 %v7579, 0.0
  %v7583 = vld [vmem:[%s15] sm:$0xff]
  %v7584 = vld [vmem:[%s15 + $0x8] sm:$0xff]
  %v7585 = vld [vmem:[%s15 + $0x10] sm:$0xff]
  %v7586 = vld [vmem:[%s15 + $0x18] sm:$0xff]
  %v7587 = vld [vmem:[%s15 + $0x20] sm:$0xff]
  %v7588 = vld [vmem:[%s15 + $0x28] sm:$0xff]
  %v7589 = vld [vmem:[%s15 + $0x30] sm:$0xff]
  %v7590 = vld [vmem:[%s15 + $0x38] sm:$0xff]
  %v7591 = vld [vmem:[%s15 + $0x40] sm:$0xff]
  %v7592 = vld [vmem:[%s15 + $0x48] sm:$0xff]
  %v7593 = vld [vmem:[%s15 + $0x50] sm:$0xff]
  %v7594 = vld [vmem:[%s15 + $0x58] sm:$0xff]
  %v7595 = vld [vmem:[%s15 + $0x60] sm:$0xff]
  %v7596 = vld [vmem:[%s15 + $0x68] sm:$0xff]
  %v7597 = vld [vmem:[%s15 + $0x70] sm:$0xff]
  %v7598 = vld [vmem:[%s15 + $0x78] sm:$0xff]
  %v7599 = vld [vmem:[%s16] sm:$0x1]
  %v7601 = vlaneseq
  %v7602 = vshrl.u32 %v7601, 7
  %v7603 = vsub.s32 0, %v7602
  %v7604 = vrot.slane %v7599, %v7603
  %7606 = vmatprep.subr.mxu0 0.0
  %7607 = vmatpush1.msra.mxu0 %v7598
  %7608 = vmatprep.subr.mxu0 0.0
  %7609 = vmatpush1.msra.mxu0 %v7597
  %7610 = vmatprep.subr.mxu0 0.0
  %7611 = vmatpush1.msra.mxu0 %v7596
  %7612 = vmatprep.subr.mxu0 0.0
  %7613 = vmatpush1.msra.mxu0 %v7595
  %7614 = vmatprep.subr.mxu0 0.0
  %7615 = vmatpush1.msra.mxu0 %v7594
  %7616 = vmatprep.subr.mxu0 0.0
  %7617 = vmatpush1.msra.mxu0 %v7593
  %7618 = vmatprep.subr.mxu0 0.0
  %7619 = vmatpush1.msra.mxu0 %v7592
  %7620 = vmatprep.subr.mxu0 0.0
  %7621 = vmatpush1.msra.mxu0 %v7591
  %7622 = vmatprep.subr.mxu0 0.0
  %7623 = vmatpush1.msra.mxu0 %v7590
  %7624 = vmatprep.subr.mxu0 0.0
  %7625 = vmatpush1.msra.mxu0 %v7589
  %7626 = vmatprep.subr.mxu0 0.0
  %7627 = vmatpush1.msra.mxu0 %v7588
  %7628 = vmatprep.subr.mxu0 0.0
  %7629 = vmatpush1.msra.mxu0 %v7587
  %7630 = vmatprep.subr.mxu0 0.0
  %7631 = vmatpush1.msra.mxu0 %v7586
  %7632 = vmatprep.subr.mxu0 0.0
  %7633 = vmatpush1.msra.mxu0 %v7585
  %7634 = vmatprep.subr.mxu0 0.0
  %7635 = vmatpush1.msra.mxu0 %v7584
  %7636 = vmatprep.subr.mxu0 0.0
  %7637 = vmatpush1.msra.mxu0 %v7583
  %7638 = vmatprep.subr.mxu0 0.0
  %7639 = vmatpush2.msra.mxu0 0.0
  %7640 = vmatprep.subr.mxu0 0.0
  %7641 = vmatpush2.msra.mxu0 0.0
  %7642 = vmatprep.subr.mxu0 0.0
  %7643 = vmatpush2.msra.mxu0 0.0
  %7644 = vmatprep.subr.mxu0 0.0
  %7645 = vmatpush2.msra.mxu0 0.0
  %7646 = vmatprep.subr.mxu0 0.0
  %7647 = vmatpush2.msra.mxu0 0.0
  %7648 = vmatprep.subr.mxu0 0.0
  %7649 = vmatpush2.msra.mxu0 0.0
  %7650 = vmatprep.subr.mxu0 0.0
  %7651 = vmatpush2.msra.mxu0 0.0
  %7652 = vmatprep.subr.mxu0 0.0
  %7653 = vmatpush2.msra.mxu0 0.0
  %7654 = vmatprep.subr.mxu0 0.0
  %7655 = vmatpush2.msra.mxu0 0.0
  %7656 = vmatprep.subr.mxu0 0.0
  %7657 = vmatpush2.msra.mxu0 0.0
  %7658 = vmatprep.subr.mxu0 0.0
  %7659 = vmatpush2.msra.mxu0 0.0
  %7660 = vmatprep.subr.mxu0 0.0
  %7661 = vmatpush2.msra.mxu0 0.0
  %7662 = vmatprep.subr.mxu0 0.0
  %7663 = vmatpush2.msra.mxu0 0.0
  %7664 = vmatprep.subr.mxu0 0.0
  %7665 = vmatpush2.msra.mxu0 0.0
  %7666 = vmatprep.subr.mxu0 0.0
  %7667 = vmatpush2.msra.mxu0 0.0
  %7668 = vmatprep.subr.mxu0 0.0
  %7669 = vmatpush2.msra.mxu0 0.0
  %7670 = vmatprep.mubr.f32.mxu0 0.0
  %7671 = vmatmul.mubr.f32.gmra.mxu0 %v7582
  %v7672 = vpop.f32.mrf.mxu0
  %v7673 = vadd.f32 %v7604, %v7672
  %v7674 = vpop.f32.mrf.mxu0
  %7675 = vdwg.mxu0
  %v7676 = vmax.f32 %v7673, 0.0
  %v7677 = vld [vmem:[%s17] sm:$0xff]
  %v7678 = vld [vmem:[%s17 + $0x8] sm:$0xff]
  %v7679 = vld [vmem:[%s17 + $0x10] sm:$0xff]
  %v7680 = vld [vmem:[%s17 + $0x18] sm:$0xff]
  %v7681 = vld [vmem:[%s17 + $0x20] sm:$0xff]
  %v7682 = vld [vmem:[%s17 + $0x28] sm:$0xff]
  %v7683 = vld [vmem:[%s17 + $0x30] sm:$0xff]
  %v7684 = vld [vmem:[%s17 + $0x38] sm:$0xff]
  %v7685 = vld [vmem:[%s17 + $0x40] sm:$0xff]
  %v7686 = vld [vmem:[%s17 + $0x48] sm:$0xff]
  %v7687 = vld [vmem:[%s17 + $0x50] sm:$0xff]
  %v7688 = vld [vmem:[%s17 + $0x58] sm:$0xff]
  %v7689 = vld [vmem:[%s17 + $0x60] sm:$0xff]
  %v7690 = vld [vmem:[%s17 + $0x68] sm:$0xff]
  %v7691 = vld [vmem:[%s17 + $0x70] sm:$0xff]
  %v7692 = vld [vmem:[%s17 + $0x78] sm:$0xff]
  %v7693 = vld [vmem:[%s18] sm:$0x1]
  %v7695 = vlaneseq
  %v7696 = vshrl.u32 %v7695, 7
  %v7697 = vsub.s32 0, %v7696
  %v7698 = vrot.slane %v7693, %v7697
  %7700 = vmatprep.subr.mxu0 0.0
  %7701 = vmatpush1.msra.mxu0 %v7692
  %7702 = vmatprep.subr.mxu0 0.0
  %7703 = vmatpush1.msra.mxu0 %v7691
  %7704 = vmatprep.subr.mxu0 0.0
  %7705 = vmatpush1.msra.mxu0 %v7690
  %7706 = vmatprep.subr.mxu0 0.0
  %7707 = vmatpush1.msra.mxu0 %v7689
  %7708 = vmatprep.subr.mxu0 0.0
  %7709 = vmatpush1.msra.mxu0 %v7688
  %7710 = vmatprep.subr.mxu0 0.0
  %7711 = vmatpush1.msra.mxu0 %v7687
  %7712 = vmatprep.subr.mxu0 0.0
  %7713 = vmatpush1.msra.mxu0 %v7686
  %7714 = vmatprep.subr.mxu0 0.0
  %7715 = vmatpush1.msra.mxu0 %v7685
  %7716 = vmatprep.subr.mxu0 0.0
  %7717 = vmatpush1.msra.mxu0 %v7684
  %7718 = vmatprep.subr.mxu0 0.0
  %7719 = vmatpush1.msra.mxu0 %v7683
  %7720 = vmatprep.subr.mxu0 0.0
  %7721 = vmatpush1.msra.mxu0 %v7682
  %7722 = vmatprep.subr.mxu0 0.0
  %7723 = vmatpush1.msra.mxu0 %v7681
  %7724 = vmatprep.subr.mxu0 0.0
  %7725 = vmatpush1.msra.mxu0 %v7680
  %7726 = vmatprep.subr.mxu0 0.0
  %7727 = vmatpush1.msra.mxu0 %v7679
  %7728 = vmatprep.subr.mxu0 0.0
  %7729 = vmatpush1.msra.mxu0 %v7678
  %7730 = vmatprep.subr.mxu0 0.0
  %7731 = vmatpush1.msra.mxu0 %v7677
  %7732 = vmatprep.subr.mxu0 0.0
  %7733 = vmatpush2.msra.mxu0 0.0
  %7734 = vmatprep.subr.mxu0 0.0
  %7735 = vmatpush2.msra.mxu0 0.0
  %7736 = vmatprep.subr.mxu0 0.0
  %7737 = vmatpush2.msra.mxu0 0.0
  %7738 = vmatprep.subr.mxu0 0.0
  %7739 = vmatpush2.msra.mxu0 0.0
  %7740 = vmatprep.subr.mxu0 0.0
  %7741 = vmatpush2.msra.mxu0 0.0
  %7742 = vmatprep.subr.mxu0 0.0
  %7743 = vmatpush2.msra.mxu0 0.0
  %7744 = vmatprep.subr.mxu0 0.0
  %7745 = vmatpush2.msra.mxu0 0.0
  %7746 = vmatprep.subr.mxu0 0.0
  %7747 = vmatpush2.msra.mxu0 0.0
  %7748 = vmatprep.subr.mxu0 0.0
  %7749 = vmatpush2.msra.mxu0 0.0
  %7750 = vmatprep.subr.mxu0 0.0
  %7751 = vmatpush2.msra.mxu0 0.0
  %7752 = vmatprep.subr.mxu0 0.0
  %7753 = vmatpush2.msra.mxu0 0.0
  %7754 = vmatprep.subr.mxu0 0.0
  %7755 = vmatpush2.msra.mxu0 0.0
  %7756 = vmatprep.subr.mxu0 0.0
  %7757 = vmatpush2.msra.mxu0 0.0
  %7758 = vmatprep.subr.mxu0 0.0
  %7759 = vmatpush2.msra.mxu0 0.0
  %7760 = vmatprep.subr.mxu0 0.0
  %7761 = vmatpush2.msra.mxu0 0.0
  %7762 = vmatprep.subr.mxu0 0.0
  %7763 = vmatpush2.msra.mxu0 0.0
  %7764 = vmatprep.mubr.f32.mxu0 0.0
  %7765 = vmatmul.mubr.f32.gmra.mxu0 %v7676
  %v7766 = vpop.f32.mrf.mxu0
  %v7767 = vadd.f32 %v7698, %v7766
  %v7768 = vpop.f32.mrf.mxu0
  %7769 = vdwg.mxu0
  %7770 = vst [vmem:[%s19] sm:$0xff] %v7767
  // Predicated region
  $region78: #{lstm_net_forward.1} parent=0 // pred_check
    _
  $region79: #{lstm_net_forward.1} parent=0 // pred_check_branch
    %7772 = sbr.rel (0) target = $region81
  $region80: #{lstm_net_forward.1} parent=0 // pred_region
    _
  $region81: #{lstm_net_forward.1} parent=0 // pred_fallthru
    _
  // Predicated region
  $region82: #{lstm_net_forward.1} parent=0 // pred_check
    _
  $region83: #{lstm_net_forward.1} parent=0 // pred_check_branch
    %7774 = sbr.rel (0) target = $region85
  $region84: #{lstm_net_forward.1} parent=0 // pred_region
    _
  $region85: #{lstm_net_forward.1} parent=0 // pred_fallthru
    _

</llo_original>
